<compile_context>
chip_gen: v6e
topology: v6e:2x2x1
jax: 0.10.0
libtpu: 0.0.40
codegen_flags: <defaults>
</compile_context>

<pallas_src>
import functools

import jax
import jax.numpy as jnp
from jax.experimental import pallas as pl
from jax.experimental.pallas import tpu as pltpu


# --------------------------------------------------------------------------
# Fused Pallas kernel: encoder stand-in + head_lab + all unlab/over heads
# --------------------------------------------------------------------------
def _fused_forward_kernel(xp_ref, convw_ref, bng_ref, bnb_ref, protolab_ref,
                          w1_ref, b1_ref, g1_ref, be1_ref,
                          w2_ref, b2_ref, mask_ref, protobd_ref, out_ref):
    B, Hp, Wp, C = xp_ref.shape
    H, W = Hp - 2, Wp - 2
    hw = H * W
    cout = convw_ref.shape[2]

    # ---- encoder: 3x3 conv (stride 1, pad 1) as 9 shifted-tap matmuls -------------
    # taps are sliced from the padded NHWC slab in VMEM (no im2col in HBM)
    acc = jnp.zeros((B * hw, cout), jnp.float32)
    for t in range(9):
        dy, dx = t // 3, t % 3
        tap = xp_ref[:, dy:dy + H, dx:dx + W, :].reshape(B * hw, C)
        acc = acc + jnp.dot(tap, convw_ref[t], preferred_element_type=jnp.float32)

    # BatchNorm2d (training-mode batch stats over N*H*W, biased var) + ReLU
    mu = jnp.mean(acc, axis=0, keepdims=True)
    var = jnp.mean((acc - mu) ** 2, axis=0, keepdims=True)
    y = (acc - mu) * jax.lax.rsqrt(var + 1e-5) * bng_ref[...] + bnb_ref[...]
    y = jnp.maximum(y, 0.0)

    # global average pool per image via static row-range means (no sublane-splitting reshape)
    feats = jnp.concatenate(
        [jnp.mean(y[b * hw:(b + 1) * hw], axis=0, keepdims=True) for b in range(B)],
        axis=0)                                                        # (B, cout) f32
    feats_bf = feats.astype(jnp.bfloat16)

    # ---- head_lab: normalize(feats, dim=1) @ prototypes^T --------------------------
    fss = jnp.sum(feats * feats, axis=1, keepdims=True)
    fn = feats * jax.lax.rsqrt(jnp.maximum(fss, 1e-24))                # == x / max(|x|, 1e-12)
    logits_lab = jnp.dot(fn.astype(jnp.bfloat16), protolab_ref[...],
                         preferred_element_type=jnp.float32)           # (B, L)

    # ---- head_unlab + head_unlab_over: all 2*nh MLP heads batched along lanes -------
    h1 = jnp.dot(feats_bf, w1_ref[...], preferred_element_type=jnp.float32) + b1_ref[...]
    m1 = jnp.mean(h1, axis=0, keepdims=True)                           # BatchNorm1d (batch
    v1 = jnp.mean((h1 - m1) ** 2, axis=0, keepdims=True)               # stats) per column
    h1 = (h1 - m1) * jax.lax.rsqrt(v1 + 1e-5) * g1_ref[...] + be1_ref[...]
    h1 = jnp.maximum(h1, 0.0)
    # block-diagonal W2 keeps heads independent inside a single matmul
    z = jnp.dot(h1.astype(jnp.bfloat16), w2_ref[...],
                preferred_element_type=jnp.float32) + b2_ref[...]      # (B, 2nh*pdim)
    # per-head L2 norm: block-mask matmul broadcasts each head's sum-of-squares per column
    sumsq = jnp.dot(z * z, mask_ref[...], preferred_element_type=jnp.float32)
    zn = z * jax.lax.rsqrt(jnp.maximum(sumsq, 1e-24))                  # == F.normalize(z, dim=1)
    logits_heads = jnp.dot(zn.astype(jnp.bfloat16), protobd_ref[...],
                           preferred_element_type=jnp.float32)         # (B, nh*(nu+no))

    # ---- single lane-dense packed store (last dim padded to a multiple of 128) ------
    packed = jnp.concatenate([feats, logits_lab, logits_heads, zn], axis=1)
    pad = out_ref.shape[1] - packed.shape[1]
    if pad > 0:
        packed = jnp.concatenate([packed, jnp.zeros((B, pad), jnp.float32)], axis=1)
    out_ref[...] = packed


# --------------------------------------------------------------------------
# One-time parameter preparation (hoisted out of the per-forward path)
# --------------------------------------------------------------------------
def _block_diag(blocks):
    rows = sum(b.shape[0] for b in blocks)
    cols = sum(b.shape[1] for b in blocks)
    out = jnp.zeros((rows, cols), blocks[0].dtype)
    r = c = 0
    for b in blocks:
        out = out.at[r:r + b.shape[0], c:c + b.shape[1]].set(b)
        r += b.shape[0]
        c += b.shape[1]
    return out


def prepare_params(raw):
    """Transposes, head concatenation / block-diagonalization, bf16 casts — done once."""
    enc = raw["encoder"]
    conv_w = jnp.transpose(enc["conv_w"], (2, 3, 1, 0))                # (kh, kw, Cin, Cout)
    kh, kw, cin, cout = conv_w.shape
    conv_w = conv_w.reshape(kh * kw, cin, cout).astype(jnp.float32)

    proto_lab_t = jnp.transpose(raw["head_lab_proto"]).astype(jnp.bfloat16)   # (F, L)

    hu, ho = raw["head_unlab"], raw["head_unlab_over"]
    nh = hu["w1"].shape[0]
    w1_all = jnp.concatenate([hu["w1"], ho["w1"]], axis=0)             # (2nh, hid, F)
    nht, hid, fdim = w1_all.shape
    w1cat = jnp.transpose(w1_all, (2, 0, 1)).reshape(fdim, nht * hid).astype(jnp.bfloat16)

    def cat_rows(name):
        return jnp.concatenate([hu[name], ho[name]], axis=0).reshape(1, -1).astype(jnp.float32)

    b1cat, g1cat, be1cat = cat_rows("b1"), cat_rows("g1"), cat_rows("be1")

    w2_all = jnp.concatenate([hu["w2"], ho["w2"]], axis=0)             # (2nh, pdim, hid)
    pdim = w2_all.shape[1]
    w2bd = _block_diag([jnp.transpose(w2_all[h]) for h in range(nht)]).astype(jnp.bfloat16)
    b2cat = jnp.concatenate([hu["b2"], ho["b2"]], axis=0).reshape(1, -1).astype(jnp.float32)
    mask = _block_diag([jnp.ones((pdim, pdim), jnp.float32)] * nht)
    proto_bd = _block_diag([jnp.transpose(hu["proto"][h]) for h in range(nh)]
                           + [jnp.transpose(ho["proto"][h]) for h in range(nh)]
                           ).astype(jnp.bfloat16)

    nu = int(hu["proto"].shape[1])
    no = int(ho["proto"].shape[1])
    L = int(proto_lab_t.shape[1])
    total = int(fdim) + L + nh * nu + nh * no + int(nht) * int(pdim)
    out_width = ((total + 127) // 128) * 128

    return {
        "conv_w": conv_w,
        "bn_g": enc["bn_g"].reshape(1, -1).astype(jnp.float32),
        "bn_b": enc["bn_b"].reshape(1, -1).astype(jnp.float32),
        "proto_lab_t": proto_lab_t,
        "w1": w1cat, "b1": b1cat, "g1": g1cat, "be1": be1cat,
        "w2": w2bd, "b2": b2cat, "mask": mask, "proto_bd": proto_bd,
        "feat_dim": int(fdim), "num_labeled": L, "num_heads": int(nh),
        "proj_dim": int(pdim), "num_unlab": nu, "num_over": no,
        "out_width": int(out_width),
    }


# --------------------------------------------------------------------------
# Forward wrapper (only layout glue outside the fused kernel)
# --------------------------------------------------------------------------
def multi_head_encoder_forward(views, params):
    """Mirrors MultiHeadEncoder.forward for a single (non-list) NCHW input tensor.
    `params` must come from prepare_params()."""
    P = params
    x = jnp.transpose(views, (0, 2, 3, 1))                             # NCHW -> NHWC
    B = x.shape[0]
    xp = jnp.pad(x, ((0, 0), (1, 1), (1, 1), (0, 0)))                  # conv padding=1

    packed = pl.pallas_call(
        _fused_forward_kernel,
        out_shape=jax.ShapeDtypeStruct((B, P["out_width"]), jnp.float32),
        compiler_params=pltpu.CompilerParams(vmem_limit_bytes=32 * 1024 * 1024),
    )(xp, P["conv_w"], P["bn_g"], P["bn_b"], P["proto_lab_t"],
      P["w1"], P["b1"], P["g1"], P["be1"],
      P["w2"], P["b2"], P["mask"], P["proto_bd"])

    fdim, L = P["feat_dim"], P["num_labeled"]
    nh, pdim = P["num_heads"], P["proj_dim"]
    nu, no = P["num_unlab"], P["num_over"]

    o = 0
    feats = packed[:, o:o + fdim]; o += fdim
    logits_lab = packed[:, o:o + L]; o += L
    logits_unlab = jnp.transpose(
        packed[:, o:o + nh * nu].reshape(B, nh, nu), (1, 0, 2)); o += nh * nu
    logits_over = jnp.transpose(
        packed[:, o:o + nh * no].reshape(B, nh, no), (1, 0, 2)); o += nh * no
    z_all = packed[:, o:o + 2 * nh * pdim].reshape(B, 2 * nh, pdim)
    proj_unlab = jnp.transpose(z_all[:, :nh], (1, 0, 2))
    proj_over = jnp.transpose(z_all[:, nh:], (1, 0, 2))

    return {
        "feats": feats,
        "logits_lab": logits_lab,
        "logits_unlab": logits_unlab,
        "proj_feats_unlab": proj_unlab,
        "logits_unlab_over": logits_over,
        "proj_feats_unlab_over": proj_over,
    }


# --------------------------------------------------------------------------
# Deterministic synthetic parameters (shapes follow the module's __init__)
# --------------------------------------------------------------------------
def init_params(key, *, in_ch=3, feat_dim=32, hidden_dim=64, proj_dim=16,
                num_labeled=10, num_unlabeled=12, overcluster_factor=3,
                num_heads=3):
    ks = jax.random.split(key, 4)

    def nrm(k, shape, scale=0.05):
        return scale * jax.random.normal(k, shape, jnp.float32)

    def normalize_rows(w):   # F.normalize(w, dim=-1, p=2)
        return w / jnp.maximum(jnp.linalg.norm(w, axis=-1, keepdims=True), 1e-12)

    encoder = {
        "conv_w": nrm(ks[0], (feat_dim, in_ch, 3, 3), 0.2),   # kaiming-style stand-in
        "bn_g": jnp.ones((feat_dim,), jnp.float32),
        "bn_b": jnp.zeros((feat_dim,), jnp.float32),
    }
    head_lab_proto = normalize_rows(nrm(ks[1], (num_labeled, feat_dim), 1.0))

    def make_multihead(kbase, nproto):
        kk = jax.random.split(kbase, 5)
        return {
            "w1": nrm(kk[0], (num_heads, hidden_dim, feat_dim)),
            "b1": nrm(kk[1], (num_heads, hidden_dim)),
            "g1": jnp.ones((num_heads, hidden_dim), jnp.float32),
            "be1": jnp.zeros((num_heads, hidden_dim), jnp.float32),
            "w2": nrm(kk[2], (num_heads, proj_dim, hidden_dim)),
            "b2": nrm(kk[3], (num_heads, proj_dim)),
            "proto": normalize_rows(nrm(kk[4], (num_heads, nproto, proj_dim), 1.0)),
        }

    return {
        "encoder": encoder,
        "head_lab_proto": head_lab_proto,
        "head_unlab": make_multihead(ks[2], num_unlabeled),
        "head_unlab_over": make_multihead(ks[3], num_unlabeled * overcluster_factor),
    }


if __name__ == "__main__":
    key = jax.random.PRNGKey(0)
    kx, kp = jax.random.split(key)

    # small, low_res-style input (PyTorch NCHW): batch=2, 3 channels, 16x16
    x = jax.random.normal(kx, (2, 3, 16, 16), jnp.float32)
    raw_params = init_params(kp)
    params = prepare_params(raw_params)   # one-time weight prep, outside the forward

    fwd = jax.jit(functools.partial(multi_head_encoder_forward, params=params))
    out = fwd(x)
    jax.block_until_ready(out)

    assert out["feats"].shape == (2, 32)
    assert out["logits_lab"].shape == (2, 10)
    assert out["logits_unlab"].shape == (3, 2, 12)
    assert out["proj_feats_unlab"].shape == (3, 2, 16)
    assert out["logits_unlab_over"].shape == (3, 2, 36)
    assert out["proj_feats_unlab_over"].shape == (3, 2, 16)

    print("KERNEL_OK")
</pallas_src>

<mosaic_0001>
module attributes {stable_mosaic.version = 11 : i64} {
  func.func @_fused_forward_kernel(%arg0: memref<2x18x18x3xf32, #tpu.memory_space<vmem>>, %arg1: memref<9x3x32xf32, #tpu.memory_space<vmem>>, %arg2: memref<1x32xf32, #tpu.memory_space<vmem>>, %arg3: memref<1x32xf32, #tpu.memory_space<vmem>>, %arg4: memref<32x10xbf16, #tpu.memory_space<vmem>>, %arg5: memref<32x384xbf16, #tpu.memory_space<vmem>>, %arg6: memref<1x384xf32, #tpu.memory_space<vmem>>, %arg7: memref<1x384xf32, #tpu.memory_space<vmem>>, %arg8: memref<1x384xf32, #tpu.memory_space<vmem>>, %arg9: memref<384x96xbf16, #tpu.memory_space<vmem>>, %arg10: memref<1x96xf32, #tpu.memory_space<vmem>>, %arg11: memref<96x96xf32, #tpu.memory_space<vmem>>, %arg12: memref<96x144xbf16, #tpu.memory_space<vmem>>, %arg13: memref<2x384xf32, #tpu.memory_space<vmem>>) attributes {dimension_semantics = [], scalar_prefetch = 0 : i64, scratch_operands = 0 : i64, tpu.core_type = #tpu.core_type<tc>} {
    %cst = arith.constant 0.000000e+00 : f32
    %0 = vector.broadcast %cst : f32 to vector<512x32xf32>
    %c0 = arith.constant 0 : index
    %c0_0 = arith.constant 0 : index
    %c0_1 = arith.constant 0 : index
    %c0_2 = arith.constant 0 : index
    %1 = vector.load %arg0[%c0, %c0_0, %c0_1, %c0_2] : memref<2x18x18x3xf32, #tpu.memory_space<vmem>>, vector<2x16x16x3xf32>
    %2 = vector.shape_cast %1 : vector<2x16x16x3xf32> to vector<512x3xf32>
    %c0_3 = arith.constant 0 : index
    %c0_4 = arith.constant 0 : index
    %c0_5 = arith.constant 0 : index
    %3 = vector.load %arg1[%c0_3, %c0_4, %c0_5] : memref<9x3x32xf32, #tpu.memory_space<vmem>>, vector<1x3x32xf32>
    %4 = vector.shape_cast %3 : vector<1x3x32xf32> to vector<3x32xf32>
    %cst_6 = arith.constant dense<0.000000e+00> : vector<512x32xf32>
    %5 = tpu.matmul %2, %4, %cst_6 {dimension_numbers = #tpu.dot_dimension_numbers<[1], [0], [0], [1], [0, 0, 1, 1], [], []>} : vector<512x3xf32>, vector<3x32xf32>, vector<512x32xf32> -> vector<512x32xf32>
    %6 = arith.addf %0, %5 : vector<512x32xf32>
    %c0_7 = arith.constant 0 : index
    %c0_8 = arith.constant 0 : index
    %c1 = arith.constant 1 : index
    %c0_9 = arith.constant 0 : index
    %7 = vector.load %arg0[%c0_7, %c0_8, %c1, %c0_9] : memref<2x18x18x3xf32, #tpu.memory_space<vmem>>, vector<2x16x16x3xf32>
    %8 = vector.shape_cast %7 : vector<2x16x16x3xf32> to vector<512x3xf32>
    %c1_10 = arith.constant 1 : index
    %c0_11 = arith.constant 0 : index
    %c0_12 = arith.constant 0 : index
    %9 = vector.load %arg1[%c1_10, %c0_11, %c0_12] : memref<9x3x32xf32, #tpu.memory_space<vmem>>, vector<1x3x32xf32>
    %10 = vector.shape_cast %9 : vector<1x3x32xf32> to vector<3x32xf32>
    %cst_13 = arith.constant dense<0.000000e+00> : vector<512x32xf32>
    %11 = tpu.matmul %8, %10, %cst_13 {dimension_numbers = #tpu.dot_dimension_numbers<[1], [0], [0], [1], [0, 0, 1, 1], [], []>} : vector<512x3xf32>, vector<3x32xf32>, vector<512x32xf32> -> vector<512x32xf32>
    %12 = arith.addf %6, %11 : vector<512x32xf32>
    %c0_14 = arith.constant 0 : index
    %c0_15 = arith.constant 0 : index
    %c2 = arith.constant 2 : index
    %c0_16 = arith.constant 0 : index
    %13 = vector.load %arg0[%c0_14, %c0_15, %c2, %c0_16] : memref<2x18x18x3xf32, #tpu.memory_space<vmem>>, vector<2x16x16x3xf32>
    %14 = vector.shape_cast %13 : vector<2x16x16x3xf32> to vector<512x3xf32>
    %c2_17 = arith.constant 2 : index
    %c0_18 = arith.constant 0 : index
    %c0_19 = arith.constant 0 : index
    %15 = vector.load %arg1[%c2_17, %c0_18, %c0_19] : memref<9x3x32xf32, #tpu.memory_space<vmem>>, vector<1x3x32xf32>
    %16 = vector.shape_cast %15 : vector<1x3x32xf32> to vector<3x32xf32>
    %cst_20 = arith.constant dense<0.000000e+00> : vector<512x32xf32>
    %17 = tpu.matmul %14, %16, %cst_20 {dimension_numbers = #tpu.dot_dimension_numbers<[1], [0], [0], [1], [0, 0, 1, 1], [], []>} : vector<512x3xf32>, vector<3x32xf32>, vector<512x32xf32> -> vector<512x32xf32>
    %18 = arith.addf %12, %17 : vector<512x32xf32>
    %c0_21 = arith.constant 0 : index
    %c1_22 = arith.constant 1 : index
    %c0_23 = arith.constant 0 : index
    %c0_24 = arith.constant 0 : index
    %19 = vector.load %arg0[%c0_21, %c1_22, %c0_23, %c0_24] : memref<2x18x18x3xf32, #tpu.memory_space<vmem>>, vector<2x16x16x3xf32>
    %20 = vector.shape_cast %19 : vector<2x16x16x3xf32> to vector<512x3xf32>
    %c3 = arith.constant 3 : index
    %c0_25 = arith.constant 0 : index
    %c0_26 = arith.constant 0 : index
    %21 = vector.load %arg1[%c3, %c0_25, %c0_26] : memref<9x3x32xf32, #tpu.memory_space<vmem>>, vector<1x3x32xf32>
    %22 = vector.shape_cast %21 : vector<1x3x32xf32> to vector<3x32xf32>
    %cst_27 = arith.constant dense<0.000000e+00> : vector<512x32xf32>
    %23 = tpu.matmul %20, %22, %cst_27 {dimension_numbers = #tpu.dot_dimension_numbers<[1], [0], [0], [1], [0, 0, 1, 1], [], []>} : vector<512x3xf32>, vector<3x32xf32>, vector<512x32xf32> -> vector<512x32xf32>
    %24 = arith.addf %18, %23 : vector<512x32xf32>
    %c0_28 = arith.constant 0 : index
    %c1_29 = arith.constant 1 : index
    %c1_30 = arith.constant 1 : index
    %c0_31 = arith.constant 0 : index
    %25 = vector.load %arg0[%c0_28, %c1_29, %c1_30, %c0_31] : memref<2x18x18x3xf32, #tpu.memory_space<vmem>>, vector<2x16x16x3xf32>
    %26 = vector.shape_cast %25 : vector<2x16x16x3xf32> to vector<512x3xf32>
    %c4 = arith.constant 4 : index
    %c0_32 = arith.constant 0 : index
    %c0_33 = arith.constant 0 : index
    %27 = vector.load %arg1[%c4, %c0_32, %c0_33] : memref<9x3x32xf32, #tpu.memory_space<vmem>>, vector<1x3x32xf32>
    %28 = vector.shape_cast %27 : vector<1x3x32xf32> to vector<3x32xf32>
    %cst_34 = arith.constant dense<0.000000e+00> : vector<512x32xf32>
    %29 = tpu.matmul %26, %28, %cst_34 {dimension_numbers = #tpu.dot_dimension_numbers<[1], [0], [0], [1], [0, 0, 1, 1], [], []>} : vector<512x3xf32>, vector<3x32xf32>, vector<512x32xf32> -> vector<512x32xf32>
    %30 = arith.addf %24, %29 : vector<512x32xf32>
    %c0_35 = arith.constant 0 : index
    %c1_36 = arith.constant 1 : index
    %c2_37 = arith.constant 2 : index
    %c0_38 = arith.constant 0 : index
    %31 = vector.load %arg0[%c0_35, %c1_36, %c2_37, %c0_38] : memref<2x18x18x3xf32, #tpu.memory_space<vmem>>, vector<2x16x16x3xf32>
    %32 = vector.shape_cast %31 : vector<2x16x16x3xf32> to vector<512x3xf32>
    %c5 = arith.constant 5 : index
    %c0_39 = arith.constant 0 : index
    %c0_40 = arith.constant 0 : index
    %33 = vector.load %arg1[%c5, %c0_39, %c0_40] : memref<9x3x32xf32, #tpu.memory_space<vmem>>, vector<1x3x32xf32>
    %34 = vector.shape_cast %33 : vector<1x3x32xf32> to vector<3x32xf32>
    %cst_41 = arith.constant dense<0.000000e+00> : vector<512x32xf32>
    %35 = tpu.matmul %32, %34, %cst_41 {dimension_numbers = #tpu.dot_dimension_numbers<[1], [0], [0], [1], [0, 0, 1, 1], [], []>} : vector<512x3xf32>, vector<3x32xf32>, vector<512x32xf32> -> vector<512x32xf32>
    %36 = arith.addf %30, %35 : vector<512x32xf32>
    %c0_42 = arith.constant 0 : index
    %c2_43 = arith.constant 2 : index
    %c0_44 = arith.constant 0 : index
    %c0_45 = arith.constant 0 : index
    %37 = vector.load %arg0[%c0_42, %c2_43, %c0_44, %c0_45] : memref<2x18x18x3xf32, #tpu.memory_space<vmem>>, vector<2x16x16x3xf32>
    %38 = vector.shape_cast %37 : vector<2x16x16x3xf32> to vector<512x3xf32>
    %c6 = arith.constant 6 : index
    %c0_46 = arith.constant 0 : index
    %c0_47 = arith.constant 0 : index
    %39 = vector.load %arg1[%c6, %c0_46, %c0_47] : memref<9x3x32xf32, #tpu.memory_space<vmem>>, vector<1x3x32xf32>
    %40 = vector.shape_cast %39 : vector<1x3x32xf32> to vector<3x32xf32>
    %cst_48 = arith.constant dense<0.000000e+00> : vector<512x32xf32>
    %41 = tpu.matmul %38, %40, %cst_48 {dimension_numbers = #tpu.dot_dimension_numbers<[1], [0], [0], [1], [0, 0, 1, 1], [], []>} : vector<512x3xf32>, vector<3x32xf32>, vector<512x32xf32> -> vector<512x32xf32>
    %42 = arith.addf %36, %41 : vector<512x32xf32>
    %c0_49 = arith.constant 0 : index
    %c2_50 = arith.constant 2 : index
    %c1_51 = arith.constant 1 : index
    %c0_52 = arith.constant 0 : index
    %43 = vector.load %arg0[%c0_49, %c2_50, %c1_51, %c0_52] : memref<2x18x18x3xf32, #tpu.memory_space<vmem>>, vector<2x16x16x3xf32>
    %44 = vector.shape_cast %43 : vector<2x16x16x3xf32> to vector<512x3xf32>
    %c7 = arith.constant 7 : index
    %c0_53 = arith.constant 0 : index
    %c0_54 = arith.constant 0 : index
    %45 = vector.load %arg1[%c7, %c0_53, %c0_54] : memref<9x3x32xf32, #tpu.memory_space<vmem>>, vector<1x3x32xf32>
    %46 = vector.shape_cast %45 : vector<1x3x32xf32> to vector<3x32xf32>
    %cst_55 = arith.constant dense<0.000000e+00> : vector<512x32xf32>
    %47 = tpu.matmul %44, %46, %cst_55 {dimension_numbers = #tpu.dot_dimension_numbers<[1], [0], [0], [1], [0, 0, 1, 1], [], []>} : vector<512x3xf32>, vector<3x32xf32>, vector<512x32xf32> -> vector<512x32xf32>
    %48 = arith.addf %42, %47 : vector<512x32xf32>
    %c0_56 = arith.constant 0 : index
    %c2_57 = arith.constant 2 : index
    %c2_58 = arith.constant 2 : index
    %c0_59 = arith.constant 0 : index
    %49 = vector.load %arg0[%c0_56, %c2_57, %c2_58, %c0_59] : memref<2x18x18x3xf32, #tpu.memory_space<vmem>>, vector<2x16x16x3xf32>
    %50 = vector.shape_cast %49 : vector<2x16x16x3xf32> to vector<512x3xf32>
    %c8 = arith.constant 8 : index
    %c0_60 = arith.constant 0 : index
    %c0_61 = arith.constant 0 : index
    %51 = vector.load %arg1[%c8, %c0_60, %c0_61] : memref<9x3x32xf32, #tpu.memory_space<vmem>>, vector<1x3x32xf32>
    %52 = vector.shape_cast %51 : vector<1x3x32xf32> to vector<3x32xf32>
    %cst_62 = arith.constant dense<0.000000e+00> : vector<512x32xf32>
    %53 = tpu.matmul %50, %52, %cst_62 {dimension_numbers = #tpu.dot_dimension_numbers<[1], [0], [0], [1], [0, 0, 1, 1], [], []>} : vector<512x3xf32>, vector<3x32xf32>, vector<512x32xf32> -> vector<512x32xf32>
    %54 = arith.addf %48, %53 : vector<512x32xf32>
    %cst_63 = arith.constant dense<0.000000e+00> : vector<32xf32>
    %55 = vector.multi_reduction <add>, %54, %cst_63 [0] : vector<512x32xf32> to vector<32xf32>
    %56 = vector.shape_cast %55 : vector<32xf32> to vector<1x32xf32>
    %cst_64 = arith.constant 5.120000e+02 : f32
    %57 = vector.broadcast %cst_64 : f32 to vector<1x32xf32>
    %58 = arith.divf %56, %57 : vector<1x32xf32>
    %59 = vector.broadcast %58 : vector<1x32xf32> to vector<512x32xf32>
    %60 = arith.subf %54, %59 : vector<512x32xf32>
    %61 = arith.mulf %60, %60 : vector<512x32xf32>
    %cst_65 = arith.constant dense<0.000000e+00> : vector<32xf32>
    %62 = vector.multi_reduction <add>, %61, %cst_65 [0] : vector<512x32xf32> to vector<32xf32>
    %63 = vector.shape_cast %62 : vector<32xf32> to vector<1x32xf32>
    %cst_66 = arith.constant 5.120000e+02 : f32
    %64 = vector.broadcast %cst_66 : f32 to vector<1x32xf32>
    %65 = arith.divf %63, %64 : vector<1x32xf32>
    %66 = vector.broadcast %58 : vector<1x32xf32> to vector<512x32xf32>
    %67 = arith.subf %54, %66 : vector<512x32xf32>
    %cst_67 = arith.constant 9.99999974E-6 : f32
    %68 = vector.broadcast %cst_67 : f32 to vector<1x32xf32>
    %69 = arith.addf %65, %68 : vector<1x32xf32>
    %70 = math.rsqrt %69 : vector<1x32xf32>
    %71 = vector.broadcast %70 : vector<1x32xf32> to vector<512x32xf32>
    %72 = arith.mulf %67, %71 : vector<512x32xf32>
    %c0_68 = arith.constant 0 : index
    %c0_69 = arith.constant 0 : index
    %73 = vector.load %arg2[%c0_68, %c0_69] : memref<1x32xf32, #tpu.memory_space<vmem>>, vector<1x32xf32>
    %74 = vector.broadcast %73 : vector<1x32xf32> to vector<512x32xf32>
    %75 = arith.mulf %72, %74 : vector<512x32xf32>
    %c0_70 = arith.constant 0 : index
    %c0_71 = arith.constant 0 : index
    %76 = vector.load %arg3[%c0_70, %c0_71] : memref<1x32xf32, #tpu.memory_space<vmem>>, vector<1x32xf32>
    %77 = vector.broadcast %76 : vector<1x32xf32> to vector<512x32xf32>
    %78 = arith.addf %75, %77 : vector<512x32xf32>
    %cst_72 = arith.constant 0.000000e+00 : f32
    %79 = vector.broadcast %cst_72 : f32 to vector<512x32xf32>
    %80 = arith.maximumf %78, %79 : vector<512x32xf32>
    %81 = vector.extract_strided_slice %80 {offsets = [0, 0], sizes = [256, 32], strides = [1, 1]} : vector<512x32xf32> to vector<256x32xf32>
    %cst_73 = arith.constant dense<0.000000e+00> : vector<32xf32>
    %82 = vector.multi_reduction <add>, %81, %cst_73 [0] : vector<256x32xf32> to vector<32xf32>
    %83 = vector.shape_cast %82 : vector<32xf32> to vector<1x32xf32>
    %cst_74 = arith.constant 2.560000e+02 : f32
    %84 = vector.broadcast %cst_74 : f32 to vector<1x32xf32>
    %85 = arith.divf %83, %84 : vector<1x32xf32>
    %86 = vector.extract_strided_slice %80 {offsets = [256, 0], sizes = [256, 32], strides = [1, 1]} : vector<512x32xf32> to vector<256x32xf32>
    %cst_75 = arith.constant dense<0.000000e+00> : vector<32xf32>
    %87 = vector.multi_reduction <add>, %86, %cst_75 [0] : vector<256x32xf32> to vector<32xf32>
    %88 = vector.shape_cast %87 : vector<32xf32> to vector<1x32xf32>
    %cst_76 = arith.constant 2.560000e+02 : f32
    %89 = vector.broadcast %cst_76 : f32 to vector<1x32xf32>
    %90 = arith.divf %88, %89 : vector<1x32xf32>
    %91 = tpu.concatenate %85, %90 in 0 : vector<1x32xf32>, vector<1x32xf32> -> vector<2x32xf32>
    %92 = arith.truncf %91 : vector<2x32xf32> to vector<2x32xbf16>
    %93 = arith.mulf %91, %91 : vector<2x32xf32>
    %cst_77 = arith.constant dense<0.000000e+00> : vector<2xf32>
    %94 = vector.multi_reduction <add>, %93, %cst_77 [1] : vector<2x32xf32> to vector<2xf32>
    %95 = vector.shape_cast %94 : vector<2xf32> to vector<2x1xf32>
    %cst_78 = arith.constant 1.000000e-24 : f32
    %96 = vector.broadcast %cst_78 : f32 to vector<2x1xf32>
    %97 = arith.maximumf %95, %96 : vector<2x1xf32>
    %98 = math.rsqrt %97 : vector<2x1xf32>
    %99 = vector.broadcast %98 : vector<2x1xf32> to vector<2x32xf32>
    %100 = arith.mulf %91, %99 : vector<2x32xf32>
    %101 = arith.truncf %100 : vector<2x32xf32> to vector<2x32xbf16>
    %c0_79 = arith.constant 0 : index
    %c0_80 = arith.constant 0 : index
    %102 = vector.load %arg4[%c0_79, %c0_80] : memref<32x10xbf16, #tpu.memory_space<vmem>>, vector<32x10xbf16>
    %cst_81 = arith.constant dense<0.000000e+00> : vector<2x10xf32>
    %103 = tpu.matmul %101, %102, %cst_81 {dimension_numbers = #tpu.dot_dimension_numbers<[1], [0], [0], [1], [0, 0, 1, 1], [], []>} : vector<2x32xbf16>, vector<32x10xbf16>, vector<2x10xf32> -> vector<2x10xf32>
    %c0_82 = arith.constant 0 : index
    %c0_83 = arith.constant 0 : index
    %104 = vector.load %arg5[%c0_82, %c0_83] : memref<32x384xbf16, #tpu.memory_space<vmem>>, vector<32x384xbf16>
    %cst_84 = arith.constant dense<0.000000e+00> : vector<2x384xf32>
    %105 = tpu.matmul %92, %104, %cst_84 {dimension_numbers = #tpu.dot_dimension_numbers<[1], [0], [0], [1], [0, 0, 1, 1], [], []>} : vector<2x32xbf16>, vector<32x384xbf16>, vector<2x384xf32> -> vector<2x384xf32>
    %c0_85 = arith.constant 0 : index
    %c0_86 = arith.constant 0 : index
    %106 = vector.load %arg6[%c0_85, %c0_86] : memref<1x384xf32, #tpu.memory_space<vmem>>, vector<1x384xf32>
    %107 = vector.broadcast %106 : vector<1x384xf32> to vector<2x384xf32>
    %108 = arith.addf %105, %107 : vector<2x384xf32>
    %cst_87 = arith.constant dense<0.000000e+00> : vector<384xf32>
    %109 = vector.multi_reduction <add>, %108, %cst_87 [0] : vector<2x384xf32> to vector<384xf32>
    %110 = vector.shape_cast %109 : vector<384xf32> to vector<1x384xf32>
    %cst_88 = arith.constant 2.000000e+00 : f32
    %111 = vector.broadcast %cst_88 : f32 to vector<1x384xf32>
    %112 = arith.divf %110, %111 : vector<1x384xf32>
    %113 = vector.broadcast %112 : vector<1x384xf32> to vector<2x384xf32>
    %114 = arith.subf %108, %113 : vector<2x384xf32>
    %115 = arith.mulf %114, %114 : vector<2x384xf32>
    %cst_89 = arith.constant dense<0.000000e+00> : vector<384xf32>
    %116 = vector.multi_reduction <add>, %115, %cst_89 [0] : vector<2x384xf32> to vector<384xf32>
    %117 = vector.shape_cast %116 : vector<384xf32> to vector<1x384xf32>
    %cst_90 = arith.constant 2.000000e+00 : f32
    %118 = vector.broadcast %cst_90 : f32 to vector<1x384xf32>
    %119 = arith.divf %117, %118 : vector<1x384xf32>
    %120 = vector.broadcast %112 : vector<1x384xf32> to vector<2x384xf32>
    %121 = arith.subf %108, %120 : vector<2x384xf32>
    %cst_91 = arith.constant 9.99999974E-6 : f32
    %122 = vector.broadcast %cst_91 : f32 to vector<1x384xf32>
    %123 = arith.addf %119, %122 : vector<1x384xf32>
    %124 = math.rsqrt %123 : vector<1x384xf32>
    %125 = vector.broadcast %124 : vector<1x384xf32> to vector<2x384xf32>
    %126 = arith.mulf %121, %125 : vector<2x384xf32>
    %c0_92 = arith.constant 0 : index
    %c0_93 = arith.constant 0 : index
    %127 = vector.load %arg7[%c0_92, %c0_93] : memref<1x384xf32, #tpu.memory_space<vmem>>, vector<1x384xf32>
    %128 = vector.broadcast %127 : vector<1x384xf32> to vector<2x384xf32>
    %129 = arith.mulf %126, %128 : vector<2x384xf32>
    %c0_94 = arith.constant 0 : index
    %c0_95 = arith.constant 0 : index
    %130 = vector.load %arg8[%c0_94, %c0_95] : memref<1x384xf32, #tpu.memory_space<vmem>>, vector<1x384xf32>
    %131 = vector.broadcast %130 : vector<1x384xf32> to vector<2x384xf32>
    %132 = arith.addf %129, %131 : vector<2x384xf32>
    %cst_96 = arith.constant 0.000000e+00 : f32
    %133 = vector.broadcast %cst_96 : f32 to vector<2x384xf32>
    %134 = arith.maximumf %132, %133 : vector<2x384xf32>
    %135 = arith.truncf %134 : vector<2x384xf32> to vector<2x384xbf16>
    %c0_97 = arith.constant 0 : index
    %c0_98 = arith.constant 0 : index
    %136 = vector.load %arg9[%c0_97, %c0_98] : memref<384x96xbf16, #tpu.memory_space<vmem>>, vector<384x96xbf16>
    %cst_99 = arith.constant dense<0.000000e+00> : vector<2x96xf32>
    %137 = tpu.matmul %135, %136, %cst_99 {dimension_numbers = #tpu.dot_dimension_numbers<[1], [0], [0], [1], [0, 0, 1, 1], [], []>} : vector<2x384xbf16>, vector<384x96xbf16>, vector<2x96xf32> -> vector<2x96xf32>
    %c0_100 = arith.constant 0 : index
    %c0_101 = arith.constant 0 : index
    %138 = vector.load %arg10[%c0_100, %c0_101] : memref<1x96xf32, #tpu.memory_space<vmem>>, vector<1x96xf32>
    %139 = vector.broadcast %138 : vector<1x96xf32> to vector<2x96xf32>
    %140 = arith.addf %137, %139 : vector<2x96xf32>
    %141 = arith.mulf %140, %140 : vector<2x96xf32>
    %c0_102 = arith.constant 0 : index
    %c0_103 = arith.constant 0 : index
    %142 = vector.load %arg11[%c0_102, %c0_103] : memref<96x96xf32, #tpu.memory_space<vmem>>, vector<96x96xf32>
    %cst_104 = arith.constant dense<0.000000e+00> : vector<2x96xf32>
    %143 = tpu.matmul %141, %142, %cst_104 {dimension_numbers = #tpu.dot_dimension_numbers<[1], [0], [0], [1], [0, 0, 1, 1], [], []>} : vector<2x96xf32>, vector<96x96xf32>, vector<2x96xf32> -> vector<2x96xf32>
    %cst_105 = arith.constant 1.000000e-24 : f32
    %144 = vector.broadcast %cst_105 : f32 to vector<2x96xf32>
    %145 = arith.maximumf %143, %144 : vector<2x96xf32>
    %146 = math.rsqrt %145 : vector<2x96xf32>
    %147 = arith.mulf %140, %146 : vector<2x96xf32>
    %148 = arith.truncf %147 : vector<2x96xf32> to vector<2x96xbf16>
    %c0_106 = arith.constant 0 : index
    %c0_107 = arith.constant 0 : index
    %149 = vector.load %arg12[%c0_106, %c0_107] : memref<96x144xbf16, #tpu.memory_space<vmem>>, vector<96x144xbf16>
    %cst_108 = arith.constant dense<0.000000e+00> : vector<2x144xf32>
    %150 = tpu.matmul %148, %149, %cst_108 {dimension_numbers = #tpu.dot_dimension_numbers<[1], [0], [0], [1], [0, 0, 1, 1], [], []>} : vector<2x96xbf16>, vector<96x144xbf16>, vector<2x144xf32> -> vector<2x144xf32>
    %151 = tpu.concatenate %91, %103, %150, %147 in 1 : vector<2x32xf32>, vector<2x10xf32>, vector<2x144xf32>, vector<2x96xf32> -> vector<2x282xf32>
    %cst_109 = arith.constant 0.000000e+00 : f32
    %152 = vector.broadcast %cst_109 : f32 to vector<2x102xf32>
    %153 = tpu.concatenate %151, %152 in 1 : vector<2x282xf32>, vector<2x102xf32> -> vector<2x384xf32>
    %c0_110 = arith.constant 0 : index
    %c0_111 = arith.constant 0 : index
    %154 = vector.load %arg13[%c0_110, %c0_111] : memref<2x384xf32, #tpu.memory_space<vmem>>, vector<2x384xf32>
    tpu.vector_store %arg13[%c0_110, %c0_111], %153 {strides = array<i32>} : memref<2x384xf32, #tpu.memory_space<vmem>>, vector<2x384xf32>,
    return
  }
}

</mosaic_0001>

<llo_original>
// kernel: multi_head_encoder_forward.1
$region0: #{multi_head_encoder_forward.1}
  #allocation0 [shape = 'u32[]', space=smem, size = 0x4, offset = 0x4, fixed_abs, tag = 'smem constant byte address 0x4 - core index']
  #allocation1 [shape = 'u32[144,128]{1,0:T(1,128)}', space=vmem, size = 0x12000, scoped, tag = 'internal scratch']
  %s0 = inlined_call_operand.vmem [shape: f32[2,18,18,3], index: 0, kind: input, shape index: {}]
  %s1 = inlined_call_operand.vmem [shape: f32[9,3,32], index: 1, kind: input, shape index: {}]
  %s2 = inlined_call_operand.vmem [shape: f32[1,32], index: 2, kind: input, shape index: {}]
  %s3 = inlined_call_operand.vmem [shape: f32[1,32], index: 3, kind: input, shape index: {}]
  %s4 = inlined_call_operand.vmem [shape: bf16[32,10], index: 4, kind: input, shape index: {}]
  %s5 = inlined_call_operand.vmem [shape: bf16[32,384], index: 5, kind: input, shape index: {}]
  %s6 = inlined_call_operand.vmem [shape: f32[1,384], index: 6, kind: input, shape index: {}]
  %s7 = inlined_call_operand.vmem [shape: f32[1,384], index: 7, kind: input, shape index: {}]
  %s8 = inlined_call_operand.vmem [shape: f32[1,384], index: 8, kind: input, shape index: {}]
  %s9 = inlined_call_operand.vmem [shape: bf16[384,96], index: 9, kind: input, shape index: {}]
  %s10 = inlined_call_operand.vmem [shape: f32[1,96], index: 10, kind: input, shape index: {}]
  %s11 = inlined_call_operand.vmem [shape: f32[96,96], index: 11, kind: input, shape index: {}]
  %s12 = inlined_call_operand.vmem [shape: bf16[96,144], index: 12, kind: input, shape index: {}]
  %s13 = inlined_call_operand.vmem [shape: f32[2,384], index: 13, kind: output, shape index: {}]
  %s14 = sld [smem:[#allocation0]]
  $region62: #{multi_head_encoder_forward.1} parent=0
    _
  %s16 = ssub.s32 1, %s14
  %s17 = scalar_select 0, %s16, %s14
  // Predicated region
  $region2: #{multi_head_encoder_forward.1} parent=0 // pred_check
    _
  $region3: #{multi_head_encoder_forward.1} parent=0 // pred_check_branch
    %19 = sbr.rel (0) target = $region5
  $region4: #{multi_head_encoder_forward.1} parent=0 // pred_region
    _
  $region5: #{multi_head_encoder_forward.1} parent=0 // pred_fallthru
    _
  // Predicated region
  $region6: #{multi_head_encoder_forward.1} parent=0 // pred_check
    _
  $region7: #{multi_head_encoder_forward.1} parent=0 // pred_check_branch
    %21 = sbr.rel (0) target = $region9
  $region8: #{multi_head_encoder_forward.1} parent=0 // pred_region
    _
  $region9: #{multi_head_encoder_forward.1} parent=0 // pred_fallthru
    _
  // Predicated region
  $region10: #{multi_head_encoder_forward.1} parent=0 // pred_check
    _
  $region11: #{multi_head_encoder_forward.1} parent=0 // pred_check_branch
    %23 = sbr.rel (0) target = $region13
  $region12: #{multi_head_encoder_forward.1} parent=0 // pred_region
    _
  $region13: #{multi_head_encoder_forward.1} parent=0 // pred_fallthru
    _
  // Predicated region
  $region14: #{multi_head_encoder_forward.1} parent=0 // pred_check
    _
  $region15: #{multi_head_encoder_forward.1} parent=0 // pred_check_branch
    %25 = sbr.rel (0) target = $region17
  $region16: #{multi_head_encoder_forward.1} parent=0 // pred_region
    _
  $region17: #{multi_head_encoder_forward.1} parent=0 // pred_fallthru
    _
  // Predicated region
  $region18: #{multi_head_encoder_forward.1} parent=0 // pred_check
    _
  $region19: #{multi_head_encoder_forward.1} parent=0 // pred_check_branch
    %27 = sbr.rel (0) target = $region21
  $region20: #{multi_head_encoder_forward.1} parent=0 // pred_region
    _
  $region21: #{multi_head_encoder_forward.1} parent=0 // pred_fallthru
    _
  // Predicated region
  $region22: #{multi_head_encoder_forward.1} parent=0 // pred_check
    _
  $region23: #{multi_head_encoder_forward.1} parent=0 // pred_check_branch
    %29 = sbr.rel (0) target = $region25
  $region24: #{multi_head_encoder_forward.1} parent=0 // pred_region
    _
  $region25: #{multi_head_encoder_forward.1} parent=0 // pred_fallthru
    _
  // Predicated region
  $region26: #{multi_head_encoder_forward.1} parent=0 // pred_check
    _
  $region27: #{multi_head_encoder_forward.1} parent=0 // pred_check_branch
    %31 = sbr.rel (0) target = $region29
  $region28: #{multi_head_encoder_forward.1} parent=0 // pred_region
    _
  $region29: #{multi_head_encoder_forward.1} parent=0 // pred_fallthru
    _
  // Predicated region
  $region30: #{multi_head_encoder_forward.1} parent=0 // pred_check
    _
  $region31: #{multi_head_encoder_forward.1} parent=0 // pred_check_branch
    %33 = sbr.rel (0) target = $region33
  $region32: #{multi_head_encoder_forward.1} parent=0 // pred_region
    _
  $region33: #{multi_head_encoder_forward.1} parent=0 // pred_fallthru
    _
  // Predicated region
  $region34: #{multi_head_encoder_forward.1} parent=0 // pred_check
    _
  $region35: #{multi_head_encoder_forward.1} parent=0 // pred_check_branch
    %35 = sbr.rel (0) target = $region37
  $region36: #{multi_head_encoder_forward.1} parent=0 // pred_region
    _
  $region37: #{multi_head_encoder_forward.1} parent=0 // pred_fallthru
    _
  // Predicated region
  $region38: #{multi_head_encoder_forward.1} parent=0 // pred_check
    _
  $region39: #{multi_head_encoder_forward.1} parent=0 // pred_check_branch
    %37 = sbr.rel (0) target = $region41
  $region40: #{multi_head_encoder_forward.1} parent=0 // pred_region
    _
  $region41: #{multi_head_encoder_forward.1} parent=0 // pred_fallthru
    _
  // Predicated region
  $region42: #{multi_head_encoder_forward.1} parent=0 // pred_check
    _
  $region43: #{multi_head_encoder_forward.1} parent=0 // pred_check_branch
    %39 = sbr.rel (0) target = $region45
  $region44: #{multi_head_encoder_forward.1} parent=0 // pred_region
    _
  $region45: #{multi_head_encoder_forward.1} parent=0 // pred_fallthru
    _
  // Predicated region
  $region46: #{multi_head_encoder_forward.1} parent=0 // pred_check
    _
  $region47: #{multi_head_encoder_forward.1} parent=0 // pred_check_branch
    %41 = sbr.rel (0) target = $region49
  $region48: #{multi_head_encoder_forward.1} parent=0 // pred_region
    _
  $region49: #{multi_head_encoder_forward.1} parent=0 // pred_fallthru
    _
  // Predicated region
  $region50: #{multi_head_encoder_forward.1} parent=0 // pred_check
    _
  $region51: #{multi_head_encoder_forward.1} parent=0 // pred_check_branch
    %43 = sbr.rel (0) target = $region53
  $region52: #{multi_head_encoder_forward.1} parent=0 // pred_region
    _
  $region53: #{multi_head_encoder_forward.1} parent=0 // pred_fallthru
    _
  %v45 = vld [vmem:[%s0] sm:$0xff]
  %v46 = vld [vmem:[%s0 + $0x8] sm:$0xff]
  %v47 = vld [vmem:[%s0 + $0x18] sm:$0xff]
  %v48 = vld [vmem:[%s0 + $0x20] sm:$0xff]
  %v49 = vld [vmem:[%s0 + $0x30] sm:$0xff]
  %v50 = vld [vmem:[%s0 + $0x38] sm:$0xff]
  %v51 = vld [vmem:[%s0 + $0x48] sm:$0xff]
  %v52 = vld [vmem:[%s0 + $0x50] sm:$0xff]
  %v53 = vld [vmem:[%s0 + $0x60] sm:$0xff]
  %v54 = vld [vmem:[%s0 + $0x68] sm:$0xff]
  %v55 = vld [vmem:[%s0 + $0x78] sm:$0xff]
  %v56 = vld [vmem:[%s0 + $0x80] sm:$0xff]
  %v57 = vld [vmem:[%s0 + $0x90] sm:$0xff]
  %v58 = vld [vmem:[%s0 + $0x98] sm:$0xff]
  %v59 = vld [vmem:[%s0 + $0xa8] sm:$0xff]
  %v60 = vld [vmem:[%s0 + $0xb0] sm:$0xff]
  %v61 = vld [vmem:[%s0 + $0xc0] sm:$0xff]
  %v62 = vld [vmem:[%s0 + $0xc8] sm:$0xff]
  %v63 = vld [vmem:[%s0 + $0xd8] sm:$0xff]
  %v64 = vld [vmem:[%s0 + $0xe0] sm:$0xff]
  %v65 = vld [vmem:[%s0 + $0xf0] sm:$0xff]
  %v66 = vld [vmem:[%s0 + $0xf8] sm:$0xff]
  %v67 = vld [vmem:[%s0 + $0x108] sm:$0xff]
  %v68 = vld [vmem:[%s0 + $0x110] sm:$0xff]
  %v69 = vld [vmem:[%s0 + $0x120] sm:$0xff]
  %v70 = vld [vmem:[%s0 + $0x128] sm:$0xff]
  %v71 = vld [vmem:[%s0 + $0x138] sm:$0xff]
  %v72 = vld [vmem:[%s0 + $0x140] sm:$0xff]
  %v73 = vld [vmem:[%s0 + $0x150] sm:$0xff]
  %v74 = vld [vmem:[%s0 + $0x158] sm:$0xff]
  %v75 = vld [vmem:[%s0 + $0x168] sm:$0xff]
  %v76 = vld [vmem:[%s0 + $0x170] sm:$0xff]
  %v77 = vld [vmem:[%s0 + $0x1b0] sm:$0xff]
  %v78 = vld [vmem:[%s0 + $0x1b8] sm:$0xff]
  %v79 = vld [vmem:[%s0 + $0x1c8] sm:$0xff]
  %v80 = vld [vmem:[%s0 + $0x1d0] sm:$0xff]
  %v81 = vld [vmem:[%s0 + $0x1e0] sm:$0xff]
  %v82 = vld [vmem:[%s0 + $0x1e8] sm:$0xff]
  %v83 = vld [vmem:[%s0 + $0x1f8] sm:$0xff]
  %v84 = vld [vmem:[%s0 + $0x200] sm:$0xff]
  %v85 = vld [vmem:[%s0 + $0x210] sm:$0xff]
  %v86 = vld [vmem:[%s0 + $0x218] sm:$0xff]
  %v87 = vld [vmem:[%s0 + $0x228] sm:$0xff]
  %v88 = vld [vmem:[%s0 + $0x230] sm:$0xff]
  %v89 = vld [vmem:[%s0 + $0x240] sm:$0xff]
  %v90 = vld [vmem:[%s0 + $0x248] sm:$0xff]
  %v91 = vld [vmem:[%s0 + $0x258] sm:$0xff]
  %v92 = vld [vmem:[%s0 + $0x260] sm:$0xff]
  %v93 = vld [vmem:[%s0 + $0x270] sm:$0xff]
  %v94 = vld [vmem:[%s0 + $0x278] sm:$0xff]
  %v95 = vld [vmem:[%s0 + $0x288] sm:$0xff]
  %v96 = vld [vmem:[%s0 + $0x290] sm:$0xff]
  %v97 = vld [vmem:[%s0 + $0x2a0] sm:$0xff]
  %v98 = vld [vmem:[%s0 + $0x2a8] sm:$0xff]
  %v99 = vld [vmem:[%s0 + $0x2b8] sm:$0xff]
  %v100 = vld [vmem:[%s0 + $0x2c0] sm:$0xff]
  %v101 = vld [vmem:[%s0 + $0x2d0] sm:$0xff]
  %v102 = vld [vmem:[%s0 + $0x2d8] sm:$0xff]
  %v103 = vld [vmem:[%s0 + $0x2e8] sm:$0xff]
  %v104 = vld [vmem:[%s0 + $0x2f0] sm:$0xff]
  %v105 = vld [vmem:[%s0 + $0x300] sm:$0xff]
  %v106 = vld [vmem:[%s0 + $0x308] sm:$0xff]
  %v107 = vld [vmem:[%s0 + $0x318] sm:$0xff]
  %v108 = vld [vmem:[%s0 + $0x320] sm:$0xff]
  %v109 = vld [vmem:[%s1] sm:$0x7]
  %v110 = vld [vmem:[%s0 + $0x1] sm:$0xff]
  %v111 = vld [vmem:[%s0 + $0x9] sm:$0xff]
  %v112 = vld [vmem:[%s0 + $0x19] sm:$0xff]
  %v113 = vld [vmem:[%s0 + $0x21] sm:$0xff]
  %v114 = vld [vmem:[%s0 + $0x31] sm:$0xff]
  %v115 = vld [vmem:[%s0 + $0x39] sm:$0xff]
  %v116 = vld [vmem:[%s0 + $0x49] sm:$0xff]
  %v117 = vld [vmem:[%s0 + $0x51] sm:$0xff]
  %v118 = vld [vmem:[%s0 + $0x61] sm:$0xff]
  %v119 = vld [vmem:[%s0 + $0x69] sm:$0xff]
  %v120 = vld [vmem:[%s0 + $0x79] sm:$0xff]
  %v121 = vld [vmem:[%s0 + $0x81] sm:$0xff]
  %v122 = vld [vmem:[%s0 + $0x91] sm:$0xff]
  %v123 = vld [vmem:[%s0 + $0x99] sm:$0xff]
  %v124 = vld [vmem:[%s0 + $0xa9] sm:$0xff]
  %v125 = vld [vmem:[%s0 + $0xb1] sm:$0xff]
  %v126 = vld [vmem:[%s0 + $0xc1] sm:$0xff]
  %v127 = vld [vmem:[%s0 + $0xc9] sm:$0xff]
  %v128 = vld [vmem:[%s0 + $0xd9] sm:$0xff]
  %v129 = vld [vmem:[%s0 + $0xe1] sm:$0xff]
  %v130 = vld [vmem:[%s0 + $0xf1] sm:$0xff]
  %v131 = vld [vmem:[%s0 + $0xf9] sm:$0xff]
  %v132 = vld [vmem:[%s0 + $0x109] sm:$0xff]
  %v133 = vld [vmem:[%s0 + $0x111] sm:$0xff]
  %v134 = vld [vmem:[%s0 + $0x121] sm:$0xff]
  %v135 = vld [vmem:[%s0 + $0x129] sm:$0xff]
  %v136 = vld [vmem:[%s0 + $0x139] sm:$0xff]
  %v137 = vld [vmem:[%s0 + $0x141] sm:$0xff]
  %v138 = vld [vmem:[%s0 + $0x151] sm:$0xff]
  %v139 = vld [vmem:[%s0 + $0x159] sm:$0xff]
  %v140 = vld [vmem:[%s0 + $0x169] sm:$0xff]
  %v141 = vld [vmem:[%s0 + $0x171] sm:$0xff]
  %v142 = vld [vmem:[%s0 + $0x1b1] sm:$0xff]
  %v143 = vld [vmem:[%s0 + $0x1b9] sm:$0xff]
  %v144 = vld [vmem:[%s0 + $0x1c9] sm:$0xff]
  %v145 = vld [vmem:[%s0 + $0x1d1] sm:$0xff]
  %v146 = vld [vmem:[%s0 + $0x1e1] sm:$0xff]
  %v147 = vld [vmem:[%s0 + $0x1e9] sm:$0xff]
  %v148 = vld [vmem:[%s0 + $0x1f9] sm:$0xff]
  %v149 = vld [vmem:[%s0 + $0x201] sm:$0xff]
  %v150 = vld [vmem:[%s0 + $0x211] sm:$0xff]
  %v151 = vld [vmem:[%s0 + $0x219] sm:$0xff]
  %v152 = vld [vmem:[%s0 + $0x229] sm:$0xff]
  %v153 = vld [vmem:[%s0 + $0x231] sm:$0xff]
  %v154 = vld [vmem:[%s0 + $0x241] sm:$0xff]
  %v155 = vld [vmem:[%s0 + $0x249] sm:$0xff]
  %v156 = vld [vmem:[%s0 + $0x259] sm:$0xff]
  %v157 = vld [vmem:[%s0 + $0x261] sm:$0xff]
  %v158 = vld [vmem:[%s0 + $0x271] sm:$0xff]
  %v159 = vld [vmem:[%s0 + $0x279] sm:$0xff]
  %v160 = vld [vmem:[%s0 + $0x289] sm:$0xff]
  %v161 = vld [vmem:[%s0 + $0x291] sm:$0xff]
  %v162 = vld [vmem:[%s0 + $0x2a1] sm:$0xff]
  %v163 = vld [vmem:[%s0 + $0x2a9] sm:$0xff]
  %v164 = vld [vmem:[%s0 + $0x2b9] sm:$0xff]
  %v165 = vld [vmem:[%s0 + $0x2c1] sm:$0xff]
  %v166 = vld [vmem:[%s0 + $0x2d1] sm:$0xff]
  %v167 = vld [vmem:[%s0 + $0x2d9] sm:$0xff]
  %v168 = vld [vmem:[%s0 + $0x2e9] sm:$0xff]
  %v169 = vld [vmem:[%s0 + $0x2f1] sm:$0xff]
  %v170 = vld [vmem:[%s0 + $0x301] sm:$0xff]
  %v171 = vld [vmem:[%s0 + $0x309] sm:$0xff]
  %v172 = vld [vmem:[%s0 + $0x319] sm:$0xff]
  %v173 = vld [vmem:[%s0 + $0x321] sm:$0xff]
  %s174 = scalar_lea.vmem %s1, 4
  %v175 = vld [vmem:[%s174] sm:$0x7]
  %vm176 = vcmask 23552
  %v178 = vsel %vm176, %v110, 0
  %v181 = vsel %vm176, %v111, 0
  %v184 = vsel %vm176, %v112, 0
  %v187 = vsel %vm176, %v113, 0
  %v190 = vsel %vm176, %v114, 0
  %v193 = vsel %vm176, %v115, 0
  %v196 = vsel %vm176, %v116, 0
  %v199 = vsel %vm176, %v117, 0
  %v202 = vsel %vm176, %v118, 0
  %v205 = vsel %vm176, %v119, 0
  %v208 = vsel %vm176, %v120, 0
  %v211 = vsel %vm176, %v121, 0
  %v214 = vsel %vm176, %v122, 0
  %v217 = vsel %vm176, %v123, 0
  %v220 = vsel %vm176, %v124, 0
  %v223 = vsel %vm176, %v125, 0
  %v226 = vsel %vm176, %v126, 0
  %v229 = vsel %vm176, %v127, 0
  %v232 = vsel %vm176, %v128, 0
  %v235 = vsel %vm176, %v129, 0
  %v238 = vsel %vm176, %v130, 0
  %v241 = vsel %vm176, %v131, 0
  %v244 = vsel %vm176, %v132, 0
  %v247 = vsel %vm176, %v133, 0
  %v250 = vsel %vm176, %v134, 0
  %v253 = vsel %vm176, %v135, 0
  %v256 = vsel %vm176, %v136, 0
  %v259 = vsel %vm176, %v137, 0
  %v262 = vsel %vm176, %v138, 0
  %v265 = vsel %vm176, %v139, 0
  %v268 = vsel %vm176, %v140, 0
  %v271 = vsel %vm176, %v141, 0
  %v274 = vsel %vm176, %v142, 0
  %v277 = vsel %vm176, %v143, 0
  %v280 = vsel %vm176, %v144, 0
  %v283 = vsel %vm176, %v145, 0
  %v286 = vsel %vm176, %v146, 0
  %v289 = vsel %vm176, %v147, 0
  %v292 = vsel %vm176, %v148, 0
  %v295 = vsel %vm176, %v149, 0
  %v298 = vsel %vm176, %v150, 0
  %v301 = vsel %vm176, %v151, 0
  %v304 = vsel %vm176, %v152, 0
  %v307 = vsel %vm176, %v153, 0
  %v310 = vsel %vm176, %v154, 0
  %v313 = vsel %vm176, %v155, 0
  %v316 = vsel %vm176, %v156, 0
  %v319 = vsel %vm176, %v157, 0
  %v322 = vsel %vm176, %v158, 0
  %v325 = vsel %vm176, %v159, 0
  %v328 = vsel %vm176, %v160, 0
  %v331 = vsel %vm176, %v161, 0
  %v334 = vsel %vm176, %v162, 0
  %v337 = vsel %vm176, %v163, 0
  %v340 = vsel %vm176, %v164, 0
  %v343 = vsel %vm176, %v165, 0
  %v346 = vsel %vm176, %v166, 0
  %v349 = vsel %vm176, %v167, 0
  %v352 = vsel %vm176, %v168, 0
  %v355 = vsel %vm176, %v169, 0
  %v358 = vsel %vm176, %v170, 0
  %v361 = vsel %vm176, %v171, 0
  %v364 = vsel %vm176, %v172, 0
  %v367 = vsel %vm176, %v173, 0
  %vm369 = vcmask 1042432
  %v371 = vsel %vm369, %v175, 0
  %373 = vmatprep.subr.mxu0 0.0
  %374 = vmatpush1.msra.mxu0 0.0
  %375 = vmatprep.subr.mxu0 0.0
  %376 = vmatpush1.msra.mxu0 0.0
  %377 = vmatprep.subr.mxu0 0.0
  %378 = vmatpush1.msra.mxu0 0.0
  %379 = vmatprep.subr.mxu0 0.0
  %380 = vmatpush1.msra.mxu0 0.0
  %381 = vmatprep.subr.mxu0 0.0
  %382 = vmatpush1.msra.mxu0 0.0
  %383 = vmatprep.subr.mxu0 0.0
  %384 = vmatpush1.msra.mxu0 0.0
  %385 = vmatprep.subr.mxu0 0.0
  %386 = vmatpush1.msra.mxu0 0.0
  %387 = vmatprep.subr.mxu0 0.0
  %388 = vmatpush1.msra.mxu0 0.0
  %389 = vmatprep.subr.mxu0 0.0
  %390 = vmatpush1.msra.mxu0 0.0
  %391 = vmatprep.subr.mxu0 0.0
  %392 = vmatpush1.msra.mxu0 0.0
  %393 = vmatprep.subr.mxu0 0.0
  %394 = vmatpush1.msra.mxu0 0.0
  %395 = vmatprep.subr.mxu0 0.0
  %396 = vmatpush1.msra.mxu0 0.0
  %397 = vmatprep.subr.mxu0 0.0
  %398 = vmatpush1.msra.mxu0 0.0
  %399 = vmatprep.subr.mxu0 0.0
  %400 = vmatpush1.msra.mxu0 0.0
  %401 = vmatprep.subr.mxu0 0.0
  %402 = vmatpush1.msra.mxu0 0.0
  %403 = vmatprep.subr.mxu0 0.0
  %404 = vmatpush1.msra.mxu0 %v371
  %405 = vmatprep.subr.mxu0 0.0
  %406 = vmatpush2.msra.mxu0 0.0
  %407 = vmatprep.subr.mxu0 0.0
  %408 = vmatpush2.msra.mxu0 0.0
  %409 = vmatprep.subr.mxu0 0.0
  %410 = vmatpush2.msra.mxu0 0.0
  %411 = vmatprep.subr.mxu0 0.0
  %412 = vmatpush2.msra.mxu0 0.0
  %413 = vmatprep.subr.mxu0 0.0
  %414 = vmatpush2.msra.mxu0 0.0
  %415 = vmatprep.subr.mxu0 0.0
  %416 = vmatpush2.msra.mxu0 0.0
  %417 = vmatprep.subr.mxu0 0.0
  %418 = vmatpush2.msra.mxu0 0.0
  %419 = vmatprep.subr.mxu0 0.0
  %420 = vmatpush2.msra.mxu0 0.0
  %421 = vmatprep.subr.mxu0 0.0
  %422 = vmatpush2.msra.mxu0 0.0
  %423 = vmatprep.subr.mxu0 0.0
  %424 = vmatpush2.msra.mxu0 0.0
  %425 = vmatprep.subr.mxu0 0.0
  %426 = vmatpush2.msra.mxu0 0.0
  %427 = vmatprep.subr.mxu0 0.0
  %428 = vmatpush2.msra.mxu0 0.0
  %429 = vmatprep.subr.mxu0 0.0
  %430 = vmatpush2.msra.mxu0 0.0
  %431 = vmatprep.subr.mxu0 0.0
  %432 = vmatpush2.msra.mxu0 0.0
  %433 = vmatprep.subr.mxu0 0.0
  %434 = vmatpush2.msra.mxu0 0.0
  %435 = vmatprep.subr.mxu0 0.0
  %436 = vmatpush2.msra.mxu0 0.0
  %437 = vmatprep.mubr.f32.mxu0 0.0
  %438 = vmatmul.mubr.f32.gmra.mxu0 %v178
  %v439 = vpop.f32.mrf.mxu0
  %v440 = vadd.f32 0.0, %v439
  %v441 = vpop.f32.mrf.mxu0
  %442 = vmatprep.mubr.f32.mxu0 0.0
  %443 = vmatmul.mubr.f32.gmra.mxu0 %v181
  %v444 = vpop.f32.mrf.mxu0
  %v445 = vadd.f32 0.0, %v444
  %v446 = vpop.f32.mrf.mxu0
  %447 = vmatprep.mubr.f32.mxu0 0.0
  %448 = vmatmul.mubr.f32.gmra.mxu0 %v184
  %v449 = vpop.f32.mrf.mxu0
  %v450 = vadd.f32 0.0, %v449
  %v451 = vpop.f32.mrf.mxu0
  %452 = vmatprep.mubr.f32.mxu0 0.0
  %453 = vmatmul.mubr.f32.gmra.mxu0 %v187
  %v454 = vpop.f32.mrf.mxu0
  %v455 = vadd.f32 0.0, %v454
  %v456 = vpop.f32.mrf.mxu0
  %457 = vmatprep.mubr.f32.mxu0 0.0
  %458 = vmatmul.mubr.f32.gmra.mxu0 %v190
  %v459 = vpop.f32.mrf.mxu0
  %v460 = vadd.f32 0.0, %v459
  %v461 = vpop.f32.mrf.mxu0
  %462 = vmatprep.mubr.f32.mxu0 0.0
  %463 = vmatmul.mubr.f32.gmra.mxu0 %v193
  %v464 = vpop.f32.mrf.mxu0
  %v465 = vadd.f32 0.0, %v464
  %v466 = vpop.f32.mrf.mxu0
  %467 = vmatprep.mubr.f32.mxu0 0.0
  %468 = vmatmul.mubr.f32.gmra.mxu0 %v196
  %v469 = vpop.f32.mrf.mxu0
  %v470 = vadd.f32 0.0, %v469
  %v471 = vpop.f32.mrf.mxu0
  %472 = vmatprep.mubr.f32.mxu0 0.0
  %473 = vmatmul.mubr.f32.gmra.mxu0 %v199
  %v474 = vpop.f32.mrf.mxu0
  %v475 = vadd.f32 0.0, %v474
  %v476 = vpop.f32.mrf.mxu0
  %477 = vmatprep.mubr.f32.mxu0 0.0
  %478 = vmatmul.mubr.f32.gmra.mxu0 %v202
  %v479 = vpop.f32.mrf.mxu0
  %v480 = vadd.f32 0.0, %v479
  %v481 = vpop.f32.mrf.mxu0
  %482 = vmatprep.mubr.f32.mxu0 0.0
  %483 = vmatmul.mubr.f32.gmra.mxu0 %v205
  %v484 = vpop.f32.mrf.mxu0
  %v485 = vadd.f32 0.0, %v484
  %v486 = vpop.f32.mrf.mxu0
  %487 = vmatprep.mubr.f32.mxu0 0.0
  %488 = vmatmul.mubr.f32.gmra.mxu0 %v208
  %v489 = vpop.f32.mrf.mxu0
  %v490 = vadd.f32 0.0, %v489
  %v491 = vpop.f32.mrf.mxu0
  %492 = vmatprep.mubr.f32.mxu0 0.0
  %493 = vmatmul.mubr.f32.gmra.mxu0 %v211
  %v494 = vpop.f32.mrf.mxu0
  %v495 = vadd.f32 0.0, %v494
  %v496 = vpop.f32.mrf.mxu0
  %497 = vmatprep.mubr.f32.mxu0 0.0
  %498 = vmatmul.mubr.f32.gmra.mxu0 %v214
  %v499 = vpop.f32.mrf.mxu0
  %v500 = vadd.f32 0.0, %v499
  %v501 = vpop.f32.mrf.mxu0
  %502 = vmatprep.mubr.f32.mxu0 0.0
  %503 = vmatmul.mubr.f32.gmra.mxu0 %v217
  %v504 = vpop.f32.mrf.mxu0
  %v505 = vadd.f32 0.0, %v504
  %v506 = vpop.f32.mrf.mxu0
  %507 = vmatprep.mubr.f32.mxu0 0.0
  %508 = vmatmul.mubr.f32.gmra.mxu0 %v220
  %v509 = vpop.f32.mrf.mxu0
  %v510 = vadd.f32 0.0, %v509
  %v511 = vpop.f32.mrf.mxu0
  %512 = vmatprep.mubr.f32.mxu0 0.0
  %513 = vmatmul.mubr.f32.gmra.mxu0 %v223
  %v514 = vpop.f32.mrf.mxu0
  %v515 = vadd.f32 0.0, %v514
  %v516 = vpop.f32.mrf.mxu0
  %517 = vmatprep.mubr.f32.mxu0 0.0
  %518 = vmatmul.mubr.f32.gmra.mxu0 %v226
  %v519 = vpop.f32.mrf.mxu0
  %v520 = vadd.f32 0.0, %v519
  %v521 = vpop.f32.mrf.mxu0
  %522 = vmatprep.mubr.f32.mxu0 0.0
  %523 = vmatmul.mubr.f32.gmra.mxu0 %v229
  %v524 = vpop.f32.mrf.mxu0
  %v525 = vadd.f32 0.0, %v524
  %v526 = vpop.f32.mrf.mxu0
  %527 = vmatprep.mubr.f32.mxu0 0.0
  %528 = vmatmul.mubr.f32.gmra.mxu0 %v232
  %v529 = vpop.f32.mrf.mxu0
  %v530 = vadd.f32 0.0, %v529
  %v531 = vpop.f32.mrf.mxu0
  %532 = vmatprep.mubr.f32.mxu0 0.0
  %533 = vmatmul.mubr.f32.gmra.mxu0 %v235
  %v534 = vpop.f32.mrf.mxu0
  %v535 = vadd.f32 0.0, %v534
  %v536 = vpop.f32.mrf.mxu0
  %537 = vmatprep.mubr.f32.mxu0 0.0
  %538 = vmatmul.mubr.f32.gmra.mxu0 %v238
  %v539 = vpop.f32.mrf.mxu0
  %v540 = vadd.f32 0.0, %v539
  %v541 = vpop.f32.mrf.mxu0
  %542 = vmatprep.mubr.f32.mxu0 0.0
  %543 = vmatmul.mubr.f32.gmra.mxu0 %v241
  %v544 = vpop.f32.mrf.mxu0
  %v545 = vadd.f32 0.0, %v544
  %v546 = vpop.f32.mrf.mxu0
  %547 = vmatprep.mubr.f32.mxu0 0.0
  %548 = vmatmul.mubr.f32.gmra.mxu0 %v244
  %v549 = vpop.f32.mrf.mxu0
  %v550 = vadd.f32 0.0, %v549
  %v551 = vpop.f32.mrf.mxu0
  %552 = vmatprep.mubr.f32.mxu0 0.0
  %553 = vmatmul.mubr.f32.gmra.mxu0 %v247
  %v554 = vpop.f32.mrf.mxu0
  %v555 = vadd.f32 0.0, %v554
  %v556 = vpop.f32.mrf.mxu0
  %557 = vmatprep.mubr.f32.mxu0 0.0
  %558 = vmatmul.mubr.f32.gmra.mxu0 %v250
  %v559 = vpop.f32.mrf.mxu0
  %v560 = vadd.f32 0.0, %v559
  %v561 = vpop.f32.mrf.mxu0
  %562 = vmatprep.mubr.f32.mxu0 0.0
  %563 = vmatmul.mubr.f32.gmra.mxu0 %v253
  %v564 = vpop.f32.mrf.mxu0
  %v565 = vadd.f32 0.0, %v564
  %v566 = vpop.f32.mrf.mxu0
  %567 = vmatprep.mubr.f32.mxu0 0.0
  %568 = vmatmul.mubr.f32.gmra.mxu0 %v256
  %v569 = vpop.f32.mrf.mxu0
  %v570 = vadd.f32 0.0, %v569
  %v571 = vpop.f32.mrf.mxu0
  %572 = vmatprep.mubr.f32.mxu0 0.0
  %573 = vmatmul.mubr.f32.gmra.mxu0 %v259
  %v574 = vpop.f32.mrf.mxu0
  %v575 = vadd.f32 0.0, %v574
  %v576 = vpop.f32.mrf.mxu0
  %577 = vmatprep.mubr.f32.mxu0 0.0
  %578 = vmatmul.mubr.f32.gmra.mxu0 %v262
  %v579 = vpop.f32.mrf.mxu0
  %v580 = vadd.f32 0.0, %v579
  %v581 = vpop.f32.mrf.mxu0
  %582 = vmatprep.mubr.f32.mxu0 0.0
  %583 = vmatmul.mubr.f32.gmra.mxu0 %v265
  %v584 = vpop.f32.mrf.mxu0
  %v585 = vadd.f32 0.0, %v584
  %v586 = vpop.f32.mrf.mxu0
  %587 = vmatprep.mubr.f32.mxu0 0.0
  %588 = vmatmul.mubr.f32.gmra.mxu0 %v268
  %v589 = vpop.f32.mrf.mxu0
  %v590 = vadd.f32 0.0, %v589
  %v591 = vpop.f32.mrf.mxu0
  %592 = vmatprep.mubr.f32.mxu0 0.0
  %593 = vmatmul.mubr.f32.gmra.mxu0 %v271
  %v594 = vpop.f32.mrf.mxu0
  %v595 = vadd.f32 0.0, %v594
  %v596 = vpop.f32.mrf.mxu0
  %597 = vmatprep.mubr.f32.mxu0 0.0
  %598 = vmatmul.mubr.f32.gmra.mxu0 %v274
  %v599 = vpop.f32.mrf.mxu0
  %v600 = vadd.f32 0.0, %v599
  %v601 = vpop.f32.mrf.mxu0
  %602 = vmatprep.mubr.f32.mxu0 0.0
  %603 = vmatmul.mubr.f32.gmra.mxu0 %v277
  %v604 = vpop.f32.mrf.mxu0
  %v605 = vadd.f32 0.0, %v604
  %v606 = vpop.f32.mrf.mxu0
  %607 = vmatprep.mubr.f32.mxu0 0.0
  %608 = vmatmul.mubr.f32.gmra.mxu0 %v280
  %v609 = vpop.f32.mrf.mxu0
  %v610 = vadd.f32 0.0, %v609
  %v611 = vpop.f32.mrf.mxu0
  %612 = vmatprep.mubr.f32.mxu0 0.0
  %613 = vmatmul.mubr.f32.gmra.mxu0 %v283
  %v614 = vpop.f32.mrf.mxu0
  %v615 = vadd.f32 0.0, %v614
  %v616 = vpop.f32.mrf.mxu0
  %617 = vmatprep.mubr.f32.mxu0 0.0
  %618 = vmatmul.mubr.f32.gmra.mxu0 %v286
  %v619 = vpop.f32.mrf.mxu0
  %v620 = vadd.f32 0.0, %v619
  %v621 = vpop.f32.mrf.mxu0
  %622 = vmatprep.mubr.f32.mxu0 0.0
  %623 = vmatmul.mubr.f32.gmra.mxu0 %v289
  %v624 = vpop.f32.mrf.mxu0
  %v625 = vadd.f32 0.0, %v624
  %v626 = vpop.f32.mrf.mxu0
  %627 = vmatprep.mubr.f32.mxu0 0.0
  %628 = vmatmul.mubr.f32.gmra.mxu0 %v292
  %v629 = vpop.f32.mrf.mxu0
  %v630 = vadd.f32 0.0, %v629
  %v631 = vpop.f32.mrf.mxu0
  %632 = vmatprep.mubr.f32.mxu0 0.0
  %633 = vmatmul.mubr.f32.gmra.mxu0 %v295
  %v634 = vpop.f32.mrf.mxu0
  %v635 = vadd.f32 0.0, %v634
  %v636 = vpop.f32.mrf.mxu0
  %637 = vmatprep.mubr.f32.mxu0 0.0
  %638 = vmatmul.mubr.f32.gmra.mxu0 %v298
  %v639 = vpop.f32.mrf.mxu0
  %v640 = vadd.f32 0.0, %v639
  %v641 = vpop.f32.mrf.mxu0
  %642 = vmatprep.mubr.f32.mxu0 0.0
  %643 = vmatmul.mubr.f32.gmra.mxu0 %v301
  %v644 = vpop.f32.mrf.mxu0
  %v645 = vadd.f32 0.0, %v644
  %v646 = vpop.f32.mrf.mxu0
  %647 = vmatprep.mubr.f32.mxu0 0.0
  %648 = vmatmul.mubr.f32.gmra.mxu0 %v304
  %v649 = vpop.f32.mrf.mxu0
  %v650 = vadd.f32 0.0, %v649
  %v651 = vpop.f32.mrf.mxu0
  %652 = vmatprep.mubr.f32.mxu0 0.0
  %653 = vmatmul.mubr.f32.gmra.mxu0 %v307
  %v654 = vpop.f32.mrf.mxu0
  %v655 = vadd.f32 0.0, %v654
  %v656 = vpop.f32.mrf.mxu0
  %657 = vmatprep.mubr.f32.mxu0 0.0
  %658 = vmatmul.mubr.f32.gmra.mxu0 %v310
  %v659 = vpop.f32.mrf.mxu0
  %v660 = vadd.f32 0.0, %v659
  %v661 = vpop.f32.mrf.mxu0
  %662 = vmatprep.mubr.f32.mxu0 0.0
  %663 = vmatmul.mubr.f32.gmra.mxu0 %v313
  %v664 = vpop.f32.mrf.mxu0
  %v665 = vadd.f32 0.0, %v664
  %v666 = vpop.f32.mrf.mxu0
  %667 = vmatprep.mubr.f32.mxu0 0.0
  %668 = vmatmul.mubr.f32.gmra.mxu0 %v316
  %v669 = vpop.f32.mrf.mxu0
  %v670 = vadd.f32 0.0, %v669
  %v671 = vpop.f32.mrf.mxu0
  %672 = vmatprep.mubr.f32.mxu0 0.0
  %673 = vmatmul.mubr.f32.gmra.mxu0 %v319
  %v674 = vpop.f32.mrf.mxu0
  %v675 = vadd.f32 0.0, %v674
  %v676 = vpop.f32.mrf.mxu0
  %677 = vmatprep.mubr.f32.mxu0 0.0
  %678 = vmatmul.mubr.f32.gmra.mxu0 %v322
  %v679 = vpop.f32.mrf.mxu0
  %v680 = vadd.f32 0.0, %v679
  %v681 = vpop.f32.mrf.mxu0
  %682 = vmatprep.mubr.f32.mxu0 0.0
  %683 = vmatmul.mubr.f32.gmra.mxu0 %v325
  %v684 = vpop.f32.mrf.mxu0
  %v685 = vadd.f32 0.0, %v684
  %v686 = vpop.f32.mrf.mxu0
  %687 = vmatprep.mubr.f32.mxu0 0.0
  %688 = vmatmul.mubr.f32.gmra.mxu0 %v328
  %v689 = vpop.f32.mrf.mxu0
  %v690 = vadd.f32 0.0, %v689
  %v691 = vpop.f32.mrf.mxu0
  %692 = vmatprep.mubr.f32.mxu0 0.0
  %693 = vmatmul.mubr.f32.gmra.mxu0 %v331
  %v694 = vpop.f32.mrf.mxu0
  %v695 = vadd.f32 0.0, %v694
  %v696 = vpop.f32.mrf.mxu0
  %697 = vmatprep.mubr.f32.mxu0 0.0
  %698 = vmatmul.mubr.f32.gmra.mxu0 %v334
  %v699 = vpop.f32.mrf.mxu0
  %v700 = vadd.f32 0.0, %v699
  %v701 = vpop.f32.mrf.mxu0
  %702 = vmatprep.mubr.f32.mxu0 0.0
  %703 = vmatmul.mubr.f32.gmra.mxu0 %v337
  %v704 = vpop.f32.mrf.mxu0
  %v705 = vadd.f32 0.0, %v704
  %v706 = vpop.f32.mrf.mxu0
  %707 = vmatprep.mubr.f32.mxu0 0.0
  %708 = vmatmul.mubr.f32.gmra.mxu0 %v340
  %v709 = vpop.f32.mrf.mxu0
  %v710 = vadd.f32 0.0, %v709
  %v711 = vpop.f32.mrf.mxu0
  %712 = vmatprep.mubr.f32.mxu0 0.0
  %713 = vmatmul.mubr.f32.gmra.mxu0 %v343
  %v714 = vpop.f32.mrf.mxu0
  %v715 = vadd.f32 0.0, %v714
  %v716 = vpop.f32.mrf.mxu0
  %717 = vmatprep.mubr.f32.mxu0 0.0
  %718 = vmatmul.mubr.f32.gmra.mxu0 %v346
  %v719 = vpop.f32.mrf.mxu0
  %v720 = vadd.f32 0.0, %v719
  %v721 = vpop.f32.mrf.mxu0
  %722 = vmatprep.mubr.f32.mxu0 0.0
  %723 = vmatmul.mubr.f32.gmra.mxu0 %v349
  %v724 = vpop.f32.mrf.mxu0
  %v725 = vadd.f32 0.0, %v724
  %v726 = vpop.f32.mrf.mxu0
  %727 = vmatprep.mubr.f32.mxu0 0.0
  %728 = vmatmul.mubr.f32.gmra.mxu0 %v352
  %v729 = vpop.f32.mrf.mxu0
  %v730 = vadd.f32 0.0, %v729
  %v731 = vpop.f32.mrf.mxu0
  %732 = vmatprep.mubr.f32.mxu0 0.0
  %733 = vmatmul.mubr.f32.gmra.mxu0 %v355
  %v734 = vpop.f32.mrf.mxu0
  %v735 = vadd.f32 0.0, %v734
  %v736 = vpop.f32.mrf.mxu0
  %737 = vmatprep.mubr.f32.mxu0 0.0
  %738 = vmatmul.mubr.f32.gmra.mxu0 %v358
  %v739 = vpop.f32.mrf.mxu0
  %v740 = vadd.f32 0.0, %v739
  %v741 = vpop.f32.mrf.mxu0
  %742 = vmatprep.mubr.f32.mxu0 0.0
  %743 = vmatmul.mubr.f32.gmra.mxu0 %v361
  %v744 = vpop.f32.mrf.mxu0
  %v745 = vadd.f32 0.0, %v744
  %v746 = vpop.f32.mrf.mxu0
  %747 = vmatprep.mubr.f32.mxu0 0.0
  %748 = vmatmul.mubr.f32.gmra.mxu0 %v364
  %v749 = vpop.f32.mrf.mxu0
  %v750 = vadd.f32 0.0, %v749
  %v751 = vpop.f32.mrf.mxu0
  %752 = vmatprep.mubr.f32.mxu0 0.0
  %753 = vmatmul.mubr.f32.gmra.mxu0 %v367
  %v754 = vpop.f32.mrf.mxu0
  %v755 = vadd.f32 0.0, %v754
  %v756 = vpop.f32.mrf.mxu0
  %757 = vdwg.mxu0
  %v759 = vsel %vm176, %v45, 0
  %v762 = vsel %vm176, %v46, 0
  %v765 = vsel %vm176, %v47, 0
  %v768 = vsel %vm176, %v48, 0
  %v771 = vsel %vm176, %v49, 0
  %v774 = vsel %vm176, %v50, 0
  %v777 = vsel %vm176, %v51, 0
  %v780 = vsel %vm176, %v52, 0
  %v783 = vsel %vm176, %v53, 0
  %v786 = vsel %vm176, %v54, 0
  %v789 = vsel %vm176, %v55, 0
  %v792 = vsel %vm176, %v56, 0
  %v795 = vsel %vm176, %v57, 0
  %v798 = vsel %vm176, %v58, 0
  %v801 = vsel %vm176, %v59, 0
  %v804 = vsel %vm176, %v60, 0
  %v807 = vsel %vm176, %v61, 0
  %v810 = vsel %vm176, %v62, 0
  %v813 = vsel %vm176, %v63, 0
  %v816 = vsel %vm176, %v64, 0
  %v819 = vsel %vm176, %v65, 0
  %v822 = vsel %vm176, %v66, 0
  %v825 = vsel %vm176, %v67, 0
  %v828 = vsel %vm176, %v68, 0
  %v831 = vsel %vm176, %v69, 0
  %v834 = vsel %vm176, %v70, 0
  %v837 = vsel %vm176, %v71, 0
  %v840 = vsel %vm176, %v72, 0
  %v843 = vsel %vm176, %v73, 0
  %v846 = vsel %vm176, %v74, 0
  %v849 = vsel %vm176, %v75, 0
  %v852 = vsel %vm176, %v76, 0
  %v855 = vsel %vm176, %v77, 0
  %v858 = vsel %vm176, %v78, 0
  %v861 = vsel %vm176, %v79, 0
  %v864 = vsel %vm176, %v80, 0
  %v867 = vsel %vm176, %v81, 0
  %v870 = vsel %vm176, %v82, 0
  %v873 = vsel %vm176, %v83, 0
  %v876 = vsel %vm176, %v84, 0
  %v879 = vsel %vm176, %v85, 0
  %v882 = vsel %vm176, %v86, 0
  %v885 = vsel %vm176, %v87, 0
  %v888 = vsel %vm176, %v88, 0
  %v891 = vsel %vm176, %v89, 0
  %v894 = vsel %vm176, %v90, 0
  %v897 = vsel %vm176, %v91, 0
  %v900 = vsel %vm176, %v92, 0
  %v903 = vsel %vm176, %v93, 0
  %v906 = vsel %vm176, %v94, 0
  %v909 = vsel %vm176, %v95, 0
  %v912 = vsel %vm176, %v96, 0
  %v915 = vsel %vm176, %v97, 0
  %v918 = vsel %vm176, %v98, 0
  %v921 = vsel %vm176, %v99, 0
  %v924 = vsel %vm176, %v100, 0
  %v927 = vsel %vm176, %v101, 0
  %v930 = vsel %vm176, %v102, 0
  %v933 = vsel %vm176, %v103, 0
  %v936 = vsel %vm176, %v104, 0
  %v939 = vsel %vm176, %v105, 0
  %v942 = vsel %vm176, %v106, 0
  %v945 = vsel %vm176, %v107, 0
  %v948 = vsel %vm176, %v108, 0
  %v951 = vsel %vm369, %v109, 0
  %953 = vmatprep.subr.mxu0 0.0
  %954 = vmatpush1.msra.mxu0 0.0
  %955 = vmatprep.subr.mxu0 0.0
  %956 = vmatpush1.msra.mxu0 0.0
  %957 = vmatprep.subr.mxu0 0.0
  %958 = vmatpush1.msra.mxu0 0.0
  %959 = vmatprep.subr.mxu0 0.0
  %960 = vmatpush1.msra.mxu0 0.0
  %961 = vmatprep.subr.mxu0 0.0
  %962 = vmatpush1.msra.mxu0 0.0
  %963 = vmatprep.subr.mxu0 0.0
  %964 = vmatpush1.msra.mxu0 0.0
  %965 = vmatprep.subr.mxu0 0.0
  %966 = vmatpush1.msra.mxu0 0.0
  %967 = vmatprep.subr.mxu0 0.0
  %968 = vmatpush1.msra.mxu0 0.0
  %969 = vmatprep.subr.mxu0 0.0
  %970 = vmatpush1.msra.mxu0 0.0
  %971 = vmatprep.subr.mxu0 0.0
  %972 = vmatpush1.msra.mxu0 0.0
  %973 = vmatprep.subr.mxu0 0.0
  %974 = vmatpush1.msra.mxu0 0.0
  %975 = vmatprep.subr.mxu0 0.0
  %976 = vmatpush1.msra.mxu0 0.0
  %977 = vmatprep.subr.mxu0 0.0
  %978 = vmatpush1.msra.mxu0 0.0
  %979 = vmatprep.subr.mxu0 0.0
  %980 = vmatpush1.msra.mxu0 0.0
  %981 = vmatprep.subr.mxu0 0.0
  %982 = vmatpush1.msra.mxu0 0.0
  %983 = vmatprep.subr.mxu0 0.0
  %984 = vmatpush1.msra.mxu0 %v951
  %985 = vmatprep.subr.mxu0 0.0
  %986 = vmatpush2.msra.mxu0 0.0
  %987 = vmatprep.subr.mxu0 0.0
  %988 = vmatpush2.msra.mxu0 0.0
  %989 = vmatprep.subr.mxu0 0.0
  %990 = vmatpush2.msra.mxu0 0.0
  %991 = vmatprep.subr.mxu0 0.0
  %992 = vmatpush2.msra.mxu0 0.0
  %993 = vmatprep.subr.mxu0 0.0
  %994 = vmatpush2.msra.mxu0 0.0
  %995 = vmatprep.subr.mxu0 0.0
  %996 = vmatpush2.msra.mxu0 0.0
  %997 = vmatprep.subr.mxu0 0.0
  %998 = vmatpush2.msra.mxu0 0.0
  %999 = vmatprep.subr.mxu0 0.0
  %1000 = vmatpush2.msra.mxu0 0.0
  %1001 = vmatprep.subr.mxu0 0.0
  %1002 = vmatpush2.msra.mxu0 0.0
  %1003 = vmatprep.subr.mxu0 0.0
  %1004 = vmatpush2.msra.mxu0 0.0
  %1005 = vmatprep.subr.mxu0 0.0
  %1006 = vmatpush2.msra.mxu0 0.0
  %1007 = vmatprep.subr.mxu0 0.0
  %1008 = vmatpush2.msra.mxu0 0.0
  %1009 = vmatprep.subr.mxu0 0.0
  %1010 = vmatpush2.msra.mxu0 0.0
  %1011 = vmatprep.subr.mxu0 0.0
  %1012 = vmatpush2.msra.mxu0 0.0
  %1013 = vmatprep.subr.mxu0 0.0
  %1014 = vmatpush2.msra.mxu0 0.0
  %1015 = vmatprep.subr.mxu0 0.0
  %1016 = vmatpush2.msra.mxu0 0.0
  %1017 = vmatprep.mubr.f32.mxu0 0.0
  %1018 = vmatmul.mubr.f32.gmra.mxu0 %v759
  %v1019 = vpop.f32.mrf.mxu0
  %v1020 = vadd.f32 %v440, %v1019
  %v1021 = vpop.f32.mrf.mxu0
  %1022 = vmatprep.mubr.f32.mxu0 0.0
  %1023 = vmatmul.mubr.f32.gmra.mxu0 %v762
  %v1024 = vpop.f32.mrf.mxu0
  %v1025 = vadd.f32 %v445, %v1024
  %v1026 = vpop.f32.mrf.mxu0
  %1027 = vmatprep.mubr.f32.mxu0 0.0
  %1028 = vmatmul.mubr.f32.gmra.mxu0 %v765
  %v1029 = vpop.f32.mrf.mxu0
  %v1030 = vadd.f32 %v450, %v1029
  %v1031 = vpop.f32.mrf.mxu0
  %1032 = vmatprep.mubr.f32.mxu0 0.0
  %1033 = vmatmul.mubr.f32.gmra.mxu0 %v768
  %v1034 = vpop.f32.mrf.mxu0
  %v1035 = vadd.f32 %v455, %v1034
  %v1036 = vpop.f32.mrf.mxu0
  %1037 = vmatprep.mubr.f32.mxu0 0.0
  %1038 = vmatmul.mubr.f32.gmra.mxu0 %v771
  %v1039 = vpop.f32.mrf.mxu0
  %v1040 = vadd.f32 %v460, %v1039
  %v1041 = vpop.f32.mrf.mxu0
  %1042 = vmatprep.mubr.f32.mxu0 0.0
  %1043 = vmatmul.mubr.f32.gmra.mxu0 %v774
  %v1044 = vpop.f32.mrf.mxu0
  %v1045 = vadd.f32 %v465, %v1044
  %v1046 = vpop.f32.mrf.mxu0
  %1047 = vmatprep.mubr.f32.mxu0 0.0
  %1048 = vmatmul.mubr.f32.gmra.mxu0 %v777
  %v1049 = vpop.f32.mrf.mxu0
  %v1050 = vadd.f32 %v470, %v1049
  %v1051 = vpop.f32.mrf.mxu0
  %1052 = vmatprep.mubr.f32.mxu0 0.0
  %1053 = vmatmul.mubr.f32.gmra.mxu0 %v780
  %v1054 = vpop.f32.mrf.mxu0
  %v1055 = vadd.f32 %v475, %v1054
  %v1056 = vpop.f32.mrf.mxu0
  %1057 = vmatprep.mubr.f32.mxu0 0.0
  %1058 = vmatmul.mubr.f32.gmra.mxu0 %v783
  %v1059 = vpop.f32.mrf.mxu0
  %v1060 = vadd.f32 %v480, %v1059
  %v1061 = vpop.f32.mrf.mxu0
  %1062 = vmatprep.mubr.f32.mxu0 0.0
  %1063 = vmatmul.mubr.f32.gmra.mxu0 %v786
  %v1064 = vpop.f32.mrf.mxu0
  %v1065 = vadd.f32 %v485, %v1064
  %v1066 = vpop.f32.mrf.mxu0
  %1067 = vmatprep.mubr.f32.mxu0 0.0
  %1068 = vmatmul.mubr.f32.gmra.mxu0 %v789
  %v1069 = vpop.f32.mrf.mxu0
  %v1070 = vadd.f32 %v490, %v1069
  %v1071 = vpop.f32.mrf.mxu0
  %1072 = vmatprep.mubr.f32.mxu0 0.0
  %1073 = vmatmul.mubr.f32.gmra.mxu0 %v792
  %v1074 = vpop.f32.mrf.mxu0
  %v1075 = vadd.f32 %v495, %v1074
  %v1076 = vpop.f32.mrf.mxu0
  %1077 = vmatprep.mubr.f32.mxu0 0.0
  %1078 = vmatmul.mubr.f32.gmra.mxu0 %v795
  %v1079 = vpop.f32.mrf.mxu0
  %v1080 = vadd.f32 %v500, %v1079
  %v1081 = vpop.f32.mrf.mxu0
  %1082 = vmatprep.mubr.f32.mxu0 0.0
  %1083 = vmatmul.mubr.f32.gmra.mxu0 %v798
  %v1084 = vpop.f32.mrf.mxu0
  %v1085 = vadd.f32 %v505, %v1084
  %v1086 = vpop.f32.mrf.mxu0
  %1087 = vmatprep.mubr.f32.mxu0 0.0
  %1088 = vmatmul.mubr.f32.gmra.mxu0 %v801
  %v1089 = vpop.f32.mrf.mxu0
  %v1090 = vadd.f32 %v510, %v1089
  %v1091 = vpop.f32.mrf.mxu0
  %1092 = vmatprep.mubr.f32.mxu0 0.0
  %1093 = vmatmul.mubr.f32.gmra.mxu0 %v804
  %v1094 = vpop.f32.mrf.mxu0
  %v1095 = vadd.f32 %v515, %v1094
  %v1096 = vpop.f32.mrf.mxu0
  %1097 = vmatprep.mubr.f32.mxu0 0.0
  %1098 = vmatmul.mubr.f32.gmra.mxu0 %v807
  %v1099 = vpop.f32.mrf.mxu0
  %v1100 = vadd.f32 %v520, %v1099
  %v1101 = vpop.f32.mrf.mxu0
  %1102 = vmatprep.mubr.f32.mxu0 0.0
  %1103 = vmatmul.mubr.f32.gmra.mxu0 %v810
  %v1104 = vpop.f32.mrf.mxu0
  %v1105 = vadd.f32 %v525, %v1104
  %v1106 = vpop.f32.mrf.mxu0
  %1107 = vmatprep.mubr.f32.mxu0 0.0
  %1108 = vmatmul.mubr.f32.gmra.mxu0 %v813
  %v1109 = vpop.f32.mrf.mxu0
  %v1110 = vadd.f32 %v530, %v1109
  %v1111 = vpop.f32.mrf.mxu0
  %1112 = vmatprep.mubr.f32.mxu0 0.0
  %1113 = vmatmul.mubr.f32.gmra.mxu0 %v816
  %v1114 = vpop.f32.mrf.mxu0
  %v1115 = vadd.f32 %v535, %v1114
  %v1116 = vpop.f32.mrf.mxu0
  %1117 = vmatprep.mubr.f32.mxu0 0.0
  %1118 = vmatmul.mubr.f32.gmra.mxu0 %v819
  %v1119 = vpop.f32.mrf.mxu0
  %v1120 = vadd.f32 %v540, %v1119
  %v1121 = vpop.f32.mrf.mxu0
  %1122 = vmatprep.mubr.f32.mxu0 0.0
  %1123 = vmatmul.mubr.f32.gmra.mxu0 %v822
  %v1124 = vpop.f32.mrf.mxu0
  %v1125 = vadd.f32 %v545, %v1124
  %v1126 = vpop.f32.mrf.mxu0
  %1127 = vmatprep.mubr.f32.mxu0 0.0
  %1128 = vmatmul.mubr.f32.gmra.mxu0 %v825
  %v1129 = vpop.f32.mrf.mxu0
  %v1130 = vadd.f32 %v550, %v1129
  %v1131 = vpop.f32.mrf.mxu0
  %1132 = vmatprep.mubr.f32.mxu0 0.0
  %1133 = vmatmul.mubr.f32.gmra.mxu0 %v828
  %v1134 = vpop.f32.mrf.mxu0
  %v1135 = vadd.f32 %v555, %v1134
  %v1136 = vpop.f32.mrf.mxu0
  %1137 = vmatprep.mubr.f32.mxu0 0.0
  %1138 = vmatmul.mubr.f32.gmra.mxu0 %v831
  %v1139 = vpop.f32.mrf.mxu0
  %v1140 = vadd.f32 %v560, %v1139
  %v1141 = vpop.f32.mrf.mxu0
  %1142 = vmatprep.mubr.f32.mxu0 0.0
  %1143 = vmatmul.mubr.f32.gmra.mxu0 %v834
  %v1144 = vpop.f32.mrf.mxu0
  %v1145 = vadd.f32 %v565, %v1144
  %v1146 = vpop.f32.mrf.mxu0
  %1147 = vmatprep.mubr.f32.mxu0 0.0
  %1148 = vmatmul.mubr.f32.gmra.mxu0 %v837
  %v1149 = vpop.f32.mrf.mxu0
  %v1150 = vadd.f32 %v570, %v1149
  %v1151 = vpop.f32.mrf.mxu0
  %1152 = vmatprep.mubr.f32.mxu0 0.0
  %1153 = vmatmul.mubr.f32.gmra.mxu0 %v840
  %v1154 = vpop.f32.mrf.mxu0
  %v1155 = vadd.f32 %v575, %v1154
  %v1156 = vpop.f32.mrf.mxu0
  %1157 = vmatprep.mubr.f32.mxu0 0.0
  %1158 = vmatmul.mubr.f32.gmra.mxu0 %v843
  %v1159 = vpop.f32.mrf.mxu0
  %v1160 = vadd.f32 %v580, %v1159
  %v1161 = vpop.f32.mrf.mxu0
  %1162 = vmatprep.mubr.f32.mxu0 0.0
  %1163 = vmatmul.mubr.f32.gmra.mxu0 %v846
  %v1164 = vpop.f32.mrf.mxu0
  %v1165 = vadd.f32 %v585, %v1164
  %v1166 = vpop.f32.mrf.mxu0
  %1167 = vmatprep.mubr.f32.mxu0 0.0
  %1168 = vmatmul.mubr.f32.gmra.mxu0 %v849
  %v1169 = vpop.f32.mrf.mxu0
  %v1170 = vadd.f32 %v590, %v1169
  %v1171 = vpop.f32.mrf.mxu0
  %1172 = vmatprep.mubr.f32.mxu0 0.0
  %1173 = vmatmul.mubr.f32.gmra.mxu0 %v852
  %v1174 = vpop.f32.mrf.mxu0
  %v1175 = vadd.f32 %v595, %v1174
  %v1176 = vpop.f32.mrf.mxu0
  %1177 = vmatprep.mubr.f32.mxu0 0.0
  %1178 = vmatmul.mubr.f32.gmra.mxu0 %v855
  %v1179 = vpop.f32.mrf.mxu0
  %v1180 = vadd.f32 %v600, %v1179
  %v1181 = vpop.f32.mrf.mxu0
  %1182 = vmatprep.mubr.f32.mxu0 0.0
  %1183 = vmatmul.mubr.f32.gmra.mxu0 %v858
  %v1184 = vpop.f32.mrf.mxu0
  %v1185 = vadd.f32 %v605, %v1184
  %v1186 = vpop.f32.mrf.mxu0
  %1187 = vmatprep.mubr.f32.mxu0 0.0
  %1188 = vmatmul.mubr.f32.gmra.mxu0 %v861
  %v1189 = vpop.f32.mrf.mxu0
  %v1190 = vadd.f32 %v610, %v1189
  %v1191 = vpop.f32.mrf.mxu0
  %1192 = vmatprep.mubr.f32.mxu0 0.0
  %1193 = vmatmul.mubr.f32.gmra.mxu0 %v864
  %v1194 = vpop.f32.mrf.mxu0
  %v1195 = vadd.f32 %v615, %v1194
  %v1196 = vpop.f32.mrf.mxu0
  %1197 = vmatprep.mubr.f32.mxu0 0.0
  %1198 = vmatmul.mubr.f32.gmra.mxu0 %v867
  %v1199 = vpop.f32.mrf.mxu0
  %v1200 = vadd.f32 %v620, %v1199
  %v1201 = vpop.f32.mrf.mxu0
  %1202 = vmatprep.mubr.f32.mxu0 0.0
  %1203 = vmatmul.mubr.f32.gmra.mxu0 %v870
  %v1204 = vpop.f32.mrf.mxu0
  %v1205 = vadd.f32 %v625, %v1204
  %v1206 = vpop.f32.mrf.mxu0
  %1207 = vmatprep.mubr.f32.mxu0 0.0
  %1208 = vmatmul.mubr.f32.gmra.mxu0 %v873
  %v1209 = vpop.f32.mrf.mxu0
  %v1210 = vadd.f32 %v630, %v1209
  %v1211 = vpop.f32.mrf.mxu0
  %1212 = vmatprep.mubr.f32.mxu0 0.0
  %1213 = vmatmul.mubr.f32.gmra.mxu0 %v876
  %v1214 = vpop.f32.mrf.mxu0
  %v1215 = vadd.f32 %v635, %v1214
  %v1216 = vpop.f32.mrf.mxu0
  %1217 = vmatprep.mubr.f32.mxu0 0.0
  %1218 = vmatmul.mubr.f32.gmra.mxu0 %v879
  %v1219 = vpop.f32.mrf.mxu0
  %v1220 = vadd.f32 %v640, %v1219
  %v1221 = vpop.f32.mrf.mxu0
  %1222 = vmatprep.mubr.f32.mxu0 0.0
  %1223 = vmatmul.mubr.f32.gmra.mxu0 %v882
  %v1224 = vpop.f32.mrf.mxu0
  %v1225 = vadd.f32 %v645, %v1224
  %v1226 = vpop.f32.mrf.mxu0
  %1227 = vmatprep.mubr.f32.mxu0 0.0
  %1228 = vmatmul.mubr.f32.gmra.mxu0 %v885
  %v1229 = vpop.f32.mrf.mxu0
  %v1230 = vadd.f32 %v650, %v1229
  %v1231 = vpop.f32.mrf.mxu0
  %1232 = vmatprep.mubr.f32.mxu0 0.0
  %1233 = vmatmul.mubr.f32.gmra.mxu0 %v888
  %v1234 = vpop.f32.mrf.mxu0
  %v1235 = vadd.f32 %v655, %v1234
  %v1236 = vpop.f32.mrf.mxu0
  %1237 = vmatprep.mubr.f32.mxu0 0.0
  %1238 = vmatmul.mubr.f32.gmra.mxu0 %v891
  %v1239 = vpop.f32.mrf.mxu0
  %v1240 = vadd.f32 %v660, %v1239
  %v1241 = vpop.f32.mrf.mxu0
  %1242 = vmatprep.mubr.f32.mxu0 0.0
  %1243 = vmatmul.mubr.f32.gmra.mxu0 %v894
  %v1244 = vpop.f32.mrf.mxu0
  %v1245 = vadd.f32 %v665, %v1244
  %v1246 = vpop.f32.mrf.mxu0
  %1247 = vmatprep.mubr.f32.mxu0 0.0
  %1248 = vmatmul.mubr.f32.gmra.mxu0 %v897
  %v1249 = vpop.f32.mrf.mxu0
  %v1250 = vadd.f32 %v670, %v1249
  %v1251 = vpop.f32.mrf.mxu0
  %1252 = vmatprep.mubr.f32.mxu0 0.0
  %1253 = vmatmul.mubr.f32.gmra.mxu0 %v900
  %v1254 = vpop.f32.mrf.mxu0
  %v1255 = vadd.f32 %v675, %v1254
  %v1256 = vpop.f32.mrf.mxu0
  %1257 = vmatprep.mubr.f32.mxu0 0.0
  %1258 = vmatmul.mubr.f32.gmra.mxu0 %v903
  %v1259 = vpop.f32.mrf.mxu0
  %v1260 = vadd.f32 %v680, %v1259
  %v1261 = vpop.f32.mrf.mxu0
  %1262 = vmatprep.mubr.f32.mxu0 0.0
  %1263 = vmatmul.mubr.f32.gmra.mxu0 %v906
  %v1264 = vpop.f32.mrf.mxu0
  %v1265 = vadd.f32 %v685, %v1264
  %v1266 = vpop.f32.mrf.mxu0
  %1267 = vmatprep.mubr.f32.mxu0 0.0
  %1268 = vmatmul.mubr.f32.gmra.mxu0 %v909
  %v1269 = vpop.f32.mrf.mxu0
  %v1270 = vadd.f32 %v690, %v1269
  %v1271 = vpop.f32.mrf.mxu0
  %1272 = vmatprep.mubr.f32.mxu0 0.0
  %1273 = vmatmul.mubr.f32.gmra.mxu0 %v912
  %v1274 = vpop.f32.mrf.mxu0
  %v1275 = vadd.f32 %v695, %v1274
  %v1276 = vpop.f32.mrf.mxu0
  %1277 = vmatprep.mubr.f32.mxu0 0.0
  %1278 = vmatmul.mubr.f32.gmra.mxu0 %v915
  %v1279 = vpop.f32.mrf.mxu0
  %v1280 = vadd.f32 %v700, %v1279
  %v1281 = vpop.f32.mrf.mxu0
  %1282 = vmatprep.mubr.f32.mxu0 0.0
  %1283 = vmatmul.mubr.f32.gmra.mxu0 %v918
  %v1284 = vpop.f32.mrf.mxu0
  %v1285 = vadd.f32 %v705, %v1284
  %v1286 = vpop.f32.mrf.mxu0
  %1287 = vmatprep.mubr.f32.mxu0 0.0
  %1288 = vmatmul.mubr.f32.gmra.mxu0 %v921
  %v1289 = vpop.f32.mrf.mxu0
  %v1290 = vadd.f32 %v710, %v1289
  %v1291 = vpop.f32.mrf.mxu0
  %1292 = vmatprep.mubr.f32.mxu0 0.0
  %1293 = vmatmul.mubr.f32.gmra.mxu0 %v924
  %v1294 = vpop.f32.mrf.mxu0
  %v1295 = vadd.f32 %v715, %v1294
  %v1296 = vpop.f32.mrf.mxu0
  %1297 = vmatprep.mubr.f32.mxu0 0.0
  %1298 = vmatmul.mubr.f32.gmra.mxu0 %v927
  %v1299 = vpop.f32.mrf.mxu0
  %v1300 = vadd.f32 %v720, %v1299
  %v1301 = vpop.f32.mrf.mxu0
  %1302 = vmatprep.mubr.f32.mxu0 0.0
  %1303 = vmatmul.mubr.f32.gmra.mxu0 %v930
  %v1304 = vpop.f32.mrf.mxu0
  %v1305 = vadd.f32 %v725, %v1304
  %v1306 = vpop.f32.mrf.mxu0
  %1307 = vmatprep.mubr.f32.mxu0 0.0
  %1308 = vmatmul.mubr.f32.gmra.mxu0 %v933
  %v1309 = vpop.f32.mrf.mxu0
  %v1310 = vadd.f32 %v730, %v1309
  %v1311 = vpop.f32.mrf.mxu0
  %1312 = vmatprep.mubr.f32.mxu0 0.0
  %1313 = vmatmul.mubr.f32.gmra.mxu0 %v936
  %v1314 = vpop.f32.mrf.mxu0
  %v1315 = vadd.f32 %v735, %v1314
  %v1316 = vpop.f32.mrf.mxu0
  %1317 = vmatprep.mubr.f32.mxu0 0.0
  %1318 = vmatmul.mubr.f32.gmra.mxu0 %v939
  %v1319 = vpop.f32.mrf.mxu0
  %v1320 = vadd.f32 %v740, %v1319
  %v1321 = vpop.f32.mrf.mxu0
  %1322 = vmatprep.mubr.f32.mxu0 0.0
  %1323 = vmatmul.mubr.f32.gmra.mxu0 %v942
  %v1324 = vpop.f32.mrf.mxu0
  %v1325 = vadd.f32 %v745, %v1324
  %v1326 = vpop.f32.mrf.mxu0
  %1327 = vmatprep.mubr.f32.mxu0 0.0
  %1328 = vmatmul.mubr.f32.gmra.mxu0 %v945
  %v1329 = vpop.f32.mrf.mxu0
  %v1330 = vadd.f32 %v750, %v1329
  %v1331 = vpop.f32.mrf.mxu0
  %1332 = vmatprep.mubr.f32.mxu0 0.0
  %1333 = vmatmul.mubr.f32.gmra.mxu0 %v948
  %v1334 = vpop.f32.mrf.mxu0
  %v1335 = vadd.f32 %v755, %v1334
  %v1336 = vpop.f32.mrf.mxu0
  %1337 = vdwg.mxu0
  %v1338 = vld [vmem:[%s0 + $0x2] sm:$0xff]
  %v1339 = vld [vmem:[%s0 + $0xa] sm:$0xff]
  %v1340 = vld [vmem:[%s0 + $0x1a] sm:$0xff]
  %v1341 = vld [vmem:[%s0 + $0x22] sm:$0xff]
  %v1342 = vld [vmem:[%s0 + $0x32] sm:$0xff]
  %v1343 = vld [vmem:[%s0 + $0x3a] sm:$0xff]
  %v1344 = vld [vmem:[%s0 + $0x4a] sm:$0xff]
  %v1345 = vld [vmem:[%s0 + $0x52] sm:$0xff]
  %v1346 = vld [vmem:[%s0 + $0x62] sm:$0xff]
  %v1347 = vld [vmem:[%s0 + $0x6a] sm:$0xff]
  %v1348 = vld [vmem:[%s0 + $0x7a] sm:$0xff]
  %v1349 = vld [vmem:[%s0 + $0x82] sm:$0xff]
  %v1350 = vld [vmem:[%s0 + $0x92] sm:$0xff]
  %v1351 = vld [vmem:[%s0 + $0x9a] sm:$0xff]
  %v1352 = vld [vmem:[%s0 + $0xaa] sm:$0xff]
  %v1353 = vld [vmem:[%s0 + $0xb2] sm:$0xff]
  %v1354 = vld [vmem:[%s0 + $0xc2] sm:$0xff]
  %v1355 = vld [vmem:[%s0 + $0xca] sm:$0xff]
  %v1356 = vld [vmem:[%s0 + $0xda] sm:$0xff]
  %v1357 = vld [vmem:[%s0 + $0xe2] sm:$0xff]
  %v1358 = vld [vmem:[%s0 + $0xf2] sm:$0xff]
  %v1359 = vld [vmem:[%s0 + $0xfa] sm:$0xff]
  %v1360 = vld [vmem:[%s0 + $0x10a] sm:$0xff]
  %v1361 = vld [vmem:[%s0 + $0x112] sm:$0xff]
  %v1362 = vld [vmem:[%s0 + $0x122] sm:$0xff]
  %v1363 = vld [vmem:[%s0 + $0x12a] sm:$0xff]
  %v1364 = vld [vmem:[%s0 + $0x13a] sm:$0xff]
  %v1365 = vld [vmem:[%s0 + $0x142] sm:$0xff]
  %v1366 = vld [vmem:[%s0 + $0x152] sm:$0xff]
  %v1367 = vld [vmem:[%s0 + $0x15a] sm:$0xff]
  %v1368 = vld [vmem:[%s0 + $0x16a] sm:$0xff]
  %v1369 = vld [vmem:[%s0 + $0x172] sm:$0xff]
  %v1370 = vld [vmem:[%s0 + $0x1b2] sm:$0xff]
  %v1371 = vld [vmem:[%s0 + $0x1ba] sm:$0xff]
  %v1372 = vld [vmem:[%s0 + $0x1ca] sm:$0xff]
  %v1373 = vld [vmem:[%s0 + $0x1d2] sm:$0xff]
  %v1374 = vld [vmem:[%s0 + $0x1e2] sm:$0xff]
  %v1375 = vld [vmem:[%s0 + $0x1ea] sm:$0xff]
  %v1376 = vld [vmem:[%s0 + $0x1fa] sm:$0xff]
  %v1377 = vld [vmem:[%s0 + $0x202] sm:$0xff]
  %v1378 = vld [vmem:[%s0 + $0x212] sm:$0xff]
  %v1379 = vld [vmem:[%s0 + $0x21a] sm:$0xff]
  %v1380 = vld [vmem:[%s0 + $0x22a] sm:$0xff]
  %v1381 = vld [vmem:[%s0 + $0x232] sm:$0xff]
  %v1382 = vld [vmem:[%s0 + $0x242] sm:$0xff]
  %v1383 = vld [vmem:[%s0 + $0x24a] sm:$0xff]
  %v1384 = vld [vmem:[%s0 + $0x25a] sm:$0xff]
  %v1385 = vld [vmem:[%s0 + $0x262] sm:$0xff]
  %v1386 = vld [vmem:[%s0 + $0x272] sm:$0xff]
  %v1387 = vld [vmem:[%s0 + $0x27a] sm:$0xff]
  %v1388 = vld [vmem:[%s0 + $0x28a] sm:$0xff]
  %v1389 = vld [vmem:[%s0 + $0x292] sm:$0xff]
  %v1390 = vld [vmem:[%s0 + $0x2a2] sm:$0xff]
  %v1391 = vld [vmem:[%s0 + $0x2aa] sm:$0xff]
  %v1392 = vld [vmem:[%s0 + $0x2ba] sm:$0xff]
  %v1393 = vld [vmem:[%s0 + $0x2c2] sm:$0xff]
  %v1394 = vld [vmem:[%s0 + $0x2d2] sm:$0xff]
  %v1395 = vld [vmem:[%s0 + $0x2da] sm:$0xff]
  %v1396 = vld [vmem:[%s0 + $0x2ea] sm:$0xff]
  %v1397 = vld [vmem:[%s0 + $0x2f2] sm:$0xff]
  %v1398 = vld [vmem:[%s0 + $0x302] sm:$0xff]
  %v1399 = vld [vmem:[%s0 + $0x30a] sm:$0xff]
  %v1400 = vld [vmem:[%s0 + $0x31a] sm:$0xff]
  %v1401 = vld [vmem:[%s0 + $0x322] sm:$0xff]
  %s1402 = scalar_lea.vmem %s1, 8
  %v1403 = vld [vmem:[%s1402] sm:$0x7]
  %v1405 = vsel %vm176, %v1338, 0
  %v1408 = vsel %vm176, %v1339, 0
  %v1411 = vsel %vm176, %v1340, 0
  %v1414 = vsel %vm176, %v1341, 0
  %v1417 = vsel %vm176, %v1342, 0
  %v1420 = vsel %vm176, %v1343, 0
  %v1423 = vsel %vm176, %v1344, 0
  %v1426 = vsel %vm176, %v1345, 0
  %v1429 = vsel %vm176, %v1346, 0
  %v1432 = vsel %vm176, %v1347, 0
  %v1435 = vsel %vm176, %v1348, 0
  %v1438 = vsel %vm176, %v1349, 0
  %v1441 = vsel %vm176, %v1350, 0
  %v1444 = vsel %vm176, %v1351, 0
  %v1447 = vsel %vm176, %v1352, 0
  %v1450 = vsel %vm176, %v1353, 0
  %v1453 = vsel %vm176, %v1354, 0
  %v1456 = vsel %vm176, %v1355, 0
  %v1459 = vsel %vm176, %v1356, 0
  %v1462 = vsel %vm176, %v1357, 0
  %v1465 = vsel %vm176, %v1358, 0
  %v1468 = vsel %vm176, %v1359, 0
  %v1471 = vsel %vm176, %v1360, 0
  %v1474 = vsel %vm176, %v1361, 0
  %v1477 = vsel %vm176, %v1362, 0
  %v1480 = vsel %vm176, %v1363, 0
  %v1483 = vsel %vm176, %v1364, 0
  %v1486 = vsel %vm176, %v1365, 0
  %v1489 = vsel %vm176, %v1366, 0
  %v1492 = vsel %vm176, %v1367, 0
  %v1495 = vsel %vm176, %v1368, 0
  %v1498 = vsel %vm176, %v1369, 0
  %v1501 = vsel %vm176, %v1370, 0
  %v1504 = vsel %vm176, %v1371, 0
  %v1507 = vsel %vm176, %v1372, 0
  %v1510 = vsel %vm176, %v1373, 0
  %v1513 = vsel %vm176, %v1374, 0
  %v1516 = vsel %vm176, %v1375, 0
  %v1519 = vsel %vm176, %v1376, 0
  %v1522 = vsel %vm176, %v1377, 0
  %v1525 = vsel %vm176, %v1378, 0
  %v1528 = vsel %vm176, %v1379, 0
  %v1531 = vsel %vm176, %v1380, 0
  %v1534 = vsel %vm176, %v1381, 0
  %v1537 = vsel %vm176, %v1382, 0
  %v1540 = vsel %vm176, %v1383, 0
  %v1543 = vsel %vm176, %v1384, 0
  %v1546 = vsel %vm176, %v1385, 0
  %v1549 = vsel %vm176, %v1386, 0
  %v1552 = vsel %vm176, %v1387, 0
  %v1555 = vsel %vm176, %v1388, 0
  %v1558 = vsel %vm176, %v1389, 0
  %v1561 = vsel %vm176, %v1390, 0
  %v1564 = vsel %vm176, %v1391, 0
  %v1567 = vsel %vm176, %v1392, 0
  %v1570 = vsel %vm176, %v1393, 0
  %v1573 = vsel %vm176, %v1394, 0
  %v1576 = vsel %vm176, %v1395, 0
  %v1579 = vsel %vm176, %v1396, 0
  %v1582 = vsel %vm176, %v1397, 0
  %v1585 = vsel %vm176, %v1398, 0
  %v1588 = vsel %vm176, %v1399, 0
  %v1591 = vsel %vm176, %v1400, 0
  %v1594 = vsel %vm176, %v1401, 0
  %v1597 = vsel %vm369, %v1403, 0
  %1599 = vmatprep.subr.mxu0 0.0
  %1600 = vmatpush1.msra.mxu0 0.0
  %1601 = vmatprep.subr.mxu0 0.0
  %1602 = vmatpush1.msra.mxu0 0.0
  %1603 = vmatprep.subr.mxu0 0.0
  %1604 = vmatpush1.msra.mxu0 0.0
  %1605 = vmatprep.subr.mxu0 0.0
  %1606 = vmatpush1.msra.mxu0 0.0
  %1607 = vmatprep.subr.mxu0 0.0
  %1608 = vmatpush1.msra.mxu0 0.0
  %1609 = vmatprep.subr.mxu0 0.0
  %1610 = vmatpush1.msra.mxu0 0.0
  %1611 = vmatprep.subr.mxu0 0.0
  %1612 = vmatpush1.msra.mxu0 0.0
  %1613 = vmatprep.subr.mxu0 0.0
  %1614 = vmatpush1.msra.mxu0 0.0
  %1615 = vmatprep.subr.mxu0 0.0
  %1616 = vmatpush1.msra.mxu0 0.0
  %1617 = vmatprep.subr.mxu0 0.0
  %1618 = vmatpush1.msra.mxu0 0.0
  %1619 = vmatprep.subr.mxu0 0.0
  %1620 = vmatpush1.msra.mxu0 0.0
  %1621 = vmatprep.subr.mxu0 0.0
  %1622 = vmatpush1.msra.mxu0 0.0
  %1623 = vmatprep.subr.mxu0 0.0
  %1624 = vmatpush1.msra.mxu0 0.0
  %1625 = vmatprep.subr.mxu0 0.0
  %1626 = vmatpush1.msra.mxu0 0.0
  %1627 = vmatprep.subr.mxu0 0.0
  %1628 = vmatpush1.msra.mxu0 0.0
  %1629 = vmatprep.subr.mxu0 0.0
  %1630 = vmatpush1.msra.mxu0 %v1597
  %1631 = vmatprep.subr.mxu0 0.0
  %1632 = vmatpush2.msra.mxu0 0.0
  %1633 = vmatprep.subr.mxu0 0.0
  %1634 = vmatpush2.msra.mxu0 0.0
  %1635 = vmatprep.subr.mxu0 0.0
  %1636 = vmatpush2.msra.mxu0 0.0
  %1637 = vmatprep.subr.mxu0 0.0
  %1638 = vmatpush2.msra.mxu0 0.0
  %1639 = vmatprep.subr.mxu0 0.0
  %1640 = vmatpush2.msra.mxu0 0.0
  %1641 = vmatprep.subr.mxu0 0.0
  %1642 = vmatpush2.msra.mxu0 0.0
  %1643 = vmatprep.subr.mxu0 0.0
  %1644 = vmatpush2.msra.mxu0 0.0
  %1645 = vmatprep.subr.mxu0 0.0
  %1646 = vmatpush2.msra.mxu0 0.0
  %1647 = vmatprep.subr.mxu0 0.0
  %1648 = vmatpush2.msra.mxu0 0.0
  %1649 = vmatprep.subr.mxu0 0.0
  %1650 = vmatpush2.msra.mxu0 0.0
  %1651 = vmatprep.subr.mxu0 0.0
  %1652 = vmatpush2.msra.mxu0 0.0
  %1653 = vmatprep.subr.mxu0 0.0
  %1654 = vmatpush2.msra.mxu0 0.0
  %1655 = vmatprep.subr.mxu0 0.0
  %1656 = vmatpush2.msra.mxu0 0.0
  %1657 = vmatprep.subr.mxu0 0.0
  %1658 = vmatpush2.msra.mxu0 0.0
  %1659 = vmatprep.subr.mxu0 0.0
  %1660 = vmatpush2.msra.mxu0 0.0
  %1661 = vmatprep.subr.mxu0 0.0
  %1662 = vmatpush2.msra.mxu0 0.0
  %1663 = vmatprep.mubr.f32.mxu0 0.0
  %1664 = vmatmul.mubr.f32.gmra.mxu0 %v1405
  %v1665 = vpop.f32.mrf.mxu0
  %v1666 = vadd.f32 0.0, %v1665
  %v1667 = vpop.f32.mrf.mxu0
  %1668 = vmatprep.mubr.f32.mxu0 0.0
  %1669 = vmatmul.mubr.f32.gmra.mxu0 %v1408
  %v1670 = vpop.f32.mrf.mxu0
  %v1671 = vadd.f32 0.0, %v1670
  %v1672 = vpop.f32.mrf.mxu0
  %1673 = vmatprep.mubr.f32.mxu0 0.0
  %1674 = vmatmul.mubr.f32.gmra.mxu0 %v1411
  %v1675 = vpop.f32.mrf.mxu0
  %v1676 = vadd.f32 0.0, %v1675
  %v1677 = vpop.f32.mrf.mxu0
  %1678 = vmatprep.mubr.f32.mxu0 0.0
  %1679 = vmatmul.mubr.f32.gmra.mxu0 %v1414
  %v1680 = vpop.f32.mrf.mxu0
  %v1681 = vadd.f32 0.0, %v1680
  %v1682 = vpop.f32.mrf.mxu0
  %1683 = vmatprep.mubr.f32.mxu0 0.0
  %1684 = vmatmul.mubr.f32.gmra.mxu0 %v1417
  %v1685 = vpop.f32.mrf.mxu0
  %v1686 = vadd.f32 0.0, %v1685
  %v1687 = vpop.f32.mrf.mxu0
  %1688 = vmatprep.mubr.f32.mxu0 0.0
  %1689 = vmatmul.mubr.f32.gmra.mxu0 %v1420
  %v1690 = vpop.f32.mrf.mxu0
  %v1691 = vadd.f32 0.0, %v1690
  %v1692 = vpop.f32.mrf.mxu0
  %1693 = vmatprep.mubr.f32.mxu0 0.0
  %1694 = vmatmul.mubr.f32.gmra.mxu0 %v1423
  %v1695 = vpop.f32.mrf.mxu0
  %v1696 = vadd.f32 0.0, %v1695
  %v1697 = vpop.f32.mrf.mxu0
  %1698 = vmatprep.mubr.f32.mxu0 0.0
  %1699 = vmatmul.mubr.f32.gmra.mxu0 %v1426
  %v1700 = vpop.f32.mrf.mxu0
  %v1701 = vadd.f32 0.0, %v1700
  %v1702 = vpop.f32.mrf.mxu0
  %1703 = vmatprep.mubr.f32.mxu0 0.0
  %1704 = vmatmul.mubr.f32.gmra.mxu0 %v1429
  %v1705 = vpop.f32.mrf.mxu0
  %v1706 = vadd.f32 0.0, %v1705
  %v1707 = vpop.f32.mrf.mxu0
  %1708 = vmatprep.mubr.f32.mxu0 0.0
  %1709 = vmatmul.mubr.f32.gmra.mxu0 %v1432
  %v1710 = vpop.f32.mrf.mxu0
  %v1711 = vadd.f32 0.0, %v1710
  %v1712 = vpop.f32.mrf.mxu0
  %1713 = vmatprep.mubr.f32.mxu0 0.0
  %1714 = vmatmul.mubr.f32.gmra.mxu0 %v1435
  %v1715 = vpop.f32.mrf.mxu0
  %v1716 = vadd.f32 0.0, %v1715
  %v1717 = vpop.f32.mrf.mxu0
  %1718 = vmatprep.mubr.f32.mxu0 0.0
  %1719 = vmatmul.mubr.f32.gmra.mxu0 %v1438
  %v1720 = vpop.f32.mrf.mxu0
  %v1721 = vadd.f32 0.0, %v1720
  %v1722 = vpop.f32.mrf.mxu0
  %1723 = vmatprep.mubr.f32.mxu0 0.0
  %1724 = vmatmul.mubr.f32.gmra.mxu0 %v1441
  %v1725 = vpop.f32.mrf.mxu0
  %v1726 = vadd.f32 0.0, %v1725
  %v1727 = vpop.f32.mrf.mxu0
  %1728 = vmatprep.mubr.f32.mxu0 0.0
  %1729 = vmatmul.mubr.f32.gmra.mxu0 %v1444
  %v1730 = vpop.f32.mrf.mxu0
  %v1731 = vadd.f32 0.0, %v1730
  %v1732 = vpop.f32.mrf.mxu0
  %1733 = vmatprep.mubr.f32.mxu0 0.0
  %1734 = vmatmul.mubr.f32.gmra.mxu0 %v1447
  %v1735 = vpop.f32.mrf.mxu0
  %v1736 = vadd.f32 0.0, %v1735
  %v1737 = vpop.f32.mrf.mxu0
  %1738 = vmatprep.mubr.f32.mxu0 0.0
  %1739 = vmatmul.mubr.f32.gmra.mxu0 %v1450
  %v1740 = vpop.f32.mrf.mxu0
  %v1741 = vadd.f32 0.0, %v1740
  %v1742 = vpop.f32.mrf.mxu0
  %1743 = vmatprep.mubr.f32.mxu0 0.0
  %1744 = vmatmul.mubr.f32.gmra.mxu0 %v1453
  %v1745 = vpop.f32.mrf.mxu0
  %v1746 = vadd.f32 0.0, %v1745
  %v1747 = vpop.f32.mrf.mxu0
  %1748 = vmatprep.mubr.f32.mxu0 0.0
  %1749 = vmatmul.mubr.f32.gmra.mxu0 %v1456
  %v1750 = vpop.f32.mrf.mxu0
  %v1751 = vadd.f32 0.0, %v1750
  %v1752 = vpop.f32.mrf.mxu0
  %1753 = vmatprep.mubr.f32.mxu0 0.0
  %1754 = vmatmul.mubr.f32.gmra.mxu0 %v1459
  %v1755 = vpop.f32.mrf.mxu0
  %v1756 = vadd.f32 0.0, %v1755
  %v1757 = vpop.f32.mrf.mxu0
  %1758 = vmatprep.mubr.f32.mxu0 0.0
  %1759 = vmatmul.mubr.f32.gmra.mxu0 %v1462
  %v1760 = vpop.f32.mrf.mxu0
  %v1761 = vadd.f32 0.0, %v1760
  %v1762 = vpop.f32.mrf.mxu0
  %1763 = vmatprep.mubr.f32.mxu0 0.0
  %1764 = vmatmul.mubr.f32.gmra.mxu0 %v1465
  %v1765 = vpop.f32.mrf.mxu0
  %v1766 = vadd.f32 0.0, %v1765
  %v1767 = vpop.f32.mrf.mxu0
  %1768 = vmatprep.mubr.f32.mxu0 0.0
  %1769 = vmatmul.mubr.f32.gmra.mxu0 %v1468
  %v1770 = vpop.f32.mrf.mxu0
  %v1771 = vadd.f32 0.0, %v1770
  %v1772 = vpop.f32.mrf.mxu0
  %1773 = vmatprep.mubr.f32.mxu0 0.0
  %1774 = vmatmul.mubr.f32.gmra.mxu0 %v1471
  %v1775 = vpop.f32.mrf.mxu0
  %v1776 = vadd.f32 0.0, %v1775
  %v1777 = vpop.f32.mrf.mxu0
  %1778 = vmatprep.mubr.f32.mxu0 0.0
  %1779 = vmatmul.mubr.f32.gmra.mxu0 %v1474
  %v1780 = vpop.f32.mrf.mxu0
  %v1781 = vadd.f32 0.0, %v1780
  %v1782 = vpop.f32.mrf.mxu0
  %1783 = vmatprep.mubr.f32.mxu0 0.0
  %1784 = vmatmul.mubr.f32.gmra.mxu0 %v1477
  %v1785 = vpop.f32.mrf.mxu0
  %v1786 = vadd.f32 0.0, %v1785
  %v1787 = vpop.f32.mrf.mxu0
  %1788 = vmatprep.mubr.f32.mxu0 0.0
  %1789 = vmatmul.mubr.f32.gmra.mxu0 %v1480
  %v1790 = vpop.f32.mrf.mxu0
  %v1791 = vadd.f32 0.0, %v1790
  %v1792 = vpop.f32.mrf.mxu0
  %1793 = vmatprep.mubr.f32.mxu0 0.0
  %1794 = vmatmul.mubr.f32.gmra.mxu0 %v1483
  %v1795 = vpop.f32.mrf.mxu0
  %v1796 = vadd.f32 0.0, %v1795
  %v1797 = vpop.f32.mrf.mxu0
  %1798 = vmatprep.mubr.f32.mxu0 0.0
  %1799 = vmatmul.mubr.f32.gmra.mxu0 %v1486
  %v1800 = vpop.f32.mrf.mxu0
  %v1801 = vadd.f32 0.0, %v1800
  %v1802 = vpop.f32.mrf.mxu0
  %1803 = vmatprep.mubr.f32.mxu0 0.0
  %1804 = vmatmul.mubr.f32.gmra.mxu0 %v1489
  %v1805 = vpop.f32.mrf.mxu0
  %v1806 = vadd.f32 0.0, %v1805
  %v1807 = vpop.f32.mrf.mxu0
  %1808 = vmatprep.mubr.f32.mxu0 0.0
  %1809 = vmatmul.mubr.f32.gmra.mxu0 %v1492
  %v1810 = vpop.f32.mrf.mxu0
  %v1811 = vadd.f32 0.0, %v1810
  %v1812 = vpop.f32.mrf.mxu0
  %1813 = vmatprep.mubr.f32.mxu0 0.0
  %1814 = vmatmul.mubr.f32.gmra.mxu0 %v1495
  %v1815 = vpop.f32.mrf.mxu0
  %v1816 = vadd.f32 0.0, %v1815
  %v1817 = vpop.f32.mrf.mxu0
  %1818 = vmatprep.mubr.f32.mxu0 0.0
  %1819 = vmatmul.mubr.f32.gmra.mxu0 %v1498
  %v1820 = vpop.f32.mrf.mxu0
  %v1821 = vadd.f32 0.0, %v1820
  %v1822 = vpop.f32.mrf.mxu0
  %1823 = vmatprep.mubr.f32.mxu0 0.0
  %1824 = vmatmul.mubr.f32.gmra.mxu0 %v1501
  %v1825 = vpop.f32.mrf.mxu0
  %v1826 = vadd.f32 0.0, %v1825
  %v1827 = vpop.f32.mrf.mxu0
  %1828 = vmatprep.mubr.f32.mxu0 0.0
  %1829 = vmatmul.mubr.f32.gmra.mxu0 %v1504
  %v1830 = vpop.f32.mrf.mxu0
  %v1831 = vadd.f32 0.0, %v1830
  %v1832 = vpop.f32.mrf.mxu0
  %1833 = vmatprep.mubr.f32.mxu0 0.0
  %1834 = vmatmul.mubr.f32.gmra.mxu0 %v1507
  %v1835 = vpop.f32.mrf.mxu0
  %v1836 = vadd.f32 0.0, %v1835
  %v1837 = vpop.f32.mrf.mxu0
  %1838 = vmatprep.mubr.f32.mxu0 0.0
  %1839 = vmatmul.mubr.f32.gmra.mxu0 %v1510
  %v1840 = vpop.f32.mrf.mxu0
  %v1841 = vadd.f32 0.0, %v1840
  %v1842 = vpop.f32.mrf.mxu0
  %1843 = vmatprep.mubr.f32.mxu0 0.0
  %1844 = vmatmul.mubr.f32.gmra.mxu0 %v1513
  %v1845 = vpop.f32.mrf.mxu0
  %v1846 = vadd.f32 0.0, %v1845
  %v1847 = vpop.f32.mrf.mxu0
  %1848 = vmatprep.mubr.f32.mxu0 0.0
  %1849 = vmatmul.mubr.f32.gmra.mxu0 %v1516
  %v1850 = vpop.f32.mrf.mxu0
  %v1851 = vadd.f32 0.0, %v1850
  %v1852 = vpop.f32.mrf.mxu0
  %1853 = vmatprep.mubr.f32.mxu0 0.0
  %1854 = vmatmul.mubr.f32.gmra.mxu0 %v1519
  %v1855 = vpop.f32.mrf.mxu0
  %v1856 = vadd.f32 0.0, %v1855
  %v1857 = vpop.f32.mrf.mxu0
  %1858 = vmatprep.mubr.f32.mxu0 0.0
  %1859 = vmatmul.mubr.f32.gmra.mxu0 %v1522
  %v1860 = vpop.f32.mrf.mxu0
  %v1861 = vadd.f32 0.0, %v1860
  %v1862 = vpop.f32.mrf.mxu0
  %1863 = vmatprep.mubr.f32.mxu0 0.0
  %1864 = vmatmul.mubr.f32.gmra.mxu0 %v1525
  %v1865 = vpop.f32.mrf.mxu0
  %v1866 = vadd.f32 0.0, %v1865
  %v1867 = vpop.f32.mrf.mxu0
  %1868 = vmatprep.mubr.f32.mxu0 0.0
  %1869 = vmatmul.mubr.f32.gmra.mxu0 %v1528
  %v1870 = vpop.f32.mrf.mxu0
  %v1871 = vadd.f32 0.0, %v1870
  %v1872 = vpop.f32.mrf.mxu0
  %1873 = vmatprep.mubr.f32.mxu0 0.0
  %1874 = vmatmul.mubr.f32.gmra.mxu0 %v1531
  %v1875 = vpop.f32.mrf.mxu0
  %v1876 = vadd.f32 0.0, %v1875
  %v1877 = vpop.f32.mrf.mxu0
  %1878 = vmatprep.mubr.f32.mxu0 0.0
  %1879 = vmatmul.mubr.f32.gmra.mxu0 %v1534
  %v1880 = vpop.f32.mrf.mxu0
  %v1881 = vadd.f32 0.0, %v1880
  %v1882 = vpop.f32.mrf.mxu0
  %1883 = vmatprep.mubr.f32.mxu0 0.0
  %1884 = vmatmul.mubr.f32.gmra.mxu0 %v1537
  %v1885 = vpop.f32.mrf.mxu0
  %v1886 = vadd.f32 0.0, %v1885
  %v1887 = vpop.f32.mrf.mxu0
  %1888 = vmatprep.mubr.f32.mxu0 0.0
  %1889 = vmatmul.mubr.f32.gmra.mxu0 %v1540
  %v1890 = vpop.f32.mrf.mxu0
  %v1891 = vadd.f32 0.0, %v1890
  %v1892 = vpop.f32.mrf.mxu0
  %1893 = vmatprep.mubr.f32.mxu0 0.0
  %1894 = vmatmul.mubr.f32.gmra.mxu0 %v1543
  %v1895 = vpop.f32.mrf.mxu0
  %v1896 = vadd.f32 0.0, %v1895
  %v1897 = vpop.f32.mrf.mxu0
  %1898 = vmatprep.mubr.f32.mxu0 0.0
  %1899 = vmatmul.mubr.f32.gmra.mxu0 %v1546
  %v1900 = vpop.f32.mrf.mxu0
  %v1901 = vadd.f32 0.0, %v1900
  %v1902 = vpop.f32.mrf.mxu0
  %1903 = vmatprep.mubr.f32.mxu0 0.0
  %1904 = vmatmul.mubr.f32.gmra.mxu0 %v1549
  %v1905 = vpop.f32.mrf.mxu0
  %v1906 = vadd.f32 0.0, %v1905
  %v1907 = vpop.f32.mrf.mxu0
  %1908 = vmatprep.mubr.f32.mxu0 0.0
  %1909 = vmatmul.mubr.f32.gmra.mxu0 %v1552
  %v1910 = vpop.f32.mrf.mxu0
  %v1911 = vadd.f32 0.0, %v1910
  %v1912 = vpop.f32.mrf.mxu0
  %1913 = vmatprep.mubr.f32.mxu0 0.0
  %1914 = vmatmul.mubr.f32.gmra.mxu0 %v1555
  %v1915 = vpop.f32.mrf.mxu0
  %v1916 = vadd.f32 0.0, %v1915
  %v1917 = vpop.f32.mrf.mxu0
  %1918 = vmatprep.mubr.f32.mxu0 0.0
  %1919 = vmatmul.mubr.f32.gmra.mxu0 %v1558
  %v1920 = vpop.f32.mrf.mxu0
  %v1921 = vadd.f32 0.0, %v1920
  %v1922 = vpop.f32.mrf.mxu0
  %1923 = vmatprep.mubr.f32.mxu0 0.0
  %1924 = vmatmul.mubr.f32.gmra.mxu0 %v1561
  %v1925 = vpop.f32.mrf.mxu0
  %v1926 = vadd.f32 0.0, %v1925
  %v1927 = vpop.f32.mrf.mxu0
  %1928 = vmatprep.mubr.f32.mxu0 0.0
  %1929 = vmatmul.mubr.f32.gmra.mxu0 %v1564
  %v1930 = vpop.f32.mrf.mxu0
  %v1931 = vadd.f32 0.0, %v1930
  %v1932 = vpop.f32.mrf.mxu0
  %1933 = vmatprep.mubr.f32.mxu0 0.0
  %1934 = vmatmul.mubr.f32.gmra.mxu0 %v1567
  %v1935 = vpop.f32.mrf.mxu0
  %v1936 = vadd.f32 0.0, %v1935
  %v1937 = vpop.f32.mrf.mxu0
  %1938 = vmatprep.mubr.f32.mxu0 0.0
  %1939 = vmatmul.mubr.f32.gmra.mxu0 %v1570
  %v1940 = vpop.f32.mrf.mxu0
  %v1941 = vadd.f32 0.0, %v1940
  %v1942 = vpop.f32.mrf.mxu0
  %1943 = vmatprep.mubr.f32.mxu0 0.0
  %1944 = vmatmul.mubr.f32.gmra.mxu0 %v1573
  %v1945 = vpop.f32.mrf.mxu0
  %v1946 = vadd.f32 0.0, %v1945
  %v1947 = vpop.f32.mrf.mxu0
  %1948 = vmatprep.mubr.f32.mxu0 0.0
  %1949 = vmatmul.mubr.f32.gmra.mxu0 %v1576
  %v1950 = vpop.f32.mrf.mxu0
  %v1951 = vadd.f32 0.0, %v1950
  %v1952 = vpop.f32.mrf.mxu0
  %1953 = vmatprep.mubr.f32.mxu0 0.0
  %1954 = vmatmul.mubr.f32.gmra.mxu0 %v1579
  %v1955 = vpop.f32.mrf.mxu0
  %v1956 = vadd.f32 0.0, %v1955
  %v1957 = vpop.f32.mrf.mxu0
  %1958 = vmatprep.mubr.f32.mxu0 0.0
  %1959 = vmatmul.mubr.f32.gmra.mxu0 %v1582
  %v1960 = vpop.f32.mrf.mxu0
  %v1961 = vadd.f32 0.0, %v1960
  %v1962 = vpop.f32.mrf.mxu0
  %1963 = vmatprep.mubr.f32.mxu0 0.0
  %1964 = vmatmul.mubr.f32.gmra.mxu0 %v1585
  %v1965 = vpop.f32.mrf.mxu0
  %v1966 = vadd.f32 0.0, %v1965
  %v1967 = vpop.f32.mrf.mxu0
  %1968 = vmatprep.mubr.f32.mxu0 0.0
  %1969 = vmatmul.mubr.f32.gmra.mxu0 %v1588
  %v1970 = vpop.f32.mrf.mxu0
  %v1971 = vadd.f32 0.0, %v1970
  %v1972 = vpop.f32.mrf.mxu0
  %1973 = vmatprep.mubr.f32.mxu0 0.0
  %1974 = vmatmul.mubr.f32.gmra.mxu0 %v1591
  %v1975 = vpop.f32.mrf.mxu0
  %v1976 = vadd.f32 0.0, %v1975
  %v1977 = vpop.f32.mrf.mxu0
  %1978 = vmatprep.mubr.f32.mxu0 0.0
  %1979 = vmatmul.mubr.f32.gmra.mxu0 %v1594
  %v1980 = vpop.f32.mrf.mxu0
  %v1981 = vadd.f32 0.0, %v1980
  %v1982 = vpop.f32.mrf.mxu0
  %1983 = vdwg.mxu0
  %v1984 = vadd.f32 %v1020, %v1666
  %v1985 = vadd.f32 %v1025, %v1671
  %v1986 = vadd.f32 %v1030, %v1676
  %v1987 = vadd.f32 %v1035, %v1681
  %v1988 = vadd.f32 %v1040, %v1686
  %v1989 = vadd.f32 %v1045, %v1691
  %v1990 = vadd.f32 %v1050, %v1696
  %v1991 = vadd.f32 %v1055, %v1701
  %v1992 = vadd.f32 %v1060, %v1706
  %v1993 = vadd.f32 %v1065, %v1711
  %v1994 = vadd.f32 %v1070, %v1716
  %v1995 = vadd.f32 %v1075, %v1721
  %v1996 = vadd.f32 %v1080, %v1726
  %v1997 = vadd.f32 %v1085, %v1731
  %v1998 = vadd.f32 %v1090, %v1736
  %v1999 = vadd.f32 %v1095, %v1741
  %v2000 = vadd.f32 %v1100, %v1746
  %v2001 = vadd.f32 %v1105, %v1751
  %v2002 = vadd.f32 %v1110, %v1756
  %v2003 = vadd.f32 %v1115, %v1761
  %v2004 = vadd.f32 %v1120, %v1766
  %v2005 = vadd.f32 %v1125, %v1771
  %v2006 = vadd.f32 %v1130, %v1776
  %v2007 = vadd.f32 %v1135, %v1781
  %v2008 = vadd.f32 %v1140, %v1786
  %v2009 = vadd.f32 %v1145, %v1791
  %v2010 = vadd.f32 %v1150, %v1796
  %v2011 = vadd.f32 %v1155, %v1801
  %v2012 = vadd.f32 %v1160, %v1806
  %v2013 = vadd.f32 %v1165, %v1811
  %v2014 = vadd.f32 %v1170, %v1816
  %v2015 = vadd.f32 %v1175, %v1821
  %v2016 = vadd.f32 %v1180, %v1826
  %v2017 = vadd.f32 %v1185, %v1831
  %v2018 = vadd.f32 %v1190, %v1836
  %v2019 = vadd.f32 %v1195, %v1841
  %v2020 = vadd.f32 %v1200, %v1846
  %v2021 = vadd.f32 %v1205, %v1851
  %v2022 = vadd.f32 %v1210, %v1856
  %v2023 = vadd.f32 %v1215, %v1861
  %v2024 = vadd.f32 %v1220, %v1866
  %v2025 = vadd.f32 %v1225, %v1871
  %v2026 = vadd.f32 %v1230, %v1876
  %v2027 = vadd.f32 %v1235, %v1881
  %v2028 = vadd.f32 %v1240, %v1886
  %v2029 = vadd.f32 %v1245, %v1891
  %v2030 = vadd.f32 %v1250, %v1896
  %v2031 = vadd.f32 %v1255, %v1901
  %v2032 = vadd.f32 %v1260, %v1906
  %v2033 = vadd.f32 %v1265, %v1911
  %v2034 = vadd.f32 %v1270, %v1916
  %v2035 = vadd.f32 %v1275, %v1921
  %v2036 = vadd.f32 %v1280, %v1926
  %v2037 = vadd.f32 %v1285, %v1931
  %v2038 = vadd.f32 %v1290, %v1936
  %v2039 = vadd.f32 %v1295, %v1941
  %v2040 = vadd.f32 %v1300, %v1946
  %v2041 = vadd.f32 %v1305, %v1951
  %v2042 = vadd.f32 %v1310, %v1956
  %v2043 = vadd.f32 %v1315, %v1961
  %v2044 = vadd.f32 %v1320, %v1966
  %v2045 = vadd.f32 %v1325, %v1971
  %v2046 = vadd.f32 %v1330, %v1976
  %v2047 = vadd.f32 %v1335, %v1981
  %s2048 = scalar_lea.vmem %s0, 24
  %v2049 = vld [vmem:[%s2048] sm:$0xff]
  %v2050 = vld [vmem:[%s2048 + $0x8] sm:$0xff]
  %v2051 = vld [vmem:[%s2048 + $0x18] sm:$0xff]
  %v2052 = vld [vmem:[%s2048 + $0x20] sm:$0xff]
  %v2053 = vld [vmem:[%s2048 + $0x30] sm:$0xff]
  %v2054 = vld [vmem:[%s2048 + $0x38] sm:$0xff]
  %v2055 = vld [vmem:[%s2048 + $0x48] sm:$0xff]
  %v2056 = vld [vmem:[%s2048 + $0x50] sm:$0xff]
  %v2057 = vld [vmem:[%s2048 + $0x60] sm:$0xff]
  %v2058 = vld [vmem:[%s2048 + $0x68] sm:$0xff]
  %v2059 = vld [vmem:[%s2048 + $0x78] sm:$0xff]
  %v2060 = vld [vmem:[%s2048 + $0x80] sm:$0xff]
  %v2061 = vld [vmem:[%s2048 + $0x90] sm:$0xff]
  %v2062 = vld [vmem:[%s2048 + $0x98] sm:$0xff]
  %v2063 = vld [vmem:[%s2048 + $0xa8] sm:$0xff]
  %v2064 = vld [vmem:[%s2048 + $0xb0] sm:$0xff]
  %v2065 = vld [vmem:[%s2048 + $0xc0] sm:$0xff]
  %v2066 = vld [vmem:[%s2048 + $0xc8] sm:$0xff]
  %v2067 = vld [vmem:[%s2048 + $0xd8] sm:$0xff]
  %v2068 = vld [vmem:[%s2048 + $0xe0] sm:$0xff]
  %v2069 = vld [vmem:[%s2048 + $0xf0] sm:$0xff]
  %v2070 = vld [vmem:[%s2048 + $0xf8] sm:$0xff]
  %v2071 = vld [vmem:[%s2048 + $0x108] sm:$0xff]
  %v2072 = vld [vmem:[%s2048 + $0x110] sm:$0xff]
  %v2073 = vld [vmem:[%s2048 + $0x120] sm:$0xff]
  %v2074 = vld [vmem:[%s2048 + $0x128] sm:$0xff]
  %v2075 = vld [vmem:[%s2048 + $0x138] sm:$0xff]
  %v2076 = vld [vmem:[%s2048 + $0x140] sm:$0xff]
  %v2077 = vld [vmem:[%s2048 + $0x150] sm:$0xff]
  %v2078 = vld [vmem:[%s2048 + $0x158] sm:$0xff]
  %v2079 = vld [vmem:[%s2048 + $0x168] sm:$0xff]
  %v2080 = vld [vmem:[%s2048 + $0x170] sm:$0xff]
  %v2081 = vld [vmem:[%s2048 + $0x1b0] sm:$0xff]
  %v2082 = vld [vmem:[%s2048 + $0x1b8] sm:$0xff]
  %v2083 = vld [vmem:[%s2048 + $0x1c8] sm:$0xff]
  %v2084 = vld [vmem:[%s2048 + $0x1d0] sm:$0xff]
  %v2085 = vld [vmem:[%s2048 + $0x1e0] sm:$0xff]
  %v2086 = vld [vmem:[%s2048 + $0x1e8] sm:$0xff]
  %v2087 = vld [vmem:[%s2048 + $0x1f8] sm:$0xff]
  %v2088 = vld [vmem:[%s2048 + $0x200] sm:$0xff]
  %v2089 = vld [vmem:[%s2048 + $0x210] sm:$0xff]
  %v2090 = vld [vmem:[%s2048 + $0x218] sm:$0xff]
  %v2091 = vld [vmem:[%s2048 + $0x228] sm:$0xff]
  %v2092 = vld [vmem:[%s2048 + $0x230] sm:$0xff]
  %v2093 = vld [vmem:[%s2048 + $0x240] sm:$0xff]
  %v2094 = vld [vmem:[%s2048 + $0x248] sm:$0xff]
  %v2095 = vld [vmem:[%s2048 + $0x258] sm:$0xff]
  %v2096 = vld [vmem:[%s2048 + $0x260] sm:$0xff]
  %v2097 = vld [vmem:[%s2048 + $0x270] sm:$0xff]
  %v2098 = vld [vmem:[%s2048 + $0x278] sm:$0xff]
  %v2099 = vld [vmem:[%s2048 + $0x288] sm:$0xff]
  %v2100 = vld [vmem:[%s2048 + $0x290] sm:$0xff]
  %v2101 = vld [vmem:[%s2048 + $0x2a0] sm:$0xff]
  %v2102 = vld [vmem:[%s2048 + $0x2a8] sm:$0xff]
  %v2103 = vld [vmem:[%s2048 + $0x2b8] sm:$0xff]
  %v2104 = vld [vmem:[%s2048 + $0x2c0] sm:$0xff]
  %v2105 = vld [vmem:[%s2048 + $0x2d0] sm:$0xff]
  %v2106 = vld [vmem:[%s2048 + $0x2d8] sm:$0xff]
  %v2107 = vld [vmem:[%s2048 + $0x2e8] sm:$0xff]
  %v2108 = vld [vmem:[%s2048 + $0x2f0] sm:$0xff]
  %v2109 = vld [vmem:[%s2048 + $0x300] sm:$0xff]
  %v2110 = vld [vmem:[%s2048 + $0x308] sm:$0xff]
  %v2111 = vld [vmem:[%s2048 + $0x318] sm:$0xff]
  %v2112 = vld [vmem:[%s2048 + $0x320] sm:$0xff]
  %s2113 = scalar_lea.vmem %s1, 12
  %v2114 = vld [vmem:[%s2113] sm:$0x7]
  %v2116 = vsel %vm176, %v2049, 0
  %v2119 = vsel %vm176, %v2050, 0
  %v2122 = vsel %vm176, %v2051, 0
  %v2125 = vsel %vm176, %v2052, 0
  %v2128 = vsel %vm176, %v2053, 0
  %v2131 = vsel %vm176, %v2054, 0
  %v2134 = vsel %vm176, %v2055, 0
  %v2137 = vsel %vm176, %v2056, 0
  %v2140 = vsel %vm176, %v2057, 0
  %v2143 = vsel %vm176, %v2058, 0
  %v2146 = vsel %vm176, %v2059, 0
  %v2149 = vsel %vm176, %v2060, 0
  %v2152 = vsel %vm176, %v2061, 0
  %v2155 = vsel %vm176, %v2062, 0
  %v2158 = vsel %vm176, %v2063, 0
  %v2161 = vsel %vm176, %v2064, 0
  %v2164 = vsel %vm176, %v2065, 0
  %v2167 = vsel %vm176, %v2066, 0
  %v2170 = vsel %vm176, %v2067, 0
  %v2173 = vsel %vm176, %v2068, 0
  %v2176 = vsel %vm176, %v2069, 0
  %v2179 = vsel %vm176, %v2070, 0
  %v2182 = vsel %vm176, %v2071, 0
  %v2185 = vsel %vm176, %v2072, 0
  %v2188 = vsel %vm176, %v2073, 0
  %v2191 = vsel %vm176, %v2074, 0
  %v2194 = vsel %vm176, %v2075, 0
  %v2197 = vsel %vm176, %v2076, 0
  %v2200 = vsel %vm176, %v2077, 0
  %v2203 = vsel %vm176, %v2078, 0
  %v2206 = vsel %vm176, %v2079, 0
  %v2209 = vsel %vm176, %v2080, 0
  %v2212 = vsel %vm176, %v2081, 0
  %v2215 = vsel %vm176, %v2082, 0
  %v2218 = vsel %vm176, %v2083, 0
  %v2221 = vsel %vm176, %v2084, 0
  %v2224 = vsel %vm176, %v2085, 0
  %v2227 = vsel %vm176, %v2086, 0
  %v2230 = vsel %vm176, %v2087, 0
  %v2233 = vsel %vm176, %v2088, 0
  %v2236 = vsel %vm176, %v2089, 0
  %v2239 = vsel %vm176, %v2090, 0
  %v2242 = vsel %vm176, %v2091, 0
  %v2245 = vsel %vm176, %v2092, 0
  %v2248 = vsel %vm176, %v2093, 0
  %v2251 = vsel %vm176, %v2094, 0
  %v2254 = vsel %vm176, %v2095, 0
  %v2257 = vsel %vm176, %v2096, 0
  %v2260 = vsel %vm176, %v2097, 0
  %v2263 = vsel %vm176, %v2098, 0
  %v2266 = vsel %vm176, %v2099, 0
  %v2269 = vsel %vm176, %v2100, 0
  %v2272 = vsel %vm176, %v2101, 0
  %v2275 = vsel %vm176, %v2102, 0
  %v2278 = vsel %vm176, %v2103, 0
  %v2281 = vsel %vm176, %v2104, 0
  %v2284 = vsel %vm176, %v2105, 0
  %v2287 = vsel %vm176, %v2106, 0
  %v2290 = vsel %vm176, %v2107, 0
  %v2293 = vsel %vm176, %v2108, 0
  %v2296 = vsel %vm176, %v2109, 0
  %v2299 = vsel %vm176, %v2110, 0
  %v2302 = vsel %vm176, %v2111, 0
  %v2305 = vsel %vm176, %v2112, 0
  %v2308 = vsel %vm369, %v2114, 0
  %2310 = vmatprep.subr.mxu0 0.0
  %2311 = vmatpush1.msra.mxu0 0.0
  %2312 = vmatprep.subr.mxu0 0.0
  %2313 = vmatpush1.msra.mxu0 0.0
  %2314 = vmatprep.subr.mxu0 0.0
  %2315 = vmatpush1.msra.mxu0 0.0
  %2316 = vmatprep.subr.mxu0 0.0
  %2317 = vmatpush1.msra.mxu0 0.0
  %2318 = vmatprep.subr.mxu0 0.0
  %2319 = vmatpush1.msra.mxu0 0.0
  %2320 = vmatprep.subr.mxu0 0.0
  %2321 = vmatpush1.msra.mxu0 0.0
  %2322 = vmatprep.subr.mxu0 0.0
  %2323 = vmatpush1.msra.mxu0 0.0
  %2324 = vmatprep.subr.mxu0 0.0
  %2325 = vmatpush1.msra.mxu0 0.0
  %2326 = vmatprep.subr.mxu0 0.0
  %2327 = vmatpush1.msra.mxu0 0.0
  %2328 = vmatprep.subr.mxu0 0.0
  %2329 = vmatpush1.msra.mxu0 0.0
  %2330 = vmatprep.subr.mxu0 0.0
  %2331 = vmatpush1.msra.mxu0 0.0
  %2332 = vmatprep.subr.mxu0 0.0
  %2333 = vmatpush1.msra.mxu0 0.0
  %2334 = vmatprep.subr.mxu0 0.0
  %2335 = vmatpush1.msra.mxu0 0.0
  %2336 = vmatprep.subr.mxu0 0.0
  %2337 = vmatpush1.msra.mxu0 0.0
  %2338 = vmatprep.subr.mxu0 0.0
  %2339 = vmatpush1.msra.mxu0 0.0
  %2340 = vmatprep.subr.mxu0 0.0
  %2341 = vmatpush1.msra.mxu0 %v2308
  %2342 = vmatprep.subr.mxu0 0.0
  %2343 = vmatpush2.msra.mxu0 0.0
  %2344 = vmatprep.subr.mxu0 0.0
  %2345 = vmatpush2.msra.mxu0 0.0
  %2346 = vmatprep.subr.mxu0 0.0
  %2347 = vmatpush2.msra.mxu0 0.0
  %2348 = vmatprep.subr.mxu0 0.0
  %2349 = vmatpush2.msra.mxu0 0.0
  %2350 = vmatprep.subr.mxu0 0.0
  %2351 = vmatpush2.msra.mxu0 0.0
  %2352 = vmatprep.subr.mxu0 0.0
  %2353 = vmatpush2.msra.mxu0 0.0
  %2354 = vmatprep.subr.mxu0 0.0
  %2355 = vmatpush2.msra.mxu0 0.0
  %2356 = vmatprep.subr.mxu0 0.0
  %2357 = vmatpush2.msra.mxu0 0.0
  %2358 = vmatprep.subr.mxu0 0.0
  %2359 = vmatpush2.msra.mxu0 0.0
  %2360 = vmatprep.subr.mxu0 0.0
  %2361 = vmatpush2.msra.mxu0 0.0
  %2362 = vmatprep.subr.mxu0 0.0
  %2363 = vmatpush2.msra.mxu0 0.0
  %2364 = vmatprep.subr.mxu0 0.0
  %2365 = vmatpush2.msra.mxu0 0.0
  %2366 = vmatprep.subr.mxu0 0.0
  %2367 = vmatpush2.msra.mxu0 0.0
  %2368 = vmatprep.subr.mxu0 0.0
  %2369 = vmatpush2.msra.mxu0 0.0
  %2370 = vmatprep.subr.mxu0 0.0
  %2371 = vmatpush2.msra.mxu0 0.0
  %2372 = vmatprep.subr.mxu0 0.0
  %2373 = vmatpush2.msra.mxu0 0.0
  %2374 = vmatprep.mubr.f32.mxu0 0.0
  %2375 = vmatmul.mubr.f32.gmra.mxu0 %v2116
  %v2376 = vpop.f32.mrf.mxu0
  %v2377 = vadd.f32 0.0, %v2376
  %v2378 = vpop.f32.mrf.mxu0
  %2379 = vmatprep.mubr.f32.mxu0 0.0
  %2380 = vmatmul.mubr.f32.gmra.mxu0 %v2119
  %v2381 = vpop.f32.mrf.mxu0
  %v2382 = vadd.f32 0.0, %v2381
  %v2383 = vpop.f32.mrf.mxu0
  %2384 = vmatprep.mubr.f32.mxu0 0.0
  %2385 = vmatmul.mubr.f32.gmra.mxu0 %v2122
  %v2386 = vpop.f32.mrf.mxu0
  %v2387 = vadd.f32 0.0, %v2386
  %v2388 = vpop.f32.mrf.mxu0
  %2389 = vmatprep.mubr.f32.mxu0 0.0
  %2390 = vmatmul.mubr.f32.gmra.mxu0 %v2125
  %v2391 = vpop.f32.mrf.mxu0
  %v2392 = vadd.f32 0.0, %v2391
  %v2393 = vpop.f32.mrf.mxu0
  %2394 = vmatprep.mubr.f32.mxu0 0.0
  %2395 = vmatmul.mubr.f32.gmra.mxu0 %v2128
  %v2396 = vpop.f32.mrf.mxu0
  %v2397 = vadd.f32 0.0, %v2396
  %v2398 = vpop.f32.mrf.mxu0
  %2399 = vmatprep.mubr.f32.mxu0 0.0
  %2400 = vmatmul.mubr.f32.gmra.mxu0 %v2131
  %v2401 = vpop.f32.mrf.mxu0
  %v2402 = vadd.f32 0.0, %v2401
  %v2403 = vpop.f32.mrf.mxu0
  %2404 = vmatprep.mubr.f32.mxu0 0.0
  %2405 = vmatmul.mubr.f32.gmra.mxu0 %v2134
  %v2406 = vpop.f32.mrf.mxu0
  %v2407 = vadd.f32 0.0, %v2406
  %v2408 = vpop.f32.mrf.mxu0
  %2409 = vmatprep.mubr.f32.mxu0 0.0
  %2410 = vmatmul.mubr.f32.gmra.mxu0 %v2137
  %v2411 = vpop.f32.mrf.mxu0
  %v2412 = vadd.f32 0.0, %v2411
  %v2413 = vpop.f32.mrf.mxu0
  %2414 = vmatprep.mubr.f32.mxu0 0.0
  %2415 = vmatmul.mubr.f32.gmra.mxu0 %v2140
  %v2416 = vpop.f32.mrf.mxu0
  %v2417 = vadd.f32 0.0, %v2416
  %v2418 = vpop.f32.mrf.mxu0
  %2419 = vmatprep.mubr.f32.mxu0 0.0
  %2420 = vmatmul.mubr.f32.gmra.mxu0 %v2143
  %v2421 = vpop.f32.mrf.mxu0
  %v2422 = vadd.f32 0.0, %v2421
  %v2423 = vpop.f32.mrf.mxu0
  %2424 = vmatprep.mubr.f32.mxu0 0.0
  %2425 = vmatmul.mubr.f32.gmra.mxu0 %v2146
  %v2426 = vpop.f32.mrf.mxu0
  %v2427 = vadd.f32 0.0, %v2426
  %v2428 = vpop.f32.mrf.mxu0
  %2429 = vmatprep.mubr.f32.mxu0 0.0
  %2430 = vmatmul.mubr.f32.gmra.mxu0 %v2149
  %v2431 = vpop.f32.mrf.mxu0
  %v2432 = vadd.f32 0.0, %v2431
  %v2433 = vpop.f32.mrf.mxu0
  %2434 = vmatprep.mubr.f32.mxu0 0.0
  %2435 = vmatmul.mubr.f32.gmra.mxu0 %v2152
  %v2436 = vpop.f32.mrf.mxu0
  %v2437 = vadd.f32 0.0, %v2436
  %v2438 = vpop.f32.mrf.mxu0
  %2439 = vmatprep.mubr.f32.mxu0 0.0
  %2440 = vmatmul.mubr.f32.gmra.mxu0 %v2155
  %v2441 = vpop.f32.mrf.mxu0
  %v2442 = vadd.f32 0.0, %v2441
  %v2443 = vpop.f32.mrf.mxu0
  %2444 = vmatprep.mubr.f32.mxu0 0.0
  %2445 = vmatmul.mubr.f32.gmra.mxu0 %v2158
  %v2446 = vpop.f32.mrf.mxu0
  %v2447 = vadd.f32 0.0, %v2446
  %v2448 = vpop.f32.mrf.mxu0
  %2449 = vmatprep.mubr.f32.mxu0 0.0
  %2450 = vmatmul.mubr.f32.gmra.mxu0 %v2161
  %v2451 = vpop.f32.mrf.mxu0
  %v2452 = vadd.f32 0.0, %v2451
  %v2453 = vpop.f32.mrf.mxu0
  %2454 = vmatprep.mubr.f32.mxu0 0.0
  %2455 = vmatmul.mubr.f32.gmra.mxu0 %v2164
  %v2456 = vpop.f32.mrf.mxu0
  %v2457 = vadd.f32 0.0, %v2456
  %v2458 = vpop.f32.mrf.mxu0
  %2459 = vmatprep.mubr.f32.mxu0 0.0
  %2460 = vmatmul.mubr.f32.gmra.mxu0 %v2167
  %v2461 = vpop.f32.mrf.mxu0
  %v2462 = vadd.f32 0.0, %v2461
  %v2463 = vpop.f32.mrf.mxu0
  %2464 = vmatprep.mubr.f32.mxu0 0.0
  %2465 = vmatmul.mubr.f32.gmra.mxu0 %v2170
  %v2466 = vpop.f32.mrf.mxu0
  %v2467 = vadd.f32 0.0, %v2466
  %v2468 = vpop.f32.mrf.mxu0
  %2469 = vmatprep.mubr.f32.mxu0 0.0
  %2470 = vmatmul.mubr.f32.gmra.mxu0 %v2173
  %v2471 = vpop.f32.mrf.mxu0
  %v2472 = vadd.f32 0.0, %v2471
  %v2473 = vpop.f32.mrf.mxu0
  %2474 = vmatprep.mubr.f32.mxu0 0.0
  %2475 = vmatmul.mubr.f32.gmra.mxu0 %v2176
  %v2476 = vpop.f32.mrf.mxu0
  %v2477 = vadd.f32 0.0, %v2476
  %v2478 = vpop.f32.mrf.mxu0
  %2479 = vmatprep.mubr.f32.mxu0 0.0
  %2480 = vmatmul.mubr.f32.gmra.mxu0 %v2179
  %v2481 = vpop.f32.mrf.mxu0
  %v2482 = vadd.f32 0.0, %v2481
  %v2483 = vpop.f32.mrf.mxu0
  %2484 = vmatprep.mubr.f32.mxu0 0.0
  %2485 = vmatmul.mubr.f32.gmra.mxu0 %v2182
  %v2486 = vpop.f32.mrf.mxu0
  %v2487 = vadd.f32 0.0, %v2486
  %v2488 = vpop.f32.mrf.mxu0
  %2489 = vmatprep.mubr.f32.mxu0 0.0
  %2490 = vmatmul.mubr.f32.gmra.mxu0 %v2185
  %v2491 = vpop.f32.mrf.mxu0
  %v2492 = vadd.f32 0.0, %v2491
  %v2493 = vpop.f32.mrf.mxu0
  %2494 = vmatprep.mubr.f32.mxu0 0.0
  %2495 = vmatmul.mubr.f32.gmra.mxu0 %v2188
  %v2496 = vpop.f32.mrf.mxu0
  %v2497 = vadd.f32 0.0, %v2496
  %v2498 = vpop.f32.mrf.mxu0
  %2499 = vmatprep.mubr.f32.mxu0 0.0
  %2500 = vmatmul.mubr.f32.gmra.mxu0 %v2191
  %v2501 = vpop.f32.mrf.mxu0
  %v2502 = vadd.f32 0.0, %v2501
  %v2503 = vpop.f32.mrf.mxu0
  %2504 = vmatprep.mubr.f32.mxu0 0.0
  %2505 = vmatmul.mubr.f32.gmra.mxu0 %v2194
  %v2506 = vpop.f32.mrf.mxu0
  %v2507 = vadd.f32 0.0, %v2506
  %v2508 = vpop.f32.mrf.mxu0
  %2509 = vmatprep.mubr.f32.mxu0 0.0
  %2510 = vmatmul.mubr.f32.gmra.mxu0 %v2197
  %v2511 = vpop.f32.mrf.mxu0
  %v2512 = vadd.f32 0.0, %v2511
  %v2513 = vpop.f32.mrf.mxu0
  %2514 = vmatprep.mubr.f32.mxu0 0.0
  %2515 = vmatmul.mubr.f32.gmra.mxu0 %v2200
  %v2516 = vpop.f32.mrf.mxu0
  %v2517 = vadd.f32 0.0, %v2516
  %v2518 = vpop.f32.mrf.mxu0
  %2519 = vmatprep.mubr.f32.mxu0 0.0
  %2520 = vmatmul.mubr.f32.gmra.mxu0 %v2203
  %v2521 = vpop.f32.mrf.mxu0
  %v2522 = vadd.f32 0.0, %v2521
  %v2523 = vpop.f32.mrf.mxu0
  %2524 = vmatprep.mubr.f32.mxu0 0.0
  %2525 = vmatmul.mubr.f32.gmra.mxu0 %v2206
  %v2526 = vpop.f32.mrf.mxu0
  %v2527 = vadd.f32 0.0, %v2526
  %v2528 = vpop.f32.mrf.mxu0
  %2529 = vmatprep.mubr.f32.mxu0 0.0
  %2530 = vmatmul.mubr.f32.gmra.mxu0 %v2209
  %v2531 = vpop.f32.mrf.mxu0
  %v2532 = vadd.f32 0.0, %v2531
  %v2533 = vpop.f32.mrf.mxu0
  %2534 = vmatprep.mubr.f32.mxu0 0.0
  %2535 = vmatmul.mubr.f32.gmra.mxu0 %v2212
  %v2536 = vpop.f32.mrf.mxu0
  %v2537 = vadd.f32 0.0, %v2536
  %v2538 = vpop.f32.mrf.mxu0
  %2539 = vmatprep.mubr.f32.mxu0 0.0
  %2540 = vmatmul.mubr.f32.gmra.mxu0 %v2215
  %v2541 = vpop.f32.mrf.mxu0
  %v2542 = vadd.f32 0.0, %v2541
  %v2543 = vpop.f32.mrf.mxu0
  %2544 = vmatprep.mubr.f32.mxu0 0.0
  %2545 = vmatmul.mubr.f32.gmra.mxu0 %v2218
  %v2546 = vpop.f32.mrf.mxu0
  %v2547 = vadd.f32 0.0, %v2546
  %v2548 = vpop.f32.mrf.mxu0
  %2549 = vmatprep.mubr.f32.mxu0 0.0
  %2550 = vmatmul.mubr.f32.gmra.mxu0 %v2221
  %v2551 = vpop.f32.mrf.mxu0
  %v2552 = vadd.f32 0.0, %v2551
  %v2553 = vpop.f32.mrf.mxu0
  %2554 = vmatprep.mubr.f32.mxu0 0.0
  %2555 = vmatmul.mubr.f32.gmra.mxu0 %v2224
  %v2556 = vpop.f32.mrf.mxu0
  %v2557 = vadd.f32 0.0, %v2556
  %v2558 = vpop.f32.mrf.mxu0
  %2559 = vmatprep.mubr.f32.mxu0 0.0
  %2560 = vmatmul.mubr.f32.gmra.mxu0 %v2227
  %v2561 = vpop.f32.mrf.mxu0
  %v2562 = vadd.f32 0.0, %v2561
  %v2563 = vpop.f32.mrf.mxu0
  %2564 = vmatprep.mubr.f32.mxu0 0.0
  %2565 = vmatmul.mubr.f32.gmra.mxu0 %v2230
  %v2566 = vpop.f32.mrf.mxu0
  %v2567 = vadd.f32 0.0, %v2566
  %v2568 = vpop.f32.mrf.mxu0
  %2569 = vmatprep.mubr.f32.mxu0 0.0
  %2570 = vmatmul.mubr.f32.gmra.mxu0 %v2233
  %v2571 = vpop.f32.mrf.mxu0
  %v2572 = vadd.f32 0.0, %v2571
  %v2573 = vpop.f32.mrf.mxu0
  %2574 = vmatprep.mubr.f32.mxu0 0.0
  %2575 = vmatmul.mubr.f32.gmra.mxu0 %v2236
  %v2576 = vpop.f32.mrf.mxu0
  %v2577 = vadd.f32 0.0, %v2576
  %v2578 = vpop.f32.mrf.mxu0
  %2579 = vmatprep.mubr.f32.mxu0 0.0
  %2580 = vmatmul.mubr.f32.gmra.mxu0 %v2239
  %v2581 = vpop.f32.mrf.mxu0
  %v2582 = vadd.f32 0.0, %v2581
  %v2583 = vpop.f32.mrf.mxu0
  %2584 = vmatprep.mubr.f32.mxu0 0.0
  %2585 = vmatmul.mubr.f32.gmra.mxu0 %v2242
  %v2586 = vpop.f32.mrf.mxu0
  %v2587 = vadd.f32 0.0, %v2586
  %v2588 = vpop.f32.mrf.mxu0
  %2589 = vmatprep.mubr.f32.mxu0 0.0
  %2590 = vmatmul.mubr.f32.gmra.mxu0 %v2245
  %v2591 = vpop.f32.mrf.mxu0
  %v2592 = vadd.f32 0.0, %v2591
  %v2593 = vpop.f32.mrf.mxu0
  %2594 = vmatprep.mubr.f32.mxu0 0.0
  %2595 = vmatmul.mubr.f32.gmra.mxu0 %v2248
  %v2596 = vpop.f32.mrf.mxu0
  %v2597 = vadd.f32 0.0, %v2596
  %v2598 = vpop.f32.mrf.mxu0
  %2599 = vmatprep.mubr.f32.mxu0 0.0
  %2600 = vmatmul.mubr.f32.gmra.mxu0 %v2251
  %v2601 = vpop.f32.mrf.mxu0
  %v2602 = vadd.f32 0.0, %v2601
  %v2603 = vpop.f32.mrf.mxu0
  %2604 = vmatprep.mubr.f32.mxu0 0.0
  %2605 = vmatmul.mubr.f32.gmra.mxu0 %v2254
  %v2606 = vpop.f32.mrf.mxu0
  %v2607 = vadd.f32 0.0, %v2606
  %v2608 = vpop.f32.mrf.mxu0
  %2609 = vmatprep.mubr.f32.mxu0 0.0
  %2610 = vmatmul.mubr.f32.gmra.mxu0 %v2257
  %v2611 = vpop.f32.mrf.mxu0
  %v2612 = vadd.f32 0.0, %v2611
  %v2613 = vpop.f32.mrf.mxu0
  %2614 = vmatprep.mubr.f32.mxu0 0.0
  %2615 = vmatmul.mubr.f32.gmra.mxu0 %v2260
  %v2616 = vpop.f32.mrf.mxu0
  %v2617 = vadd.f32 0.0, %v2616
  %v2618 = vpop.f32.mrf.mxu0
  %2619 = vmatprep.mubr.f32.mxu0 0.0
  %2620 = vmatmul.mubr.f32.gmra.mxu0 %v2263
  %v2621 = vpop.f32.mrf.mxu0
  %v2622 = vadd.f32 0.0, %v2621
  %v2623 = vpop.f32.mrf.mxu0
  %2624 = vmatprep.mubr.f32.mxu0 0.0
  %2625 = vmatmul.mubr.f32.gmra.mxu0 %v2266
  %v2626 = vpop.f32.mrf.mxu0
  %v2627 = vadd.f32 0.0, %v2626
  %v2628 = vpop.f32.mrf.mxu0
  %2629 = vmatprep.mubr.f32.mxu0 0.0
  %2630 = vmatmul.mubr.f32.gmra.mxu0 %v2269
  %v2631 = vpop.f32.mrf.mxu0
  %v2632 = vadd.f32 0.0, %v2631
  %v2633 = vpop.f32.mrf.mxu0
  %2634 = vmatprep.mubr.f32.mxu0 0.0
  %2635 = vmatmul.mubr.f32.gmra.mxu0 %v2272
  %v2636 = vpop.f32.mrf.mxu0
  %v2637 = vadd.f32 0.0, %v2636
  %v2638 = vpop.f32.mrf.mxu0
  %2639 = vmatprep.mubr.f32.mxu0 0.0
  %2640 = vmatmul.mubr.f32.gmra.mxu0 %v2275
  %v2641 = vpop.f32.mrf.mxu0
  %v2642 = vadd.f32 0.0, %v2641
  %v2643 = vpop.f32.mrf.mxu0
  %2644 = vmatprep.mubr.f32.mxu0 0.0
  %2645 = vmatmul.mubr.f32.gmra.mxu0 %v2278
  %v2646 = vpop.f32.mrf.mxu0
  %v2647 = vadd.f32 0.0, %v2646
  %v2648 = vpop.f32.mrf.mxu0
  %2649 = vmatprep.mubr.f32.mxu0 0.0
  %2650 = vmatmul.mubr.f32.gmra.mxu0 %v2281
  %v2651 = vpop.f32.mrf.mxu0
  %v2652 = vadd.f32 0.0, %v2651
  %v2653 = vpop.f32.mrf.mxu0
  %2654 = vmatprep.mubr.f32.mxu0 0.0
  %2655 = vmatmul.mubr.f32.gmra.mxu0 %v2284
  %v2656 = vpop.f32.mrf.mxu0
  %v2657 = vadd.f32 0.0, %v2656
  %v2658 = vpop.f32.mrf.mxu0
  %2659 = vmatprep.mubr.f32.mxu0 0.0
  %2660 = vmatmul.mubr.f32.gmra.mxu0 %v2287
  %v2661 = vpop.f32.mrf.mxu0
  %v2662 = vadd.f32 0.0, %v2661
  %v2663 = vpop.f32.mrf.mxu0
  %2664 = vmatprep.mubr.f32.mxu0 0.0
  %2665 = vmatmul.mubr.f32.gmra.mxu0 %v2290
  %v2666 = vpop.f32.mrf.mxu0
  %v2667 = vadd.f32 0.0, %v2666
  %v2668 = vpop.f32.mrf.mxu0
  %2669 = vmatprep.mubr.f32.mxu0 0.0
  %2670 = vmatmul.mubr.f32.gmra.mxu0 %v2293
  %v2671 = vpop.f32.mrf.mxu0
  %v2672 = vadd.f32 0.0, %v2671
  %v2673 = vpop.f32.mrf.mxu0
  %2674 = vmatprep.mubr.f32.mxu0 0.0
  %2675 = vmatmul.mubr.f32.gmra.mxu0 %v2296
  %v2676 = vpop.f32.mrf.mxu0
  %v2677 = vadd.f32 0.0, %v2676
  %v2678 = vpop.f32.mrf.mxu0
  %2679 = vmatprep.mubr.f32.mxu0 0.0
  %2680 = vmatmul.mubr.f32.gmra.mxu0 %v2299
  %v2681 = vpop.f32.mrf.mxu0
  %v2682 = vadd.f32 0.0, %v2681
  %v2683 = vpop.f32.mrf.mxu0
  %2684 = vmatprep.mubr.f32.mxu0 0.0
  %2685 = vmatmul.mubr.f32.gmra.mxu0 %v2302
  %v2686 = vpop.f32.mrf.mxu0
  %v2687 = vadd.f32 0.0, %v2686
  %v2688 = vpop.f32.mrf.mxu0
  %2689 = vmatprep.mubr.f32.mxu0 0.0
  %2690 = vmatmul.mubr.f32.gmra.mxu0 %v2305
  %v2691 = vpop.f32.mrf.mxu0
  %v2692 = vadd.f32 0.0, %v2691
  %v2693 = vpop.f32.mrf.mxu0
  %2694 = vdwg.mxu0
  %v2695 = vadd.f32 %v1984, %v2377
  %v2696 = vadd.f32 %v1985, %v2382
  %v2697 = vadd.f32 %v1986, %v2387
  %v2698 = vadd.f32 %v1987, %v2392
  %v2699 = vadd.f32 %v1988, %v2397
  %v2700 = vadd.f32 %v1989, %v2402
  %v2701 = vadd.f32 %v1990, %v2407
  %v2702 = vadd.f32 %v1991, %v2412
  %v2703 = vadd.f32 %v1992, %v2417
  %v2704 = vadd.f32 %v1993, %v2422
  %v2705 = vadd.f32 %v1994, %v2427
  %v2706 = vadd.f32 %v1995, %v2432
  %v2707 = vadd.f32 %v1996, %v2437
  %v2708 = vadd.f32 %v1997, %v2442
  %v2709 = vadd.f32 %v1998, %v2447
  %v2710 = vadd.f32 %v1999, %v2452
  %v2711 = vadd.f32 %v2000, %v2457
  %v2712 = vadd.f32 %v2001, %v2462
  %v2713 = vadd.f32 %v2002, %v2467
  %v2714 = vadd.f32 %v2003, %v2472
  %v2715 = vadd.f32 %v2004, %v2477
  %v2716 = vadd.f32 %v2005, %v2482
  %v2717 = vadd.f32 %v2006, %v2487
  %v2718 = vadd.f32 %v2007, %v2492
  %v2719 = vadd.f32 %v2008, %v2497
  %v2720 = vadd.f32 %v2009, %v2502
  %v2721 = vadd.f32 %v2010, %v2507
  %v2722 = vadd.f32 %v2011, %v2512
  %v2723 = vadd.f32 %v2012, %v2517
  %v2724 = vadd.f32 %v2013, %v2522
  %v2725 = vadd.f32 %v2014, %v2527
  %v2726 = vadd.f32 %v2015, %v2532
  %v2727 = vadd.f32 %v2016, %v2537
  %v2728 = vadd.f32 %v2017, %v2542
  %v2729 = vadd.f32 %v2018, %v2547
  %v2730 = vadd.f32 %v2019, %v2552
  %v2731 = vadd.f32 %v2020, %v2557
  %v2732 = vadd.f32 %v2021, %v2562
  %v2733 = vadd.f32 %v2022, %v2567
  %v2734 = vadd.f32 %v2023, %v2572
  %v2735 = vadd.f32 %v2024, %v2577
  %v2736 = vadd.f32 %v2025, %v2582
  %v2737 = vadd.f32 %v2026, %v2587
  %v2738 = vadd.f32 %v2027, %v2592
  %v2739 = vadd.f32 %v2028, %v2597
  %v2740 = vadd.f32 %v2029, %v2602
  %v2741 = vadd.f32 %v2030, %v2607
  %v2742 = vadd.f32 %v2031, %v2612
  %v2743 = vadd.f32 %v2032, %v2617
  %v2744 = vadd.f32 %v2033, %v2622
  %v2745 = vadd.f32 %v2034, %v2627
  %v2746 = vadd.f32 %v2035, %v2632
  %v2747 = vadd.f32 %v2036, %v2637
  %v2748 = vadd.f32 %v2037, %v2642
  %v2749 = vadd.f32 %v2038, %v2647
  %v2750 = vadd.f32 %v2039, %v2652
  %v2751 = vadd.f32 %v2040, %v2657
  %v2752 = vadd.f32 %v2041, %v2662
  %v2753 = vadd.f32 %v2042, %v2667
  %v2754 = vadd.f32 %v2043, %v2672
  %v2755 = vadd.f32 %v2044, %v2677
  %v2756 = vadd.f32 %v2045, %v2682
  %v2757 = vadd.f32 %v2046, %v2687
  %v2758 = vadd.f32 %v2047, %v2692
  %v2759 = vld [vmem:[%s2048 + $0x1] sm:$0xff]
  %v2760 = vld [vmem:[%s2048 + $0x9] sm:$0xff]
  %v2761 = vld [vmem:[%s2048 + $0x19] sm:$0xff]
  %v2762 = vld [vmem:[%s2048 + $0x21] sm:$0xff]
  %v2763 = vld [vmem:[%s2048 + $0x31] sm:$0xff]
  %v2764 = vld [vmem:[%s2048 + $0x39] sm:$0xff]
  %v2765 = vld [vmem:[%s2048 + $0x49] sm:$0xff]
  %v2766 = vld [vmem:[%s2048 + $0x51] sm:$0xff]
  %v2767 = vld [vmem:[%s2048 + $0x61] sm:$0xff]
  %v2768 = vld [vmem:[%s2048 + $0x69] sm:$0xff]
  %v2769 = vld [vmem:[%s2048 + $0x79] sm:$0xff]
  %v2770 = vld [vmem:[%s2048 + $0x81] sm:$0xff]
  %v2771 = vld [vmem:[%s2048 + $0x91] sm:$0xff]
  %v2772 = vld [vmem:[%s2048 + $0x99] sm:$0xff]
  %v2773 = vld [vmem:[%s2048 + $0xa9] sm:$0xff]
  %v2774 = vld [vmem:[%s2048 + $0xb1] sm:$0xff]
  %v2775 = vld [vmem:[%s2048 + $0xc1] sm:$0xff]
  %v2776 = vld [vmem:[%s2048 + $0xc9] sm:$0xff]
  %v2777 = vld [vmem:[%s2048 + $0xd9] sm:$0xff]
  %v2778 = vld [vmem:[%s2048 + $0xe1] sm:$0xff]
  %v2779 = vld [vmem:[%s2048 + $0xf1] sm:$0xff]
  %v2780 = vld [vmem:[%s2048 + $0xf9] sm:$0xff]
  %v2781 = vld [vmem:[%s2048 + $0x109] sm:$0xff]
  %v2782 = vld [vmem:[%s2048 + $0x111] sm:$0xff]
  %v2783 = vld [vmem:[%s2048 + $0x121] sm:$0xff]
  %v2784 = vld [vmem:[%s2048 + $0x129] sm:$0xff]
  %v2785 = vld [vmem:[%s2048 + $0x139] sm:$0xff]
  %v2786 = vld [vmem:[%s2048 + $0x141] sm:$0xff]
  %v2787 = vld [vmem:[%s2048 + $0x151] sm:$0xff]
  %v2788 = vld [vmem:[%s2048 + $0x159] sm:$0xff]
  %v2789 = vld [vmem:[%s2048 + $0x169] sm:$0xff]
  %v2790 = vld [vmem:[%s2048 + $0x171] sm:$0xff]
  %v2791 = vld [vmem:[%s2048 + $0x1b1] sm:$0xff]
  %v2792 = vld [vmem:[%s2048 + $0x1b9] sm:$0xff]
  %v2793 = vld [vmem:[%s2048 + $0x1c9] sm:$0xff]
  %v2794 = vld [vmem:[%s2048 + $0x1d1] sm:$0xff]
  %v2795 = vld [vmem:[%s2048 + $0x1e1] sm:$0xff]
  %v2796 = vld [vmem:[%s2048 + $0x1e9] sm:$0xff]
  %v2797 = vld [vmem:[%s2048 + $0x1f9] sm:$0xff]
  %v2798 = vld [vmem:[%s2048 + $0x201] sm:$0xff]
  %v2799 = vld [vmem:[%s2048 + $0x211] sm:$0xff]
  %v2800 = vld [vmem:[%s2048 + $0x219] sm:$0xff]
  %v2801 = vld [vmem:[%s2048 + $0x229] sm:$0xff]
  %v2802 = vld [vmem:[%s2048 + $0x231] sm:$0xff]
  %v2803 = vld [vmem:[%s2048 + $0x241] sm:$0xff]
  %v2804 = vld [vmem:[%s2048 + $0x249] sm:$0xff]
  %v2805 = vld [vmem:[%s2048 + $0x259] sm:$0xff]
  %v2806 = vld [vmem:[%s2048 + $0x261] sm:$0xff]
  %v2807 = vld [vmem:[%s2048 + $0x271] sm:$0xff]
  %v2808 = vld [vmem:[%s2048 + $0x279] sm:$0xff]
  %v2809 = vld [vmem:[%s2048 + $0x289] sm:$0xff]
  %v2810 = vld [vmem:[%s2048 + $0x291] sm:$0xff]
  %v2811 = vld [vmem:[%s2048 + $0x2a1] sm:$0xff]
  %v2812 = vld [vmem:[%s2048 + $0x2a9] sm:$0xff]
  %v2813 = vld [vmem:[%s2048 + $0x2b9] sm:$0xff]
  %v2814 = vld [vmem:[%s2048 + $0x2c1] sm:$0xff]
  %v2815 = vld [vmem:[%s2048 + $0x2d1] sm:$0xff]
  %v2816 = vld [vmem:[%s2048 + $0x2d9] sm:$0xff]
  %v2817 = vld [vmem:[%s2048 + $0x2e9] sm:$0xff]
  %v2818 = vld [vmem:[%s2048 + $0x2f1] sm:$0xff]
  %v2819 = vld [vmem:[%s2048 + $0x301] sm:$0xff]
  %v2820 = vld [vmem:[%s2048 + $0x309] sm:$0xff]
  %v2821 = vld [vmem:[%s2048 + $0x319] sm:$0xff]
  %v2822 = vld [vmem:[%s2048 + $0x321] sm:$0xff]
  %s2823 = scalar_lea.vmem %s1, 16
  %v2824 = vld [vmem:[%s2823] sm:$0x7]
  %v2826 = vsel %vm176, %v2759, 0
  %v2829 = vsel %vm176, %v2760, 0
  %v2832 = vsel %vm176, %v2761, 0
  %v2835 = vsel %vm176, %v2762, 0
  %v2838 = vsel %vm176, %v2763, 0
  %v2841 = vsel %vm176, %v2764, 0
  %v2844 = vsel %vm176, %v2765, 0
  %v2847 = vsel %vm176, %v2766, 0
  %v2850 = vsel %vm176, %v2767, 0
  %v2853 = vsel %vm176, %v2768, 0
  %v2856 = vsel %vm176, %v2769, 0
  %v2859 = vsel %vm176, %v2770, 0
  %v2862 = vsel %vm176, %v2771, 0
  %v2865 = vsel %vm176, %v2772, 0
  %v2868 = vsel %vm176, %v2773, 0
  %v2871 = vsel %vm176, %v2774, 0
  %v2874 = vsel %vm176, %v2775, 0
  %v2877 = vsel %vm176, %v2776, 0
  %v2880 = vsel %vm176, %v2777, 0
  %v2883 = vsel %vm176, %v2778, 0
  %v2886 = vsel %vm176, %v2779, 0
  %v2889 = vsel %vm176, %v2780, 0
  %v2892 = vsel %vm176, %v2781, 0
  %v2895 = vsel %vm176, %v2782, 0
  %v2898 = vsel %vm176, %v2783, 0
  %v2901 = vsel %vm176, %v2784, 0
  %v2904 = vsel %vm176, %v2785, 0
  %v2907 = vsel %vm176, %v2786, 0
  %v2910 = vsel %vm176, %v2787, 0
  %v2913 = vsel %vm176, %v2788, 0
  %v2916 = vsel %vm176, %v2789, 0
  %v2919 = vsel %vm176, %v2790, 0
  %v2922 = vsel %vm176, %v2791, 0
  %v2925 = vsel %vm176, %v2792, 0
  %v2928 = vsel %vm176, %v2793, 0
  %v2931 = vsel %vm176, %v2794, 0
  %v2934 = vsel %vm176, %v2795, 0
  %v2937 = vsel %vm176, %v2796, 0
  %v2940 = vsel %vm176, %v2797, 0
  %v2943 = vsel %vm176, %v2798, 0
  %v2946 = vsel %vm176, %v2799, 0
  %v2949 = vsel %vm176, %v2800, 0
  %v2952 = vsel %vm176, %v2801, 0
  %v2955 = vsel %vm176, %v2802, 0
  %v2958 = vsel %vm176, %v2803, 0
  %v2961 = vsel %vm176, %v2804, 0
  %v2964 = vsel %vm176, %v2805, 0
  %v2967 = vsel %vm176, %v2806, 0
  %v2970 = vsel %vm176, %v2807, 0
  %v2973 = vsel %vm176, %v2808, 0
  %v2976 = vsel %vm176, %v2809, 0
  %v2979 = vsel %vm176, %v2810, 0
  %v2982 = vsel %vm176, %v2811, 0
  %v2985 = vsel %vm176, %v2812, 0
  %v2988 = vsel %vm176, %v2813, 0
  %v2991 = vsel %vm176, %v2814, 0
  %v2994 = vsel %vm176, %v2815, 0
  %v2997 = vsel %vm176, %v2816, 0
  %v3000 = vsel %vm176, %v2817, 0
  %v3003 = vsel %vm176, %v2818, 0
  %v3006 = vsel %vm176, %v2819, 0
  %v3009 = vsel %vm176, %v2820, 0
  %v3012 = vsel %vm176, %v2821, 0
  %v3015 = vsel %vm176, %v2822, 0
  %v3018 = vsel %vm369, %v2824, 0
  %3020 = vmatprep.subr.mxu0 0.0
  %3021 = vmatpush1.msra.mxu0 0.0
  %3022 = vmatprep.subr.mxu0 0.0
  %3023 = vmatpush1.msra.mxu0 0.0
  %3024 = vmatprep.subr.mxu0 0.0
  %3025 = vmatpush1.msra.mxu0 0.0
  %3026 = vmatprep.subr.mxu0 0.0
  %3027 = vmatpush1.msra.mxu0 0.0
  %3028 = vmatprep.subr.mxu0 0.0
  %3029 = vmatpush1.msra.mxu0 0.0
  %3030 = vmatprep.subr.mxu0 0.0
  %3031 = vmatpush1.msra.mxu0 0.0
  %3032 = vmatprep.subr.mxu0 0.0
  %3033 = vmatpush1.msra.mxu0 0.0
  %3034 = vmatprep.subr.mxu0 0.0
  %3035 = vmatpush1.msra.mxu0 0.0
  %3036 = vmatprep.subr.mxu0 0.0
  %3037 = vmatpush1.msra.mxu0 0.0
  %3038 = vmatprep.subr.mxu0 0.0
  %3039 = vmatpush1.msra.mxu0 0.0
  %3040 = vmatprep.subr.mxu0 0.0
  %3041 = vmatpush1.msra.mxu0 0.0
  %3042 = vmatprep.subr.mxu0 0.0
  %3043 = vmatpush1.msra.mxu0 0.0
  %3044 = vmatprep.subr.mxu0 0.0
  %3045 = vmatpush1.msra.mxu0 0.0
  %3046 = vmatprep.subr.mxu0 0.0
  %3047 = vmatpush1.msra.mxu0 0.0
  %3048 = vmatprep.subr.mxu0 0.0
  %3049 = vmatpush1.msra.mxu0 0.0
  %3050 = vmatprep.subr.mxu0 0.0
  %3051 = vmatpush1.msra.mxu0 %v3018
  %3052 = vmatprep.subr.mxu0 0.0
  %3053 = vmatpush2.msra.mxu0 0.0
  %3054 = vmatprep.subr.mxu0 0.0
  %3055 = vmatpush2.msra.mxu0 0.0
  %3056 = vmatprep.subr.mxu0 0.0
  %3057 = vmatpush2.msra.mxu0 0.0
  %3058 = vmatprep.subr.mxu0 0.0
  %3059 = vmatpush2.msra.mxu0 0.0
  %3060 = vmatprep.subr.mxu0 0.0
  %3061 = vmatpush2.msra.mxu0 0.0
  %3062 = vmatprep.subr.mxu0 0.0
  %3063 = vmatpush2.msra.mxu0 0.0
  %3064 = vmatprep.subr.mxu0 0.0
  %3065 = vmatpush2.msra.mxu0 0.0
  %3066 = vmatprep.subr.mxu0 0.0
  %3067 = vmatpush2.msra.mxu0 0.0
  %3068 = vmatprep.subr.mxu0 0.0
  %3069 = vmatpush2.msra.mxu0 0.0
  %3070 = vmatprep.subr.mxu0 0.0
  %3071 = vmatpush2.msra.mxu0 0.0
  %3072 = vmatprep.subr.mxu0 0.0
  %3073 = vmatpush2.msra.mxu0 0.0
  %3074 = vmatprep.subr.mxu0 0.0
  %3075 = vmatpush2.msra.mxu0 0.0
  %3076 = vmatprep.subr.mxu0 0.0
  %3077 = vmatpush2.msra.mxu0 0.0
  %3078 = vmatprep.subr.mxu0 0.0
  %3079 = vmatpush2.msra.mxu0 0.0
  %3080 = vmatprep.subr.mxu0 0.0
  %3081 = vmatpush2.msra.mxu0 0.0
  %3082 = vmatprep.subr.mxu0 0.0
  %3083 = vmatpush2.msra.mxu0 0.0
  %3084 = vmatprep.mubr.f32.mxu0 0.0
  %3085 = vmatmul.mubr.f32.gmra.mxu0 %v2826
  %v3086 = vpop.f32.mrf.mxu0
  %v3087 = vadd.f32 0.0, %v3086
  %v3088 = vpop.f32.mrf.mxu0
  %3089 = vmatprep.mubr.f32.mxu0 0.0
  %3090 = vmatmul.mubr.f32.gmra.mxu0 %v2829
  %v3091 = vpop.f32.mrf.mxu0
  %v3092 = vadd.f32 0.0, %v3091
  %v3093 = vpop.f32.mrf.mxu0
  %3094 = vmatprep.mubr.f32.mxu0 0.0
  %3095 = vmatmul.mubr.f32.gmra.mxu0 %v2832
  %v3096 = vpop.f32.mrf.mxu0
  %v3097 = vadd.f32 0.0, %v3096
  %v3098 = vpop.f32.mrf.mxu0
  %3099 = vmatprep.mubr.f32.mxu0 0.0
  %3100 = vmatmul.mubr.f32.gmra.mxu0 %v2835
  %v3101 = vpop.f32.mrf.mxu0
  %v3102 = vadd.f32 0.0, %v3101
  %v3103 = vpop.f32.mrf.mxu0
  %3104 = vmatprep.mubr.f32.mxu0 0.0
  %3105 = vmatmul.mubr.f32.gmra.mxu0 %v2838
  %v3106 = vpop.f32.mrf.mxu0
  %v3107 = vadd.f32 0.0, %v3106
  %v3108 = vpop.f32.mrf.mxu0
  %3109 = vmatprep.mubr.f32.mxu0 0.0
  %3110 = vmatmul.mubr.f32.gmra.mxu0 %v2841
  %v3111 = vpop.f32.mrf.mxu0
  %v3112 = vadd.f32 0.0, %v3111
  %v3113 = vpop.f32.mrf.mxu0
  %3114 = vmatprep.mubr.f32.mxu0 0.0
  %3115 = vmatmul.mubr.f32.gmra.mxu0 %v2844
  %v3116 = vpop.f32.mrf.mxu0
  %v3117 = vadd.f32 0.0, %v3116
  %v3118 = vpop.f32.mrf.mxu0
  %3119 = vmatprep.mubr.f32.mxu0 0.0
  %3120 = vmatmul.mubr.f32.gmra.mxu0 %v2847
  %v3121 = vpop.f32.mrf.mxu0
  %v3122 = vadd.f32 0.0, %v3121
  %v3123 = vpop.f32.mrf.mxu0
  %3124 = vmatprep.mubr.f32.mxu0 0.0
  %3125 = vmatmul.mubr.f32.gmra.mxu0 %v2850
  %v3126 = vpop.f32.mrf.mxu0
  %v3127 = vadd.f32 0.0, %v3126
  %v3128 = vpop.f32.mrf.mxu0
  %3129 = vmatprep.mubr.f32.mxu0 0.0
  %3130 = vmatmul.mubr.f32.gmra.mxu0 %v2853
  %v3131 = vpop.f32.mrf.mxu0
  %v3132 = vadd.f32 0.0, %v3131
  %v3133 = vpop.f32.mrf.mxu0
  %3134 = vmatprep.mubr.f32.mxu0 0.0
  %3135 = vmatmul.mubr.f32.gmra.mxu0 %v2856
  %v3136 = vpop.f32.mrf.mxu0
  %v3137 = vadd.f32 0.0, %v3136
  %v3138 = vpop.f32.mrf.mxu0
  %3139 = vmatprep.mubr.f32.mxu0 0.0
  %3140 = vmatmul.mubr.f32.gmra.mxu0 %v2859
  %v3141 = vpop.f32.mrf.mxu0
  %v3142 = vadd.f32 0.0, %v3141
  %v3143 = vpop.f32.mrf.mxu0
  %3144 = vmatprep.mubr.f32.mxu0 0.0
  %3145 = vmatmul.mubr.f32.gmra.mxu0 %v2862
  %v3146 = vpop.f32.mrf.mxu0
  %v3147 = vadd.f32 0.0, %v3146
  %v3148 = vpop.f32.mrf.mxu0
  %3149 = vmatprep.mubr.f32.mxu0 0.0
  %3150 = vmatmul.mubr.f32.gmra.mxu0 %v2865
  %v3151 = vpop.f32.mrf.mxu0
  %v3152 = vadd.f32 0.0, %v3151
  %v3153 = vpop.f32.mrf.mxu0
  %3154 = vmatprep.mubr.f32.mxu0 0.0
  %3155 = vmatmul.mubr.f32.gmra.mxu0 %v2868
  %v3156 = vpop.f32.mrf.mxu0
  %v3157 = vadd.f32 0.0, %v3156
  %v3158 = vpop.f32.mrf.mxu0
  %3159 = vmatprep.mubr.f32.mxu0 0.0
  %3160 = vmatmul.mubr.f32.gmra.mxu0 %v2871
  %v3161 = vpop.f32.mrf.mxu0
  %v3162 = vadd.f32 0.0, %v3161
  %v3163 = vpop.f32.mrf.mxu0
  %3164 = vmatprep.mubr.f32.mxu0 0.0
  %3165 = vmatmul.mubr.f32.gmra.mxu0 %v2874
  %v3166 = vpop.f32.mrf.mxu0
  %v3167 = vadd.f32 0.0, %v3166
  %v3168 = vpop.f32.mrf.mxu0
  %3169 = vmatprep.mubr.f32.mxu0 0.0
  %3170 = vmatmul.mubr.f32.gmra.mxu0 %v2877
  %v3171 = vpop.f32.mrf.mxu0
  %v3172 = vadd.f32 0.0, %v3171
  %v3173 = vpop.f32.mrf.mxu0
  %3174 = vmatprep.mubr.f32.mxu0 0.0
  %3175 = vmatmul.mubr.f32.gmra.mxu0 %v2880
  %v3176 = vpop.f32.mrf.mxu0
  %v3177 = vadd.f32 0.0, %v3176
  %v3178 = vpop.f32.mrf.mxu0
  %3179 = vmatprep.mubr.f32.mxu0 0.0
  %3180 = vmatmul.mubr.f32.gmra.mxu0 %v2883
  %v3181 = vpop.f32.mrf.mxu0
  %v3182 = vadd.f32 0.0, %v3181
  %v3183 = vpop.f32.mrf.mxu0
  %3184 = vmatprep.mubr.f32.mxu0 0.0
  %3185 = vmatmul.mubr.f32.gmra.mxu0 %v2886
  %v3186 = vpop.f32.mrf.mxu0
  %v3187 = vadd.f32 0.0, %v3186
  %v3188 = vpop.f32.mrf.mxu0
  %3189 = vmatprep.mubr.f32.mxu0 0.0
  %3190 = vmatmul.mubr.f32.gmra.mxu0 %v2889
  %v3191 = vpop.f32.mrf.mxu0
  %v3192 = vadd.f32 0.0, %v3191
  %v3193 = vpop.f32.mrf.mxu0
  %3194 = vmatprep.mubr.f32.mxu0 0.0
  %3195 = vmatmul.mubr.f32.gmra.mxu0 %v2892
  %v3196 = vpop.f32.mrf.mxu0
  %v3197 = vadd.f32 0.0, %v3196
  %v3198 = vpop.f32.mrf.mxu0
  %3199 = vmatprep.mubr.f32.mxu0 0.0
  %3200 = vmatmul.mubr.f32.gmra.mxu0 %v2895
  %v3201 = vpop.f32.mrf.mxu0
  %v3202 = vadd.f32 0.0, %v3201
  %v3203 = vpop.f32.mrf.mxu0
  %3204 = vmatprep.mubr.f32.mxu0 0.0
  %3205 = vmatmul.mubr.f32.gmra.mxu0 %v2898
  %v3206 = vpop.f32.mrf.mxu0
  %v3207 = vadd.f32 0.0, %v3206
  %v3208 = vpop.f32.mrf.mxu0
  %3209 = vmatprep.mubr.f32.mxu0 0.0
  %3210 = vmatmul.mubr.f32.gmra.mxu0 %v2901
  %v3211 = vpop.f32.mrf.mxu0
  %v3212 = vadd.f32 0.0, %v3211
  %v3213 = vpop.f32.mrf.mxu0
  %3214 = vmatprep.mubr.f32.mxu0 0.0
  %3215 = vmatmul.mubr.f32.gmra.mxu0 %v2904
  %v3216 = vpop.f32.mrf.mxu0
  %v3217 = vadd.f32 0.0, %v3216
  %v3218 = vpop.f32.mrf.mxu0
  %3219 = vmatprep.mubr.f32.mxu0 0.0
  %3220 = vmatmul.mubr.f32.gmra.mxu0 %v2907
  %v3221 = vpop.f32.mrf.mxu0
  %v3222 = vadd.f32 0.0, %v3221
  %v3223 = vpop.f32.mrf.mxu0
  %3224 = vmatprep.mubr.f32.mxu0 0.0
  %3225 = vmatmul.mubr.f32.gmra.mxu0 %v2910
  %v3226 = vpop.f32.mrf.mxu0
  %v3227 = vadd.f32 0.0, %v3226
  %v3228 = vpop.f32.mrf.mxu0
  %3229 = vmatprep.mubr.f32.mxu0 0.0
  %3230 = vmatmul.mubr.f32.gmra.mxu0 %v2913
  %v3231 = vpop.f32.mrf.mxu0
  %v3232 = vadd.f32 0.0, %v3231
  %v3233 = vpop.f32.mrf.mxu0
  %3234 = vmatprep.mubr.f32.mxu0 0.0
  %3235 = vmatmul.mubr.f32.gmra.mxu0 %v2916
  %v3236 = vpop.f32.mrf.mxu0
  %v3237 = vadd.f32 0.0, %v3236
  %v3238 = vpop.f32.mrf.mxu0
  %3239 = vmatprep.mubr.f32.mxu0 0.0
  %3240 = vmatmul.mubr.f32.gmra.mxu0 %v2919
  %v3241 = vpop.f32.mrf.mxu0
  %v3242 = vadd.f32 0.0, %v3241
  %v3243 = vpop.f32.mrf.mxu0
  %3244 = vmatprep.mubr.f32.mxu0 0.0
  %3245 = vmatmul.mubr.f32.gmra.mxu0 %v2922
  %v3246 = vpop.f32.mrf.mxu0
  %v3247 = vadd.f32 0.0, %v3246
  %v3248 = vpop.f32.mrf.mxu0
  %3249 = vmatprep.mubr.f32.mxu0 0.0
  %3250 = vmatmul.mubr.f32.gmra.mxu0 %v2925
  %v3251 = vpop.f32.mrf.mxu0
  %v3252 = vadd.f32 0.0, %v3251
  %v3253 = vpop.f32.mrf.mxu0
  %3254 = vmatprep.mubr.f32.mxu0 0.0
  %3255 = vmatmul.mubr.f32.gmra.mxu0 %v2928
  %v3256 = vpop.f32.mrf.mxu0
  %v3257 = vadd.f32 0.0, %v3256
  %v3258 = vpop.f32.mrf.mxu0
  %3259 = vmatprep.mubr.f32.mxu0 0.0
  %3260 = vmatmul.mubr.f32.gmra.mxu0 %v2931
  %v3261 = vpop.f32.mrf.mxu0
  %v3262 = vadd.f32 0.0, %v3261
  %v3263 = vpop.f32.mrf.mxu0
  %3264 = vmatprep.mubr.f32.mxu0 0.0
  %3265 = vmatmul.mubr.f32.gmra.mxu0 %v2934
  %v3266 = vpop.f32.mrf.mxu0
  %v3267 = vadd.f32 0.0, %v3266
  %v3268 = vpop.f32.mrf.mxu0
  %3269 = vmatprep.mubr.f32.mxu0 0.0
  %3270 = vmatmul.mubr.f32.gmra.mxu0 %v2937
  %v3271 = vpop.f32.mrf.mxu0
  %v3272 = vadd.f32 0.0, %v3271
  %v3273 = vpop.f32.mrf.mxu0
  %3274 = vmatprep.mubr.f32.mxu0 0.0
  %3275 = vmatmul.mubr.f32.gmra.mxu0 %v2940
  %v3276 = vpop.f32.mrf.mxu0
  %v3277 = vadd.f32 0.0, %v3276
  %v3278 = vpop.f32.mrf.mxu0
  %3279 = vmatprep.mubr.f32.mxu0 0.0
  %3280 = vmatmul.mubr.f32.gmra.mxu0 %v2943
  %v3281 = vpop.f32.mrf.mxu0
  %v3282 = vadd.f32 0.0, %v3281
  %v3283 = vpop.f32.mrf.mxu0
  %3284 = vmatprep.mubr.f32.mxu0 0.0
  %3285 = vmatmul.mubr.f32.gmra.mxu0 %v2946
  %v3286 = vpop.f32.mrf.mxu0
  %v3287 = vadd.f32 0.0, %v3286
  %v3288 = vpop.f32.mrf.mxu0
  %3289 = vmatprep.mubr.f32.mxu0 0.0
  %3290 = vmatmul.mubr.f32.gmra.mxu0 %v2949
  %v3291 = vpop.f32.mrf.mxu0
  %v3292 = vadd.f32 0.0, %v3291
  %v3293 = vpop.f32.mrf.mxu0
  %3294 = vmatprep.mubr.f32.mxu0 0.0
  %3295 = vmatmul.mubr.f32.gmra.mxu0 %v2952
  %v3296 = vpop.f32.mrf.mxu0
  %v3297 = vadd.f32 0.0, %v3296
  %v3298 = vpop.f32.mrf.mxu0
  %3299 = vmatprep.mubr.f32.mxu0 0.0
  %3300 = vmatmul.mubr.f32.gmra.mxu0 %v2955
  %v3301 = vpop.f32.mrf.mxu0
  %v3302 = vadd.f32 0.0, %v3301
  %v3303 = vpop.f32.mrf.mxu0
  %3304 = vmatprep.mubr.f32.mxu0 0.0
  %3305 = vmatmul.mubr.f32.gmra.mxu0 %v2958
  %v3306 = vpop.f32.mrf.mxu0
  %v3307 = vadd.f32 0.0, %v3306
  %v3308 = vpop.f32.mrf.mxu0
  %3309 = vmatprep.mubr.f32.mxu0 0.0
  %3310 = vmatmul.mubr.f32.gmra.mxu0 %v2961
  %v3311 = vpop.f32.mrf.mxu0
  %v3312 = vadd.f32 0.0, %v3311
  %v3313 = vpop.f32.mrf.mxu0
  %3314 = vmatprep.mubr.f32.mxu0 0.0
  %3315 = vmatmul.mubr.f32.gmra.mxu0 %v2964
  %v3316 = vpop.f32.mrf.mxu0
  %v3317 = vadd.f32 0.0, %v3316
  %v3318 = vpop.f32.mrf.mxu0
  %3319 = vmatprep.mubr.f32.mxu0 0.0
  %3320 = vmatmul.mubr.f32.gmra.mxu0 %v2967
  %v3321 = vpop.f32.mrf.mxu0
  %v3322 = vadd.f32 0.0, %v3321
  %v3323 = vpop.f32.mrf.mxu0
  %3324 = vmatprep.mubr.f32.mxu0 0.0
  %3325 = vmatmul.mubr.f32.gmra.mxu0 %v2970
  %v3326 = vpop.f32.mrf.mxu0
  %v3327 = vadd.f32 0.0, %v3326
  %v3328 = vpop.f32.mrf.mxu0
  %3329 = vmatprep.mubr.f32.mxu0 0.0
  %3330 = vmatmul.mubr.f32.gmra.mxu0 %v2973
  %v3331 = vpop.f32.mrf.mxu0
  %v3332 = vadd.f32 0.0, %v3331
  %v3333 = vpop.f32.mrf.mxu0
  %3334 = vmatprep.mubr.f32.mxu0 0.0
  %3335 = vmatmul.mubr.f32.gmra.mxu0 %v2976
  %v3336 = vpop.f32.mrf.mxu0
  %v3337 = vadd.f32 0.0, %v3336
  %v3338 = vpop.f32.mrf.mxu0
  %3339 = vmatprep.mubr.f32.mxu0 0.0
  %3340 = vmatmul.mubr.f32.gmra.mxu0 %v2979
  %v3341 = vpop.f32.mrf.mxu0
  %v3342 = vadd.f32 0.0, %v3341
  %v3343 = vpop.f32.mrf.mxu0
  %3344 = vmatprep.mubr.f32.mxu0 0.0
  %3345 = vmatmul.mubr.f32.gmra.mxu0 %v2982
  %v3346 = vpop.f32.mrf.mxu0
  %v3347 = vadd.f32 0.0, %v3346
  %v3348 = vpop.f32.mrf.mxu0
  %3349 = vmatprep.mubr.f32.mxu0 0.0
  %3350 = vmatmul.mubr.f32.gmra.mxu0 %v2985
  %v3351 = vpop.f32.mrf.mxu0
  %v3352 = vadd.f32 0.0, %v3351
  %v3353 = vpop.f32.mrf.mxu0
  %3354 = vmatprep.mubr.f32.mxu0 0.0
  %3355 = vmatmul.mubr.f32.gmra.mxu0 %v2988
  %v3356 = vpop.f32.mrf.mxu0
  %v3357 = vadd.f32 0.0, %v3356
  %v3358 = vpop.f32.mrf.mxu0
  %3359 = vmatprep.mubr.f32.mxu0 0.0
  %3360 = vmatmul.mubr.f32.gmra.mxu0 %v2991
  %v3361 = vpop.f32.mrf.mxu0
  %v3362 = vadd.f32 0.0, %v3361
  %v3363 = vpop.f32.mrf.mxu0
  %3364 = vmatprep.mubr.f32.mxu0 0.0
  %3365 = vmatmul.mubr.f32.gmra.mxu0 %v2994
  %v3366 = vpop.f32.mrf.mxu0
  %v3367 = vadd.f32 0.0, %v3366
  %v3368 = vpop.f32.mrf.mxu0
  %3369 = vmatprep.mubr.f32.mxu0 0.0
  %3370 = vmatmul.mubr.f32.gmra.mxu0 %v2997
  %v3371 = vpop.f32.mrf.mxu0
  %v3372 = vadd.f32 0.0, %v3371
  %v3373 = vpop.f32.mrf.mxu0
  %3374 = vmatprep.mubr.f32.mxu0 0.0
  %3375 = vmatmul.mubr.f32.gmra.mxu0 %v3000
  %v3376 = vpop.f32.mrf.mxu0
  %v3377 = vadd.f32 0.0, %v3376
  %v3378 = vpop.f32.mrf.mxu0
  %3379 = vmatprep.mubr.f32.mxu0 0.0
  %3380 = vmatmul.mubr.f32.gmra.mxu0 %v3003
  %v3381 = vpop.f32.mrf.mxu0
  %v3382 = vadd.f32 0.0, %v3381
  %v3383 = vpop.f32.mrf.mxu0
  %3384 = vmatprep.mubr.f32.mxu0 0.0
  %3385 = vmatmul.mubr.f32.gmra.mxu0 %v3006
  %v3386 = vpop.f32.mrf.mxu0
  %v3387 = vadd.f32 0.0, %v3386
  %v3388 = vpop.f32.mrf.mxu0
  %3389 = vmatprep.mubr.f32.mxu0 0.0
  %3390 = vmatmul.mubr.f32.gmra.mxu0 %v3009
  %v3391 = vpop.f32.mrf.mxu0
  %v3392 = vadd.f32 0.0, %v3391
  %v3393 = vpop.f32.mrf.mxu0
  %3394 = vmatprep.mubr.f32.mxu0 0.0
  %3395 = vmatmul.mubr.f32.gmra.mxu0 %v3012
  %v3396 = vpop.f32.mrf.mxu0
  %v3397 = vadd.f32 0.0, %v3396
  %v3398 = vpop.f32.mrf.mxu0
  %3399 = vmatprep.mubr.f32.mxu0 0.0
  %3400 = vmatmul.mubr.f32.gmra.mxu0 %v3015
  %v3401 = vpop.f32.mrf.mxu0
  %v3402 = vadd.f32 0.0, %v3401
  %v3403 = vpop.f32.mrf.mxu0
  %3404 = vdwg.mxu0
  %v3405 = vadd.f32 %v2695, %v3087
  %v3406 = vadd.f32 %v2696, %v3092
  %v3407 = vadd.f32 %v2697, %v3097
  %v3408 = vadd.f32 %v2698, %v3102
  %v3409 = vadd.f32 %v2699, %v3107
  %v3410 = vadd.f32 %v2700, %v3112
  %v3411 = vadd.f32 %v2701, %v3117
  %v3412 = vadd.f32 %v2702, %v3122
  %v3413 = vadd.f32 %v2703, %v3127
  %v3414 = vadd.f32 %v2704, %v3132
  %v3415 = vadd.f32 %v2705, %v3137
  %v3416 = vadd.f32 %v2706, %v3142
  %v3417 = vadd.f32 %v2707, %v3147
  %v3418 = vadd.f32 %v2708, %v3152
  %v3419 = vadd.f32 %v2709, %v3157
  %v3420 = vadd.f32 %v2710, %v3162
  %v3421 = vadd.f32 %v2711, %v3167
  %v3422 = vadd.f32 %v2712, %v3172
  %v3423 = vadd.f32 %v2713, %v3177
  %v3424 = vadd.f32 %v2714, %v3182
  %v3425 = vadd.f32 %v2715, %v3187
  %v3426 = vadd.f32 %v2716, %v3192
  %v3427 = vadd.f32 %v2717, %v3197
  %v3428 = vadd.f32 %v2718, %v3202
  %v3429 = vadd.f32 %v2719, %v3207
  %v3430 = vadd.f32 %v2720, %v3212
  %v3431 = vadd.f32 %v2721, %v3217
  %v3432 = vadd.f32 %v2722, %v3222
  %v3433 = vadd.f32 %v2723, %v3227
  %v3434 = vadd.f32 %v2724, %v3232
  %v3435 = vadd.f32 %v2725, %v3237
  %v3436 = vadd.f32 %v2726, %v3242
  %v3437 = vadd.f32 %v2727, %v3247
  %v3438 = vadd.f32 %v2728, %v3252
  %v3439 = vadd.f32 %v2729, %v3257
  %v3440 = vadd.f32 %v2730, %v3262
  %v3441 = vadd.f32 %v2731, %v3267
  %v3442 = vadd.f32 %v2732, %v3272
  %v3443 = vadd.f32 %v2733, %v3277
  %v3444 = vadd.f32 %v2734, %v3282
  %v3445 = vadd.f32 %v2735, %v3287
  %v3446 = vadd.f32 %v2736, %v3292
  %v3447 = vadd.f32 %v2737, %v3297
  %v3448 = vadd.f32 %v2738, %v3302
  %v3449 = vadd.f32 %v2739, %v3307
  %v3450 = vadd.f32 %v2740, %v3312
  %v3451 = vadd.f32 %v2741, %v3317
  %v3452 = vadd.f32 %v2742, %v3322
  %v3453 = vadd.f32 %v2743, %v3327
  %v3454 = vadd.f32 %v2744, %v3332
  %v3455 = vadd.f32 %v2745, %v3337
  %v3456 = vadd.f32 %v2746, %v3342
  %v3457 = vadd.f32 %v2747, %v3347
  %v3458 = vadd.f32 %v2748, %v3352
  %v3459 = vadd.f32 %v2749, %v3357
  %v3460 = vadd.f32 %v2750, %v3362
  %v3461 = vadd.f32 %v2751, %v3367
  %v3462 = vadd.f32 %v2752, %v3372
  %v3463 = vadd.f32 %v2753, %v3377
  %v3464 = vadd.f32 %v2754, %v3382
  %v3465 = vadd.f32 %v2755, %v3387
  %v3466 = vadd.f32 %v2756, %v3392
  %v3467 = vadd.f32 %v2757, %v3397
  %v3468 = vadd.f32 %v2758, %v3402
  %v3469 = vld [vmem:[%s2048 + $0x2] sm:$0xff]
  %v3470 = vld [vmem:[%s2048 + $0xa] sm:$0xff]
  %v3471 = vld [vmem:[%s2048 + $0x1a] sm:$0xff]
  %v3472 = vld [vmem:[%s2048 + $0x22] sm:$0xff]
  %v3473 = vld [vmem:[%s2048 + $0x32] sm:$0xff]
  %v3474 = vld [vmem:[%s2048 + $0x3a] sm:$0xff]
  %v3475 = vld [vmem:[%s2048 + $0x4a] sm:$0xff]
  %v3476 = vld [vmem:[%s2048 + $0x52] sm:$0xff]
  %v3477 = vld [vmem:[%s2048 + $0x62] sm:$0xff]
  %v3478 = vld [vmem:[%s2048 + $0x6a] sm:$0xff]
  %v3479 = vld [vmem:[%s2048 + $0x7a] sm:$0xff]
  %v3480 = vld [vmem:[%s2048 + $0x82] sm:$0xff]
  %v3481 = vld [vmem:[%s2048 + $0x92] sm:$0xff]
  %v3482 = vld [vmem:[%s2048 + $0x9a] sm:$0xff]
  %v3483 = vld [vmem:[%s2048 + $0xaa] sm:$0xff]
  %v3484 = vld [vmem:[%s2048 + $0xb2] sm:$0xff]
  %v3485 = vld [vmem:[%s2048 + $0xc2] sm:$0xff]
  %v3486 = vld [vmem:[%s2048 + $0xca] sm:$0xff]
  %v3487 = vld [vmem:[%s2048 + $0xda] sm:$0xff]
  %v3488 = vld [vmem:[%s2048 + $0xe2] sm:$0xff]
  %v3489 = vld [vmem:[%s2048 + $0xf2] sm:$0xff]
  %v3490 = vld [vmem:[%s2048 + $0xfa] sm:$0xff]
  %v3491 = vld [vmem:[%s2048 + $0x10a] sm:$0xff]
  %v3492 = vld [vmem:[%s2048 + $0x112] sm:$0xff]
  %v3493 = vld [vmem:[%s2048 + $0x122] sm:$0xff]
  %v3494 = vld [vmem:[%s2048 + $0x12a] sm:$0xff]
  %v3495 = vld [vmem:[%s2048 + $0x13a] sm:$0xff]
  %v3496 = vld [vmem:[%s2048 + $0x142] sm:$0xff]
  %v3497 = vld [vmem:[%s2048 + $0x152] sm:$0xff]
  %v3498 = vld [vmem:[%s2048 + $0x15a] sm:$0xff]
  %v3499 = vld [vmem:[%s2048 + $0x16a] sm:$0xff]
  %v3500 = vld [vmem:[%s2048 + $0x172] sm:$0xff]
  %v3501 = vld [vmem:[%s2048 + $0x1b2] sm:$0xff]
  %v3502 = vld [vmem:[%s2048 + $0x1ba] sm:$0xff]
  %v3503 = vld [vmem:[%s2048 + $0x1ca] sm:$0xff]
  %v3504 = vld [vmem:[%s2048 + $0x1d2] sm:$0xff]
  %v3505 = vld [vmem:[%s2048 + $0x1e2] sm:$0xff]
  %v3506 = vld [vmem:[%s2048 + $0x1ea] sm:$0xff]
  %v3507 = vld [vmem:[%s2048 + $0x1fa] sm:$0xff]
  %v3508 = vld [vmem:[%s2048 + $0x202] sm:$0xff]
  %v3509 = vld [vmem:[%s2048 + $0x212] sm:$0xff]
  %v3510 = vld [vmem:[%s2048 + $0x21a] sm:$0xff]
  %v3511 = vld [vmem:[%s2048 + $0x22a] sm:$0xff]
  %v3512 = vld [vmem:[%s2048 + $0x232] sm:$0xff]
  %v3513 = vld [vmem:[%s2048 + $0x242] sm:$0xff]
  %v3514 = vld [vmem:[%s2048 + $0x24a] sm:$0xff]
  %v3515 = vld [vmem:[%s2048 + $0x25a] sm:$0xff]
  %v3516 = vld [vmem:[%s2048 + $0x262] sm:$0xff]
  %v3517 = vld [vmem:[%s2048 + $0x272] sm:$0xff]
  %v3518 = vld [vmem:[%s2048 + $0x27a] sm:$0xff]
  %v3519 = vld [vmem:[%s2048 + $0x28a] sm:$0xff]
  %v3520 = vld [vmem:[%s2048 + $0x292] sm:$0xff]
  %v3521 = vld [vmem:[%s2048 + $0x2a2] sm:$0xff]
  %v3522 = vld [vmem:[%s2048 + $0x2aa] sm:$0xff]
  %v3523 = vld [vmem:[%s2048 + $0x2ba] sm:$0xff]
  %v3524 = vld [vmem:[%s2048 + $0x2c2] sm:$0xff]
  %v3525 = vld [vmem:[%s2048 + $0x2d2] sm:$0xff]
  %v3526 = vld [vmem:[%s2048 + $0x2da] sm:$0xff]
  %v3527 = vld [vmem:[%s2048 + $0x2ea] sm:$0xff]
  %v3528 = vld [vmem:[%s2048 + $0x2f2] sm:$0xff]
  %v3529 = vld [vmem:[%s2048 + $0x302] sm:$0xff]
  %v3530 = vld [vmem:[%s2048 + $0x30a] sm:$0xff]
  %v3531 = vld [vmem:[%s2048 + $0x31a] sm:$0xff]
  %v3532 = vld [vmem:[%s2048 + $0x322] sm:$0xff]
  %s3533 = scalar_lea.vmem %s1, 20
  %v3534 = vld [vmem:[%s3533] sm:$0x7]
  %v3536 = vsel %vm176, %v3469, 0
  %v3539 = vsel %vm176, %v3470, 0
  %v3542 = vsel %vm176, %v3471, 0
  %v3545 = vsel %vm176, %v3472, 0
  %v3548 = vsel %vm176, %v3473, 0
  %v3551 = vsel %vm176, %v3474, 0
  %v3554 = vsel %vm176, %v3475, 0
  %v3557 = vsel %vm176, %v3476, 0
  %v3560 = vsel %vm176, %v3477, 0
  %v3563 = vsel %vm176, %v3478, 0
  %v3566 = vsel %vm176, %v3479, 0
  %v3569 = vsel %vm176, %v3480, 0
  %v3572 = vsel %vm176, %v3481, 0
  %v3575 = vsel %vm176, %v3482, 0
  %v3578 = vsel %vm176, %v3483, 0
  %v3581 = vsel %vm176, %v3484, 0
  %v3584 = vsel %vm176, %v3485, 0
  %v3587 = vsel %vm176, %v3486, 0
  %v3590 = vsel %vm176, %v3487, 0
  %v3593 = vsel %vm176, %v3488, 0
  %v3596 = vsel %vm176, %v3489, 0
  %v3599 = vsel %vm176, %v3490, 0
  %v3602 = vsel %vm176, %v3491, 0
  %v3605 = vsel %vm176, %v3492, 0
  %v3608 = vsel %vm176, %v3493, 0
  %v3611 = vsel %vm176, %v3494, 0
  %v3614 = vsel %vm176, %v3495, 0
  %v3617 = vsel %vm176, %v3496, 0
  %v3620 = vsel %vm176, %v3497, 0
  %v3623 = vsel %vm176, %v3498, 0
  %v3626 = vsel %vm176, %v3499, 0
  %v3629 = vsel %vm176, %v3500, 0
  %v3632 = vsel %vm176, %v3501, 0
  %v3635 = vsel %vm176, %v3502, 0
  %v3638 = vsel %vm176, %v3503, 0
  %v3641 = vsel %vm176, %v3504, 0
  %v3644 = vsel %vm176, %v3505, 0
  %v3647 = vsel %vm176, %v3506, 0
  %v3650 = vsel %vm176, %v3507, 0
  %v3653 = vsel %vm176, %v3508, 0
  %v3656 = vsel %vm176, %v3509, 0
  %v3659 = vsel %vm176, %v3510, 0
  %v3662 = vsel %vm176, %v3511, 0
  %v3665 = vsel %vm176, %v3512, 0
  %v3668 = vsel %vm176, %v3513, 0
  %v3671 = vsel %vm176, %v3514, 0
  %v3674 = vsel %vm176, %v3515, 0
  %v3677 = vsel %vm176, %v3516, 0
  %v3680 = vsel %vm176, %v3517, 0
  %v3683 = vsel %vm176, %v3518, 0
  %v3686 = vsel %vm176, %v3519, 0
  %v3689 = vsel %vm176, %v3520, 0
  %v3692 = vsel %vm176, %v3521, 0
  %v3695 = vsel %vm176, %v3522, 0
  %v3698 = vsel %vm176, %v3523, 0
  %v3701 = vsel %vm176, %v3524, 0
  %v3704 = vsel %vm176, %v3525, 0
  %v3707 = vsel %vm176, %v3526, 0
  %v3710 = vsel %vm176, %v3527, 0
  %v3713 = vsel %vm176, %v3528, 0
  %v3716 = vsel %vm176, %v3529, 0
  %v3719 = vsel %vm176, %v3530, 0
  %v3722 = vsel %vm176, %v3531, 0
  %v3725 = vsel %vm176, %v3532, 0
  %v3728 = vsel %vm369, %v3534, 0
  %3730 = vmatprep.subr.mxu0 0.0
  %3731 = vmatpush1.msra.mxu0 0.0
  %3732 = vmatprep.subr.mxu0 0.0
  %3733 = vmatpush1.msra.mxu0 0.0
  %3734 = vmatprep.subr.mxu0 0.0
  %3735 = vmatpush1.msra.mxu0 0.0
  %3736 = vmatprep.subr.mxu0 0.0
  %3737 = vmatpush1.msra.mxu0 0.0
  %3738 = vmatprep.subr.mxu0 0.0
  %3739 = vmatpush1.msra.mxu0 0.0
  %3740 = vmatprep.subr.mxu0 0.0
  %3741 = vmatpush1.msra.mxu0 0.0
  %3742 = vmatprep.subr.mxu0 0.0
  %3743 = vmatpush1.msra.mxu0 0.0
  %3744 = vmatprep.subr.mxu0 0.0
  %3745 = vmatpush1.msra.mxu0 0.0
  %3746 = vmatprep.subr.mxu0 0.0
  %3747 = vmatpush1.msra.mxu0 0.0
  %3748 = vmatprep.subr.mxu0 0.0
  %3749 = vmatpush1.msra.mxu0 0.0
  %3750 = vmatprep.subr.mxu0 0.0
  %3751 = vmatpush1.msra.mxu0 0.0
  %3752 = vmatprep.subr.mxu0 0.0
  %3753 = vmatpush1.msra.mxu0 0.0
  %3754 = vmatprep.subr.mxu0 0.0
  %3755 = vmatpush1.msra.mxu0 0.0
  %3756 = vmatprep.subr.mxu0 0.0
  %3757 = vmatpush1.msra.mxu0 0.0
  %3758 = vmatprep.subr.mxu0 0.0
  %3759 = vmatpush1.msra.mxu0 0.0
  %3760 = vmatprep.subr.mxu0 0.0
  %3761 = vmatpush1.msra.mxu0 %v3728
  %3762 = vmatprep.subr.mxu0 0.0
  %3763 = vmatpush2.msra.mxu0 0.0
  %3764 = vmatprep.subr.mxu0 0.0
  %3765 = vmatpush2.msra.mxu0 0.0
  %3766 = vmatprep.subr.mxu0 0.0
  %3767 = vmatpush2.msra.mxu0 0.0
  %3768 = vmatprep.subr.mxu0 0.0
  %3769 = vmatpush2.msra.mxu0 0.0
  %3770 = vmatprep.subr.mxu0 0.0
  %3771 = vmatpush2.msra.mxu0 0.0
  %3772 = vmatprep.subr.mxu0 0.0
  %3773 = vmatpush2.msra.mxu0 0.0
  %3774 = vmatprep.subr.mxu0 0.0
  %3775 = vmatpush2.msra.mxu0 0.0
  %3776 = vmatprep.subr.mxu0 0.0
  %3777 = vmatpush2.msra.mxu0 0.0
  %3778 = vmatprep.subr.mxu0 0.0
  %3779 = vmatpush2.msra.mxu0 0.0
  %3780 = vmatprep.subr.mxu0 0.0
  %3781 = vmatpush2.msra.mxu0 0.0
  %3782 = vmatprep.subr.mxu0 0.0
  %3783 = vmatpush2.msra.mxu0 0.0
  %3784 = vmatprep.subr.mxu0 0.0
  %3785 = vmatpush2.msra.mxu0 0.0
  %3786 = vmatprep.subr.mxu0 0.0
  %3787 = vmatpush2.msra.mxu0 0.0
  %3788 = vmatprep.subr.mxu0 0.0
  %3789 = vmatpush2.msra.mxu0 0.0
  %3790 = vmatprep.subr.mxu0 0.0
  %3791 = vmatpush2.msra.mxu0 0.0
  %3792 = vmatprep.subr.mxu0 0.0
  %3793 = vmatpush2.msra.mxu0 0.0
  %3794 = vmatprep.mubr.f32.mxu0 0.0
  %3795 = vmatmul.mubr.f32.gmra.mxu0 %v3536
  %v3796 = vpop.f32.mrf.mxu0
  %v3797 = vadd.f32 0.0, %v3796
  %v3798 = vpop.f32.mrf.mxu0
  %3799 = vmatprep.mubr.f32.mxu0 0.0
  %3800 = vmatmul.mubr.f32.gmra.mxu0 %v3539
  %v3801 = vpop.f32.mrf.mxu0
  %v3802 = vadd.f32 0.0, %v3801
  %v3803 = vpop.f32.mrf.mxu0
  %3804 = vmatprep.mubr.f32.mxu0 0.0
  %3805 = vmatmul.mubr.f32.gmra.mxu0 %v3542
  %v3806 = vpop.f32.mrf.mxu0
  %v3807 = vadd.f32 0.0, %v3806
  %v3808 = vpop.f32.mrf.mxu0
  %3809 = vmatprep.mubr.f32.mxu0 0.0
  %3810 = vmatmul.mubr.f32.gmra.mxu0 %v3545
  %v3811 = vpop.f32.mrf.mxu0
  %v3812 = vadd.f32 0.0, %v3811
  %v3813 = vpop.f32.mrf.mxu0
  %3814 = vmatprep.mubr.f32.mxu0 0.0
  %3815 = vmatmul.mubr.f32.gmra.mxu0 %v3548
  %v3816 = vpop.f32.mrf.mxu0
  %v3817 = vadd.f32 0.0, %v3816
  %v3818 = vpop.f32.mrf.mxu0
  %3819 = vmatprep.mubr.f32.mxu0 0.0
  %3820 = vmatmul.mubr.f32.gmra.mxu0 %v3551
  %v3821 = vpop.f32.mrf.mxu0
  %v3822 = vadd.f32 0.0, %v3821
  %v3823 = vpop.f32.mrf.mxu0
  %3824 = vmatprep.mubr.f32.mxu0 0.0
  %3825 = vmatmul.mubr.f32.gmra.mxu0 %v3554
  %v3826 = vpop.f32.mrf.mxu0
  %v3827 = vadd.f32 0.0, %v3826
  %v3828 = vpop.f32.mrf.mxu0
  %3829 = vmatprep.mubr.f32.mxu0 0.0
  %3830 = vmatmul.mubr.f32.gmra.mxu0 %v3557
  %v3831 = vpop.f32.mrf.mxu0
  %v3832 = vadd.f32 0.0, %v3831
  %v3833 = vpop.f32.mrf.mxu0
  %3834 = vmatprep.mubr.f32.mxu0 0.0
  %3835 = vmatmul.mubr.f32.gmra.mxu0 %v3560
  %v3836 = vpop.f32.mrf.mxu0
  %v3837 = vadd.f32 0.0, %v3836
  %v3838 = vpop.f32.mrf.mxu0
  %3839 = vmatprep.mubr.f32.mxu0 0.0
  %3840 = vmatmul.mubr.f32.gmra.mxu0 %v3563
  %v3841 = vpop.f32.mrf.mxu0
  %v3842 = vadd.f32 0.0, %v3841
  %v3843 = vpop.f32.mrf.mxu0
  %3844 = vmatprep.mubr.f32.mxu0 0.0
  %3845 = vmatmul.mubr.f32.gmra.mxu0 %v3566
  %v3846 = vpop.f32.mrf.mxu0
  %v3847 = vadd.f32 0.0, %v3846
  %v3848 = vpop.f32.mrf.mxu0
  %3849 = vmatprep.mubr.f32.mxu0 0.0
  %3850 = vmatmul.mubr.f32.gmra.mxu0 %v3569
  %v3851 = vpop.f32.mrf.mxu0
  %v3852 = vadd.f32 0.0, %v3851
  %v3853 = vpop.f32.mrf.mxu0
  %3854 = vmatprep.mubr.f32.mxu0 0.0
  %3855 = vmatmul.mubr.f32.gmra.mxu0 %v3572
  %v3856 = vpop.f32.mrf.mxu0
  %v3857 = vadd.f32 0.0, %v3856
  %v3858 = vpop.f32.mrf.mxu0
  %3859 = vmatprep.mubr.f32.mxu0 0.0
  %3860 = vmatmul.mubr.f32.gmra.mxu0 %v3575
  %v3861 = vpop.f32.mrf.mxu0
  %v3862 = vadd.f32 0.0, %v3861
  %v3863 = vpop.f32.mrf.mxu0
  %3864 = vmatprep.mubr.f32.mxu0 0.0
  %3865 = vmatmul.mubr.f32.gmra.mxu0 %v3578
  %v3866 = vpop.f32.mrf.mxu0
  %v3867 = vadd.f32 0.0, %v3866
  %v3868 = vpop.f32.mrf.mxu0
  %3869 = vmatprep.mubr.f32.mxu0 0.0
  %3870 = vmatmul.mubr.f32.gmra.mxu0 %v3581
  %v3871 = vpop.f32.mrf.mxu0
  %v3872 = vadd.f32 0.0, %v3871
  %v3873 = vpop.f32.mrf.mxu0
  %3874 = vmatprep.mubr.f32.mxu0 0.0
  %3875 = vmatmul.mubr.f32.gmra.mxu0 %v3584
  %v3876 = vpop.f32.mrf.mxu0
  %v3877 = vadd.f32 0.0, %v3876
  %v3878 = vpop.f32.mrf.mxu0
  %3879 = vmatprep.mubr.f32.mxu0 0.0
  %3880 = vmatmul.mubr.f32.gmra.mxu0 %v3587
  %v3881 = vpop.f32.mrf.mxu0
  %v3882 = vadd.f32 0.0, %v3881
  %v3883 = vpop.f32.mrf.mxu0
  %3884 = vmatprep.mubr.f32.mxu0 0.0
  %3885 = vmatmul.mubr.f32.gmra.mxu0 %v3590
  %v3886 = vpop.f32.mrf.mxu0
  %v3887 = vadd.f32 0.0, %v3886
  %v3888 = vpop.f32.mrf.mxu0
  %3889 = vmatprep.mubr.f32.mxu0 0.0
  %3890 = vmatmul.mubr.f32.gmra.mxu0 %v3593
  %v3891 = vpop.f32.mrf.mxu0
  %v3892 = vadd.f32 0.0, %v3891
  %v3893 = vpop.f32.mrf.mxu0
  %3894 = vmatprep.mubr.f32.mxu0 0.0
  %3895 = vmatmul.mubr.f32.gmra.mxu0 %v3596
  %v3896 = vpop.f32.mrf.mxu0
  %v3897 = vadd.f32 0.0, %v3896
  %v3898 = vpop.f32.mrf.mxu0
  %3899 = vmatprep.mubr.f32.mxu0 0.0
  %3900 = vmatmul.mubr.f32.gmra.mxu0 %v3599
  %v3901 = vpop.f32.mrf.mxu0
  %v3902 = vadd.f32 0.0, %v3901
  %v3903 = vpop.f32.mrf.mxu0
  %3904 = vmatprep.mubr.f32.mxu0 0.0
  %3905 = vmatmul.mubr.f32.gmra.mxu0 %v3602
  %v3906 = vpop.f32.mrf.mxu0
  %v3907 = vadd.f32 0.0, %v3906
  %v3908 = vpop.f32.mrf.mxu0
  %3909 = vmatprep.mubr.f32.mxu0 0.0
  %3910 = vmatmul.mubr.f32.gmra.mxu0 %v3605
  %v3911 = vpop.f32.mrf.mxu0
  %v3912 = vadd.f32 0.0, %v3911
  %v3913 = vpop.f32.mrf.mxu0
  %3914 = vmatprep.mubr.f32.mxu0 0.0
  %3915 = vmatmul.mubr.f32.gmra.mxu0 %v3608
  %v3916 = vpop.f32.mrf.mxu0
  %v3917 = vadd.f32 0.0, %v3916
  %v3918 = vpop.f32.mrf.mxu0
  %3919 = vmatprep.mubr.f32.mxu0 0.0
  %3920 = vmatmul.mubr.f32.gmra.mxu0 %v3611
  %v3921 = vpop.f32.mrf.mxu0
  %v3922 = vadd.f32 0.0, %v3921
  %v3923 = vpop.f32.mrf.mxu0
  %3924 = vmatprep.mubr.f32.mxu0 0.0
  %3925 = vmatmul.mubr.f32.gmra.mxu0 %v3614
  %v3926 = vpop.f32.mrf.mxu0
  %v3927 = vadd.f32 0.0, %v3926
  %v3928 = vpop.f32.mrf.mxu0
  %3929 = vmatprep.mubr.f32.mxu0 0.0
  %3930 = vmatmul.mubr.f32.gmra.mxu0 %v3617
  %v3931 = vpop.f32.mrf.mxu0
  %v3932 = vadd.f32 0.0, %v3931
  %v3933 = vpop.f32.mrf.mxu0
  %3934 = vmatprep.mubr.f32.mxu0 0.0
  %3935 = vmatmul.mubr.f32.gmra.mxu0 %v3620
  %v3936 = vpop.f32.mrf.mxu0
  %v3937 = vadd.f32 0.0, %v3936
  %v3938 = vpop.f32.mrf.mxu0
  %3939 = vmatprep.mubr.f32.mxu0 0.0
  %3940 = vmatmul.mubr.f32.gmra.mxu0 %v3623
  %v3941 = vpop.f32.mrf.mxu0
  %v3942 = vadd.f32 0.0, %v3941
  %v3943 = vpop.f32.mrf.mxu0
  %3944 = vmatprep.mubr.f32.mxu0 0.0
  %3945 = vmatmul.mubr.f32.gmra.mxu0 %v3626
  %v3946 = vpop.f32.mrf.mxu0
  %v3947 = vadd.f32 0.0, %v3946
  %v3948 = vpop.f32.mrf.mxu0
  %3949 = vmatprep.mubr.f32.mxu0 0.0
  %3950 = vmatmul.mubr.f32.gmra.mxu0 %v3629
  %v3951 = vpop.f32.mrf.mxu0
  %v3952 = vadd.f32 0.0, %v3951
  %v3953 = vpop.f32.mrf.mxu0
  %3954 = vmatprep.mubr.f32.mxu0 0.0
  %3955 = vmatmul.mubr.f32.gmra.mxu0 %v3632
  %v3956 = vpop.f32.mrf.mxu0
  %v3957 = vadd.f32 0.0, %v3956
  %v3958 = vpop.f32.mrf.mxu0
  %3959 = vmatprep.mubr.f32.mxu0 0.0
  %3960 = vmatmul.mubr.f32.gmra.mxu0 %v3635
  %v3961 = vpop.f32.mrf.mxu0
  %v3962 = vadd.f32 0.0, %v3961
  %v3963 = vpop.f32.mrf.mxu0
  %3964 = vmatprep.mubr.f32.mxu0 0.0
  %3965 = vmatmul.mubr.f32.gmra.mxu0 %v3638
  %v3966 = vpop.f32.mrf.mxu0
  %v3967 = vadd.f32 0.0, %v3966
  %v3968 = vpop.f32.mrf.mxu0
  %3969 = vmatprep.mubr.f32.mxu0 0.0
  %3970 = vmatmul.mubr.f32.gmra.mxu0 %v3641
  %v3971 = vpop.f32.mrf.mxu0
  %v3972 = vadd.f32 0.0, %v3971
  %v3973 = vpop.f32.mrf.mxu0
  %3974 = vmatprep.mubr.f32.mxu0 0.0
  %3975 = vmatmul.mubr.f32.gmra.mxu0 %v3644
  %v3976 = vpop.f32.mrf.mxu0
  %v3977 = vadd.f32 0.0, %v3976
  %v3978 = vpop.f32.mrf.mxu0
  %3979 = vmatprep.mubr.f32.mxu0 0.0
  %3980 = vmatmul.mubr.f32.gmra.mxu0 %v3647
  %v3981 = vpop.f32.mrf.mxu0
  %v3982 = vadd.f32 0.0, %v3981
  %v3983 = vpop.f32.mrf.mxu0
  %3984 = vmatprep.mubr.f32.mxu0 0.0
  %3985 = vmatmul.mubr.f32.gmra.mxu0 %v3650
  %v3986 = vpop.f32.mrf.mxu0
  %v3987 = vadd.f32 0.0, %v3986
  %v3988 = vpop.f32.mrf.mxu0
  %3989 = vmatprep.mubr.f32.mxu0 0.0
  %3990 = vmatmul.mubr.f32.gmra.mxu0 %v3653
  %v3991 = vpop.f32.mrf.mxu0
  %v3992 = vadd.f32 0.0, %v3991
  %v3993 = vpop.f32.mrf.mxu0
  %3994 = vmatprep.mubr.f32.mxu0 0.0
  %3995 = vmatmul.mubr.f32.gmra.mxu0 %v3656
  %v3996 = vpop.f32.mrf.mxu0
  %v3997 = vadd.f32 0.0, %v3996
  %v3998 = vpop.f32.mrf.mxu0
  %3999 = vmatprep.mubr.f32.mxu0 0.0
  %4000 = vmatmul.mubr.f32.gmra.mxu0 %v3659
  %v4001 = vpop.f32.mrf.mxu0
  %v4002 = vadd.f32 0.0, %v4001
  %v4003 = vpop.f32.mrf.mxu0
  %4004 = vmatprep.mubr.f32.mxu0 0.0
  %4005 = vmatmul.mubr.f32.gmra.mxu0 %v3662
  %v4006 = vpop.f32.mrf.mxu0
  %v4007 = vadd.f32 0.0, %v4006
  %v4008 = vpop.f32.mrf.mxu0
  %4009 = vmatprep.mubr.f32.mxu0 0.0
  %4010 = vmatmul.mubr.f32.gmra.mxu0 %v3665
  %v4011 = vpop.f32.mrf.mxu0
  %v4012 = vadd.f32 0.0, %v4011
  %v4013 = vpop.f32.mrf.mxu0
  %4014 = vmatprep.mubr.f32.mxu0 0.0
  %4015 = vmatmul.mubr.f32.gmra.mxu0 %v3668
  %v4016 = vpop.f32.mrf.mxu0
  %v4017 = vadd.f32 0.0, %v4016
  %v4018 = vpop.f32.mrf.mxu0
  %4019 = vmatprep.mubr.f32.mxu0 0.0
  %4020 = vmatmul.mubr.f32.gmra.mxu0 %v3671
  %v4021 = vpop.f32.mrf.mxu0
  %v4022 = vadd.f32 0.0, %v4021
  %v4023 = vpop.f32.mrf.mxu0
  %4024 = vmatprep.mubr.f32.mxu0 0.0
  %4025 = vmatmul.mubr.f32.gmra.mxu0 %v3674
  %v4026 = vpop.f32.mrf.mxu0
  %v4027 = vadd.f32 0.0, %v4026
  %v4028 = vpop.f32.mrf.mxu0
  %4029 = vmatprep.mubr.f32.mxu0 0.0
  %4030 = vmatmul.mubr.f32.gmra.mxu0 %v3677
  %v4031 = vpop.f32.mrf.mxu0
  %v4032 = vadd.f32 0.0, %v4031
  %v4033 = vpop.f32.mrf.mxu0
  %4034 = vmatprep.mubr.f32.mxu0 0.0
  %4035 = vmatmul.mubr.f32.gmra.mxu0 %v3680
  %v4036 = vpop.f32.mrf.mxu0
  %v4037 = vadd.f32 0.0, %v4036
  %v4038 = vpop.f32.mrf.mxu0
  %4039 = vmatprep.mubr.f32.mxu0 0.0
  %4040 = vmatmul.mubr.f32.gmra.mxu0 %v3683
  %v4041 = vpop.f32.mrf.mxu0
  %v4042 = vadd.f32 0.0, %v4041
  %v4043 = vpop.f32.mrf.mxu0
  %4044 = vmatprep.mubr.f32.mxu0 0.0
  %4045 = vmatmul.mubr.f32.gmra.mxu0 %v3686
  %v4046 = vpop.f32.mrf.mxu0
  %v4047 = vadd.f32 0.0, %v4046
  %v4048 = vpop.f32.mrf.mxu0
  %4049 = vmatprep.mubr.f32.mxu0 0.0
  %4050 = vmatmul.mubr.f32.gmra.mxu0 %v3689
  %v4051 = vpop.f32.mrf.mxu0
  %v4052 = vadd.f32 0.0, %v4051
  %v4053 = vpop.f32.mrf.mxu0
  %4054 = vmatprep.mubr.f32.mxu0 0.0
  %4055 = vmatmul.mubr.f32.gmra.mxu0 %v3692
  %v4056 = vpop.f32.mrf.mxu0
  %v4057 = vadd.f32 0.0, %v4056
  %v4058 = vpop.f32.mrf.mxu0
  %4059 = vmatprep.mubr.f32.mxu0 0.0
  %4060 = vmatmul.mubr.f32.gmra.mxu0 %v3695
  %v4061 = vpop.f32.mrf.mxu0
  %v4062 = vadd.f32 0.0, %v4061
  %v4063 = vpop.f32.mrf.mxu0
  %4064 = vmatprep.mubr.f32.mxu0 0.0
  %4065 = vmatmul.mubr.f32.gmra.mxu0 %v3698
  %v4066 = vpop.f32.mrf.mxu0
  %v4067 = vadd.f32 0.0, %v4066
  %v4068 = vpop.f32.mrf.mxu0
  %4069 = vmatprep.mubr.f32.mxu0 0.0
  %4070 = vmatmul.mubr.f32.gmra.mxu0 %v3701
  %v4071 = vpop.f32.mrf.mxu0
  %v4072 = vadd.f32 0.0, %v4071
  %v4073 = vpop.f32.mrf.mxu0
  %4074 = vmatprep.mubr.f32.mxu0 0.0
  %4075 = vmatmul.mubr.f32.gmra.mxu0 %v3704
  %v4076 = vpop.f32.mrf.mxu0
  %v4077 = vadd.f32 0.0, %v4076
  %v4078 = vpop.f32.mrf.mxu0
  %4079 = vmatprep.mubr.f32.mxu0 0.0
  %4080 = vmatmul.mubr.f32.gmra.mxu0 %v3707
  %v4081 = vpop.f32.mrf.mxu0
  %v4082 = vadd.f32 0.0, %v4081
  %v4083 = vpop.f32.mrf.mxu0
  %4084 = vmatprep.mubr.f32.mxu0 0.0
  %4085 = vmatmul.mubr.f32.gmra.mxu0 %v3710
  %v4086 = vpop.f32.mrf.mxu0
  %v4087 = vadd.f32 0.0, %v4086
  %v4088 = vpop.f32.mrf.mxu0
  %4089 = vmatprep.mubr.f32.mxu0 0.0
  %4090 = vmatmul.mubr.f32.gmra.mxu0 %v3713
  %v4091 = vpop.f32.mrf.mxu0
  %v4092 = vadd.f32 0.0, %v4091
  %v4093 = vpop.f32.mrf.mxu0
  %4094 = vmatprep.mubr.f32.mxu0 0.0
  %4095 = vmatmul.mubr.f32.gmra.mxu0 %v3716
  %v4096 = vpop.f32.mrf.mxu0
  %v4097 = vadd.f32 0.0, %v4096
  %v4098 = vpop.f32.mrf.mxu0
  %4099 = vmatprep.mubr.f32.mxu0 0.0
  %4100 = vmatmul.mubr.f32.gmra.mxu0 %v3719
  %v4101 = vpop.f32.mrf.mxu0
  %v4102 = vadd.f32 0.0, %v4101
  %v4103 = vpop.f32.mrf.mxu0
  %4104 = vmatprep.mubr.f32.mxu0 0.0
  %4105 = vmatmul.mubr.f32.gmra.mxu0 %v3722
  %v4106 = vpop.f32.mrf.mxu0
  %v4107 = vadd.f32 0.0, %v4106
  %v4108 = vpop.f32.mrf.mxu0
  %4109 = vmatprep.mubr.f32.mxu0 0.0
  %4110 = vmatmul.mubr.f32.gmra.mxu0 %v3725
  %v4111 = vpop.f32.mrf.mxu0
  %v4112 = vadd.f32 0.0, %v4111
  %v4113 = vpop.f32.mrf.mxu0
  %4114 = vdwg.mxu0
  %v4115 = vadd.f32 %v3405, %v3797
  %v4116 = vadd.f32 %v3406, %v3802
  %v4117 = vadd.f32 %v3407, %v3807
  %v4118 = vadd.f32 %v3408, %v3812
  %v4119 = vadd.f32 %v3409, %v3817
  %v4120 = vadd.f32 %v3410, %v3822
  %v4121 = vadd.f32 %v3411, %v3827
  %v4122 = vadd.f32 %v3412, %v3832
  %v4123 = vadd.f32 %v3413, %v3837
  %v4124 = vadd.f32 %v3414, %v3842
  %v4125 = vadd.f32 %v3415, %v3847
  %v4126 = vadd.f32 %v3416, %v3852
  %v4127 = vadd.f32 %v3417, %v3857
  %v4128 = vadd.f32 %v3418, %v3862
  %v4129 = vadd.f32 %v3419, %v3867
  %v4130 = vadd.f32 %v3420, %v3872
  %v4131 = vadd.f32 %v3421, %v3877
  %v4132 = vadd.f32 %v3422, %v3882
  %v4133 = vadd.f32 %v3423, %v3887
  %v4134 = vadd.f32 %v3424, %v3892
  %v4135 = vadd.f32 %v3425, %v3897
  %v4136 = vadd.f32 %v3426, %v3902
  %v4137 = vadd.f32 %v3427, %v3907
  %v4138 = vadd.f32 %v3428, %v3912
  %v4139 = vadd.f32 %v3429, %v3917
  %v4140 = vadd.f32 %v3430, %v3922
  %v4141 = vadd.f32 %v3431, %v3927
  %v4142 = vadd.f32 %v3432, %v3932
  %v4143 = vadd.f32 %v3433, %v3937
  %v4144 = vadd.f32 %v3434, %v3942
  %v4145 = vadd.f32 %v3435, %v3947
  %v4146 = vadd.f32 %v3436, %v3952
  %v4147 = vadd.f32 %v3437, %v3957
  %v4148 = vadd.f32 %v3438, %v3962
  %v4149 = vadd.f32 %v3439, %v3967
  %v4150 = vadd.f32 %v3440, %v3972
  %v4151 = vadd.f32 %v3441, %v3977
  %v4152 = vadd.f32 %v3442, %v3982
  %v4153 = vadd.f32 %v3443, %v3987
  %v4154 = vadd.f32 %v3444, %v3992
  %v4155 = vadd.f32 %v3445, %v3997
  %v4156 = vadd.f32 %v3446, %v4002
  %v4157 = vadd.f32 %v3447, %v4007
  %v4158 = vadd.f32 %v3448, %v4012
  %v4159 = vadd.f32 %v3449, %v4017
  %v4160 = vadd.f32 %v3450, %v4022
  %v4161 = vadd.f32 %v3451, %v4027
  %v4162 = vadd.f32 %v3452, %v4032
  %v4163 = vadd.f32 %v3453, %v4037
  %v4164 = vadd.f32 %v3454, %v4042
  %v4165 = vadd.f32 %v3455, %v4047
  %v4166 = vadd.f32 %v3456, %v4052
  %v4167 = vadd.f32 %v3457, %v4057
  %v4168 = vadd.f32 %v3458, %v4062
  %v4169 = vadd.f32 %v3459, %v4067
  %v4170 = vadd.f32 %v3460, %v4072
  %v4171 = vadd.f32 %v3461, %v4077
  %v4172 = vadd.f32 %v3462, %v4082
  %v4173 = vadd.f32 %v3463, %v4087
  %v4174 = vadd.f32 %v3464, %v4092
  %v4175 = vadd.f32 %v3465, %v4097
  %v4176 = vadd.f32 %v3466, %v4102
  %v4177 = vadd.f32 %v3467, %v4107
  %v4178 = vadd.f32 %v3468, %v4112
  %s4179 = scalar_lea.vmem %s0, 48
  %v4180 = vld [vmem:[%s4179] sm:$0xff]
  %v4181 = vld [vmem:[%s4179 + $0x8] sm:$0xff]
  %v4182 = vld [vmem:[%s4179 + $0x18] sm:$0xff]
  %v4183 = vld [vmem:[%s4179 + $0x20] sm:$0xff]
  %v4184 = vld [vmem:[%s4179 + $0x30] sm:$0xff]
  %v4185 = vld [vmem:[%s4179 + $0x38] sm:$0xff]
  %v4186 = vld [vmem:[%s4179 + $0x48] sm:$0xff]
  %v4187 = vld [vmem:[%s4179 + $0x50] sm:$0xff]
  %v4188 = vld [vmem:[%s4179 + $0x60] sm:$0xff]
  %v4189 = vld [vmem:[%s4179 + $0x68] sm:$0xff]
  %v4190 = vld [vmem:[%s4179 + $0x78] sm:$0xff]
  %v4191 = vld [vmem:[%s4179 + $0x80] sm:$0xff]
  %v4192 = vld [vmem:[%s4179 + $0x90] sm:$0xff]
  %v4193 = vld [vmem:[%s4179 + $0x98] sm:$0xff]
  %v4194 = vld [vmem:[%s4179 + $0xa8] sm:$0xff]
  %v4195 = vld [vmem:[%s4179 + $0xb0] sm:$0xff]
  %v4196 = vld [vmem:[%s4179 + $0xc0] sm:$0xff]
  %v4197 = vld [vmem:[%s4179 + $0xc8] sm:$0xff]
  %v4198 = vld [vmem:[%s4179 + $0xd8] sm:$0xff]
  %v4199 = vld [vmem:[%s4179 + $0xe0] sm:$0xff]
  %v4200 = vld [vmem:[%s4179 + $0xf0] sm:$0xff]
  %v4201 = vld [vmem:[%s4179 + $0xf8] sm:$0xff]
  %v4202 = vld [vmem:[%s4179 + $0x108] sm:$0xff]
  %v4203 = vld [vmem:[%s4179 + $0x110] sm:$0xff]
  %v4204 = vld [vmem:[%s4179 + $0x120] sm:$0xff]
  %v4205 = vld [vmem:[%s4179 + $0x128] sm:$0xff]
  %v4206 = vld [vmem:[%s4179 + $0x138] sm:$0xff]
  %v4207 = vld [vmem:[%s4179 + $0x140] sm:$0xff]
  %v4208 = vld [vmem:[%s4179 + $0x150] sm:$0xff]
  %v4209 = vld [vmem:[%s4179 + $0x158] sm:$0xff]
  %v4210 = vld [vmem:[%s4179 + $0x168] sm:$0xff]
  %v4211 = vld [vmem:[%s4179 + $0x170] sm:$0xff]
  %v4212 = vld [vmem:[%s4179 + $0x1b0] sm:$0xff]
  %v4213 = vld [vmem:[%s4179 + $0x1b8] sm:$0xff]
  %v4214 = vld [vmem:[%s4179 + $0x1c8] sm:$0xff]
  %v4215 = vld [vmem:[%s4179 + $0x1d0] sm:$0xff]
  %v4216 = vld [vmem:[%s4179 + $0x1e0] sm:$0xff]
  %v4217 = vld [vmem:[%s4179 + $0x1e8] sm:$0xff]
  %v4218 = vld [vmem:[%s4179 + $0x1f8] sm:$0xff]
  %v4219 = vld [vmem:[%s4179 + $0x200] sm:$0xff]
  %v4220 = vld [vmem:[%s4179 + $0x210] sm:$0xff]
  %v4221 = vld [vmem:[%s4179 + $0x218] sm:$0xff]
  %v4222 = vld [vmem:[%s4179 + $0x228] sm:$0xff]
  %v4223 = vld [vmem:[%s4179 + $0x230] sm:$0xff]
  %v4224 = vld [vmem:[%s4179 + $0x240] sm:$0xff]
  %v4225 = vld [vmem:[%s4179 + $0x248] sm:$0xff]
  %v4226 = vld [vmem:[%s4179 + $0x258] sm:$0xff]
  %v4227 = vld [vmem:[%s4179 + $0x260] sm:$0xff]
  %v4228 = vld [vmem:[%s4179 + $0x270] sm:$0xff]
  %v4229 = vld [vmem:[%s4179 + $0x278] sm:$0xff]
  %v4230 = vld [vmem:[%s4179 + $0x288] sm:$0xff]
  %v4231 = vld [vmem:[%s4179 + $0x290] sm:$0xff]
  %v4232 = vld [vmem:[%s4179 + $0x2a0] sm:$0xff]
  %v4233 = vld [vmem:[%s4179 + $0x2a8] sm:$0xff]
  %v4234 = vld [vmem:[%s4179 + $0x2b8] sm:$0xff]
  %v4235 = vld [vmem:[%s4179 + $0x2c0] sm:$0xff]
  %v4236 = vld [vmem:[%s4179 + $0x2d0] sm:$0xff]
  %v4237 = vld [vmem:[%s4179 + $0x2d8] sm:$0xff]
  %v4238 = vld [vmem:[%s4179 + $0x2e8] sm:$0xff]
  %v4239 = vld [vmem:[%s4179 + $0x2f0] sm:$0xff]
  %v4240 = vld [vmem:[%s4179 + $0x300] sm:$0xff]
  %v4241 = vld [vmem:[%s4179 + $0x308] sm:$0xff]
  %v4242 = vld [vmem:[%s4179 + $0x318] sm:$0xff]
  %v4243 = vld [vmem:[%s4179 + $0x320] sm:$0xff]
  %s4244 = scalar_lea.vmem %s1, 24
  %v4245 = vld [vmem:[%s4244] sm:$0x7]
  %v4247 = vsel %vm176, %v4180, 0
  %v4250 = vsel %vm176, %v4181, 0
  %v4253 = vsel %vm176, %v4182, 0
  %v4256 = vsel %vm176, %v4183, 0
  %v4259 = vsel %vm176, %v4184, 0
  %v4262 = vsel %vm176, %v4185, 0
  %v4265 = vsel %vm176, %v4186, 0
  %v4268 = vsel %vm176, %v4187, 0
  %v4271 = vsel %vm176, %v4188, 0
  %v4274 = vsel %vm176, %v4189, 0
  %v4277 = vsel %vm176, %v4190, 0
  %v4280 = vsel %vm176, %v4191, 0
  %v4283 = vsel %vm176, %v4192, 0
  %v4286 = vsel %vm176, %v4193, 0
  %v4289 = vsel %vm176, %v4194, 0
  %v4292 = vsel %vm176, %v4195, 0
  %v4295 = vsel %vm176, %v4196, 0
  %v4298 = vsel %vm176, %v4197, 0
  %v4301 = vsel %vm176, %v4198, 0
  %v4304 = vsel %vm176, %v4199, 0
  %v4307 = vsel %vm176, %v4200, 0
  %v4310 = vsel %vm176, %v4201, 0
  %v4313 = vsel %vm176, %v4202, 0
  %v4316 = vsel %vm176, %v4203, 0
  %v4319 = vsel %vm176, %v4204, 0
  %v4322 = vsel %vm176, %v4205, 0
  %v4325 = vsel %vm176, %v4206, 0
  %v4328 = vsel %vm176, %v4207, 0
  %v4331 = vsel %vm176, %v4208, 0
  %v4334 = vsel %vm176, %v4209, 0
  %v4337 = vsel %vm176, %v4210, 0
  %v4340 = vsel %vm176, %v4211, 0
  %v4343 = vsel %vm176, %v4212, 0
  %v4346 = vsel %vm176, %v4213, 0
  %v4349 = vsel %vm176, %v4214, 0
  %v4352 = vsel %vm176, %v4215, 0
  %v4355 = vsel %vm176, %v4216, 0
  %v4358 = vsel %vm176, %v4217, 0
  %v4361 = vsel %vm176, %v4218, 0
  %v4364 = vsel %vm176, %v4219, 0
  %v4367 = vsel %vm176, %v4220, 0
  %v4370 = vsel %vm176, %v4221, 0
  %v4373 = vsel %vm176, %v4222, 0
  %v4376 = vsel %vm176, %v4223, 0
  %v4379 = vsel %vm176, %v4224, 0
  %v4382 = vsel %vm176, %v4225, 0
  %v4385 = vsel %vm176, %v4226, 0
  %v4388 = vsel %vm176, %v4227, 0
  %v4391 = vsel %vm176, %v4228, 0
  %v4394 = vsel %vm176, %v4229, 0
  %v4397 = vsel %vm176, %v4230, 0
  %v4400 = vsel %vm176, %v4231, 0
  %v4403 = vsel %vm176, %v4232, 0
  %v4406 = vsel %vm176, %v4233, 0
  %v4409 = vsel %vm176, %v4234, 0
  %v4412 = vsel %vm176, %v4235, 0
  %v4415 = vsel %vm176, %v4236, 0
  %v4418 = vsel %vm176, %v4237, 0
  %v4421 = vsel %vm176, %v4238, 0
  %v4424 = vsel %vm176, %v4239, 0
  %v4427 = vsel %vm176, %v4240, 0
  %v4430 = vsel %vm176, %v4241, 0
  %v4433 = vsel %vm176, %v4242, 0
  %v4436 = vsel %vm176, %v4243, 0
  %v4439 = vsel %vm369, %v4245, 0
  %4441 = vmatprep.subr.mxu0 0.0
  %4442 = vmatpush1.msra.mxu0 0.0
  %4443 = vmatprep.subr.mxu0 0.0
  %4444 = vmatpush1.msra.mxu0 0.0
  %4445 = vmatprep.subr.mxu0 0.0
  %4446 = vmatpush1.msra.mxu0 0.0
  %4447 = vmatprep.subr.mxu0 0.0
  %4448 = vmatpush1.msra.mxu0 0.0
  %4449 = vmatprep.subr.mxu0 0.0
  %4450 = vmatpush1.msra.mxu0 0.0
  %4451 = vmatprep.subr.mxu0 0.0
  %4452 = vmatpush1.msra.mxu0 0.0
  %4453 = vmatprep.subr.mxu0 0.0
  %4454 = vmatpush1.msra.mxu0 0.0
  %4455 = vmatprep.subr.mxu0 0.0
  %4456 = vmatpush1.msra.mxu0 0.0
  %4457 = vmatprep.subr.mxu0 0.0
  %4458 = vmatpush1.msra.mxu0 0.0
  %4459 = vmatprep.subr.mxu0 0.0
  %4460 = vmatpush1.msra.mxu0 0.0
  %4461 = vmatprep.subr.mxu0 0.0
  %4462 = vmatpush1.msra.mxu0 0.0
  %4463 = vmatprep.subr.mxu0 0.0
  %4464 = vmatpush1.msra.mxu0 0.0
  %4465 = vmatprep.subr.mxu0 0.0
  %4466 = vmatpush1.msra.mxu0 0.0
  %4467 = vmatprep.subr.mxu0 0.0
  %4468 = vmatpush1.msra.mxu0 0.0
  %4469 = vmatprep.subr.mxu0 0.0
  %4470 = vmatpush1.msra.mxu0 0.0
  %4471 = vmatprep.subr.mxu0 0.0
  %4472 = vmatpush1.msra.mxu0 %v4439
  %4473 = vmatprep.subr.mxu0 0.0
  %4474 = vmatpush2.msra.mxu0 0.0
  %4475 = vmatprep.subr.mxu0 0.0
  %4476 = vmatpush2.msra.mxu0 0.0
  %4477 = vmatprep.subr.mxu0 0.0
  %4478 = vmatpush2.msra.mxu0 0.0
  %4479 = vmatprep.subr.mxu0 0.0
  %4480 = vmatpush2.msra.mxu0 0.0
  %4481 = vmatprep.subr.mxu0 0.0
  %4482 = vmatpush2.msra.mxu0 0.0
  %4483 = vmatprep.subr.mxu0 0.0
  %4484 = vmatpush2.msra.mxu0 0.0
  %4485 = vmatprep.subr.mxu0 0.0
  %4486 = vmatpush2.msra.mxu0 0.0
  %4487 = vmatprep.subr.mxu0 0.0
  %4488 = vmatpush2.msra.mxu0 0.0
  %4489 = vmatprep.subr.mxu0 0.0
  %4490 = vmatpush2.msra.mxu0 0.0
  %4491 = vmatprep.subr.mxu0 0.0
  %4492 = vmatpush2.msra.mxu0 0.0
  %4493 = vmatprep.subr.mxu0 0.0
  %4494 = vmatpush2.msra.mxu0 0.0
  %4495 = vmatprep.subr.mxu0 0.0
  %4496 = vmatpush2.msra.mxu0 0.0
  %4497 = vmatprep.subr.mxu0 0.0
  %4498 = vmatpush2.msra.mxu0 0.0
  %4499 = vmatprep.subr.mxu0 0.0
  %4500 = vmatpush2.msra.mxu0 0.0
  %4501 = vmatprep.subr.mxu0 0.0
  %4502 = vmatpush2.msra.mxu0 0.0
  %4503 = vmatprep.subr.mxu0 0.0
  %4504 = vmatpush2.msra.mxu0 0.0
  %4505 = vmatprep.mubr.f32.mxu0 0.0
  %4506 = vmatmul.mubr.f32.gmra.mxu0 %v4247
  %v4507 = vpop.f32.mrf.mxu0
  %v4508 = vadd.f32 0.0, %v4507
  %v4509 = vpop.f32.mrf.mxu0
  %4510 = vmatprep.mubr.f32.mxu0 0.0
  %4511 = vmatmul.mubr.f32.gmra.mxu0 %v4250
  %v4512 = vpop.f32.mrf.mxu0
  %v4513 = vadd.f32 0.0, %v4512
  %v4514 = vpop.f32.mrf.mxu0
  %4515 = vmatprep.mubr.f32.mxu0 0.0
  %4516 = vmatmul.mubr.f32.gmra.mxu0 %v4253
  %v4517 = vpop.f32.mrf.mxu0
  %v4518 = vadd.f32 0.0, %v4517
  %v4519 = vpop.f32.mrf.mxu0
  %4520 = vmatprep.mubr.f32.mxu0 0.0
  %4521 = vmatmul.mubr.f32.gmra.mxu0 %v4256
  %v4522 = vpop.f32.mrf.mxu0
  %v4523 = vadd.f32 0.0, %v4522
  %v4524 = vpop.f32.mrf.mxu0
  %4525 = vmatprep.mubr.f32.mxu0 0.0
  %4526 = vmatmul.mubr.f32.gmra.mxu0 %v4259
  %v4527 = vpop.f32.mrf.mxu0
  %v4528 = vadd.f32 0.0, %v4527
  %v4529 = vpop.f32.mrf.mxu0
  %4530 = vmatprep.mubr.f32.mxu0 0.0
  %4531 = vmatmul.mubr.f32.gmra.mxu0 %v4262
  %v4532 = vpop.f32.mrf.mxu0
  %v4533 = vadd.f32 0.0, %v4532
  %v4534 = vpop.f32.mrf.mxu0
  %4535 = vmatprep.mubr.f32.mxu0 0.0
  %4536 = vmatmul.mubr.f32.gmra.mxu0 %v4265
  %v4537 = vpop.f32.mrf.mxu0
  %v4538 = vadd.f32 0.0, %v4537
  %v4539 = vpop.f32.mrf.mxu0
  %4540 = vmatprep.mubr.f32.mxu0 0.0
  %4541 = vmatmul.mubr.f32.gmra.mxu0 %v4268
  %v4542 = vpop.f32.mrf.mxu0
  %v4543 = vadd.f32 0.0, %v4542
  %v4544 = vpop.f32.mrf.mxu0
  %4545 = vmatprep.mubr.f32.mxu0 0.0
  %4546 = vmatmul.mubr.f32.gmra.mxu0 %v4271
  %v4547 = vpop.f32.mrf.mxu0
  %v4548 = vadd.f32 0.0, %v4547
  %v4549 = vpop.f32.mrf.mxu0
  %4550 = vmatprep.mubr.f32.mxu0 0.0
  %4551 = vmatmul.mubr.f32.gmra.mxu0 %v4274
  %v4552 = vpop.f32.mrf.mxu0
  %v4553 = vadd.f32 0.0, %v4552
  %v4554 = vpop.f32.mrf.mxu0
  %4555 = vmatprep.mubr.f32.mxu0 0.0
  %4556 = vmatmul.mubr.f32.gmra.mxu0 %v4277
  %v4557 = vpop.f32.mrf.mxu0
  %v4558 = vadd.f32 0.0, %v4557
  %v4559 = vpop.f32.mrf.mxu0
  %4560 = vmatprep.mubr.f32.mxu0 0.0
  %4561 = vmatmul.mubr.f32.gmra.mxu0 %v4280
  %v4562 = vpop.f32.mrf.mxu0
  %v4563 = vadd.f32 0.0, %v4562
  %v4564 = vpop.f32.mrf.mxu0
  %4565 = vmatprep.mubr.f32.mxu0 0.0
  %4566 = vmatmul.mubr.f32.gmra.mxu0 %v4283
  %v4567 = vpop.f32.mrf.mxu0
  %v4568 = vadd.f32 0.0, %v4567
  %v4569 = vpop.f32.mrf.mxu0
  %4570 = vmatprep.mubr.f32.mxu0 0.0
  %4571 = vmatmul.mubr.f32.gmra.mxu0 %v4286
  %v4572 = vpop.f32.mrf.mxu0
  %v4573 = vadd.f32 0.0, %v4572
  %v4574 = vpop.f32.mrf.mxu0
  %4575 = vmatprep.mubr.f32.mxu0 0.0
  %4576 = vmatmul.mubr.f32.gmra.mxu0 %v4289
  %v4577 = vpop.f32.mrf.mxu0
  %v4578 = vadd.f32 0.0, %v4577
  %v4579 = vpop.f32.mrf.mxu0
  %4580 = vmatprep.mubr.f32.mxu0 0.0
  %4581 = vmatmul.mubr.f32.gmra.mxu0 %v4292
  %v4582 = vpop.f32.mrf.mxu0
  %v4583 = vadd.f32 0.0, %v4582
  %v4584 = vpop.f32.mrf.mxu0
  %4585 = vmatprep.mubr.f32.mxu0 0.0
  %4586 = vmatmul.mubr.f32.gmra.mxu0 %v4295
  %v4587 = vpop.f32.mrf.mxu0
  %v4588 = vadd.f32 0.0, %v4587
  %v4589 = vpop.f32.mrf.mxu0
  %4590 = vmatprep.mubr.f32.mxu0 0.0
  %4591 = vmatmul.mubr.f32.gmra.mxu0 %v4298
  %v4592 = vpop.f32.mrf.mxu0
  %v4593 = vadd.f32 0.0, %v4592
  %v4594 = vpop.f32.mrf.mxu0
  %4595 = vmatprep.mubr.f32.mxu0 0.0
  %4596 = vmatmul.mubr.f32.gmra.mxu0 %v4301
  %v4597 = vpop.f32.mrf.mxu0
  %v4598 = vadd.f32 0.0, %v4597
  %v4599 = vpop.f32.mrf.mxu0
  %4600 = vmatprep.mubr.f32.mxu0 0.0
  %4601 = vmatmul.mubr.f32.gmra.mxu0 %v4304
  %v4602 = vpop.f32.mrf.mxu0
  %v4603 = vadd.f32 0.0, %v4602
  %v4604 = vpop.f32.mrf.mxu0
  %4605 = vmatprep.mubr.f32.mxu0 0.0
  %4606 = vmatmul.mubr.f32.gmra.mxu0 %v4307
  %v4607 = vpop.f32.mrf.mxu0
  %v4608 = vadd.f32 0.0, %v4607
  %v4609 = vpop.f32.mrf.mxu0
  %4610 = vmatprep.mubr.f32.mxu0 0.0
  %4611 = vmatmul.mubr.f32.gmra.mxu0 %v4310
  %v4612 = vpop.f32.mrf.mxu0
  %v4613 = vadd.f32 0.0, %v4612
  %v4614 = vpop.f32.mrf.mxu0
  %4615 = vmatprep.mubr.f32.mxu0 0.0
  %4616 = vmatmul.mubr.f32.gmra.mxu0 %v4313
  %v4617 = vpop.f32.mrf.mxu0
  %v4618 = vadd.f32 0.0, %v4617
  %v4619 = vpop.f32.mrf.mxu0
  %4620 = vmatprep.mubr.f32.mxu0 0.0
  %4621 = vmatmul.mubr.f32.gmra.mxu0 %v4316
  %v4622 = vpop.f32.mrf.mxu0
  %v4623 = vadd.f32 0.0, %v4622
  %v4624 = vpop.f32.mrf.mxu0
  %4625 = vmatprep.mubr.f32.mxu0 0.0
  %4626 = vmatmul.mubr.f32.gmra.mxu0 %v4319
  %v4627 = vpop.f32.mrf.mxu0
  %v4628 = vadd.f32 0.0, %v4627
  %v4629 = vpop.f32.mrf.mxu0
  %4630 = vmatprep.mubr.f32.mxu0 0.0
  %4631 = vmatmul.mubr.f32.gmra.mxu0 %v4322
  %v4632 = vpop.f32.mrf.mxu0
  %v4633 = vadd.f32 0.0, %v4632
  %v4634 = vpop.f32.mrf.mxu0
  %4635 = vmatprep.mubr.f32.mxu0 0.0
  %4636 = vmatmul.mubr.f32.gmra.mxu0 %v4325
  %v4637 = vpop.f32.mrf.mxu0
  %v4638 = vadd.f32 0.0, %v4637
  %v4639 = vpop.f32.mrf.mxu0
  %4640 = vmatprep.mubr.f32.mxu0 0.0
  %4641 = vmatmul.mubr.f32.gmra.mxu0 %v4328
  %v4642 = vpop.f32.mrf.mxu0
  %v4643 = vadd.f32 0.0, %v4642
  %v4644 = vpop.f32.mrf.mxu0
  %4645 = vmatprep.mubr.f32.mxu0 0.0
  %4646 = vmatmul.mubr.f32.gmra.mxu0 %v4331
  %v4647 = vpop.f32.mrf.mxu0
  %v4648 = vadd.f32 0.0, %v4647
  %v4649 = vpop.f32.mrf.mxu0
  %4650 = vmatprep.mubr.f32.mxu0 0.0
  %4651 = vmatmul.mubr.f32.gmra.mxu0 %v4334
  %v4652 = vpop.f32.mrf.mxu0
  %v4653 = vadd.f32 0.0, %v4652
  %v4654 = vpop.f32.mrf.mxu0
  %4655 = vmatprep.mubr.f32.mxu0 0.0
  %4656 = vmatmul.mubr.f32.gmra.mxu0 %v4337
  %v4657 = vpop.f32.mrf.mxu0
  %v4658 = vadd.f32 0.0, %v4657
  %v4659 = vpop.f32.mrf.mxu0
  %4660 = vmatprep.mubr.f32.mxu0 0.0
  %4661 = vmatmul.mubr.f32.gmra.mxu0 %v4340
  %v4662 = vpop.f32.mrf.mxu0
  %v4663 = vadd.f32 0.0, %v4662
  %v4664 = vpop.f32.mrf.mxu0
  %4665 = vmatprep.mubr.f32.mxu0 0.0
  %4666 = vmatmul.mubr.f32.gmra.mxu0 %v4343
  %v4667 = vpop.f32.mrf.mxu0
  %v4668 = vadd.f32 0.0, %v4667
  %v4669 = vpop.f32.mrf.mxu0
  %4670 = vmatprep.mubr.f32.mxu0 0.0
  %4671 = vmatmul.mubr.f32.gmra.mxu0 %v4346
  %v4672 = vpop.f32.mrf.mxu0
  %v4673 = vadd.f32 0.0, %v4672
  %v4674 = vpop.f32.mrf.mxu0
  %4675 = vmatprep.mubr.f32.mxu0 0.0
  %4676 = vmatmul.mubr.f32.gmra.mxu0 %v4349
  %v4677 = vpop.f32.mrf.mxu0
  %v4678 = vadd.f32 0.0, %v4677
  %v4679 = vpop.f32.mrf.mxu0
  %4680 = vmatprep.mubr.f32.mxu0 0.0
  %4681 = vmatmul.mubr.f32.gmra.mxu0 %v4352
  %v4682 = vpop.f32.mrf.mxu0
  %v4683 = vadd.f32 0.0, %v4682
  %v4684 = vpop.f32.mrf.mxu0
  %4685 = vmatprep.mubr.f32.mxu0 0.0
  %4686 = vmatmul.mubr.f32.gmra.mxu0 %v4355
  %v4687 = vpop.f32.mrf.mxu0
  %v4688 = vadd.f32 0.0, %v4687
  %v4689 = vpop.f32.mrf.mxu0
  %4690 = vmatprep.mubr.f32.mxu0 0.0
  %4691 = vmatmul.mubr.f32.gmra.mxu0 %v4358
  %v4692 = vpop.f32.mrf.mxu0
  %v4693 = vadd.f32 0.0, %v4692
  %v4694 = vpop.f32.mrf.mxu0
  %4695 = vmatprep.mubr.f32.mxu0 0.0
  %4696 = vmatmul.mubr.f32.gmra.mxu0 %v4361
  %v4697 = vpop.f32.mrf.mxu0
  %v4698 = vadd.f32 0.0, %v4697
  %v4699 = vpop.f32.mrf.mxu0
  %4700 = vmatprep.mubr.f32.mxu0 0.0
  %4701 = vmatmul.mubr.f32.gmra.mxu0 %v4364
  %v4702 = vpop.f32.mrf.mxu0
  %v4703 = vadd.f32 0.0, %v4702
  %v4704 = vpop.f32.mrf.mxu0
  %4705 = vmatprep.mubr.f32.mxu0 0.0
  %4706 = vmatmul.mubr.f32.gmra.mxu0 %v4367
  %v4707 = vpop.f32.mrf.mxu0
  %v4708 = vadd.f32 0.0, %v4707
  %v4709 = vpop.f32.mrf.mxu0
  %4710 = vmatprep.mubr.f32.mxu0 0.0
  %4711 = vmatmul.mubr.f32.gmra.mxu0 %v4370
  %v4712 = vpop.f32.mrf.mxu0
  %v4713 = vadd.f32 0.0, %v4712
  %v4714 = vpop.f32.mrf.mxu0
  %4715 = vmatprep.mubr.f32.mxu0 0.0
  %4716 = vmatmul.mubr.f32.gmra.mxu0 %v4373
  %v4717 = vpop.f32.mrf.mxu0
  %v4718 = vadd.f32 0.0, %v4717
  %v4719 = vpop.f32.mrf.mxu0
  %4720 = vmatprep.mubr.f32.mxu0 0.0
  %4721 = vmatmul.mubr.f32.gmra.mxu0 %v4376
  %v4722 = vpop.f32.mrf.mxu0
  %v4723 = vadd.f32 0.0, %v4722
  %v4724 = vpop.f32.mrf.mxu0
  %4725 = vmatprep.mubr.f32.mxu0 0.0
  %4726 = vmatmul.mubr.f32.gmra.mxu0 %v4379
  %v4727 = vpop.f32.mrf.mxu0
  %v4728 = vadd.f32 0.0, %v4727
  %v4729 = vpop.f32.mrf.mxu0
  %4730 = vmatprep.mubr.f32.mxu0 0.0
  %4731 = vmatmul.mubr.f32.gmra.mxu0 %v4382
  %v4732 = vpop.f32.mrf.mxu0
  %v4733 = vadd.f32 0.0, %v4732
  %v4734 = vpop.f32.mrf.mxu0
  %4735 = vmatprep.mubr.f32.mxu0 0.0
  %4736 = vmatmul.mubr.f32.gmra.mxu0 %v4385
  %v4737 = vpop.f32.mrf.mxu0
  %v4738 = vadd.f32 0.0, %v4737
  %v4739 = vpop.f32.mrf.mxu0
  %4740 = vmatprep.mubr.f32.mxu0 0.0
  %4741 = vmatmul.mubr.f32.gmra.mxu0 %v4388
  %v4742 = vpop.f32.mrf.mxu0
  %v4743 = vadd.f32 0.0, %v4742
  %v4744 = vpop.f32.mrf.mxu0
  %4745 = vmatprep.mubr.f32.mxu0 0.0
  %4746 = vmatmul.mubr.f32.gmra.mxu0 %v4391
  %v4747 = vpop.f32.mrf.mxu0
  %v4748 = vadd.f32 0.0, %v4747
  %v4749 = vpop.f32.mrf.mxu0
  %4750 = vmatprep.mubr.f32.mxu0 0.0
  %4751 = vmatmul.mubr.f32.gmra.mxu0 %v4394
  %v4752 = vpop.f32.mrf.mxu0
  %v4753 = vadd.f32 0.0, %v4752
  %v4754 = vpop.f32.mrf.mxu0
  %4755 = vmatprep.mubr.f32.mxu0 0.0
  %4756 = vmatmul.mubr.f32.gmra.mxu0 %v4397
  %v4757 = vpop.f32.mrf.mxu0
  %v4758 = vadd.f32 0.0, %v4757
  %v4759 = vpop.f32.mrf.mxu0
  %4760 = vmatprep.mubr.f32.mxu0 0.0
  %4761 = vmatmul.mubr.f32.gmra.mxu0 %v4400
  %v4762 = vpop.f32.mrf.mxu0
  %v4763 = vadd.f32 0.0, %v4762
  %v4764 = vpop.f32.mrf.mxu0
  %4765 = vmatprep.mubr.f32.mxu0 0.0
  %4766 = vmatmul.mubr.f32.gmra.mxu0 %v4403
  %v4767 = vpop.f32.mrf.mxu0
  %v4768 = vadd.f32 0.0, %v4767
  %v4769 = vpop.f32.mrf.mxu0
  %4770 = vmatprep.mubr.f32.mxu0 0.0
  %4771 = vmatmul.mubr.f32.gmra.mxu0 %v4406
  %v4772 = vpop.f32.mrf.mxu0
  %v4773 = vadd.f32 0.0, %v4772
  %v4774 = vpop.f32.mrf.mxu0
  %4775 = vmatprep.mubr.f32.mxu0 0.0
  %4776 = vmatmul.mubr.f32.gmra.mxu0 %v4409
  %v4777 = vpop.f32.mrf.mxu0
  %v4778 = vadd.f32 0.0, %v4777
  %v4779 = vpop.f32.mrf.mxu0
  %4780 = vmatprep.mubr.f32.mxu0 0.0
  %4781 = vmatmul.mubr.f32.gmra.mxu0 %v4412
  %v4782 = vpop.f32.mrf.mxu0
  %v4783 = vadd.f32 0.0, %v4782
  %v4784 = vpop.f32.mrf.mxu0
  %4785 = vmatprep.mubr.f32.mxu0 0.0
  %4786 = vmatmul.mubr.f32.gmra.mxu0 %v4415
  %v4787 = vpop.f32.mrf.mxu0
  %v4788 = vadd.f32 0.0, %v4787
  %v4789 = vpop.f32.mrf.mxu0
  %4790 = vmatprep.mubr.f32.mxu0 0.0
  %4791 = vmatmul.mubr.f32.gmra.mxu0 %v4418
  %v4792 = vpop.f32.mrf.mxu0
  %v4793 = vadd.f32 0.0, %v4792
  %v4794 = vpop.f32.mrf.mxu0
  %4795 = vmatprep.mubr.f32.mxu0 0.0
  %4796 = vmatmul.mubr.f32.gmra.mxu0 %v4421
  %v4797 = vpop.f32.mrf.mxu0
  %v4798 = vadd.f32 0.0, %v4797
  %v4799 = vpop.f32.mrf.mxu0
  %4800 = vmatprep.mubr.f32.mxu0 0.0
  %4801 = vmatmul.mubr.f32.gmra.mxu0 %v4424
  %v4802 = vpop.f32.mrf.mxu0
  %v4803 = vadd.f32 0.0, %v4802
  %v4804 = vpop.f32.mrf.mxu0
  %4805 = vmatprep.mubr.f32.mxu0 0.0
  %4806 = vmatmul.mubr.f32.gmra.mxu0 %v4427
  %v4807 = vpop.f32.mrf.mxu0
  %v4808 = vadd.f32 0.0, %v4807
  %v4809 = vpop.f32.mrf.mxu0
  %4810 = vmatprep.mubr.f32.mxu0 0.0
  %4811 = vmatmul.mubr.f32.gmra.mxu0 %v4430
  %v4812 = vpop.f32.mrf.mxu0
  %v4813 = vadd.f32 0.0, %v4812
  %v4814 = vpop.f32.mrf.mxu0
  %4815 = vmatprep.mubr.f32.mxu0 0.0
  %4816 = vmatmul.mubr.f32.gmra.mxu0 %v4433
  %v4817 = vpop.f32.mrf.mxu0
  %v4818 = vadd.f32 0.0, %v4817
  %v4819 = vpop.f32.mrf.mxu0
  %4820 = vmatprep.mubr.f32.mxu0 0.0
  %4821 = vmatmul.mubr.f32.gmra.mxu0 %v4436
  %v4822 = vpop.f32.mrf.mxu0
  %v4823 = vadd.f32 0.0, %v4822
  %v4824 = vpop.f32.mrf.mxu0
  %4825 = vdwg.mxu0
  %v4826 = vadd.f32 %v4115, %v4508
  %v4827 = vadd.f32 %v4116, %v4513
  %v4828 = vadd.f32 %v4117, %v4518
  %v4829 = vadd.f32 %v4118, %v4523
  %v4830 = vadd.f32 %v4119, %v4528
  %v4831 = vadd.f32 %v4120, %v4533
  %v4832 = vadd.f32 %v4121, %v4538
  %v4833 = vadd.f32 %v4122, %v4543
  %v4834 = vadd.f32 %v4123, %v4548
  %v4835 = vadd.f32 %v4124, %v4553
  %v4836 = vadd.f32 %v4125, %v4558
  %v4837 = vadd.f32 %v4126, %v4563
  %v4838 = vadd.f32 %v4127, %v4568
  %v4839 = vadd.f32 %v4128, %v4573
  %v4840 = vadd.f32 %v4129, %v4578
  %v4841 = vadd.f32 %v4130, %v4583
  %v4842 = vadd.f32 %v4131, %v4588
  %v4843 = vadd.f32 %v4132, %v4593
  %v4844 = vadd.f32 %v4133, %v4598
  %v4845 = vadd.f32 %v4134, %v4603
  %v4846 = vadd.f32 %v4135, %v4608
  %v4847 = vadd.f32 %v4136, %v4613
  %v4848 = vadd.f32 %v4137, %v4618
  %v4849 = vadd.f32 %v4138, %v4623
  %v4850 = vadd.f32 %v4139, %v4628
  %v4851 = vadd.f32 %v4140, %v4633
  %v4852 = vadd.f32 %v4141, %v4638
  %v4853 = vadd.f32 %v4142, %v4643
  %v4854 = vadd.f32 %v4143, %v4648
  %v4855 = vadd.f32 %v4144, %v4653
  %v4856 = vadd.f32 %v4145, %v4658
  %v4857 = vadd.f32 %v4146, %v4663
  %v4858 = vadd.f32 %v4147, %v4668
  %v4859 = vadd.f32 %v4148, %v4673
  %v4860 = vadd.f32 %v4149, %v4678
  %v4861 = vadd.f32 %v4150, %v4683
  %v4862 = vadd.f32 %v4151, %v4688
  %v4863 = vadd.f32 %v4152, %v4693
  %v4864 = vadd.f32 %v4153, %v4698
  %v4865 = vadd.f32 %v4154, %v4703
  %v4866 = vadd.f32 %v4155, %v4708
  %v4867 = vadd.f32 %v4156, %v4713
  %v4868 = vadd.f32 %v4157, %v4718
  %v4869 = vadd.f32 %v4158, %v4723
  %v4870 = vadd.f32 %v4159, %v4728
  %v4871 = vadd.f32 %v4160, %v4733
  %v4872 = vadd.f32 %v4161, %v4738
  %v4873 = vadd.f32 %v4162, %v4743
  %v4874 = vadd.f32 %v4163, %v4748
  %v4875 = vadd.f32 %v4164, %v4753
  %v4876 = vadd.f32 %v4165, %v4758
  %v4877 = vadd.f32 %v4166, %v4763
  %v4878 = vadd.f32 %v4167, %v4768
  %v4879 = vadd.f32 %v4168, %v4773
  %v4880 = vadd.f32 %v4169, %v4778
  %v4881 = vadd.f32 %v4170, %v4783
  %v4882 = vadd.f32 %v4171, %v4788
  %v4883 = vadd.f32 %v4172, %v4793
  %v4884 = vadd.f32 %v4173, %v4798
  %v4885 = vadd.f32 %v4174, %v4803
  %v4886 = vadd.f32 %v4175, %v4808
  %v4887 = vadd.f32 %v4176, %v4813
  %v4888 = vadd.f32 %v4177, %v4818
  %v4889 = vadd.f32 %v4178, %v4823
  %v4890 = vld [vmem:[%s4179 + $0x1] sm:$0xff]
  %v4891 = vld [vmem:[%s4179 + $0x9] sm:$0xff]
  %v4892 = vld [vmem:[%s4179 + $0x19] sm:$0xff]
  %v4893 = vld [vmem:[%s4179 + $0x21] sm:$0xff]
  %v4894 = vld [vmem:[%s4179 + $0x31] sm:$0xff]
  %v4895 = vld [vmem:[%s4179 + $0x39] sm:$0xff]
  %v4896 = vld [vmem:[%s4179 + $0x49] sm:$0xff]
  %v4897 = vld [vmem:[%s4179 + $0x51] sm:$0xff]
  %v4898 = vld [vmem:[%s4179 + $0x61] sm:$0xff]
  %v4899 = vld [vmem:[%s4179 + $0x69] sm:$0xff]
  %v4900 = vld [vmem:[%s4179 + $0x79] sm:$0xff]
  %v4901 = vld [vmem:[%s4179 + $0x81] sm:$0xff]
  %v4902 = vld [vmem:[%s4179 + $0x91] sm:$0xff]
  %v4903 = vld [vmem:[%s4179 + $0x99] sm:$0xff]
  %v4904 = vld [vmem:[%s4179 + $0xa9] sm:$0xff]
  %v4905 = vld [vmem:[%s4179 + $0xb1] sm:$0xff]
  %v4906 = vld [vmem:[%s4179 + $0xc1] sm:$0xff]
  %v4907 = vld [vmem:[%s4179 + $0xc9] sm:$0xff]
  %v4908 = vld [vmem:[%s4179 + $0xd9] sm:$0xff]
  %v4909 = vld [vmem:[%s4179 + $0xe1] sm:$0xff]
  %v4910 = vld [vmem:[%s4179 + $0xf1] sm:$0xff]
  %v4911 = vld [vmem:[%s4179 + $0xf9] sm:$0xff]
  %v4912 = vld [vmem:[%s4179 + $0x109] sm:$0xff]
  %v4913 = vld [vmem:[%s4179 + $0x111] sm:$0xff]
  %v4914 = vld [vmem:[%s4179 + $0x121] sm:$0xff]
  %v4915 = vld [vmem:[%s4179 + $0x129] sm:$0xff]
  %v4916 = vld [vmem:[%s4179 + $0x139] sm:$0xff]
  %v4917 = vld [vmem:[%s4179 + $0x141] sm:$0xff]
  %v4918 = vld [vmem:[%s4179 + $0x151] sm:$0xff]
  %v4919 = vld [vmem:[%s4179 + $0x159] sm:$0xff]
  %v4920 = vld [vmem:[%s4179 + $0x169] sm:$0xff]
  %v4921 = vld [vmem:[%s4179 + $0x171] sm:$0xff]
  %v4922 = vld [vmem:[%s4179 + $0x1b1] sm:$0xff]
  %v4923 = vld [vmem:[%s4179 + $0x1b9] sm:$0xff]
  %v4924 = vld [vmem:[%s4179 + $0x1c9] sm:$0xff]
  %v4925 = vld [vmem:[%s4179 + $0x1d1] sm:$0xff]
  %v4926 = vld [vmem:[%s4179 + $0x1e1] sm:$0xff]
  %v4927 = vld [vmem:[%s4179 + $0x1e9] sm:$0xff]
  %v4928 = vld [vmem:[%s4179 + $0x1f9] sm:$0xff]
  %v4929 = vld [vmem:[%s4179 + $0x201] sm:$0xff]
  %v4930 = vld [vmem:[%s4179 + $0x211] sm:$0xff]
  %v4931 = vld [vmem:[%s4179 + $0x219] sm:$0xff]
  %v4932 = vld [vmem:[%s4179 + $0x229] sm:$0xff]
  %v4933 = vld [vmem:[%s4179 + $0x231] sm:$0xff]
  %v4934 = vld [vmem:[%s4179 + $0x241] sm:$0xff]
  %v4935 = vld [vmem:[%s4179 + $0x249] sm:$0xff]
  %v4936 = vld [vmem:[%s4179 + $0x259] sm:$0xff]
  %v4937 = vld [vmem:[%s4179 + $0x261] sm:$0xff]
  %v4938 = vld [vmem:[%s4179 + $0x271] sm:$0xff]
  %v4939 = vld [vmem:[%s4179 + $0x279] sm:$0xff]
  %v4940 = vld [vmem:[%s4179 + $0x289] sm:$0xff]
  %v4941 = vld [vmem:[%s4179 + $0x291] sm:$0xff]
  %v4942 = vld [vmem:[%s4179 + $0x2a1] sm:$0xff]
  %v4943 = vld [vmem:[%s4179 + $0x2a9] sm:$0xff]
  %v4944 = vld [vmem:[%s4179 + $0x2b9] sm:$0xff]
  %v4945 = vld [vmem:[%s4179 + $0x2c1] sm:$0xff]
  %v4946 = vld [vmem:[%s4179 + $0x2d1] sm:$0xff]
  %v4947 = vld [vmem:[%s4179 + $0x2d9] sm:$0xff]
  %v4948 = vld [vmem:[%s4179 + $0x2e9] sm:$0xff]
  %v4949 = vld [vmem:[%s4179 + $0x2f1] sm:$0xff]
  %v4950 = vld [vmem:[%s4179 + $0x301] sm:$0xff]
  %v4951 = vld [vmem:[%s4179 + $0x309] sm:$0xff]
  %v4952 = vld [vmem:[%s4179 + $0x319] sm:$0xff]
  %v4953 = vld [vmem:[%s4179 + $0x321] sm:$0xff]
  %s4954 = scalar_lea.vmem %s1, 28
  %v4955 = vld [vmem:[%s4954] sm:$0x7]
  %v4957 = vsel %vm176, %v4890, 0
  %v4960 = vsel %vm176, %v4891, 0
  %v4963 = vsel %vm176, %v4892, 0
  %v4966 = vsel %vm176, %v4893, 0
  %v4969 = vsel %vm176, %v4894, 0
  %v4972 = vsel %vm176, %v4895, 0
  %v4975 = vsel %vm176, %v4896, 0
  %v4978 = vsel %vm176, %v4897, 0
  %v4981 = vsel %vm176, %v4898, 0
  %v4984 = vsel %vm176, %v4899, 0
  %v4987 = vsel %vm176, %v4900, 0
  %v4990 = vsel %vm176, %v4901, 0
  %v4993 = vsel %vm176, %v4902, 0
  %v4996 = vsel %vm176, %v4903, 0
  %v4999 = vsel %vm176, %v4904, 0
  %v5002 = vsel %vm176, %v4905, 0
  %v5005 = vsel %vm176, %v4906, 0
  %v5008 = vsel %vm176, %v4907, 0
  %v5011 = vsel %vm176, %v4908, 0
  %v5014 = vsel %vm176, %v4909, 0
  %v5017 = vsel %vm176, %v4910, 0
  %v5020 = vsel %vm176, %v4911, 0
  %v5023 = vsel %vm176, %v4912, 0
  %v5026 = vsel %vm176, %v4913, 0
  %v5029 = vsel %vm176, %v4914, 0
  %v5032 = vsel %vm176, %v4915, 0
  %v5035 = vsel %vm176, %v4916, 0
  %v5038 = vsel %vm176, %v4917, 0
  %v5041 = vsel %vm176, %v4918, 0
  %v5044 = vsel %vm176, %v4919, 0
  %v5047 = vsel %vm176, %v4920, 0
  %v5050 = vsel %vm176, %v4921, 0
  %v5053 = vsel %vm176, %v4922, 0
  %v5056 = vsel %vm176, %v4923, 0
  %v5059 = vsel %vm176, %v4924, 0
  %v5062 = vsel %vm176, %v4925, 0
  %v5065 = vsel %vm176, %v4926, 0
  %v5068 = vsel %vm176, %v4927, 0
  %v5071 = vsel %vm176, %v4928, 0
  %v5074 = vsel %vm176, %v4929, 0
  %v5077 = vsel %vm176, %v4930, 0
  %v5080 = vsel %vm176, %v4931, 0
  %v5083 = vsel %vm176, %v4932, 0
  %v5086 = vsel %vm176, %v4933, 0
  %v5089 = vsel %vm176, %v4934, 0
  %v5092 = vsel %vm176, %v4935, 0
  %v5095 = vsel %vm176, %v4936, 0
  %v5098 = vsel %vm176, %v4937, 0
  %v5101 = vsel %vm176, %v4938, 0
  %v5104 = vsel %vm176, %v4939, 0
  %v5107 = vsel %vm176, %v4940, 0
  %v5110 = vsel %vm176, %v4941, 0
  %v5113 = vsel %vm176, %v4942, 0
  %v5116 = vsel %vm176, %v4943, 0
  %v5119 = vsel %vm176, %v4944, 0
  %v5122 = vsel %vm176, %v4945, 0
  %v5125 = vsel %vm176, %v4946, 0
  %v5128 = vsel %vm176, %v4947, 0
  %v5131 = vsel %vm176, %v4948, 0
  %v5134 = vsel %vm176, %v4949, 0
  %v5137 = vsel %vm176, %v4950, 0
  %v5140 = vsel %vm176, %v4951, 0
  %v5143 = vsel %vm176, %v4952, 0
  %v5146 = vsel %vm176, %v4953, 0
  %v5149 = vsel %vm369, %v4955, 0
  %5151 = vmatprep.subr.mxu0 0.0
  %5152 = vmatpush1.msra.mxu0 0.0
  %5153 = vmatprep.subr.mxu0 0.0
  %5154 = vmatpush1.msra.mxu0 0.0
  %5155 = vmatprep.subr.mxu0 0.0
  %5156 = vmatpush1.msra.mxu0 0.0
  %5157 = vmatprep.subr.mxu0 0.0
  %5158 = vmatpush1.msra.mxu0 0.0
  %5159 = vmatprep.subr.mxu0 0.0
  %5160 = vmatpush1.msra.mxu0 0.0
  %5161 = vmatprep.subr.mxu0 0.0
  %5162 = vmatpush1.msra.mxu0 0.0
  %5163 = vmatprep.subr.mxu0 0.0
  %5164 = vmatpush1.msra.mxu0 0.0
  %5165 = vmatprep.subr.mxu0 0.0
  %5166 = vmatpush1.msra.mxu0 0.0
  %5167 = vmatprep.subr.mxu0 0.0
  %5168 = vmatpush1.msra.mxu0 0.0
  %5169 = vmatprep.subr.mxu0 0.0
  %5170 = vmatpush1.msra.mxu0 0.0
  %5171 = vmatprep.subr.mxu0 0.0
  %5172 = vmatpush1.msra.mxu0 0.0
  %5173 = vmatprep.subr.mxu0 0.0
  %5174 = vmatpush1.msra.mxu0 0.0
  %5175 = vmatprep.subr.mxu0 0.0
  %5176 = vmatpush1.msra.mxu0 0.0
  %5177 = vmatprep.subr.mxu0 0.0
  %5178 = vmatpush1.msra.mxu0 0.0
  %5179 = vmatprep.subr.mxu0 0.0
  %5180 = vmatpush1.msra.mxu0 0.0
  %5181 = vmatprep.subr.mxu0 0.0
  %5182 = vmatpush1.msra.mxu0 %v5149
  %5183 = vmatprep.subr.mxu0 0.0
  %5184 = vmatpush2.msra.mxu0 0.0
  %5185 = vmatprep.subr.mxu0 0.0
  %5186 = vmatpush2.msra.mxu0 0.0
  %5187 = vmatprep.subr.mxu0 0.0
  %5188 = vmatpush2.msra.mxu0 0.0
  %5189 = vmatprep.subr.mxu0 0.0
  %5190 = vmatpush2.msra.mxu0 0.0
  %5191 = vmatprep.subr.mxu0 0.0
  %5192 = vmatpush2.msra.mxu0 0.0
  %5193 = vmatprep.subr.mxu0 0.0
  %5194 = vmatpush2.msra.mxu0 0.0
  %5195 = vmatprep.subr.mxu0 0.0
  %5196 = vmatpush2.msra.mxu0 0.0
  %5197 = vmatprep.subr.mxu0 0.0
  %5198 = vmatpush2.msra.mxu0 0.0
  %5199 = vmatprep.subr.mxu0 0.0
  %5200 = vmatpush2.msra.mxu0 0.0
  %5201 = vmatprep.subr.mxu0 0.0
  %5202 = vmatpush2.msra.mxu0 0.0
  %5203 = vmatprep.subr.mxu0 0.0
  %5204 = vmatpush2.msra.mxu0 0.0
  %5205 = vmatprep.subr.mxu0 0.0
  %5206 = vmatpush2.msra.mxu0 0.0
  %5207 = vmatprep.subr.mxu0 0.0
  %5208 = vmatpush2.msra.mxu0 0.0
  %5209 = vmatprep.subr.mxu0 0.0
  %5210 = vmatpush2.msra.mxu0 0.0
  %5211 = vmatprep.subr.mxu0 0.0
  %5212 = vmatpush2.msra.mxu0 0.0
  %5213 = vmatprep.subr.mxu0 0.0
  %5214 = vmatpush2.msra.mxu0 0.0
  %5215 = vmatprep.mubr.f32.mxu0 0.0
  %5216 = vmatmul.mubr.f32.gmra.mxu0 %v4957
  %v5217 = vpop.f32.mrf.mxu0
  %v5218 = vadd.f32 0.0, %v5217
  %v5219 = vpop.f32.mrf.mxu0
  %5220 = vmatprep.mubr.f32.mxu0 0.0
  %5221 = vmatmul.mubr.f32.gmra.mxu0 %v4960
  %v5222 = vpop.f32.mrf.mxu0
  %v5223 = vadd.f32 0.0, %v5222
  %v5224 = vpop.f32.mrf.mxu0
  %5225 = vmatprep.mubr.f32.mxu0 0.0
  %5226 = vmatmul.mubr.f32.gmra.mxu0 %v4963
  %v5227 = vpop.f32.mrf.mxu0
  %v5228 = vadd.f32 0.0, %v5227
  %v5229 = vpop.f32.mrf.mxu0
  %5230 = vmatprep.mubr.f32.mxu0 0.0
  %5231 = vmatmul.mubr.f32.gmra.mxu0 %v4966
  %v5232 = vpop.f32.mrf.mxu0
  %v5233 = vadd.f32 0.0, %v5232
  %v5234 = vpop.f32.mrf.mxu0
  %5235 = vmatprep.mubr.f32.mxu0 0.0
  %5236 = vmatmul.mubr.f32.gmra.mxu0 %v4969
  %v5237 = vpop.f32.mrf.mxu0
  %v5238 = vadd.f32 0.0, %v5237
  %v5239 = vpop.f32.mrf.mxu0
  %5240 = vmatprep.mubr.f32.mxu0 0.0
  %5241 = vmatmul.mubr.f32.gmra.mxu0 %v4972
  %v5242 = vpop.f32.mrf.mxu0
  %v5243 = vadd.f32 0.0, %v5242
  %v5244 = vpop.f32.mrf.mxu0
  %5245 = vmatprep.mubr.f32.mxu0 0.0
  %5246 = vmatmul.mubr.f32.gmra.mxu0 %v4975
  %v5247 = vpop.f32.mrf.mxu0
  %v5248 = vadd.f32 0.0, %v5247
  %v5249 = vpop.f32.mrf.mxu0
  %5250 = vmatprep.mubr.f32.mxu0 0.0
  %5251 = vmatmul.mubr.f32.gmra.mxu0 %v4978
  %v5252 = vpop.f32.mrf.mxu0
  %v5253 = vadd.f32 0.0, %v5252
  %v5254 = vpop.f32.mrf.mxu0
  %5255 = vmatprep.mubr.f32.mxu0 0.0
  %5256 = vmatmul.mubr.f32.gmra.mxu0 %v4981
  %v5257 = vpop.f32.mrf.mxu0
  %v5258 = vadd.f32 0.0, %v5257
  %v5259 = vpop.f32.mrf.mxu0
  %5260 = vmatprep.mubr.f32.mxu0 0.0
  %5261 = vmatmul.mubr.f32.gmra.mxu0 %v4984
  %v5262 = vpop.f32.mrf.mxu0
  %v5263 = vadd.f32 0.0, %v5262
  %v5264 = vpop.f32.mrf.mxu0
  %5265 = vmatprep.mubr.f32.mxu0 0.0
  %5266 = vmatmul.mubr.f32.gmra.mxu0 %v4987
  %v5267 = vpop.f32.mrf.mxu0
  %v5268 = vadd.f32 0.0, %v5267
  %v5269 = vpop.f32.mrf.mxu0
  %5270 = vmatprep.mubr.f32.mxu0 0.0
  %5271 = vmatmul.mubr.f32.gmra.mxu0 %v4990
  %v5272 = vpop.f32.mrf.mxu0
  %v5273 = vadd.f32 0.0, %v5272
  %v5274 = vpop.f32.mrf.mxu0
  %5275 = vmatprep.mubr.f32.mxu0 0.0
  %5276 = vmatmul.mubr.f32.gmra.mxu0 %v4993
  %v5277 = vpop.f32.mrf.mxu0
  %v5278 = vadd.f32 0.0, %v5277
  %v5279 = vpop.f32.mrf.mxu0
  %5280 = vmatprep.mubr.f32.mxu0 0.0
  %5281 = vmatmul.mubr.f32.gmra.mxu0 %v4996
  %v5282 = vpop.f32.mrf.mxu0
  %v5283 = vadd.f32 0.0, %v5282
  %v5284 = vpop.f32.mrf.mxu0
  %5285 = vmatprep.mubr.f32.mxu0 0.0
  %5286 = vmatmul.mubr.f32.gmra.mxu0 %v4999
  %v5287 = vpop.f32.mrf.mxu0
  %v5288 = vadd.f32 0.0, %v5287
  %v5289 = vpop.f32.mrf.mxu0
  %5290 = vmatprep.mubr.f32.mxu0 0.0
  %5291 = vmatmul.mubr.f32.gmra.mxu0 %v5002
  %v5292 = vpop.f32.mrf.mxu0
  %v5293 = vadd.f32 0.0, %v5292
  %v5294 = vpop.f32.mrf.mxu0
  %5295 = vmatprep.mubr.f32.mxu0 0.0
  %5296 = vmatmul.mubr.f32.gmra.mxu0 %v5005
  %v5297 = vpop.f32.mrf.mxu0
  %v5298 = vadd.f32 0.0, %v5297
  %v5299 = vpop.f32.mrf.mxu0
  %5300 = vmatprep.mubr.f32.mxu0 0.0
  %5301 = vmatmul.mubr.f32.gmra.mxu0 %v5008
  %v5302 = vpop.f32.mrf.mxu0
  %v5303 = vadd.f32 0.0, %v5302
  %v5304 = vpop.f32.mrf.mxu0
  %5305 = vmatprep.mubr.f32.mxu0 0.0
  %5306 = vmatmul.mubr.f32.gmra.mxu0 %v5011
  %v5307 = vpop.f32.mrf.mxu0
  %v5308 = vadd.f32 0.0, %v5307
  %v5309 = vpop.f32.mrf.mxu0
  %5310 = vmatprep.mubr.f32.mxu0 0.0
  %5311 = vmatmul.mubr.f32.gmra.mxu0 %v5014
  %v5312 = vpop.f32.mrf.mxu0
  %v5313 = vadd.f32 0.0, %v5312
  %v5314 = vpop.f32.mrf.mxu0
  %5315 = vmatprep.mubr.f32.mxu0 0.0
  %5316 = vmatmul.mubr.f32.gmra.mxu0 %v5017
  %v5317 = vpop.f32.mrf.mxu0
  %v5318 = vadd.f32 0.0, %v5317
  %v5319 = vpop.f32.mrf.mxu0
  %5320 = vmatprep.mubr.f32.mxu0 0.0
  %5321 = vmatmul.mubr.f32.gmra.mxu0 %v5020
  %v5322 = vpop.f32.mrf.mxu0
  %v5323 = vadd.f32 0.0, %v5322
  %v5324 = vpop.f32.mrf.mxu0
  %5325 = vmatprep.mubr.f32.mxu0 0.0
  %5326 = vmatmul.mubr.f32.gmra.mxu0 %v5023
  %v5327 = vpop.f32.mrf.mxu0
  %v5328 = vadd.f32 0.0, %v5327
  %v5329 = vpop.f32.mrf.mxu0
  %5330 = vmatprep.mubr.f32.mxu0 0.0
  %5331 = vmatmul.mubr.f32.gmra.mxu0 %v5026
  %v5332 = vpop.f32.mrf.mxu0
  %v5333 = vadd.f32 0.0, %v5332
  %v5334 = vpop.f32.mrf.mxu0
  %5335 = vmatprep.mubr.f32.mxu0 0.0
  %5336 = vmatmul.mubr.f32.gmra.mxu0 %v5029
  %v5337 = vpop.f32.mrf.mxu0
  %v5338 = vadd.f32 0.0, %v5337
  %v5339 = vpop.f32.mrf.mxu0
  %5340 = vmatprep.mubr.f32.mxu0 0.0
  %5341 = vmatmul.mubr.f32.gmra.mxu0 %v5032
  %v5342 = vpop.f32.mrf.mxu0
  %v5343 = vadd.f32 0.0, %v5342
  %v5344 = vpop.f32.mrf.mxu0
  %5345 = vmatprep.mubr.f32.mxu0 0.0
  %5346 = vmatmul.mubr.f32.gmra.mxu0 %v5035
  %v5347 = vpop.f32.mrf.mxu0
  %v5348 = vadd.f32 0.0, %v5347
  %v5349 = vpop.f32.mrf.mxu0
  %5350 = vmatprep.mubr.f32.mxu0 0.0
  %5351 = vmatmul.mubr.f32.gmra.mxu0 %v5038
  %v5352 = vpop.f32.mrf.mxu0
  %v5353 = vadd.f32 0.0, %v5352
  %v5354 = vpop.f32.mrf.mxu0
  %5355 = vmatprep.mubr.f32.mxu0 0.0
  %5356 = vmatmul.mubr.f32.gmra.mxu0 %v5041
  %v5357 = vpop.f32.mrf.mxu0
  %v5358 = vadd.f32 0.0, %v5357
  %v5359 = vpop.f32.mrf.mxu0
  %5360 = vmatprep.mubr.f32.mxu0 0.0
  %5361 = vmatmul.mubr.f32.gmra.mxu0 %v5044
  %v5362 = vpop.f32.mrf.mxu0
  %v5363 = vadd.f32 0.0, %v5362
  %v5364 = vpop.f32.mrf.mxu0
  %5365 = vmatprep.mubr.f32.mxu0 0.0
  %5366 = vmatmul.mubr.f32.gmra.mxu0 %v5047
  %v5367 = vpop.f32.mrf.mxu0
  %v5368 = vadd.f32 0.0, %v5367
  %v5369 = vpop.f32.mrf.mxu0
  %5370 = vmatprep.mubr.f32.mxu0 0.0
  %5371 = vmatmul.mubr.f32.gmra.mxu0 %v5050
  %v5372 = vpop.f32.mrf.mxu0
  %v5373 = vadd.f32 0.0, %v5372
  %v5374 = vpop.f32.mrf.mxu0
  %5375 = vmatprep.mubr.f32.mxu0 0.0
  %5376 = vmatmul.mubr.f32.gmra.mxu0 %v5053
  %v5377 = vpop.f32.mrf.mxu0
  %v5378 = vadd.f32 0.0, %v5377
  %v5379 = vpop.f32.mrf.mxu0
  %5380 = vmatprep.mubr.f32.mxu0 0.0
  %5381 = vmatmul.mubr.f32.gmra.mxu0 %v5056
  %v5382 = vpop.f32.mrf.mxu0
  %v5383 = vadd.f32 0.0, %v5382
  %v5384 = vpop.f32.mrf.mxu0
  %5385 = vmatprep.mubr.f32.mxu0 0.0
  %5386 = vmatmul.mubr.f32.gmra.mxu0 %v5059
  %v5387 = vpop.f32.mrf.mxu0
  %v5388 = vadd.f32 0.0, %v5387
  %v5389 = vpop.f32.mrf.mxu0
  %5390 = vmatprep.mubr.f32.mxu0 0.0
  %5391 = vmatmul.mubr.f32.gmra.mxu0 %v5062
  %v5392 = vpop.f32.mrf.mxu0
  %v5393 = vadd.f32 0.0, %v5392
  %v5394 = vpop.f32.mrf.mxu0
  %5395 = vmatprep.mubr.f32.mxu0 0.0
  %5396 = vmatmul.mubr.f32.gmra.mxu0 %v5065
  %v5397 = vpop.f32.mrf.mxu0
  %v5398 = vadd.f32 0.0, %v5397
  %v5399 = vpop.f32.mrf.mxu0
  %5400 = vmatprep.mubr.f32.mxu0 0.0
  %5401 = vmatmul.mubr.f32.gmra.mxu0 %v5068
  %v5402 = vpop.f32.mrf.mxu0
  %v5403 = vadd.f32 0.0, %v5402
  %v5404 = vpop.f32.mrf.mxu0
  %5405 = vmatprep.mubr.f32.mxu0 0.0
  %5406 = vmatmul.mubr.f32.gmra.mxu0 %v5071
  %v5407 = vpop.f32.mrf.mxu0
  %v5408 = vadd.f32 0.0, %v5407
  %v5409 = vpop.f32.mrf.mxu0
  %5410 = vmatprep.mubr.f32.mxu0 0.0
  %5411 = vmatmul.mubr.f32.gmra.mxu0 %v5074
  %v5412 = vpop.f32.mrf.mxu0
  %v5413 = vadd.f32 0.0, %v5412
  %v5414 = vpop.f32.mrf.mxu0
  %5415 = vmatprep.mubr.f32.mxu0 0.0
  %5416 = vmatmul.mubr.f32.gmra.mxu0 %v5077
  %v5417 = vpop.f32.mrf.mxu0
  %v5418 = vadd.f32 0.0, %v5417
  %v5419 = vpop.f32.mrf.mxu0
  %5420 = vmatprep.mubr.f32.mxu0 0.0
  %5421 = vmatmul.mubr.f32.gmra.mxu0 %v5080
  %v5422 = vpop.f32.mrf.mxu0
  %v5423 = vadd.f32 0.0, %v5422
  %v5424 = vpop.f32.mrf.mxu0
  %5425 = vmatprep.mubr.f32.mxu0 0.0
  %5426 = vmatmul.mubr.f32.gmra.mxu0 %v5083
  %v5427 = vpop.f32.mrf.mxu0
  %v5428 = vadd.f32 0.0, %v5427
  %v5429 = vpop.f32.mrf.mxu0
  %5430 = vmatprep.mubr.f32.mxu0 0.0
  %5431 = vmatmul.mubr.f32.gmra.mxu0 %v5086
  %v5432 = vpop.f32.mrf.mxu0
  %v5433 = vadd.f32 0.0, %v5432
  %v5434 = vpop.f32.mrf.mxu0
  %5435 = vmatprep.mubr.f32.mxu0 0.0
  %5436 = vmatmul.mubr.f32.gmra.mxu0 %v5089
  %v5437 = vpop.f32.mrf.mxu0
  %v5438 = vadd.f32 0.0, %v5437
  %v5439 = vpop.f32.mrf.mxu0
  %5440 = vmatprep.mubr.f32.mxu0 0.0
  %5441 = vmatmul.mubr.f32.gmra.mxu0 %v5092
  %v5442 = vpop.f32.mrf.mxu0
  %v5443 = vadd.f32 0.0, %v5442
  %v5444 = vpop.f32.mrf.mxu0
  %5445 = vmatprep.mubr.f32.mxu0 0.0
  %5446 = vmatmul.mubr.f32.gmra.mxu0 %v5095
  %v5447 = vpop.f32.mrf.mxu0
  %v5448 = vadd.f32 0.0, %v5447
  %v5449 = vpop.f32.mrf.mxu0
  %5450 = vmatprep.mubr.f32.mxu0 0.0
  %5451 = vmatmul.mubr.f32.gmra.mxu0 %v5098
  %v5452 = vpop.f32.mrf.mxu0
  %v5453 = vadd.f32 0.0, %v5452
  %v5454 = vpop.f32.mrf.mxu0
  %5455 = vmatprep.mubr.f32.mxu0 0.0
  %5456 = vmatmul.mubr.f32.gmra.mxu0 %v5101
  %v5457 = vpop.f32.mrf.mxu0
  %v5458 = vadd.f32 0.0, %v5457
  %v5459 = vpop.f32.mrf.mxu0
  %5460 = vmatprep.mubr.f32.mxu0 0.0
  %5461 = vmatmul.mubr.f32.gmra.mxu0 %v5104
  %v5462 = vpop.f32.mrf.mxu0
  %v5463 = vadd.f32 0.0, %v5462
  %v5464 = vpop.f32.mrf.mxu0
  %5465 = vmatprep.mubr.f32.mxu0 0.0
  %5466 = vmatmul.mubr.f32.gmra.mxu0 %v5107
  %v5467 = vpop.f32.mrf.mxu0
  %v5468 = vadd.f32 0.0, %v5467
  %v5469 = vpop.f32.mrf.mxu0
  %5470 = vmatprep.mubr.f32.mxu0 0.0
  %5471 = vmatmul.mubr.f32.gmra.mxu0 %v5110
  %v5472 = vpop.f32.mrf.mxu0
  %v5473 = vadd.f32 0.0, %v5472
  %v5474 = vpop.f32.mrf.mxu0
  %5475 = vmatprep.mubr.f32.mxu0 0.0
  %5476 = vmatmul.mubr.f32.gmra.mxu0 %v5113
  %v5477 = vpop.f32.mrf.mxu0
  %v5478 = vadd.f32 0.0, %v5477
  %v5479 = vpop.f32.mrf.mxu0
  %5480 = vmatprep.mubr.f32.mxu0 0.0
  %5481 = vmatmul.mubr.f32.gmra.mxu0 %v5116
  %v5482 = vpop.f32.mrf.mxu0
  %v5483 = vadd.f32 0.0, %v5482
  %v5484 = vpop.f32.mrf.mxu0
  %5485 = vmatprep.mubr.f32.mxu0 0.0
  %5486 = vmatmul.mubr.f32.gmra.mxu0 %v5119
  %v5487 = vpop.f32.mrf.mxu0
  %v5488 = vadd.f32 0.0, %v5487
  %v5489 = vpop.f32.mrf.mxu0
  %5490 = vmatprep.mubr.f32.mxu0 0.0
  %5491 = vmatmul.mubr.f32.gmra.mxu0 %v5122
  %v5492 = vpop.f32.mrf.mxu0
  %v5493 = vadd.f32 0.0, %v5492
  %v5494 = vpop.f32.mrf.mxu0
  %5495 = vmatprep.mubr.f32.mxu0 0.0
  %5496 = vmatmul.mubr.f32.gmra.mxu0 %v5125
  %v5497 = vpop.f32.mrf.mxu0
  %v5498 = vadd.f32 0.0, %v5497
  %v5499 = vpop.f32.mrf.mxu0
  %5500 = vmatprep.mubr.f32.mxu0 0.0
  %5501 = vmatmul.mubr.f32.gmra.mxu0 %v5128
  %v5502 = vpop.f32.mrf.mxu0
  %v5503 = vadd.f32 0.0, %v5502
  %v5504 = vpop.f32.mrf.mxu0
  %5505 = vmatprep.mubr.f32.mxu0 0.0
  %5506 = vmatmul.mubr.f32.gmra.mxu0 %v5131
  %v5507 = vpop.f32.mrf.mxu0
  %v5508 = vadd.f32 0.0, %v5507
  %v5509 = vpop.f32.mrf.mxu0
  %5510 = vmatprep.mubr.f32.mxu0 0.0
  %5511 = vmatmul.mubr.f32.gmra.mxu0 %v5134
  %v5512 = vpop.f32.mrf.mxu0
  %v5513 = vadd.f32 0.0, %v5512
  %v5514 = vpop.f32.mrf.mxu0
  %5515 = vmatprep.mubr.f32.mxu0 0.0
  %5516 = vmatmul.mubr.f32.gmra.mxu0 %v5137
  %v5517 = vpop.f32.mrf.mxu0
  %v5518 = vadd.f32 0.0, %v5517
  %v5519 = vpop.f32.mrf.mxu0
  %5520 = vmatprep.mubr.f32.mxu0 0.0
  %5521 = vmatmul.mubr.f32.gmra.mxu0 %v5140
  %v5522 = vpop.f32.mrf.mxu0
  %v5523 = vadd.f32 0.0, %v5522
  %v5524 = vpop.f32.mrf.mxu0
  %5525 = vmatprep.mubr.f32.mxu0 0.0
  %5526 = vmatmul.mubr.f32.gmra.mxu0 %v5143
  %v5527 = vpop.f32.mrf.mxu0
  %v5528 = vadd.f32 0.0, %v5527
  %v5529 = vpop.f32.mrf.mxu0
  %5530 = vmatprep.mubr.f32.mxu0 0.0
  %5531 = vmatmul.mubr.f32.gmra.mxu0 %v5146
  %v5532 = vpop.f32.mrf.mxu0
  %v5533 = vadd.f32 0.0, %v5532
  %v5534 = vpop.f32.mrf.mxu0
  %5535 = vdwg.mxu0
  %v5536 = vadd.f32 %v4826, %v5218
  %v5537 = vadd.f32 %v4827, %v5223
  %v5538 = vadd.f32 %v4828, %v5228
  %v5539 = vadd.f32 %v4829, %v5233
  %v5540 = vadd.f32 %v4830, %v5238
  %v5541 = vadd.f32 %v4831, %v5243
  %v5542 = vadd.f32 %v4832, %v5248
  %v5543 = vadd.f32 %v4833, %v5253
  %v5544 = vadd.f32 %v4834, %v5258
  %v5545 = vadd.f32 %v4835, %v5263
  %v5546 = vadd.f32 %v4836, %v5268
  %v5547 = vadd.f32 %v4837, %v5273
  %v5548 = vadd.f32 %v4838, %v5278
  %v5549 = vadd.f32 %v4839, %v5283
  %v5550 = vadd.f32 %v4840, %v5288
  %v5551 = vadd.f32 %v4841, %v5293
  %v5552 = vadd.f32 %v4842, %v5298
  %v5553 = vadd.f32 %v4843, %v5303
  %v5554 = vadd.f32 %v4844, %v5308
  %v5555 = vadd.f32 %v4845, %v5313
  %v5556 = vadd.f32 %v4846, %v5318
  %v5557 = vadd.f32 %v4847, %v5323
  %v5558 = vadd.f32 %v4848, %v5328
  %v5559 = vadd.f32 %v4849, %v5333
  %v5560 = vadd.f32 %v4850, %v5338
  %v5561 = vadd.f32 %v4851, %v5343
  %v5562 = vadd.f32 %v4852, %v5348
  %v5563 = vadd.f32 %v4853, %v5353
  %v5564 = vadd.f32 %v4854, %v5358
  %v5565 = vadd.f32 %v4855, %v5363
  %v5566 = vadd.f32 %v4856, %v5368
  %v5567 = vadd.f32 %v4857, %v5373
  %v5568 = vadd.f32 %v4858, %v5378
  %v5569 = vadd.f32 %v4859, %v5383
  %v5570 = vadd.f32 %v4860, %v5388
  %v5571 = vadd.f32 %v4861, %v5393
  %v5572 = vadd.f32 %v4862, %v5398
  %v5573 = vadd.f32 %v4863, %v5403
  %v5574 = vadd.f32 %v4864, %v5408
  %v5575 = vadd.f32 %v4865, %v5413
  %v5576 = vadd.f32 %v4866, %v5418
  %v5577 = vadd.f32 %v4867, %v5423
  %v5578 = vadd.f32 %v4868, %v5428
  %v5579 = vadd.f32 %v4869, %v5433
  %v5580 = vadd.f32 %v4870, %v5438
  %v5581 = vadd.f32 %v4871, %v5443
  %v5582 = vadd.f32 %v4872, %v5448
  %v5583 = vadd.f32 %v4873, %v5453
  %v5584 = vadd.f32 %v4874, %v5458
  %v5585 = vadd.f32 %v4875, %v5463
  %v5586 = vadd.f32 %v4876, %v5468
  %v5587 = vadd.f32 %v4877, %v5473
  %v5588 = vadd.f32 %v4878, %v5478
  %v5589 = vadd.f32 %v4879, %v5483
  %v5590 = vadd.f32 %v4880, %v5488
  %v5591 = vadd.f32 %v4881, %v5493
  %v5592 = vadd.f32 %v4882, %v5498
  %v5593 = vadd.f32 %v4883, %v5503
  %v5594 = vadd.f32 %v4884, %v5508
  %v5595 = vadd.f32 %v4885, %v5513
  %v5596 = vadd.f32 %v4886, %v5518
  %v5597 = vadd.f32 %v4887, %v5523
  %v5598 = vadd.f32 %v4888, %v5528
  %v5599 = vadd.f32 %v4889, %v5533
  %v5600 = vld [vmem:[%s4179 + $0x2] sm:$0xff]
  %v5601 = vld [vmem:[%s4179 + $0xa] sm:$0xff]
  %v5602 = vld [vmem:[%s4179 + $0x1a] sm:$0xff]
  %v5603 = vld [vmem:[%s4179 + $0x22] sm:$0xff]
  %v5604 = vld [vmem:[%s4179 + $0x32] sm:$0xff]
  %v5605 = vld [vmem:[%s4179 + $0x3a] sm:$0xff]
  %v5606 = vld [vmem:[%s4179 + $0x4a] sm:$0xff]
  %v5607 = vld [vmem:[%s4179 + $0x52] sm:$0xff]
  %v5608 = vld [vmem:[%s4179 + $0x62] sm:$0xff]
  %v5609 = vld [vmem:[%s4179 + $0x6a] sm:$0xff]
  %v5610 = vld [vmem:[%s4179 + $0x7a] sm:$0xff]
  %v5611 = vld [vmem:[%s4179 + $0x82] sm:$0xff]
  %v5612 = vld [vmem:[%s4179 + $0x92] sm:$0xff]
  %v5613 = vld [vmem:[%s4179 + $0x9a] sm:$0xff]
  %v5614 = vld [vmem:[%s4179 + $0xaa] sm:$0xff]
  %v5615 = vld [vmem:[%s4179 + $0xb2] sm:$0xff]
  %v5616 = vld [vmem:[%s4179 + $0xc2] sm:$0xff]
  %v5617 = vld [vmem:[%s4179 + $0xca] sm:$0xff]
  %v5618 = vld [vmem:[%s4179 + $0xda] sm:$0xff]
  %v5619 = vld [vmem:[%s4179 + $0xe2] sm:$0xff]
  %v5620 = vld [vmem:[%s4179 + $0xf2] sm:$0xff]
  %v5621 = vld [vmem:[%s4179 + $0xfa] sm:$0xff]
  %v5622 = vld [vmem:[%s4179 + $0x10a] sm:$0xff]
  %v5623 = vld [vmem:[%s4179 + $0x112] sm:$0xff]
  %v5624 = vld [vmem:[%s4179 + $0x122] sm:$0xff]
  %v5625 = vld [vmem:[%s4179 + $0x12a] sm:$0xff]
  %v5626 = vld [vmem:[%s4179 + $0x13a] sm:$0xff]
  %v5627 = vld [vmem:[%s4179 + $0x142] sm:$0xff]
  %v5628 = vld [vmem:[%s4179 + $0x152] sm:$0xff]
  %v5629 = vld [vmem:[%s4179 + $0x15a] sm:$0xff]
  %v5630 = vld [vmem:[%s4179 + $0x16a] sm:$0xff]
  %v5631 = vld [vmem:[%s4179 + $0x172] sm:$0xff]
  %v5632 = vld [vmem:[%s4179 + $0x1b2] sm:$0xff]
  %v5633 = vld [vmem:[%s4179 + $0x1ba] sm:$0xff]
  %v5634 = vld [vmem:[%s4179 + $0x1ca] sm:$0xff]
  %v5635 = vld [vmem:[%s4179 + $0x1d2] sm:$0xff]
  %v5636 = vld [vmem:[%s4179 + $0x1e2] sm:$0xff]
  %v5637 = vld [vmem:[%s4179 + $0x1ea] sm:$0xff]
  %v5638 = vld [vmem:[%s4179 + $0x1fa] sm:$0xff]
  %v5639 = vld [vmem:[%s4179 + $0x202] sm:$0xff]
  %v5640 = vld [vmem:[%s4179 + $0x212] sm:$0xff]
  %v5641 = vld [vmem:[%s4179 + $0x21a] sm:$0xff]
  %v5642 = vld [vmem:[%s4179 + $0x22a] sm:$0xff]
  %v5643 = vld [vmem:[%s4179 + $0x232] sm:$0xff]
  %v5644 = vld [vmem:[%s4179 + $0x242] sm:$0xff]
  %v5645 = vld [vmem:[%s4179 + $0x24a] sm:$0xff]
  %v5646 = vld [vmem:[%s4179 + $0x25a] sm:$0xff]
  %v5647 = vld [vmem:[%s4179 + $0x262] sm:$0xff]
  %v5648 = vld [vmem:[%s4179 + $0x272] sm:$0xff]
  %v5649 = vld [vmem:[%s4179 + $0x27a] sm:$0xff]
  %v5650 = vld [vmem:[%s4179 + $0x28a] sm:$0xff]
  %v5651 = vld [vmem:[%s4179 + $0x292] sm:$0xff]
  %v5652 = vld [vmem:[%s4179 + $0x2a2] sm:$0xff]
  %v5653 = vld [vmem:[%s4179 + $0x2aa] sm:$0xff]
  %v5654 = vld [vmem:[%s4179 + $0x2ba] sm:$0xff]
  %v5655 = vld [vmem:[%s4179 + $0x2c2] sm:$0xff]
  %v5656 = vld [vmem:[%s4179 + $0x2d2] sm:$0xff]
  %v5657 = vld [vmem:[%s4179 + $0x2da] sm:$0xff]
  %v5658 = vld [vmem:[%s4179 + $0x2ea] sm:$0xff]
  %v5659 = vld [vmem:[%s4179 + $0x2f2] sm:$0xff]
  %v5660 = vld [vmem:[%s4179 + $0x302] sm:$0xff]
  %v5661 = vld [vmem:[%s4179 + $0x30a] sm:$0xff]
  %v5662 = vld [vmem:[%s4179 + $0x31a] sm:$0xff]
  %v5663 = vld [vmem:[%s4179 + $0x322] sm:$0xff]
  %s5664 = scalar_lea.vmem %s1, 32
  %v5665 = vld [vmem:[%s5664] sm:$0x7]
  %v5667 = vsel %vm176, %v5600, 0
  %v5670 = vsel %vm176, %v5601, 0
  %v5673 = vsel %vm176, %v5602, 0
  %v5676 = vsel %vm176, %v5603, 0
  %v5679 = vsel %vm176, %v5604, 0
  %v5682 = vsel %vm176, %v5605, 0
  %v5685 = vsel %vm176, %v5606, 0
  %v5688 = vsel %vm176, %v5607, 0
  %v5691 = vsel %vm176, %v5608, 0
  %v5694 = vsel %vm176, %v5609, 0
  %v5697 = vsel %vm176, %v5610, 0
  %v5700 = vsel %vm176, %v5611, 0
  %v5703 = vsel %vm176, %v5612, 0
  %v5706 = vsel %vm176, %v5613, 0
  %v5709 = vsel %vm176, %v5614, 0
  %v5712 = vsel %vm176, %v5615, 0
  %v5715 = vsel %vm176, %v5616, 0
  %v5718 = vsel %vm176, %v5617, 0
  %v5721 = vsel %vm176, %v5618, 0
  %v5724 = vsel %vm176, %v5619, 0
  %v5727 = vsel %vm176, %v5620, 0
  %v5730 = vsel %vm176, %v5621, 0
  %v5733 = vsel %vm176, %v5622, 0
  %v5736 = vsel %vm176, %v5623, 0
  %v5739 = vsel %vm176, %v5624, 0
  %v5742 = vsel %vm176, %v5625, 0
  %v5745 = vsel %vm176, %v5626, 0
  %v5748 = vsel %vm176, %v5627, 0
  %v5751 = vsel %vm176, %v5628, 0
  %v5754 = vsel %vm176, %v5629, 0
  %v5757 = vsel %vm176, %v5630, 0
  %v5760 = vsel %vm176, %v5631, 0
  %v5763 = vsel %vm176, %v5632, 0
  %v5766 = vsel %vm176, %v5633, 0
  %v5769 = vsel %vm176, %v5634, 0
  %v5772 = vsel %vm176, %v5635, 0
  %v5775 = vsel %vm176, %v5636, 0
  %v5778 = vsel %vm176, %v5637, 0
  %v5781 = vsel %vm176, %v5638, 0
  %v5784 = vsel %vm176, %v5639, 0
  %v5787 = vsel %vm176, %v5640, 0
  %v5790 = vsel %vm176, %v5641, 0
  %v5793 = vsel %vm176, %v5642, 0
  %v5796 = vsel %vm176, %v5643, 0
  %v5799 = vsel %vm176, %v5644, 0
  %v5802 = vsel %vm176, %v5645, 0
  %v5805 = vsel %vm176, %v5646, 0
  %v5808 = vsel %vm176, %v5647, 0
  %v5811 = vsel %vm176, %v5648, 0
  %v5814 = vsel %vm176, %v5649, 0
  %v5817 = vsel %vm176, %v5650, 0
  %v5820 = vsel %vm176, %v5651, 0
  %v5823 = vsel %vm176, %v5652, 0
  %v5826 = vsel %vm176, %v5653, 0
  %v5829 = vsel %vm176, %v5654, 0
  %v5832 = vsel %vm176, %v5655, 0
  %v5835 = vsel %vm176, %v5656, 0
  %v5838 = vsel %vm176, %v5657, 0
  %v5841 = vsel %vm176, %v5658, 0
  %v5844 = vsel %vm176, %v5659, 0
  %v5847 = vsel %vm176, %v5660, 0
  %v5850 = vsel %vm176, %v5661, 0
  %v5853 = vsel %vm176, %v5662, 0
  %v5856 = vsel %vm176, %v5663, 0
  %v5859 = vsel %vm369, %v5665, 0
  %5861 = vmatprep.subr.mxu0 0.0
  %5862 = vmatpush1.msra.mxu0 0.0
  %5863 = vmatprep.subr.mxu0 0.0
  %5864 = vmatpush1.msra.mxu0 0.0
  %5865 = vmatprep.subr.mxu0 0.0
  %5866 = vmatpush1.msra.mxu0 0.0
  %5867 = vmatprep.subr.mxu0 0.0
  %5868 = vmatpush1.msra.mxu0 0.0
  %5869 = vmatprep.subr.mxu0 0.0
  %5870 = vmatpush1.msra.mxu0 0.0
  %5871 = vmatprep.subr.mxu0 0.0
  %5872 = vmatpush1.msra.mxu0 0.0
  %5873 = vmatprep.subr.mxu0 0.0
  %5874 = vmatpush1.msra.mxu0 0.0
  %5875 = vmatprep.subr.mxu0 0.0
  %5876 = vmatpush1.msra.mxu0 0.0
  %5877 = vmatprep.subr.mxu0 0.0
  %5878 = vmatpush1.msra.mxu0 0.0
  %5879 = vmatprep.subr.mxu0 0.0
  %5880 = vmatpush1.msra.mxu0 0.0
  %5881 = vmatprep.subr.mxu0 0.0
  %5882 = vmatpush1.msra.mxu0 0.0
  %5883 = vmatprep.subr.mxu0 0.0
  %5884 = vmatpush1.msra.mxu0 0.0
  %5885 = vmatprep.subr.mxu0 0.0
  %5886 = vmatpush1.msra.mxu0 0.0
  %5887 = vmatprep.subr.mxu0 0.0
  %5888 = vmatpush1.msra.mxu0 0.0
  %5889 = vmatprep.subr.mxu0 0.0
  %5890 = vmatpush1.msra.mxu0 0.0
  %5891 = vmatprep.subr.mxu0 0.0
  %5892 = vmatpush1.msra.mxu0 %v5859
  %5893 = vmatprep.subr.mxu0 0.0
  %5894 = vmatpush2.msra.mxu0 0.0
  %5895 = vmatprep.subr.mxu0 0.0
  %5896 = vmatpush2.msra.mxu0 0.0
  %5897 = vmatprep.subr.mxu0 0.0
  %5898 = vmatpush2.msra.mxu0 0.0
  %5899 = vmatprep.subr.mxu0 0.0
  %5900 = vmatpush2.msra.mxu0 0.0
  %5901 = vmatprep.subr.mxu0 0.0
  %5902 = vmatpush2.msra.mxu0 0.0
  %5903 = vmatprep.subr.mxu0 0.0
  %5904 = vmatpush2.msra.mxu0 0.0
  %5905 = vmatprep.subr.mxu0 0.0
  %5906 = vmatpush2.msra.mxu0 0.0
  %5907 = vmatprep.subr.mxu0 0.0
  %5908 = vmatpush2.msra.mxu0 0.0
  %5909 = vmatprep.subr.mxu0 0.0
  %5910 = vmatpush2.msra.mxu0 0.0
  %5911 = vmatprep.subr.mxu0 0.0
  %5912 = vmatpush2.msra.mxu0 0.0
  %5913 = vmatprep.subr.mxu0 0.0
  %5914 = vmatpush2.msra.mxu0 0.0
  %5915 = vmatprep.subr.mxu0 0.0
  %5916 = vmatpush2.msra.mxu0 0.0
  %5917 = vmatprep.subr.mxu0 0.0
  %5918 = vmatpush2.msra.mxu0 0.0
  %5919 = vmatprep.subr.mxu0 0.0
  %5920 = vmatpush2.msra.mxu0 0.0
  %5921 = vmatprep.subr.mxu0 0.0
  %5922 = vmatpush2.msra.mxu0 0.0
  %5923 = vmatprep.subr.mxu0 0.0
  %5924 = vmatpush2.msra.mxu0 0.0
  %5925 = vmatprep.mubr.f32.mxu0 0.0
  %5926 = vmatmul.mubr.f32.gmra.mxu0 %v5667
  %v5927 = vpop.f32.mrf.mxu0
  %v5928 = vadd.f32 0.0, %v5927
  %v5929 = vpop.f32.mrf.mxu0
  %5930 = vmatprep.mubr.f32.mxu0 0.0
  %5931 = vmatmul.mubr.f32.gmra.mxu0 %v5670
  %v5932 = vpop.f32.mrf.mxu0
  %v5933 = vadd.f32 0.0, %v5932
  %v5934 = vpop.f32.mrf.mxu0
  %5935 = vmatprep.mubr.f32.mxu0 0.0
  %5936 = vmatmul.mubr.f32.gmra.mxu0 %v5673
  %v5937 = vpop.f32.mrf.mxu0
  %v5938 = vadd.f32 0.0, %v5937
  %v5939 = vpop.f32.mrf.mxu0
  %5940 = vmatprep.mubr.f32.mxu0 0.0
  %5941 = vmatmul.mubr.f32.gmra.mxu0 %v5676
  %v5942 = vpop.f32.mrf.mxu0
  %v5943 = vadd.f32 0.0, %v5942
  %v5944 = vpop.f32.mrf.mxu0
  %5945 = vmatprep.mubr.f32.mxu0 0.0
  %5946 = vmatmul.mubr.f32.gmra.mxu0 %v5679
  %v5947 = vpop.f32.mrf.mxu0
  %v5948 = vadd.f32 0.0, %v5947
  %v5949 = vpop.f32.mrf.mxu0
  %5950 = vmatprep.mubr.f32.mxu0 0.0
  %5951 = vmatmul.mubr.f32.gmra.mxu0 %v5682
  %v5952 = vpop.f32.mrf.mxu0
  %v5953 = vadd.f32 0.0, %v5952
  %v5954 = vpop.f32.mrf.mxu0
  %5955 = vmatprep.mubr.f32.mxu0 0.0
  %5956 = vmatmul.mubr.f32.gmra.mxu0 %v5685
  %v5957 = vpop.f32.mrf.mxu0
  %v5958 = vadd.f32 0.0, %v5957
  %v5959 = vpop.f32.mrf.mxu0
  %5960 = vmatprep.mubr.f32.mxu0 0.0
  %5961 = vmatmul.mubr.f32.gmra.mxu0 %v5688
  %v5962 = vpop.f32.mrf.mxu0
  %v5963 = vadd.f32 0.0, %v5962
  %v5964 = vpop.f32.mrf.mxu0
  %5965 = vmatprep.mubr.f32.mxu0 0.0
  %5966 = vmatmul.mubr.f32.gmra.mxu0 %v5691
  %v5967 = vpop.f32.mrf.mxu0
  %v5968 = vadd.f32 0.0, %v5967
  %v5969 = vpop.f32.mrf.mxu0
  %5970 = vmatprep.mubr.f32.mxu0 0.0
  %5971 = vmatmul.mubr.f32.gmra.mxu0 %v5694
  %v5972 = vpop.f32.mrf.mxu0
  %v5973 = vadd.f32 0.0, %v5972
  %v5974 = vpop.f32.mrf.mxu0
  %5975 = vmatprep.mubr.f32.mxu0 0.0
  %5976 = vmatmul.mubr.f32.gmra.mxu0 %v5697
  %v5977 = vpop.f32.mrf.mxu0
  %v5978 = vadd.f32 0.0, %v5977
  %v5979 = vpop.f32.mrf.mxu0
  %5980 = vmatprep.mubr.f32.mxu0 0.0
  %5981 = vmatmul.mubr.f32.gmra.mxu0 %v5700
  %v5982 = vpop.f32.mrf.mxu0
  %v5983 = vadd.f32 0.0, %v5982
  %v5984 = vpop.f32.mrf.mxu0
  %5985 = vmatprep.mubr.f32.mxu0 0.0
  %5986 = vmatmul.mubr.f32.gmra.mxu0 %v5703
  %v5987 = vpop.f32.mrf.mxu0
  %v5988 = vadd.f32 0.0, %v5987
  %v5989 = vpop.f32.mrf.mxu0
  %5990 = vmatprep.mubr.f32.mxu0 0.0
  %5991 = vmatmul.mubr.f32.gmra.mxu0 %v5706
  %v5992 = vpop.f32.mrf.mxu0
  %v5993 = vadd.f32 0.0, %v5992
  %v5994 = vpop.f32.mrf.mxu0
  %5995 = vmatprep.mubr.f32.mxu0 0.0
  %5996 = vmatmul.mubr.f32.gmra.mxu0 %v5709
  %v5997 = vpop.f32.mrf.mxu0
  %v5998 = vadd.f32 0.0, %v5997
  %v5999 = vpop.f32.mrf.mxu0
  %6000 = vmatprep.mubr.f32.mxu0 0.0
  %6001 = vmatmul.mubr.f32.gmra.mxu0 %v5712
  %v6002 = vpop.f32.mrf.mxu0
  %v6003 = vadd.f32 0.0, %v6002
  %v6004 = vpop.f32.mrf.mxu0
  %6005 = vmatprep.mubr.f32.mxu0 0.0
  %6006 = vmatmul.mubr.f32.gmra.mxu0 %v5715
  %v6007 = vpop.f32.mrf.mxu0
  %v6008 = vadd.f32 0.0, %v6007
  %v6009 = vpop.f32.mrf.mxu0
  %6010 = vmatprep.mubr.f32.mxu0 0.0
  %6011 = vmatmul.mubr.f32.gmra.mxu0 %v5718
  %v6012 = vpop.f32.mrf.mxu0
  %v6013 = vadd.f32 0.0, %v6012
  %v6014 = vpop.f32.mrf.mxu0
  %6015 = vmatprep.mubr.f32.mxu0 0.0
  %6016 = vmatmul.mubr.f32.gmra.mxu0 %v5721
  %v6017 = vpop.f32.mrf.mxu0
  %v6018 = vadd.f32 0.0, %v6017
  %v6019 = vpop.f32.mrf.mxu0
  %6020 = vmatprep.mubr.f32.mxu0 0.0
  %6021 = vmatmul.mubr.f32.gmra.mxu0 %v5724
  %v6022 = vpop.f32.mrf.mxu0
  %v6023 = vadd.f32 0.0, %v6022
  %v6024 = vpop.f32.mrf.mxu0
  %6025 = vmatprep.mubr.f32.mxu0 0.0
  %6026 = vmatmul.mubr.f32.gmra.mxu0 %v5727
  %v6027 = vpop.f32.mrf.mxu0
  %v6028 = vadd.f32 0.0, %v6027
  %v6029 = vpop.f32.mrf.mxu0
  %6030 = vmatprep.mubr.f32.mxu0 0.0
  %6031 = vmatmul.mubr.f32.gmra.mxu0 %v5730
  %v6032 = vpop.f32.mrf.mxu0
  %v6033 = vadd.f32 0.0, %v6032
  %v6034 = vpop.f32.mrf.mxu0
  %6035 = vmatprep.mubr.f32.mxu0 0.0
  %6036 = vmatmul.mubr.f32.gmra.mxu0 %v5733
  %v6037 = vpop.f32.mrf.mxu0
  %v6038 = vadd.f32 0.0, %v6037
  %v6039 = vpop.f32.mrf.mxu0
  %6040 = vmatprep.mubr.f32.mxu0 0.0
  %6041 = vmatmul.mubr.f32.gmra.mxu0 %v5736
  %v6042 = vpop.f32.mrf.mxu0
  %v6043 = vadd.f32 0.0, %v6042
  %v6044 = vpop.f32.mrf.mxu0
  %6045 = vmatprep.mubr.f32.mxu0 0.0
  %6046 = vmatmul.mubr.f32.gmra.mxu0 %v5739
  %v6047 = vpop.f32.mrf.mxu0
  %v6048 = vadd.f32 0.0, %v6047
  %v6049 = vpop.f32.mrf.mxu0
  %6050 = vmatprep.mubr.f32.mxu0 0.0
  %6051 = vmatmul.mubr.f32.gmra.mxu0 %v5742
  %v6052 = vpop.f32.mrf.mxu0
  %v6053 = vadd.f32 0.0, %v6052
  %v6054 = vpop.f32.mrf.mxu0
  %6055 = vmatprep.mubr.f32.mxu0 0.0
  %6056 = vmatmul.mubr.f32.gmra.mxu0 %v5745
  %v6057 = vpop.f32.mrf.mxu0
  %v6058 = vadd.f32 0.0, %v6057
  %v6059 = vpop.f32.mrf.mxu0
  %6060 = vmatprep.mubr.f32.mxu0 0.0
  %6061 = vmatmul.mubr.f32.gmra.mxu0 %v5748
  %v6062 = vpop.f32.mrf.mxu0
  %v6063 = vadd.f32 0.0, %v6062
  %v6064 = vpop.f32.mrf.mxu0
  %6065 = vmatprep.mubr.f32.mxu0 0.0
  %6066 = vmatmul.mubr.f32.gmra.mxu0 %v5751
  %v6067 = vpop.f32.mrf.mxu0
  %v6068 = vadd.f32 0.0, %v6067
  %v6069 = vpop.f32.mrf.mxu0
  %6070 = vmatprep.mubr.f32.mxu0 0.0
  %6071 = vmatmul.mubr.f32.gmra.mxu0 %v5754
  %v6072 = vpop.f32.mrf.mxu0
  %v6073 = vadd.f32 0.0, %v6072
  %v6074 = vpop.f32.mrf.mxu0
  %6075 = vmatprep.mubr.f32.mxu0 0.0
  %6076 = vmatmul.mubr.f32.gmra.mxu0 %v5757
  %v6077 = vpop.f32.mrf.mxu0
  %v6078 = vadd.f32 0.0, %v6077
  %v6079 = vpop.f32.mrf.mxu0
  %6080 = vmatprep.mubr.f32.mxu0 0.0
  %6081 = vmatmul.mubr.f32.gmra.mxu0 %v5760
  %v6082 = vpop.f32.mrf.mxu0
  %v6083 = vadd.f32 0.0, %v6082
  %v6084 = vpop.f32.mrf.mxu0
  %6085 = vmatprep.mubr.f32.mxu0 0.0
  %6086 = vmatmul.mubr.f32.gmra.mxu0 %v5763
  %v6087 = vpop.f32.mrf.mxu0
  %v6088 = vadd.f32 0.0, %v6087
  %v6089 = vpop.f32.mrf.mxu0
  %6090 = vmatprep.mubr.f32.mxu0 0.0
  %6091 = vmatmul.mubr.f32.gmra.mxu0 %v5766
  %v6092 = vpop.f32.mrf.mxu0
  %v6093 = vadd.f32 0.0, %v6092
  %v6094 = vpop.f32.mrf.mxu0
  %6095 = vmatprep.mubr.f32.mxu0 0.0
  %6096 = vmatmul.mubr.f32.gmra.mxu0 %v5769
  %v6097 = vpop.f32.mrf.mxu0
  %v6098 = vadd.f32 0.0, %v6097
  %v6099 = vpop.f32.mrf.mxu0
  %6100 = vmatprep.mubr.f32.mxu0 0.0
  %6101 = vmatmul.mubr.f32.gmra.mxu0 %v5772
  %v6102 = vpop.f32.mrf.mxu0
  %v6103 = vadd.f32 0.0, %v6102
  %v6104 = vpop.f32.mrf.mxu0
  %6105 = vmatprep.mubr.f32.mxu0 0.0
  %6106 = vmatmul.mubr.f32.gmra.mxu0 %v5775
  %v6107 = vpop.f32.mrf.mxu0
  %v6108 = vadd.f32 0.0, %v6107
  %v6109 = vpop.f32.mrf.mxu0
  %6110 = vmatprep.mubr.f32.mxu0 0.0
  %6111 = vmatmul.mubr.f32.gmra.mxu0 %v5778
  %v6112 = vpop.f32.mrf.mxu0
  %v6113 = vadd.f32 0.0, %v6112
  %v6114 = vpop.f32.mrf.mxu0
  %6115 = vmatprep.mubr.f32.mxu0 0.0
  %6116 = vmatmul.mubr.f32.gmra.mxu0 %v5781
  %v6117 = vpop.f32.mrf.mxu0
  %v6118 = vadd.f32 0.0, %v6117
  %v6119 = vpop.f32.mrf.mxu0
  %6120 = vmatprep.mubr.f32.mxu0 0.0
  %6121 = vmatmul.mubr.f32.gmra.mxu0 %v5784
  %v6122 = vpop.f32.mrf.mxu0
  %v6123 = vadd.f32 0.0, %v6122
  %v6124 = vpop.f32.mrf.mxu0
  %6125 = vmatprep.mubr.f32.mxu0 0.0
  %6126 = vmatmul.mubr.f32.gmra.mxu0 %v5787
  %v6127 = vpop.f32.mrf.mxu0
  %v6128 = vadd.f32 0.0, %v6127
  %v6129 = vpop.f32.mrf.mxu0
  %6130 = vmatprep.mubr.f32.mxu0 0.0
  %6131 = vmatmul.mubr.f32.gmra.mxu0 %v5790
  %v6132 = vpop.f32.mrf.mxu0
  %v6133 = vadd.f32 0.0, %v6132
  %v6134 = vpop.f32.mrf.mxu0
  %6135 = vmatprep.mubr.f32.mxu0 0.0
  %6136 = vmatmul.mubr.f32.gmra.mxu0 %v5793
  %v6137 = vpop.f32.mrf.mxu0
  %v6138 = vadd.f32 0.0, %v6137
  %v6139 = vpop.f32.mrf.mxu0
  %6140 = vmatprep.mubr.f32.mxu0 0.0
  %6141 = vmatmul.mubr.f32.gmra.mxu0 %v5796
  %v6142 = vpop.f32.mrf.mxu0
  %v6143 = vadd.f32 0.0, %v6142
  %v6144 = vpop.f32.mrf.mxu0
  %6145 = vmatprep.mubr.f32.mxu0 0.0
  %6146 = vmatmul.mubr.f32.gmra.mxu0 %v5799
  %v6147 = vpop.f32.mrf.mxu0
  %v6148 = vadd.f32 0.0, %v6147
  %v6149 = vpop.f32.mrf.mxu0
  %6150 = vmatprep.mubr.f32.mxu0 0.0
  %6151 = vmatmul.mubr.f32.gmra.mxu0 %v5802
  %v6152 = vpop.f32.mrf.mxu0
  %v6153 = vadd.f32 0.0, %v6152
  %v6154 = vpop.f32.mrf.mxu0
  %6155 = vmatprep.mubr.f32.mxu0 0.0
  %6156 = vmatmul.mubr.f32.gmra.mxu0 %v5805
  %v6157 = vpop.f32.mrf.mxu0
  %v6158 = vadd.f32 0.0, %v6157
  %v6159 = vpop.f32.mrf.mxu0
  %6160 = vmatprep.mubr.f32.mxu0 0.0
  %6161 = vmatmul.mubr.f32.gmra.mxu0 %v5808
  %v6162 = vpop.f32.mrf.mxu0
  %v6163 = vadd.f32 0.0, %v6162
  %v6164 = vpop.f32.mrf.mxu0
  %6165 = vmatprep.mubr.f32.mxu0 0.0
  %6166 = vmatmul.mubr.f32.gmra.mxu0 %v5811
  %v6167 = vpop.f32.mrf.mxu0
  %v6168 = vadd.f32 0.0, %v6167
  %v6169 = vpop.f32.mrf.mxu0
  %6170 = vmatprep.mubr.f32.mxu0 0.0
  %6171 = vmatmul.mubr.f32.gmra.mxu0 %v5814
  %v6172 = vpop.f32.mrf.mxu0
  %v6173 = vadd.f32 0.0, %v6172
  %v6174 = vpop.f32.mrf.mxu0
  %6175 = vmatprep.mubr.f32.mxu0 0.0
  %6176 = vmatmul.mubr.f32.gmra.mxu0 %v5817
  %v6177 = vpop.f32.mrf.mxu0
  %v6178 = vadd.f32 0.0, %v6177
  %v6179 = vpop.f32.mrf.mxu0
  %6180 = vmatprep.mubr.f32.mxu0 0.0
  %6181 = vmatmul.mubr.f32.gmra.mxu0 %v5820
  %v6182 = vpop.f32.mrf.mxu0
  %v6183 = vadd.f32 0.0, %v6182
  %v6184 = vpop.f32.mrf.mxu0
  %6185 = vmatprep.mubr.f32.mxu0 0.0
  %6186 = vmatmul.mubr.f32.gmra.mxu0 %v5823
  %v6187 = vpop.f32.mrf.mxu0
  %v6188 = vadd.f32 0.0, %v6187
  %v6189 = vpop.f32.mrf.mxu0
  %6190 = vmatprep.mubr.f32.mxu0 0.0
  %6191 = vmatmul.mubr.f32.gmra.mxu0 %v5826
  %v6192 = vpop.f32.mrf.mxu0
  %v6193 = vadd.f32 0.0, %v6192
  %v6194 = vpop.f32.mrf.mxu0
  %6195 = vmatprep.mubr.f32.mxu0 0.0
  %6196 = vmatmul.mubr.f32.gmra.mxu0 %v5829
  %v6197 = vpop.f32.mrf.mxu0
  %v6198 = vadd.f32 0.0, %v6197
  %v6199 = vpop.f32.mrf.mxu0
  %6200 = vmatprep.mubr.f32.mxu0 0.0
  %6201 = vmatmul.mubr.f32.gmra.mxu0 %v5832
  %v6202 = vpop.f32.mrf.mxu0
  %v6203 = vadd.f32 0.0, %v6202
  %v6204 = vpop.f32.mrf.mxu0
  %6205 = vmatprep.mubr.f32.mxu0 0.0
  %6206 = vmatmul.mubr.f32.gmra.mxu0 %v5835
  %v6207 = vpop.f32.mrf.mxu0
  %v6208 = vadd.f32 0.0, %v6207
  %v6209 = vpop.f32.mrf.mxu0
  %6210 = vmatprep.mubr.f32.mxu0 0.0
  %6211 = vmatmul.mubr.f32.gmra.mxu0 %v5838
  %v6212 = vpop.f32.mrf.mxu0
  %v6213 = vadd.f32 0.0, %v6212
  %v6214 = vpop.f32.mrf.mxu0
  %6215 = vmatprep.mubr.f32.mxu0 0.0
  %6216 = vmatmul.mubr.f32.gmra.mxu0 %v5841
  %v6217 = vpop.f32.mrf.mxu0
  %v6218 = vadd.f32 0.0, %v6217
  %v6219 = vpop.f32.mrf.mxu0
  %6220 = vmatprep.mubr.f32.mxu0 0.0
  %6221 = vmatmul.mubr.f32.gmra.mxu0 %v5844
  %v6222 = vpop.f32.mrf.mxu0
  %v6223 = vadd.f32 0.0, %v6222
  %v6224 = vpop.f32.mrf.mxu0
  %6225 = vmatprep.mubr.f32.mxu0 0.0
  %6226 = vmatmul.mubr.f32.gmra.mxu0 %v5847
  %v6227 = vpop.f32.mrf.mxu0
  %v6228 = vadd.f32 0.0, %v6227
  %v6229 = vpop.f32.mrf.mxu0
  %6230 = vmatprep.mubr.f32.mxu0 0.0
  %6231 = vmatmul.mubr.f32.gmra.mxu0 %v5850
  %v6232 = vpop.f32.mrf.mxu0
  %v6233 = vadd.f32 0.0, %v6232
  %v6234 = vpop.f32.mrf.mxu0
  %6235 = vmatprep.mubr.f32.mxu0 0.0
  %6236 = vmatmul.mubr.f32.gmra.mxu0 %v5853
  %v6237 = vpop.f32.mrf.mxu0
  %v6238 = vadd.f32 0.0, %v6237
  %v6239 = vpop.f32.mrf.mxu0
  %6240 = vmatprep.mubr.f32.mxu0 0.0
  %6241 = vmatmul.mubr.f32.gmra.mxu0 %v5856
  %v6242 = vpop.f32.mrf.mxu0
  %v6243 = vadd.f32 0.0, %v6242
  %v6244 = vpop.f32.mrf.mxu0
  %6245 = vdwg.mxu0
  %v6246 = vadd.f32 %v5536, %v5928
  %v6247 = vadd.f32 %v5537, %v5933
  %v6248 = vadd.f32 %v5538, %v5938
  %v6249 = vadd.f32 %v5539, %v5943
  %v6250 = vadd.f32 %v5540, %v5948
  %v6251 = vadd.f32 %v5541, %v5953
  %v6252 = vadd.f32 %v5542, %v5958
  %v6253 = vadd.f32 %v5543, %v5963
  %v6254 = vadd.f32 %v5544, %v5968
  %v6255 = vadd.f32 %v5545, %v5973
  %v6256 = vadd.f32 %v5546, %v5978
  %v6257 = vadd.f32 %v5547, %v5983
  %v6258 = vadd.f32 %v5548, %v5988
  %v6259 = vadd.f32 %v5549, %v5993
  %v6260 = vadd.f32 %v5550, %v5998
  %v6261 = vadd.f32 %v5551, %v6003
  %v6262 = vadd.f32 %v5552, %v6008
  %v6263 = vadd.f32 %v5553, %v6013
  %v6264 = vadd.f32 %v5554, %v6018
  %v6265 = vadd.f32 %v5555, %v6023
  %v6266 = vadd.f32 %v5556, %v6028
  %v6267 = vadd.f32 %v5557, %v6033
  %v6268 = vadd.f32 %v5558, %v6038
  %v6269 = vadd.f32 %v5559, %v6043
  %v6270 = vadd.f32 %v5560, %v6048
  %v6271 = vadd.f32 %v5561, %v6053
  %v6272 = vadd.f32 %v5562, %v6058
  %v6273 = vadd.f32 %v5563, %v6063
  %v6274 = vadd.f32 %v5564, %v6068
  %v6275 = vadd.f32 %v5565, %v6073
  %v6276 = vadd.f32 %v5566, %v6078
  %v6277 = vadd.f32 %v5567, %v6083
  %v6278 = vadd.f32 %v5568, %v6088
  %v6279 = vadd.f32 %v5569, %v6093
  %v6280 = vadd.f32 %v5570, %v6098
  %v6281 = vadd.f32 %v5571, %v6103
  %v6282 = vadd.f32 %v5572, %v6108
  %v6283 = vadd.f32 %v5573, %v6113
  %v6284 = vadd.f32 %v5574, %v6118
  %v6285 = vadd.f32 %v5575, %v6123
  %v6286 = vadd.f32 %v5576, %v6128
  %v6287 = vadd.f32 %v5577, %v6133
  %v6288 = vadd.f32 %v5578, %v6138
  %v6289 = vadd.f32 %v5579, %v6143
  %v6290 = vadd.f32 %v5580, %v6148
  %v6291 = vadd.f32 %v5581, %v6153
  %v6292 = vadd.f32 %v5582, %v6158
  %v6293 = vadd.f32 %v5583, %v6163
  %v6294 = vadd.f32 %v5584, %v6168
  %v6295 = vadd.f32 %v5585, %v6173
  %v6296 = vadd.f32 %v5586, %v6178
  %v6297 = vadd.f32 %v5587, %v6183
  %v6298 = vadd.f32 %v5588, %v6188
  %v6299 = vadd.f32 %v5589, %v6193
  %v6300 = vadd.f32 %v5590, %v6198
  %v6301 = vadd.f32 %v5591, %v6203
  %v6302 = vadd.f32 %v5592, %v6208
  %v6303 = vadd.f32 %v5593, %v6213
  %v6304 = vadd.f32 %v5594, %v6218
  %v6305 = vadd.f32 %v5595, %v6223
  %v6306 = vadd.f32 %v5596, %v6228
  %v6307 = vadd.f32 %v5597, %v6233
  %v6308 = vadd.f32 %v5598, %v6238
  %v6309 = vadd.f32 %v5599, %v6243
  %vm6310 = vcmask 261120
  %v6311 = vsel %vm6310, %v6246, 0.0
  %v6312 = vsel %vm6310, %v6247, 0.0
  %v6313 = vadd.f32 %v6311, %v6312
  %v6314 = vsel %vm6310, %v6248, 0.0
  %v6315 = vadd.f32 %v6313, %v6314
  %v6316 = vsel %vm6310, %v6249, 0.0
  %v6317 = vadd.f32 %v6315, %v6316
  %v6318 = vsel %vm6310, %v6250, 0.0
  %v6319 = vadd.f32 %v6317, %v6318
  %v6320 = vsel %vm6310, %v6251, 0.0
  %v6321 = vadd.f32 %v6319, %v6320
  %v6322 = vsel %vm6310, %v6252, 0.0
  %v6323 = vadd.f32 %v6321, %v6322
  %v6324 = vsel %vm6310, %v6253, 0.0
  %v6325 = vadd.f32 %v6323, %v6324
  %v6326 = vsel %vm6310, %v6254, 0.0
  %v6327 = vadd.f32 %v6325, %v6326
  %v6328 = vsel %vm6310, %v6255, 0.0
  %v6329 = vadd.f32 %v6327, %v6328
  %v6330 = vsel %vm6310, %v6256, 0.0
  %v6331 = vadd.f32 %v6329, %v6330
  %v6332 = vsel %vm6310, %v6257, 0.0
  %v6333 = vadd.f32 %v6331, %v6332
  %v6334 = vsel %vm6310, %v6258, 0.0
  %v6335 = vadd.f32 %v6333, %v6334
  %v6336 = vsel %vm6310, %v6259, 0.0
  %v6337 = vadd.f32 %v6335, %v6336
  %v6338 = vsel %vm6310, %v6260, 0.0
  %v6339 = vadd.f32 %v6337, %v6338
  %v6340 = vsel %vm6310, %v6261, 0.0
  %v6341 = vadd.f32 %v6339, %v6340
  %v6342 = vsel %vm6310, %v6262, 0.0
  %v6343 = vadd.f32 %v6341, %v6342
  %v6344 = vsel %vm6310, %v6263, 0.0
  %v6345 = vadd.f32 %v6343, %v6344
  %v6346 = vsel %vm6310, %v6264, 0.0
  %v6347 = vadd.f32 %v6345, %v6346
  %v6348 = vsel %vm6310, %v6265, 0.0
  %v6349 = vadd.f32 %v6347, %v6348
  %v6350 = vsel %vm6310, %v6266, 0.0
  %v6351 = vadd.f32 %v6349, %v6350
  %v6352 = vsel %vm6310, %v6267, 0.0
  %v6353 = vadd.f32 %v6351, %v6352
  %v6354 = vsel %vm6310, %v6268, 0.0
  %v6355 = vadd.f32 %v6353, %v6354
  %v6356 = vsel %vm6310, %v6269, 0.0
  %v6357 = vadd.f32 %v6355, %v6356
  %v6358 = vsel %vm6310, %v6270, 0.0
  %v6359 = vadd.f32 %v6357, %v6358
  %v6360 = vsel %vm6310, %v6271, 0.0
  %v6361 = vadd.f32 %v6359, %v6360
  %v6362 = vsel %vm6310, %v6272, 0.0
  %v6363 = vadd.f32 %v6361, %v6362
  %v6364 = vsel %vm6310, %v6273, 0.0
  %v6365 = vadd.f32 %v6363, %v6364
  %v6366 = vsel %vm6310, %v6274, 0.0
  %v6367 = vadd.f32 %v6365, %v6366
  %v6368 = vsel %vm6310, %v6275, 0.0
  %v6369 = vadd.f32 %v6367, %v6368
  %v6370 = vsel %vm6310, %v6276, 0.0
  %v6371 = vadd.f32 %v6369, %v6370
  %v6372 = vsel %vm6310, %v6277, 0.0
  %v6373 = vadd.f32 %v6371, %v6372
  %v6374 = vsel %vm6310, %v6278, 0.0
  %v6375 = vadd.f32 %v6373, %v6374
  %v6376 = vsel %vm6310, %v6279, 0.0
  %v6377 = vadd.f32 %v6375, %v6376
  %v6378 = vsel %vm6310, %v6280, 0.0
  %v6379 = vadd.f32 %v6377, %v6378
  %v6380 = vsel %vm6310, %v6281, 0.0
  %v6381 = vadd.f32 %v6379, %v6380
  %v6382 = vsel %vm6310, %v6282, 0.0
  %v6383 = vadd.f32 %v6381, %v6382
  %v6384 = vsel %vm6310, %v6283, 0.0
  %v6385 = vadd.f32 %v6383, %v6384
  %v6386 = vsel %vm6310, %v6284, 0.0
  %v6387 = vadd.f32 %v6385, %v6386
  %v6388 = vsel %vm6310, %v6285, 0.0
  %v6389 = vadd.f32 %v6387, %v6388
  %v6390 = vsel %vm6310, %v6286, 0.0
  %v6391 = vadd.f32 %v6389, %v6390
  %v6392 = vsel %vm6310, %v6287, 0.0
  %v6393 = vadd.f32 %v6391, %v6392
  %v6394 = vsel %vm6310, %v6288, 0.0
  %v6395 = vadd.f32 %v6393, %v6394
  %v6396 = vsel %vm6310, %v6289, 0.0
  %v6397 = vadd.f32 %v6395, %v6396
  %v6398 = vsel %vm6310, %v6290, 0.0
  %v6399 = vadd.f32 %v6397, %v6398
  %v6400 = vsel %vm6310, %v6291, 0.0
  %v6401 = vadd.f32 %v6399, %v6400
  %v6402 = vsel %vm6310, %v6292, 0.0
  %v6403 = vadd.f32 %v6401, %v6402
  %v6404 = vsel %vm6310, %v6293, 0.0
  %v6405 = vadd.f32 %v6403, %v6404
  %v6406 = vsel %vm6310, %v6294, 0.0
  %v6407 = vadd.f32 %v6405, %v6406
  %v6408 = vsel %vm6310, %v6295, 0.0
  %v6409 = vadd.f32 %v6407, %v6408
  %v6410 = vsel %vm6310, %v6296, 0.0
  %v6411 = vadd.f32 %v6409, %v6410
  %v6412 = vsel %vm6310, %v6297, 0.0
  %v6413 = vadd.f32 %v6411, %v6412
  %v6414 = vsel %vm6310, %v6298, 0.0
  %v6415 = vadd.f32 %v6413, %v6414
  %v6416 = vsel %vm6310, %v6299, 0.0
  %v6417 = vadd.f32 %v6415, %v6416
  %v6418 = vsel %vm6310, %v6300, 0.0
  %v6419 = vadd.f32 %v6417, %v6418
  %v6420 = vsel %vm6310, %v6301, 0.0
  %v6421 = vadd.f32 %v6419, %v6420
  %v6422 = vsel %vm6310, %v6302, 0.0
  %v6423 = vadd.f32 %v6421, %v6422
  %v6424 = vsel %vm6310, %v6303, 0.0
  %v6425 = vadd.f32 %v6423, %v6424
  %v6426 = vsel %vm6310, %v6304, 0.0
  %v6427 = vadd.f32 %v6425, %v6426
  %v6428 = vsel %vm6310, %v6305, 0.0
  %v6429 = vadd.f32 %v6427, %v6428
  %v6430 = vsel %vm6310, %v6306, 0.0
  %v6431 = vadd.f32 %v6429, %v6430
  %v6432 = vsel %vm6310, %v6307, 0.0
  %v6433 = vadd.f32 %v6431, %v6432
  %v6434 = vsel %vm6310, %v6308, 0.0
  %v6435 = vadd.f32 %v6433, %v6434
  %v6436 = vsel %vm6310, %v6309, 0.0
  %v6437 = vadd.f32 %v6435, %v6436
  %v6438 = vrot.slane %v6437, 4
  %v6439 = vadd.f32 %v6437, %v6438
  %v6440 = vrot.slane %v6439, 2
  %v6441 = vadd.f32 %v6439, %v6440
  %v6442 = vrot.slane %v6441, 1
  %v6443 = vadd.f32 %v6441, %v6442
  %v6444 = vrcp.pop 512.0
  %v6445 = vmul.f32 %v6443, %v6444
  %v6446 = vsub.f32 %v6246, %v6445
  %v6447 = vsub.f32 %v6247, %v6445
  %v6448 = vsub.f32 %v6248, %v6445
  %v6449 = vsub.f32 %v6249, %v6445
  %v6450 = vsub.f32 %v6250, %v6445
  %v6451 = vsub.f32 %v6251, %v6445
  %v6452 = vsub.f32 %v6252, %v6445
  %v6453 = vsub.f32 %v6253, %v6445
  %v6454 = vsub.f32 %v6254, %v6445
  %v6455 = vsub.f32 %v6255, %v6445
  %v6456 = vsub.f32 %v6256, %v6445
  %v6457 = vsub.f32 %v6257, %v6445
  %v6458 = vsub.f32 %v6258, %v6445
  %v6459 = vsub.f32 %v6259, %v6445
  %v6460 = vsub.f32 %v6260, %v6445
  %v6461 = vsub.f32 %v6261, %v6445
  %v6462 = vsub.f32 %v6262, %v6445
  %v6463 = vsub.f32 %v6263, %v6445
  %v6464 = vsub.f32 %v6264, %v6445
  %v6465 = vsub.f32 %v6265, %v6445
  %v6466 = vsub.f32 %v6266, %v6445
  %v6467 = vsub.f32 %v6267, %v6445
  %v6468 = vsub.f32 %v6268, %v6445
  %v6469 = vsub.f32 %v6269, %v6445
  %v6470 = vsub.f32 %v6270, %v6445
  %v6471 = vsub.f32 %v6271, %v6445
  %v6472 = vsub.f32 %v6272, %v6445
  %v6473 = vsub.f32 %v6273, %v6445
  %v6474 = vsub.f32 %v6274, %v6445
  %v6475 = vsub.f32 %v6275, %v6445
  %v6476 = vsub.f32 %v6276, %v6445
  %v6477 = vsub.f32 %v6277, %v6445
  %v6478 = vsub.f32 %v6278, %v6445
  %v6479 = vsub.f32 %v6279, %v6445
  %v6480 = vsub.f32 %v6280, %v6445
  %v6481 = vsub.f32 %v6281, %v6445
  %v6482 = vsub.f32 %v6282, %v6445
  %v6483 = vsub.f32 %v6283, %v6445
  %v6484 = vsub.f32 %v6284, %v6445
  %v6485 = vsub.f32 %v6285, %v6445
  %v6486 = vsub.f32 %v6286, %v6445
  %v6487 = vsub.f32 %v6287, %v6445
  %v6488 = vsub.f32 %v6288, %v6445
  %v6489 = vsub.f32 %v6289, %v6445
  %v6490 = vsub.f32 %v6290, %v6445
  %v6491 = vsub.f32 %v6291, %v6445
  %v6492 = vsub.f32 %v6292, %v6445
  %v6493 = vsub.f32 %v6293, %v6445
  %v6494 = vsub.f32 %v6294, %v6445
  %v6495 = vsub.f32 %v6295, %v6445
  %v6496 = vsub.f32 %v6296, %v6445
  %v6497 = vsub.f32 %v6297, %v6445
  %v6498 = vsub.f32 %v6298, %v6445
  %v6499 = vsub.f32 %v6299, %v6445
  %v6500 = vsub.f32 %v6300, %v6445
  %v6501 = vsub.f32 %v6301, %v6445
  %v6502 = vsub.f32 %v6302, %v6445
  %v6503 = vsub.f32 %v6303, %v6445
  %v6504 = vsub.f32 %v6304, %v6445
  %v6505 = vsub.f32 %v6305, %v6445
  %v6506 = vsub.f32 %v6306, %v6445
  %v6507 = vsub.f32 %v6307, %v6445
  %v6508 = vsub.f32 %v6308, %v6445
  %v6509 = vsub.f32 %v6309, %v6445
  %v6510 = vmul.f32 %v6446, %v6446
  %v6511 = vmul.f32 %v6447, %v6447
  %v6512 = vmul.f32 %v6448, %v6448
  %v6513 = vmul.f32 %v6449, %v6449
  %v6514 = vmul.f32 %v6450, %v6450
  %v6515 = vmul.f32 %v6451, %v6451
  %v6516 = vmul.f32 %v6452, %v6452
  %v6517 = vmul.f32 %v6453, %v6453
  %v6518 = vmul.f32 %v6454, %v6454
  %v6519 = vmul.f32 %v6455, %v6455
  %v6520 = vmul.f32 %v6456, %v6456
  %v6521 = vmul.f32 %v6457, %v6457
  %v6522 = vmul.f32 %v6458, %v6458
  %v6523 = vmul.f32 %v6459, %v6459
  %v6524 = vmul.f32 %v6460, %v6460
  %v6525 = vmul.f32 %v6461, %v6461
  %v6526 = vmul.f32 %v6462, %v6462
  %v6527 = vmul.f32 %v6463, %v6463
  %v6528 = vmul.f32 %v6464, %v6464
  %v6529 = vmul.f32 %v6465, %v6465
  %v6530 = vmul.f32 %v6466, %v6466
  %v6531 = vmul.f32 %v6467, %v6467
  %v6532 = vmul.f32 %v6468, %v6468
  %v6533 = vmul.f32 %v6469, %v6469
  %v6534 = vmul.f32 %v6470, %v6470
  %v6535 = vmul.f32 %v6471, %v6471
  %v6536 = vmul.f32 %v6472, %v6472
  %v6537 = vmul.f32 %v6473, %v6473
  %v6538 = vmul.f32 %v6474, %v6474
  %v6539 = vmul.f32 %v6475, %v6475
  %v6540 = vmul.f32 %v6476, %v6476
  %v6541 = vmul.f32 %v6477, %v6477
  %v6542 = vmul.f32 %v6478, %v6478
  %v6543 = vmul.f32 %v6479, %v6479
  %v6544 = vmul.f32 %v6480, %v6480
  %v6545 = vmul.f32 %v6481, %v6481
  %v6546 = vmul.f32 %v6482, %v6482
  %v6547 = vmul.f32 %v6483, %v6483
  %v6548 = vmul.f32 %v6484, %v6484
  %v6549 = vmul.f32 %v6485, %v6485
  %v6550 = vmul.f32 %v6486, %v6486
  %v6551 = vmul.f32 %v6487, %v6487
  %v6552 = vmul.f32 %v6488, %v6488
  %v6553 = vmul.f32 %v6489, %v6489
  %v6554 = vmul.f32 %v6490, %v6490
  %v6555 = vmul.f32 %v6491, %v6491
  %v6556 = vmul.f32 %v6492, %v6492
  %v6557 = vmul.f32 %v6493, %v6493
  %v6558 = vmul.f32 %v6494, %v6494
  %v6559 = vmul.f32 %v6495, %v6495
  %v6560 = vmul.f32 %v6496, %v6496
  %v6561 = vmul.f32 %v6497, %v6497
  %v6562 = vmul.f32 %v6498, %v6498
  %v6563 = vmul.f32 %v6499, %v6499
  %v6564 = vmul.f32 %v6500, %v6500
  %v6565 = vmul.f32 %v6501, %v6501
  %v6566 = vmul.f32 %v6502, %v6502
  %v6567 = vmul.f32 %v6503, %v6503
  %v6568 = vmul.f32 %v6504, %v6504
  %v6569 = vmul.f32 %v6505, %v6505
  %v6570 = vmul.f32 %v6506, %v6506
  %v6571 = vmul.f32 %v6507, %v6507
  %v6572 = vmul.f32 %v6508, %v6508
  %v6573 = vmul.f32 %v6509, %v6509
  %v6574 = vsel %vm6310, %v6510, 0.0
  %v6575 = vsel %vm6310, %v6511, 0.0
  %v6576 = vadd.f32 %v6574, %v6575
  %v6577 = vsel %vm6310, %v6512, 0.0
  %v6578 = vadd.f32 %v6576, %v6577
  %v6579 = vsel %vm6310, %v6513, 0.0
  %v6580 = vadd.f32 %v6578, %v6579
  %v6581 = vsel %vm6310, %v6514, 0.0
  %v6582 = vadd.f32 %v6580, %v6581
  %v6583 = vsel %vm6310, %v6515, 0.0
  %v6584 = vadd.f32 %v6582, %v6583
  %v6585 = vsel %vm6310, %v6516, 0.0
  %v6586 = vadd.f32 %v6584, %v6585
  %v6587 = vsel %vm6310, %v6517, 0.0
  %v6588 = vadd.f32 %v6586, %v6587
  %v6589 = vsel %vm6310, %v6518, 0.0
  %v6590 = vadd.f32 %v6588, %v6589
  %v6591 = vsel %vm6310, %v6519, 0.0
  %v6592 = vadd.f32 %v6590, %v6591
  %v6593 = vsel %vm6310, %v6520, 0.0
  %v6594 = vadd.f32 %v6592, %v6593
  %v6595 = vsel %vm6310, %v6521, 0.0
  %v6596 = vadd.f32 %v6594, %v6595
  %v6597 = vsel %vm6310, %v6522, 0.0
  %v6598 = vadd.f32 %v6596, %v6597
  %v6599 = vsel %vm6310, %v6523, 0.0
  %v6600 = vadd.f32 %v6598, %v6599
  %v6601 = vsel %vm6310, %v6524, 0.0
  %v6602 = vadd.f32 %v6600, %v6601
  %v6603 = vsel %vm6310, %v6525, 0.0
  %v6604 = vadd.f32 %v6602, %v6603
  %v6605 = vsel %vm6310, %v6526, 0.0
  %v6606 = vadd.f32 %v6604, %v6605
  %v6607 = vsel %vm6310, %v6527, 0.0
  %v6608 = vadd.f32 %v6606, %v6607
  %v6609 = vsel %vm6310, %v6528, 0.0
  %v6610 = vadd.f32 %v6608, %v6609
  %v6611 = vsel %vm6310, %v6529, 0.0
  %v6612 = vadd.f32 %v6610, %v6611
  %v6613 = vsel %vm6310, %v6530, 0.0
  %v6614 = vadd.f32 %v6612, %v6613
  %v6615 = vsel %vm6310, %v6531, 0.0
  %v6616 = vadd.f32 %v6614, %v6615
  %v6617 = vsel %vm6310, %v6532, 0.0
  %v6618 = vadd.f32 %v6616, %v6617
  %v6619 = vsel %vm6310, %v6533, 0.0
  %v6620 = vadd.f32 %v6618, %v6619
  %v6621 = vsel %vm6310, %v6534, 0.0
  %v6622 = vadd.f32 %v6620, %v6621
  %v6623 = vsel %vm6310, %v6535, 0.0
  %v6624 = vadd.f32 %v6622, %v6623
  %v6625 = vsel %vm6310, %v6536, 0.0
  %v6626 = vadd.f32 %v6624, %v6625
  %v6627 = vsel %vm6310, %v6537, 0.0
  %v6628 = vadd.f32 %v6626, %v6627
  %v6629 = vsel %vm6310, %v6538, 0.0
  %v6630 = vadd.f32 %v6628, %v6629
  %v6631 = vsel %vm6310, %v6539, 0.0
  %v6632 = vadd.f32 %v6630, %v6631
  %v6633 = vsel %vm6310, %v6540, 0.0
  %v6634 = vadd.f32 %v6632, %v6633
  %v6635 = vsel %vm6310, %v6541, 0.0
  %v6636 = vadd.f32 %v6634, %v6635
  %v6637 = vsel %vm6310, %v6542, 0.0
  %v6638 = vadd.f32 %v6636, %v6637
  %v6639 = vsel %vm6310, %v6543, 0.0
  %v6640 = vadd.f32 %v6638, %v6639
  %v6641 = vsel %vm6310, %v6544, 0.0
  %v6642 = vadd.f32 %v6640, %v6641
  %v6643 = vsel %vm6310, %v6545, 0.0
  %v6644 = vadd.f32 %v6642, %v6643
  %v6645 = vsel %vm6310, %v6546, 0.0
  %v6646 = vadd.f32 %v6644, %v6645
  %v6647 = vsel %vm6310, %v6547, 0.0
  %v6648 = vadd.f32 %v6646, %v6647
  %v6649 = vsel %vm6310, %v6548, 0.0
  %v6650 = vadd.f32 %v6648, %v6649
  %v6651 = vsel %vm6310, %v6549, 0.0
  %v6652 = vadd.f32 %v6650, %v6651
  %v6653 = vsel %vm6310, %v6550, 0.0
  %v6654 = vadd.f32 %v6652, %v6653
  %v6655 = vsel %vm6310, %v6551, 0.0
  %v6656 = vadd.f32 %v6654, %v6655
  %v6657 = vsel %vm6310, %v6552, 0.0
  %v6658 = vadd.f32 %v6656, %v6657
  %v6659 = vsel %vm6310, %v6553, 0.0
  %v6660 = vadd.f32 %v6658, %v6659
  %v6661 = vsel %vm6310, %v6554, 0.0
  %v6662 = vadd.f32 %v6660, %v6661
  %v6663 = vsel %vm6310, %v6555, 0.0
  %v6664 = vadd.f32 %v6662, %v6663
  %v6665 = vsel %vm6310, %v6556, 0.0
  %v6666 = vadd.f32 %v6664, %v6665
  %v6667 = vsel %vm6310, %v6557, 0.0
  %v6668 = vadd.f32 %v6666, %v6667
  %v6669 = vsel %vm6310, %v6558, 0.0
  %v6670 = vadd.f32 %v6668, %v6669
  %v6671 = vsel %vm6310, %v6559, 0.0
  %v6672 = vadd.f32 %v6670, %v6671
  %v6673 = vsel %vm6310, %v6560, 0.0
  %v6674 = vadd.f32 %v6672, %v6673
  %v6675 = vsel %vm6310, %v6561, 0.0
  %v6676 = vadd.f32 %v6674, %v6675
  %v6677 = vsel %vm6310, %v6562, 0.0
  %v6678 = vadd.f32 %v6676, %v6677
  %v6679 = vsel %vm6310, %v6563, 0.0
  %v6680 = vadd.f32 %v6678, %v6679
  %v6681 = vsel %vm6310, %v6564, 0.0
  %v6682 = vadd.f32 %v6680, %v6681
  %v6683 = vsel %vm6310, %v6565, 0.0
  %v6684 = vadd.f32 %v6682, %v6683
  %v6685 = vsel %vm6310, %v6566, 0.0
  %v6686 = vadd.f32 %v6684, %v6685
  %v6687 = vsel %vm6310, %v6567, 0.0
  %v6688 = vadd.f32 %v6686, %v6687
  %v6689 = vsel %vm6310, %v6568, 0.0
  %v6690 = vadd.f32 %v6688, %v6689
  %v6691 = vsel %vm6310, %v6569, 0.0
  %v6692 = vadd.f32 %v6690, %v6691
  %v6693 = vsel %vm6310, %v6570, 0.0
  %v6694 = vadd.f32 %v6692, %v6693
  %v6695 = vsel %vm6310, %v6571, 0.0
  %v6696 = vadd.f32 %v6694, %v6695
  %v6697 = vsel %vm6310, %v6572, 0.0
  %v6698 = vadd.f32 %v6696, %v6697
  %v6699 = vsel %vm6310, %v6573, 0.0
  %v6700 = vadd.f32 %v6698, %v6699
  %v6701 = vrot.slane %v6700, 4
  %v6702 = vadd.f32 %v6700, %v6701
  %v6703 = vrot.slane %v6702, 2
  %v6704 = vadd.f32 %v6702, %v6703
  %v6705 = vrot.slane %v6704, 1
  %v6706 = vadd.f32 %v6704, %v6705
  %v6707 = vmul.f32 %v6706, %v6444
  %v6708 = vadd.f32 %v6707, 1e-05
  %v6709 = vrsqrt.pop %v6708
  %v6710 = vmul.f32 %v6446, %v6709
  %v6711 = vmul.f32 %v6447, %v6709
  %v6712 = vmul.f32 %v6448, %v6709
  %v6713 = vmul.f32 %v6449, %v6709
  %v6714 = vmul.f32 %v6450, %v6709
  %v6715 = vmul.f32 %v6451, %v6709
  %v6716 = vmul.f32 %v6452, %v6709
  %v6717 = vmul.f32 %v6453, %v6709
  %v6718 = vmul.f32 %v6454, %v6709
  %v6719 = vmul.f32 %v6455, %v6709
  %v6720 = vmul.f32 %v6456, %v6709
  %v6721 = vmul.f32 %v6457, %v6709
  %v6722 = vmul.f32 %v6458, %v6709
  %v6723 = vmul.f32 %v6459, %v6709
  %v6724 = vmul.f32 %v6460, %v6709
  %v6725 = vmul.f32 %v6461, %v6709
  %v6726 = vmul.f32 %v6462, %v6709
  %v6727 = vmul.f32 %v6463, %v6709
  %v6728 = vmul.f32 %v6464, %v6709
  %v6729 = vmul.f32 %v6465, %v6709
  %v6730 = vmul.f32 %v6466, %v6709
  %v6731 = vmul.f32 %v6467, %v6709
  %v6732 = vmul.f32 %v6468, %v6709
  %v6733 = vmul.f32 %v6469, %v6709
  %v6734 = vmul.f32 %v6470, %v6709
  %v6735 = vmul.f32 %v6471, %v6709
  %v6736 = vmul.f32 %v6472, %v6709
  %v6737 = vmul.f32 %v6473, %v6709
  %v6738 = vmul.f32 %v6474, %v6709
  %v6739 = vmul.f32 %v6475, %v6709
  %v6740 = vmul.f32 %v6476, %v6709
  %v6741 = vmul.f32 %v6477, %v6709
  %v6742 = vmul.f32 %v6478, %v6709
  %v6743 = vmul.f32 %v6479, %v6709
  %v6744 = vmul.f32 %v6480, %v6709
  %v6745 = vmul.f32 %v6481, %v6709
  %v6746 = vmul.f32 %v6482, %v6709
  %v6747 = vmul.f32 %v6483, %v6709
  %v6748 = vmul.f32 %v6484, %v6709
  %v6749 = vmul.f32 %v6485, %v6709
  %v6750 = vmul.f32 %v6486, %v6709
  %v6751 = vmul.f32 %v6487, %v6709
  %v6752 = vmul.f32 %v6488, %v6709
  %v6753 = vmul.f32 %v6489, %v6709
  %v6754 = vmul.f32 %v6490, %v6709
  %v6755 = vmul.f32 %v6491, %v6709
  %v6756 = vmul.f32 %v6492, %v6709
  %v6757 = vmul.f32 %v6493, %v6709
  %v6758 = vmul.f32 %v6494, %v6709
  %v6759 = vmul.f32 %v6495, %v6709
  %v6760 = vmul.f32 %v6496, %v6709
  %v6761 = vmul.f32 %v6497, %v6709
  %v6762 = vmul.f32 %v6498, %v6709
  %v6763 = vmul.f32 %v6499, %v6709
  %v6764 = vmul.f32 %v6500, %v6709
  %v6765 = vmul.f32 %v6501, %v6709
  %v6766 = vmul.f32 %v6502, %v6709
  %v6767 = vmul.f32 %v6503, %v6709
  %v6768 = vmul.f32 %v6504, %v6709
  %v6769 = vmul.f32 %v6505, %v6709
  %v6770 = vmul.f32 %v6506, %v6709
  %v6771 = vmul.f32 %v6507, %v6709
  %v6772 = vmul.f32 %v6508, %v6709
  %v6773 = vmul.f32 %v6509, %v6709
  %v6774 = vld [vmem:[%s2] sm:$0x1]
  %v6776 = vlaneseq
  %v6777 = vshrl.u32 %v6776, 7
  %v6778 = vsub.s32 0, %v6777
  %v6779 = vrot.slane %v6774, %v6778
  %v6781 = vmul.f32 %v6710, %v6779
  %v6782 = vmul.f32 %v6711, %v6779
  %v6783 = vmul.f32 %v6712, %v6779
  %v6784 = vmul.f32 %v6713, %v6779
  %v6785 = vmul.f32 %v6714, %v6779
  %v6786 = vmul.f32 %v6715, %v6779
  %v6787 = vmul.f32 %v6716, %v6779
  %v6788 = vmul.f32 %v6717, %v6779
  %v6789 = vmul.f32 %v6718, %v6779
  %v6790 = vmul.f32 %v6719, %v6779
  %v6791 = vmul.f32 %v6720, %v6779
  %v6792 = vmul.f32 %v6721, %v6779
  %v6793 = vmul.f32 %v6722, %v6779
  %v6794 = vmul.f32 %v6723, %v6779
  %v6795 = vmul.f32 %v6724, %v6779
  %v6796 = vmul.f32 %v6725, %v6779
  %v6797 = vmul.f32 %v6726, %v6779
  %v6798 = vmul.f32 %v6727, %v6779
  %v6799 = vmul.f32 %v6728, %v6779
  %v6800 = vmul.f32 %v6729, %v6779
  %v6801 = vmul.f32 %v6730, %v6779
  %v6802 = vmul.f32 %v6731, %v6779
  %v6803 = vmul.f32 %v6732, %v6779
  %v6804 = vmul.f32 %v6733, %v6779
  %v6805 = vmul.f32 %v6734, %v6779
  %v6806 = vmul.f32 %v6735, %v6779
  %v6807 = vmul.f32 %v6736, %v6779
  %v6808 = vmul.f32 %v6737, %v6779
  %v6809 = vmul.f32 %v6738, %v6779
  %v6810 = vmul.f32 %v6739, %v6779
  %v6811 = vmul.f32 %v6740, %v6779
  %v6812 = vmul.f32 %v6741, %v6779
  %v6813 = vmul.f32 %v6742, %v6779
  %v6814 = vmul.f32 %v6743, %v6779
  %v6815 = vmul.f32 %v6744, %v6779
  %v6816 = vmul.f32 %v6745, %v6779
  %v6817 = vmul.f32 %v6746, %v6779
  %v6818 = vmul.f32 %v6747, %v6779
  %v6819 = vmul.f32 %v6748, %v6779
  %v6820 = vmul.f32 %v6749, %v6779
  %v6821 = vmul.f32 %v6750, %v6779
  %v6822 = vmul.f32 %v6751, %v6779
  %v6823 = vmul.f32 %v6752, %v6779
  %v6824 = vmul.f32 %v6753, %v6779
  %v6825 = vmul.f32 %v6754, %v6779
  %v6826 = vmul.f32 %v6755, %v6779
  %v6827 = vmul.f32 %v6756, %v6779
  %v6828 = vmul.f32 %v6757, %v6779
  %v6829 = vmul.f32 %v6758, %v6779
  %v6830 = vmul.f32 %v6759, %v6779
  %v6831 = vmul.f32 %v6760, %v6779
  %v6832 = vmul.f32 %v6761, %v6779
  %v6833 = vmul.f32 %v6762, %v6779
  %v6834 = vmul.f32 %v6763, %v6779
  %v6835 = vmul.f32 %v6764, %v6779
  %v6836 = vmul.f32 %v6765, %v6779
  %v6837 = vmul.f32 %v6766, %v6779
  %v6838 = vmul.f32 %v6767, %v6779
  %v6839 = vmul.f32 %v6768, %v6779
  %v6840 = vmul.f32 %v6769, %v6779
  %v6841 = vmul.f32 %v6770, %v6779
  %v6842 = vmul.f32 %v6771, %v6779
  %v6843 = vmul.f32 %v6772, %v6779
  %v6844 = vmul.f32 %v6773, %v6779
  %v6845 = vld [vmem:[%s3] sm:$0x1]
  %v6847 = vlaneseq
  %v6848 = vshrl.u32 %v6847, 7
  %v6849 = vsub.s32 0, %v6848
  %v6850 = vrot.slane %v6845, %v6849
  %v6852 = vadd.f32 %v6781, %v6850
  %v6853 = vadd.f32 %v6782, %v6850
  %v6854 = vadd.f32 %v6783, %v6850
  %v6855 = vadd.f32 %v6784, %v6850
  %v6856 = vadd.f32 %v6785, %v6850
  %v6857 = vadd.f32 %v6786, %v6850
  %v6858 = vadd.f32 %v6787, %v6850
  %v6859 = vadd.f32 %v6788, %v6850
  %v6860 = vadd.f32 %v6789, %v6850
  %v6861 = vadd.f32 %v6790, %v6850
  %v6862 = vadd.f32 %v6791, %v6850
  %v6863 = vadd.f32 %v6792, %v6850
  %v6864 = vadd.f32 %v6793, %v6850
  %v6865 = vadd.f32 %v6794, %v6850
  %v6866 = vadd.f32 %v6795, %v6850
  %v6867 = vadd.f32 %v6796, %v6850
  %v6868 = vadd.f32 %v6797, %v6850
  %v6869 = vadd.f32 %v6798, %v6850
  %v6870 = vadd.f32 %v6799, %v6850
  %v6871 = vadd.f32 %v6800, %v6850
  %v6872 = vadd.f32 %v6801, %v6850
  %v6873 = vadd.f32 %v6802, %v6850
  %v6874 = vadd.f32 %v6803, %v6850
  %v6875 = vadd.f32 %v6804, %v6850
  %v6876 = vadd.f32 %v6805, %v6850
  %v6877 = vadd.f32 %v6806, %v6850
  %v6878 = vadd.f32 %v6807, %v6850
  %v6879 = vadd.f32 %v6808, %v6850
  %v6880 = vadd.f32 %v6809, %v6850
  %v6881 = vadd.f32 %v6810, %v6850
  %v6882 = vadd.f32 %v6811, %v6850
  %v6883 = vadd.f32 %v6812, %v6850
  %v6884 = vadd.f32 %v6813, %v6850
  %v6885 = vadd.f32 %v6814, %v6850
  %v6886 = vadd.f32 %v6815, %v6850
  %v6887 = vadd.f32 %v6816, %v6850
  %v6888 = vadd.f32 %v6817, %v6850
  %v6889 = vadd.f32 %v6818, %v6850
  %v6890 = vadd.f32 %v6819, %v6850
  %v6891 = vadd.f32 %v6820, %v6850
  %v6892 = vadd.f32 %v6821, %v6850
  %v6893 = vadd.f32 %v6822, %v6850
  %v6894 = vadd.f32 %v6823, %v6850
  %v6895 = vadd.f32 %v6824, %v6850
  %v6896 = vadd.f32 %v6825, %v6850
  %v6897 = vadd.f32 %v6826, %v6850
  %v6898 = vadd.f32 %v6827, %v6850
  %v6899 = vadd.f32 %v6828, %v6850
  %v6900 = vadd.f32 %v6829, %v6850
  %v6901 = vadd.f32 %v6830, %v6850
  %v6902 = vadd.f32 %v6831, %v6850
  %v6903 = vadd.f32 %v6832, %v6850
  %v6904 = vadd.f32 %v6833, %v6850
  %v6905 = vadd.f32 %v6834, %v6850
  %v6906 = vadd.f32 %v6835, %v6850
  %v6907 = vadd.f32 %v6836, %v6850
  %v6908 = vadd.f32 %v6837, %v6850
  %v6909 = vadd.f32 %v6838, %v6850
  %v6910 = vadd.f32 %v6839, %v6850
  %v6911 = vadd.f32 %v6840, %v6850
  %v6912 = vadd.f32 %v6841, %v6850
  %v6913 = vadd.f32 %v6842, %v6850
  %v6914 = vadd.f32 %v6843, %v6850
  %v6915 = vadd.f32 %v6844, %v6850
  %v6916 = vmax.f32 %v6852, 0.0
  %v6917 = vmax.f32 %v6853, 0.0
  %v6918 = vmax.f32 %v6854, 0.0
  %v6919 = vmax.f32 %v6855, 0.0
  %v6920 = vmax.f32 %v6856, 0.0
  %v6921 = vmax.f32 %v6857, 0.0
  %v6922 = vmax.f32 %v6858, 0.0
  %v6923 = vmax.f32 %v6859, 0.0
  %v6924 = vmax.f32 %v6860, 0.0
  %v6925 = vmax.f32 %v6861, 0.0
  %v6926 = vmax.f32 %v6862, 0.0
  %v6927 = vmax.f32 %v6863, 0.0
  %v6928 = vmax.f32 %v6864, 0.0
  %v6929 = vmax.f32 %v6865, 0.0
  %v6930 = vmax.f32 %v6866, 0.0
  %v6931 = vmax.f32 %v6867, 0.0
  %v6932 = vmax.f32 %v6868, 0.0
  %v6933 = vmax.f32 %v6869, 0.0
  %v6934 = vmax.f32 %v6870, 0.0
  %v6935 = vmax.f32 %v6871, 0.0
  %v6936 = vmax.f32 %v6872, 0.0
  %v6937 = vmax.f32 %v6873, 0.0
  %v6938 = vmax.f32 %v6874, 0.0
  %v6939 = vmax.f32 %v6875, 0.0
  %v6940 = vmax.f32 %v6876, 0.0
  %v6941 = vmax.f32 %v6877, 0.0
  %v6942 = vmax.f32 %v6878, 0.0
  %v6943 = vmax.f32 %v6879, 0.0
  %v6944 = vmax.f32 %v6880, 0.0
  %v6945 = vmax.f32 %v6881, 0.0
  %v6946 = vmax.f32 %v6882, 0.0
  %v6947 = vmax.f32 %v6883, 0.0
  %v6948 = vmax.f32 %v6884, 0.0
  %v6949 = vmax.f32 %v6885, 0.0
  %v6950 = vmax.f32 %v6886, 0.0
  %v6951 = vmax.f32 %v6887, 0.0
  %v6952 = vmax.f32 %v6888, 0.0
  %v6953 = vmax.f32 %v6889, 0.0
  %v6954 = vmax.f32 %v6890, 0.0
  %v6955 = vmax.f32 %v6891, 0.0
  %v6956 = vmax.f32 %v6892, 0.0
  %v6957 = vmax.f32 %v6893, 0.0
  %v6958 = vmax.f32 %v6894, 0.0
  %v6959 = vmax.f32 %v6895, 0.0
  %v6960 = vmax.f32 %v6896, 0.0
  %v6961 = vmax.f32 %v6897, 0.0
  %v6962 = vmax.f32 %v6898, 0.0
  %v6963 = vmax.f32 %v6899, 0.0
  %v6964 = vmax.f32 %v6900, 0.0
  %v6965 = vmax.f32 %v6901, 0.0
  %v6966 = vmax.f32 %v6902, 0.0
  %v6967 = vmax.f32 %v6903, 0.0
  %v6968 = vmax.f32 %v6904, 0.0
  %v6969 = vmax.f32 %v6905, 0.0
  %v6970 = vmax.f32 %v6906, 0.0
  %v6971 = vmax.f32 %v6907, 0.0
  %v6972 = vmax.f32 %v6908, 0.0
  %v6973 = vmax.f32 %v6909, 0.0
  %v6974 = vmax.f32 %v6910, 0.0
  %v6975 = vmax.f32 %v6911, 0.0
  %v6976 = vmax.f32 %v6912, 0.0
  %v6977 = vmax.f32 %v6913, 0.0
  %v6978 = vmax.f32 %v6914, 0.0
  %v6979 = vmax.f32 %v6915, 0.0
  %v6980 = vsel %vm6310, %v6916, 0.0
  %v6981 = vsel %vm6310, %v6917, 0.0
  %v6982 = vadd.f32 %v6980, %v6981
  %v6983 = vsel %vm6310, %v6918, 0.0
  %v6984 = vadd.f32 %v6982, %v6983
  %v6985 = vsel %vm6310, %v6919, 0.0
  %v6986 = vadd.f32 %v6984, %v6985
  %v6987 = vsel %vm6310, %v6920, 0.0
  %v6988 = vadd.f32 %v6986, %v6987
  %v6989 = vsel %vm6310, %v6921, 0.0
  %v6990 = vadd.f32 %v6988, %v6989
  %v6991 = vsel %vm6310, %v6922, 0.0
  %v6992 = vadd.f32 %v6990, %v6991
  %v6993 = vsel %vm6310, %v6923, 0.0
  %v6994 = vadd.f32 %v6992, %v6993
  %v6995 = vsel %vm6310, %v6924, 0.0
  %v6996 = vadd.f32 %v6994, %v6995
  %v6997 = vsel %vm6310, %v6925, 0.0
  %v6998 = vadd.f32 %v6996, %v6997
  %v6999 = vsel %vm6310, %v6926, 0.0
  %v7000 = vadd.f32 %v6998, %v6999
  %v7001 = vsel %vm6310, %v6927, 0.0
  %v7002 = vadd.f32 %v7000, %v7001
  %v7003 = vsel %vm6310, %v6928, 0.0
  %v7004 = vadd.f32 %v7002, %v7003
  %v7005 = vsel %vm6310, %v6929, 0.0
  %v7006 = vadd.f32 %v7004, %v7005
  %v7007 = vsel %vm6310, %v6930, 0.0
  %v7008 = vadd.f32 %v7006, %v7007
  %v7009 = vsel %vm6310, %v6931, 0.0
  %v7010 = vadd.f32 %v7008, %v7009
  %v7011 = vsel %vm6310, %v6932, 0.0
  %v7012 = vadd.f32 %v7010, %v7011
  %v7013 = vsel %vm6310, %v6933, 0.0
  %v7014 = vadd.f32 %v7012, %v7013
  %v7015 = vsel %vm6310, %v6934, 0.0
  %v7016 = vadd.f32 %v7014, %v7015
  %v7017 = vsel %vm6310, %v6935, 0.0
  %v7018 = vadd.f32 %v7016, %v7017
  %v7019 = vsel %vm6310, %v6936, 0.0
  %v7020 = vadd.f32 %v7018, %v7019
  %v7021 = vsel %vm6310, %v6937, 0.0
  %v7022 = vadd.f32 %v7020, %v7021
  %v7023 = vsel %vm6310, %v6938, 0.0
  %v7024 = vadd.f32 %v7022, %v7023
  %v7025 = vsel %vm6310, %v6939, 0.0
  %v7026 = vadd.f32 %v7024, %v7025
  %v7027 = vsel %vm6310, %v6940, 0.0
  %v7028 = vadd.f32 %v7026, %v7027
  %v7029 = vsel %vm6310, %v6941, 0.0
  %v7030 = vadd.f32 %v7028, %v7029
  %v7031 = vsel %vm6310, %v6942, 0.0
  %v7032 = vadd.f32 %v7030, %v7031
  %v7033 = vsel %vm6310, %v6943, 0.0
  %v7034 = vadd.f32 %v7032, %v7033
  %v7035 = vsel %vm6310, %v6944, 0.0
  %v7036 = vadd.f32 %v7034, %v7035
  %v7037 = vsel %vm6310, %v6945, 0.0
  %v7038 = vadd.f32 %v7036, %v7037
  %v7039 = vsel %vm6310, %v6946, 0.0
  %v7040 = vadd.f32 %v7038, %v7039
  %v7041 = vsel %vm6310, %v6947, 0.0
  %v7042 = vadd.f32 %v7040, %v7041
  %v7043 = vrot.slane %v7042, 4
  %v7044 = vadd.f32 %v7042, %v7043
  %v7045 = vrot.slane %v7044, 2
  %v7046 = vadd.f32 %v7044, %v7045
  %v7047 = vrot.slane %v7046, 1
  %v7048 = vadd.f32 %v7046, %v7047
  %v7049 = vrcp.pop 256.0
  %v7050 = vmul.f32 %v7048, %v7049
  %v7051 = vsel %vm6310, %v6948, 0.0
  %v7052 = vsel %vm6310, %v6949, 0.0
  %v7053 = vadd.f32 %v7051, %v7052
  %v7054 = vsel %vm6310, %v6950, 0.0
  %v7055 = vadd.f32 %v7053, %v7054
  %v7056 = vsel %vm6310, %v6951, 0.0
  %v7057 = vadd.f32 %v7055, %v7056
  %v7058 = vsel %vm6310, %v6952, 0.0
  %v7059 = vadd.f32 %v7057, %v7058
  %v7060 = vsel %vm6310, %v6953, 0.0
  %v7061 = vadd.f32 %v7059, %v7060
  %v7062 = vsel %vm6310, %v6954, 0.0
  %v7063 = vadd.f32 %v7061, %v7062
  %v7064 = vsel %vm6310, %v6955, 0.0
  %v7065 = vadd.f32 %v7063, %v7064
  %v7066 = vsel %vm6310, %v6956, 0.0
  %v7067 = vadd.f32 %v7065, %v7066
  %v7068 = vsel %vm6310, %v6957, 0.0
  %v7069 = vadd.f32 %v7067, %v7068
  %v7070 = vsel %vm6310, %v6958, 0.0
  %v7071 = vadd.f32 %v7069, %v7070
  %v7072 = vsel %vm6310, %v6959, 0.0
  %v7073 = vadd.f32 %v7071, %v7072
  %v7074 = vsel %vm6310, %v6960, 0.0
  %v7075 = vadd.f32 %v7073, %v7074
  %v7076 = vsel %vm6310, %v6961, 0.0
  %v7077 = vadd.f32 %v7075, %v7076
  %v7078 = vsel %vm6310, %v6962, 0.0
  %v7079 = vadd.f32 %v7077, %v7078
  %v7080 = vsel %vm6310, %v6963, 0.0
  %v7081 = vadd.f32 %v7079, %v7080
  %v7082 = vsel %vm6310, %v6964, 0.0
  %v7083 = vadd.f32 %v7081, %v7082
  %v7084 = vsel %vm6310, %v6965, 0.0
  %v7085 = vadd.f32 %v7083, %v7084
  %v7086 = vsel %vm6310, %v6966, 0.0
  %v7087 = vadd.f32 %v7085, %v7086
  %v7088 = vsel %vm6310, %v6967, 0.0
  %v7089 = vadd.f32 %v7087, %v7088
  %v7090 = vsel %vm6310, %v6968, 0.0
  %v7091 = vadd.f32 %v7089, %v7090
  %v7092 = vsel %vm6310, %v6969, 0.0
  %v7093 = vadd.f32 %v7091, %v7092
  %v7094 = vsel %vm6310, %v6970, 0.0
  %v7095 = vadd.f32 %v7093, %v7094
  %v7096 = vsel %vm6310, %v6971, 0.0
  %v7097 = vadd.f32 %v7095, %v7096
  %v7098 = vsel %vm6310, %v6972, 0.0
  %v7099 = vadd.f32 %v7097, %v7098
  %v7100 = vsel %vm6310, %v6973, 0.0
  %v7101 = vadd.f32 %v7099, %v7100
  %v7102 = vsel %vm6310, %v6974, 0.0
  %v7103 = vadd.f32 %v7101, %v7102
  %v7104 = vsel %vm6310, %v6975, 0.0
  %v7105 = vadd.f32 %v7103, %v7104
  %v7106 = vsel %vm6310, %v6976, 0.0
  %v7107 = vadd.f32 %v7105, %v7106
  %v7108 = vsel %vm6310, %v6977, 0.0
  %v7109 = vadd.f32 %v7107, %v7108
  %v7110 = vsel %vm6310, %v6978, 0.0
  %v7111 = vadd.f32 %v7109, %v7110
  %v7112 = vsel %vm6310, %v6979, 0.0
  %v7113 = vadd.f32 %v7111, %v7112
  %v7114 = vrot.slane %v7113, 4
  %v7115 = vadd.f32 %v7113, %v7114
  %v7116 = vrot.slane %v7115, 2
  %v7117 = vadd.f32 %v7115, %v7116
  %v7118 = vrot.slane %v7117, 1
  %v7119 = vadd.f32 %v7117, %v7118
  %v7120 = vmul.f32 %v7119, %v7049
  %vm7121 = vcmask 1040384
  %v7122 = vsel %vm7121, %v7050, %v7120
  %v7123 = vpack.c.bf16 %v7122, %v7122
  %v7124 = vmul.f32 %v7122, %v7122
  %vm7125 = vcmask 254976
  %v7126 = vsel %vm7125, %v7124, 0.0
  %7127 = vadd.xlane.f32.xlu0 %v7126
  %v7128 = vpop.xlane.xlu0 %7127
  %v7129 = vmax.f32 %v7128, 1e-24
  %v7130 = vrsqrt.pop %v7129
  %v7131 = vmul.f32 %v7122, %v7130
  %v7132 = vpack.c.bf16 %v7131, %v7131
  %v7133 = vld [vmem:[%s4] sm:$0xf]
  %v7134 = vld [vmem:[%s4 + $0x4] sm:$0xf]
  %v7135 = vld [vmem:[%s4 + $0x8] sm:$0xf]
  %v7136 = vld [vmem:[%s4 + $0xc] sm:$0xf]
  %v7141 = vunpack.c.l.b16 %v7133
  %v7142 = vunpack.c.l.b16 %v7134
  %v7143 = vunpack.c.l.b16 %v7135
  %v7144 = vunpack.c.l.b16 %v7136
  %v7145 = vpack.c.b16 %v7142, %v7141
  %v7146 = vpack.c.b16 %v7144, %v7143
  %v7150 = vsel %vm6310, %v7132, 0
  %7152 = vmatprep.subr.bf16.mxu0 0
  %7153 = vmatpush1.bf16.msra.mxu0 0
  %7154 = vmatprep.subr.bf16.mxu0 0
  %7155 = vmatpush1.bf16.msra.mxu0 0
  %7156 = vmatprep.subr.bf16.mxu0 0
  %7157 = vmatpush1.bf16.msra.mxu0 0
  %7158 = vmatprep.subr.bf16.mxu0 0
  %7159 = vmatpush1.bf16.msra.mxu0 0
  %7160 = vmatprep.subr.bf16.mxu0 0
  %7161 = vmatpush1.bf16.msra.mxu0 0
  %7162 = vmatprep.subr.bf16.mxu0 0
  %7163 = vmatpush1.bf16.msra.mxu0 0
  %7164 = vmatprep.subr.bf16.mxu0 0
  %7165 = vmatpush1.bf16.msra.mxu0 %v7146
  %7166 = vmatprep.subr.bf16.mxu0 0
  %7167 = vmatpush1.bf16.msra.mxu0 %v7145
  %7168 = vmatprep.subr.bf16.mxu0 0
  %7169 = vmatpush2.bf16.msra.mxu0 0
  %7170 = vmatprep.subr.bf16.mxu0 0
  %7171 = vmatpush2.bf16.msra.mxu0 0
  %7172 = vmatprep.subr.bf16.mxu0 0
  %7173 = vmatpush2.bf16.msra.mxu0 0
  %7174 = vmatprep.subr.bf16.mxu0 0
  %7175 = vmatpush2.bf16.msra.mxu0 0
  %7176 = vmatprep.subr.bf16.mxu0 0
  %7177 = vmatpush2.bf16.msra.mxu0 0
  %7178 = vmatprep.subr.bf16.mxu0 0
  %7179 = vmatpush2.bf16.msra.mxu0 0
  %7180 = vmatprep.subr.bf16.mxu0 0
  %7181 = vmatpush2.bf16.msra.mxu0 0
  %7182 = vmatprep.subr.bf16.mxu0 0
  %7183 = vmatpush2.bf16.msra.mxu0 0
  %7184 = vmatprep.mubr.bf16.mxu0 0
  %7185 = vmatmul.mubr.bf16.gmra.mxu0 %v7150
  %v7186 = vpop.f32.mrf.mxu0
  %v7187 = vadd.f32 0.0, %v7186
  %v7188 = vpop.f32.mrf.mxu0
  %v7189 = vpop.f32.mrf.mxu0
  %v7190 = vpop.f32.mrf.mxu0
  %7191 = vdwg.mxu0
  %v7192 = vld [vmem:[%s5] sm:$0xff]
  %v7193 = vld [vmem:[%s5 + $0x8] sm:$0xf]
  %v7194 = vld [vmem:[%s5 + $0xc] sm:$0xff]
  %v7195 = vld [vmem:[%s5 + $0x14] sm:$0xf]
  %v7196 = vld [vmem:[%s5 + $0x18] sm:$0xff]
  %v7197 = vld [vmem:[%s5 + $0x20] sm:$0xf]
  %v7198 = vld [vmem:[%s5 + $0x24] sm:$0xff]
  %v7199 = vld [vmem:[%s5 + $0x2c] sm:$0xf]
  %v7200 = vld [vmem:[%s6] sm:$0x7]
  %v7202 = vlaneseq
  %v7203 = vshrl.u32 %v7202, 7
  %v7204 = vsub.s32 0, %v7203
  %v7205 = vrot.slane %v7200, %v7204
  %v7206 = vlaneseq
  %v7207 = vshrl.u32 %v7206, 7
  %v7208 = vsub.s32 1, %v7207
  %v7209 = vrot.slane %v7200, %v7208
  %v7210 = vlaneseq
  %v7211 = vshrl.u32 %v7210, 7
  %v7212 = vsub.s32 2, %v7211
  %v7213 = vrot.slane %v7200, %v7212
  %v7225 = vunpack.c.l.b16 %v7192
  %v7226 = vunpack.c.h.b16 %v7192
  %v7227 = vunpack.c.l.b16 %v7193
  %v7228 = vunpack.c.l.b16 %v7194
  %v7229 = vunpack.c.h.b16 %v7194
  %v7230 = vunpack.c.l.b16 %v7195
  %v7231 = vunpack.c.l.b16 %v7196
  %v7232 = vunpack.c.h.b16 %v7196
  %v7233 = vunpack.c.l.b16 %v7197
  %v7234 = vunpack.c.l.b16 %v7198
  %v7235 = vunpack.c.h.b16 %v7198
  %v7236 = vunpack.c.l.b16 %v7199
  %v7237 = vpack.c.b16 %v7228, %v7225
  %v7238 = vpack.c.b16 %v7229, %v7226
  %v7239 = vpack.c.b16 %v7230, %v7227
  %v7240 = vpack.c.b16 %v7234, %v7231
  %v7241 = vpack.c.b16 %v7235, %v7232
  %v7242 = vpack.c.b16 %v7236, %v7233
  %v7250 = vsel %vm6310, %v7123, 0
  %7252 = vmatprep.subr.bf16.mxu0 0
  %7253 = vmatpush1.bf16.msra.mxu0 0
  %7254 = vmatprep.subr.bf16.mxu0 0
  %7255 = vmatpush1.bf16.msra.mxu0 0
  %7256 = vmatprep.subr.bf16.mxu0 0
  %7257 = vmatpush1.bf16.msra.mxu0 0
  %7258 = vmatprep.subr.bf16.mxu0 0
  %7259 = vmatpush1.bf16.msra.mxu0 0
  %7260 = vmatprep.subr.bf16.mxu0 0
  %7261 = vmatpush1.bf16.msra.mxu0 0
  %7262 = vmatprep.subr.bf16.mxu0 0
  %7263 = vmatpush1.bf16.msra.mxu0 0
  %7264 = vmatprep.subr.bf16.mxu0 %v7241
  %7265 = vmatpush1.bf16.msra.mxu0 %v7240
  %7266 = vmatprep.subr.bf16.mxu0 %v7238
  %7267 = vmatpush1.bf16.msra.mxu0 %v7237
  %7268 = vmatprep.subr.bf16.mxu0 0
  %7269 = vmatpush2.bf16.msra.mxu0 0
  %7270 = vmatprep.subr.bf16.mxu0 0
  %7271 = vmatpush2.bf16.msra.mxu0 0
  %7272 = vmatprep.subr.bf16.mxu0 0
  %7273 = vmatpush2.bf16.msra.mxu0 0
  %7274 = vmatprep.subr.bf16.mxu0 0
  %7275 = vmatpush2.bf16.msra.mxu0 0
  %7276 = vmatprep.subr.bf16.mxu0 0
  %7277 = vmatpush2.bf16.msra.mxu0 0
  %7278 = vmatprep.subr.bf16.mxu0 0
  %7279 = vmatpush2.bf16.msra.mxu0 0
  %7280 = vmatprep.subr.bf16.mxu0 0
  %7281 = vmatpush2.bf16.msra.mxu0 0
  %7282 = vmatprep.subr.bf16.mxu0 0
  %7283 = vmatpush2.bf16.msra.mxu0 0
  %7284 = vmatprep.mubr.bf16.mxu0 0
  %7285 = vmatmul.mubr.bf16.gmra.mxu0 %v7250
  %v7286 = vpop.f32.mrf.mxu0
  %v7287 = vadd.f32 %v7205, %v7286
  %v7288 = vpop.f32.mrf.mxu0
  %v7289 = vadd.f32 %v7209, %v7288
  %v7290 = vpop.f32.mrf.mxu0
  %v7291 = vpop.f32.mrf.mxu0
  %7292 = vdwg.mxu0
  %7293 = vmatprep.subr.bf16.mxu0 0
  %7294 = vmatpush1.bf16.msra.mxu0 0
  %7295 = vmatprep.subr.bf16.mxu0 0
  %7296 = vmatpush1.bf16.msra.mxu0 0
  %7297 = vmatprep.subr.bf16.mxu0 0
  %7298 = vmatpush1.bf16.msra.mxu0 0
  %7299 = vmatprep.subr.bf16.mxu0 0
  %7300 = vmatpush1.bf16.msra.mxu0 0
  %7301 = vmatprep.subr.bf16.mxu0 0
  %7302 = vmatpush1.bf16.msra.mxu0 0
  %7303 = vmatprep.subr.bf16.mxu0 0
  %7304 = vmatpush1.bf16.msra.mxu0 0
  %7305 = vmatprep.subr.bf16.mxu0 0
  %7306 = vmatpush1.bf16.msra.mxu0 %v7242
  %7307 = vmatprep.subr.bf16.mxu0 0
  %7308 = vmatpush1.bf16.msra.mxu0 %v7239
  %7309 = vmatprep.subr.bf16.mxu0 0
  %7310 = vmatpush2.bf16.msra.mxu0 0
  %7311 = vmatprep.subr.bf16.mxu0 0
  %7312 = vmatpush2.bf16.msra.mxu0 0
  %7313 = vmatprep.subr.bf16.mxu0 0
  %7314 = vmatpush2.bf16.msra.mxu0 0
  %7315 = vmatprep.subr.bf16.mxu0 0
  %7316 = vmatpush2.bf16.msra.mxu0 0
  %7317 = vmatprep.subr.bf16.mxu0 0
  %7318 = vmatpush2.bf16.msra.mxu0 0
  %7319 = vmatprep.subr.bf16.mxu0 0
  %7320 = vmatpush2.bf16.msra.mxu0 0
  %7321 = vmatprep.subr.bf16.mxu0 0
  %7322 = vmatpush2.bf16.msra.mxu0 0
  %7323 = vmatprep.subr.bf16.mxu0 0
  %7324 = vmatpush2.bf16.msra.mxu0 0
  %7325 = vmatprep.mubr.bf16.mxu0 0
  %7326 = vmatmul.mubr.bf16.gmra.mxu0 %v7250
  %v7327 = vpop.f32.mrf.mxu0
  %v7328 = vadd.f32 %v7213, %v7327
  %v7329 = vpop.f32.mrf.mxu0
  %v7330 = vpop.f32.mrf.mxu0
  %v7331 = vpop.f32.mrf.mxu0
  %7332 = vdwg.mxu0
  %vm7333 = vcmask 1041408
  %v7334 = vsel %vm7333, %v7287, 0.0
  %v7335 = vrot.slane %v7334, 4
  %v7336 = vadd.f32 %v7334, %v7335
  %v7337 = vrot.slane %v7336, 2
  %v7338 = vadd.f32 %v7336, %v7337
  %v7339 = vrot.slane %v7338, 1
  %v7340 = vadd.f32 %v7338, %v7339
  %v7341 = vsel %vm7333, %v7289, 0.0
  %v7342 = vrot.slane %v7341, 4
  %v7343 = vadd.f32 %v7341, %v7342
  %v7344 = vrot.slane %v7343, 2
  %v7345 = vadd.f32 %v7343, %v7344
  %v7346 = vrot.slane %v7345, 1
  %v7347 = vadd.f32 %v7345, %v7346
  %v7348 = vsel %vm7333, %v7328, 0.0
  %v7349 = vrot.slane %v7348, 4
  %v7350 = vadd.f32 %v7348, %v7349
  %v7351 = vrot.slane %v7350, 2
  %v7352 = vadd.f32 %v7350, %v7351
  %v7353 = vrot.slane %v7352, 1
  %v7354 = vadd.f32 %v7352, %v7353
  %v7355 = vrcp.pop 2.0
  %v7356 = vmul.f32 %v7340, %v7355
  %v7357 = vmul.f32 %v7347, %v7355
  %v7358 = vmul.f32 %v7354, %v7355
  %v7359 = vsub.f32 %v7287, %v7356
  %v7360 = vsub.f32 %v7289, %v7357
  %v7361 = vsub.f32 %v7328, %v7358
  %v7362 = vmul.f32 %v7359, %v7359
  %v7363 = vmul.f32 %v7360, %v7360
  %v7364 = vmul.f32 %v7361, %v7361
  %v7365 = vsel %vm7333, %v7362, 0.0
  %v7366 = vrot.slane %v7365, 4
  %v7367 = vadd.f32 %v7365, %v7366
  %v7368 = vrot.slane %v7367, 2
  %v7369 = vadd.f32 %v7367, %v7368
  %v7370 = vrot.slane %v7369, 1
  %v7371 = vadd.f32 %v7369, %v7370
  %v7372 = vsel %vm7333, %v7363, 0.0
  %v7373 = vrot.slane %v7372, 4
  %v7374 = vadd.f32 %v7372, %v7373
  %v7375 = vrot.slane %v7374, 2
  %v7376 = vadd.f32 %v7374, %v7375
  %v7377 = vrot.slane %v7376, 1
  %v7378 = vadd.f32 %v7376, %v7377
  %v7379 = vsel %vm7333, %v7364, 0.0
  %v7380 = vrot.slane %v7379, 4
  %v7381 = vadd.f32 %v7379, %v7380
  %v7382 = vrot.slane %v7381, 2
  %v7383 = vadd.f32 %v7381, %v7382
  %v7384 = vrot.slane %v7383, 1
  %v7385 = vadd.f32 %v7383, %v7384
  %v7386 = vmul.f32 %v7371, %v7355
  %v7387 = vmul.f32 %v7378, %v7355
  %v7388 = vmul.f32 %v7385, %v7355
  %v7389 = vadd.f32 %v7386, 1e-05
  %v7390 = vadd.f32 %v7387, 1e-05
  %v7391 = vadd.f32 %v7388, 1e-05
  %v7392 = vrsqrt.pop %v7389
  %v7393 = vrsqrt.pop %v7390
  %v7394 = vrsqrt.pop %v7391
  %v7395 = vmul.f32 %v7359, %v7392
  %v7396 = vmul.f32 %v7360, %v7393
  %v7397 = vmul.f32 %v7361, %v7394
  %v7398 = vld [vmem:[%s7] sm:$0x7]
  %v7400 = vlaneseq
  %v7401 = vshrl.u32 %v7400, 7
  %v7402 = vsub.s32 0, %v7401
  %v7403 = vrot.slane %v7398, %v7402
  %v7404 = vlaneseq
  %v7405 = vshrl.u32 %v7404, 7
  %v7406 = vsub.s32 1, %v7405
  %v7407 = vrot.slane %v7398, %v7406
  %v7408 = vlaneseq
  %v7409 = vshrl.u32 %v7408, 7
  %v7410 = vsub.s32 2, %v7409
  %v7411 = vrot.slane %v7398, %v7410
  %v7415 = vmul.f32 %v7395, %v7403
  %v7416 = vmul.f32 %v7396, %v7407
  %v7417 = vmul.f32 %v7397, %v7411
  %v7418 = vld [vmem:[%s8] sm:$0x7]
  %v7420 = vlaneseq
  %v7421 = vshrl.u32 %v7420, 7
  %v7422 = vsub.s32 0, %v7421
  %v7423 = vrot.slane %v7418, %v7422
  %v7424 = vlaneseq
  %v7425 = vshrl.u32 %v7424, 7
  %v7426 = vsub.s32 1, %v7425
  %v7427 = vrot.slane %v7418, %v7426
  %v7428 = vlaneseq
  %v7429 = vshrl.u32 %v7428, 7
  %v7430 = vsub.s32 2, %v7429
  %v7431 = vrot.slane %v7418, %v7430
  %v7435 = vadd.f32 %v7415, %v7423
  %v7436 = vadd.f32 %v7416, %v7427
  %v7437 = vadd.f32 %v7417, %v7431
  %v7438 = vmax.f32 %v7435, 0.0
  %v7439 = vmax.f32 %v7436, 0.0
  %v7440 = vmax.f32 %v7437, 0.0
  %v7441 = vpack.c.bf16 %v7438, %v7438
  %v7442 = vpack.c.bf16 %v7439, %v7439
  %v7443 = vpack.c.bf16 %v7440, %v7440
  %v7444 = vld [vmem:[%s9] sm:$0xf]
  %v7445 = vld [vmem:[%s9 + $0x4] sm:$0xf]
  %v7446 = vld [vmem:[%s9 + $0x8] sm:$0xf]
  %v7447 = vld [vmem:[%s9 + $0xc] sm:$0xf]
  %v7448 = vld [vmem:[%s9 + $0x10] sm:$0xf]
  %v7449 = vld [vmem:[%s9 + $0x14] sm:$0xf]
  %v7450 = vld [vmem:[%s9 + $0x18] sm:$0xf]
  %v7451 = vld [vmem:[%s9 + $0x1c] sm:$0xf]
  %v7452 = vld [vmem:[%s9 + $0x20] sm:$0xf]
  %v7453 = vld [vmem:[%s9 + $0x24] sm:$0xf]
  %v7454 = vld [vmem:[%s9 + $0x28] sm:$0xf]
  %v7455 = vld [vmem:[%s9 + $0x2c] sm:$0xf]
  %v7456 = vld [vmem:[%s9 + $0x30] sm:$0xf]
  %v7457 = vld [vmem:[%s9 + $0x34] sm:$0xf]
  %v7458 = vld [vmem:[%s9 + $0x38] sm:$0xf]
  %v7459 = vld [vmem:[%s9 + $0x3c] sm:$0xf]
  %v7460 = vld [vmem:[%s9 + $0x40] sm:$0xf]
  %v7461 = vld [vmem:[%s9 + $0x44] sm:$0xf]
  %v7462 = vld [vmem:[%s9 + $0x48] sm:$0xf]
  %v7463 = vld [vmem:[%s9 + $0x4c] sm:$0xf]
  %v7464 = vld [vmem:[%s9 + $0x50] sm:$0xf]
  %v7465 = vld [vmem:[%s9 + $0x54] sm:$0xf]
  %v7466 = vld [vmem:[%s9 + $0x58] sm:$0xf]
  %v7467 = vld [vmem:[%s9 + $0x5c] sm:$0xf]
  %v7468 = vld [vmem:[%s9 + $0x60] sm:$0xf]
  %v7469 = vld [vmem:[%s9 + $0x64] sm:$0xf]
  %v7470 = vld [vmem:[%s9 + $0x68] sm:$0xf]
  %v7471 = vld [vmem:[%s9 + $0x6c] sm:$0xf]
  %v7472 = vld [vmem:[%s9 + $0x70] sm:$0xf]
  %v7473 = vld [vmem:[%s9 + $0x74] sm:$0xf]
  %v7474 = vld [vmem:[%s9 + $0x78] sm:$0xf]
  %v7475 = vld [vmem:[%s9 + $0x7c] sm:$0xf]
  %v7476 = vld [vmem:[%s9 + $0x80] sm:$0xf]
  %v7477 = vld [vmem:[%s9 + $0x84] sm:$0xf]
  %v7478 = vld [vmem:[%s9 + $0x88] sm:$0xf]
  %v7479 = vld [vmem:[%s9 + $0x8c] sm:$0xf]
  %v7480 = vld [vmem:[%s9 + $0x90] sm:$0xf]
  %v7481 = vld [vmem:[%s9 + $0x94] sm:$0xf]
  %v7482 = vld [vmem:[%s9 + $0x98] sm:$0xf]
  %v7483 = vld [vmem:[%s9 + $0x9c] sm:$0xf]
  %v7484 = vld [vmem:[%s9 + $0xa0] sm:$0xf]
  %v7485 = vld [vmem:[%s9 + $0xa4] sm:$0xf]
  %v7486 = vld [vmem:[%s9 + $0xa8] sm:$0xf]
  %v7487 = vld [vmem:[%s9 + $0xac] sm:$0xf]
  %v7488 = vld [vmem:[%s9 + $0xb0] sm:$0xf]
  %v7489 = vld [vmem:[%s9 + $0xb4] sm:$0xf]
  %v7490 = vld [vmem:[%s9 + $0xb8] sm:$0xf]
  %v7491 = vld [vmem:[%s9 + $0xbc] sm:$0xf]
  %v7492 = vld [vmem:[%s10] sm:$0x1]
  %v7494 = vlaneseq
  %v7495 = vshrl.u32 %v7494, 7
  %v7496 = vsub.s32 0, %v7495
  %v7497 = vrot.slane %v7492, %v7496
  %v7547 = vunpack.c.l.b16 %v7444
  %v7548 = vunpack.c.l.b16 %v7445
  %v7549 = vunpack.c.l.b16 %v7446
  %v7550 = vunpack.c.l.b16 %v7447
  %v7551 = vunpack.c.l.b16 %v7448
  %v7552 = vunpack.c.l.b16 %v7449
  %v7553 = vunpack.c.l.b16 %v7450
  %v7554 = vunpack.c.l.b16 %v7451
  %v7555 = vunpack.c.l.b16 %v7452
  %v7556 = vunpack.c.l.b16 %v7453
  %v7557 = vunpack.c.l.b16 %v7454
  %v7558 = vunpack.c.l.b16 %v7455
  %v7559 = vunpack.c.l.b16 %v7456
  %v7560 = vunpack.c.l.b16 %v7457
  %v7561 = vunpack.c.l.b16 %v7458
  %v7562 = vunpack.c.l.b16 %v7459
  %v7563 = vunpack.c.l.b16 %v7460
  %v7564 = vunpack.c.l.b16 %v7461
  %v7565 = vunpack.c.l.b16 %v7462
  %v7566 = vunpack.c.l.b16 %v7463
  %v7567 = vunpack.c.l.b16 %v7464
  %v7568 = vunpack.c.l.b16 %v7465
  %v7569 = vunpack.c.l.b16 %v7466
  %v7570 = vunpack.c.l.b16 %v7467
  %v7571 = vunpack.c.l.b16 %v7468
  %v7572 = vunpack.c.l.b16 %v7469
  %v7573 = vunpack.c.l.b16 %v7470
  %v7574 = vunpack.c.l.b16 %v7471
  %v7575 = vunpack.c.l.b16 %v7472
  %v7576 = vunpack.c.l.b16 %v7473
  %v7577 = vunpack.c.l.b16 %v7474
  %v7578 = vunpack.c.l.b16 %v7475
  %v7579 = vunpack.c.l.b16 %v7476
  %v7580 = vunpack.c.l.b16 %v7477
  %v7581 = vunpack.c.l.b16 %v7478
  %v7582 = vunpack.c.l.b16 %v7479
  %v7583 = vunpack.c.l.b16 %v7480
  %v7584 = vunpack.c.l.b16 %v7481
  %v7585 = vunpack.c.l.b16 %v7482
  %v7586 = vunpack.c.l.b16 %v7483
  %v7587 = vunpack.c.l.b16 %v7484
  %v7588 = vunpack.c.l.b16 %v7485
  %v7589 = vunpack.c.l.b16 %v7486
  %v7590 = vunpack.c.l.b16 %v7487
  %v7591 = vunpack.c.l.b16 %v7488
  %v7592 = vunpack.c.l.b16 %v7489
  %v7593 = vunpack.c.l.b16 %v7490
  %v7594 = vunpack.c.l.b16 %v7491
  %v7595 = vpack.c.b16 %v7548, %v7547
  %v7596 = vpack.c.b16 %v7550, %v7549
  %v7597 = vpack.c.b16 %v7552, %v7551
  %v7598 = vpack.c.b16 %v7554, %v7553
  %v7599 = vpack.c.b16 %v7556, %v7555
  %v7600 = vpack.c.b16 %v7558, %v7557
  %v7601 = vpack.c.b16 %v7560, %v7559
  %v7602 = vpack.c.b16 %v7562, %v7561
  %v7603 = vpack.c.b16 %v7564, %v7563
  %v7604 = vpack.c.b16 %v7566, %v7565
  %v7605 = vpack.c.b16 %v7568, %v7567
  %v7606 = vpack.c.b16 %v7570, %v7569
  %v7607 = vpack.c.b16 %v7572, %v7571
  %v7608 = vpack.c.b16 %v7574, %v7573
  %v7609 = vpack.c.b16 %v7576, %v7575
  %v7610 = vpack.c.b16 %v7578, %v7577
  %v7611 = vpack.c.b16 %v7580, %v7579
  %v7612 = vpack.c.b16 %v7582, %v7581
  %v7613 = vpack.c.b16 %v7584, %v7583
  %v7614 = vpack.c.b16 %v7586, %v7585
  %v7615 = vpack.c.b16 %v7588, %v7587
  %v7616 = vpack.c.b16 %v7590, %v7589
  %v7617 = vpack.c.b16 %v7592, %v7591
  %v7618 = vpack.c.b16 %v7594, %v7593
  %7643 = vmatprep.subr.bf16.mxu0 0
  %7644 = vmatpush1.bf16.msra.mxu0 %v7602
  %7645 = vmatprep.subr.bf16.mxu0 0
  %7646 = vmatpush1.bf16.msra.mxu0 %v7601
  %7647 = vmatprep.subr.bf16.mxu0 0
  %7648 = vmatpush1.bf16.msra.mxu0 %v7600
  %7649 = vmatprep.subr.bf16.mxu0 0
  %7650 = vmatpush1.bf16.msra.mxu0 %v7599
  %7651 = vmatprep.subr.bf16.mxu0 0
  %7652 = vmatpush1.bf16.msra.mxu0 %v7598
  %7653 = vmatprep.subr.bf16.mxu0 0
  %7654 = vmatpush1.bf16.msra.mxu0 %v7597
  %7655 = vmatprep.subr.bf16.mxu0 0
  %7656 = vmatpush1.bf16.msra.mxu0 %v7596
  %7657 = vmatprep.subr.bf16.mxu0 0
  %7658 = vmatpush1.bf16.msra.mxu0 %v7595
  %7659 = vmatprep.subr.bf16.mxu0 0
  %7660 = vmatpush2.bf16.msra.mxu0 %v7610
  %7661 = vmatprep.subr.bf16.mxu0 0
  %7662 = vmatpush2.bf16.msra.mxu0 %v7609
  %7663 = vmatprep.subr.bf16.mxu0 0
  %7664 = vmatpush2.bf16.msra.mxu0 %v7608
  %7665 = vmatprep.subr.bf16.mxu0 0
  %7666 = vmatpush2.bf16.msra.mxu0 %v7607
  %7667 = vmatprep.subr.bf16.mxu0 0
  %7668 = vmatpush2.bf16.msra.mxu0 %v7606
  %7669 = vmatprep.subr.bf16.mxu0 0
  %7670 = vmatpush2.bf16.msra.mxu0 %v7605
  %7671 = vmatprep.subr.bf16.mxu0 0
  %7672 = vmatpush2.bf16.msra.mxu0 %v7604
  %7673 = vmatprep.subr.bf16.mxu0 0
  %7674 = vmatpush2.bf16.msra.mxu0 %v7603
  %7675 = vmatprep.mubr.bf16.mxu0 %v7442
  %7676 = vmatmul.mubr.bf16.gmra.mxu0 %v7441
  %v7677 = vpop.f32.mrf.mxu0
  %v7678 = vadd.f32 %v7497, %v7677
  %v7679 = vpop.f32.mrf.mxu0
  %v7680 = vpop.f32.mrf.mxu0
  %v7681 = vpop.f32.mrf.mxu0
  %7682 = vdwg.mxu0
  %7683 = vmatprep.subr.bf16.mxu0 0
  %7684 = vmatpush1.bf16.msra.mxu0 %v7618
  %7685 = vmatprep.subr.bf16.mxu0 0
  %7686 = vmatpush1.bf16.msra.mxu0 %v7617
  %7687 = vmatprep.subr.bf16.mxu0 0
  %7688 = vmatpush1.bf16.msra.mxu0 %v7616
  %7689 = vmatprep.subr.bf16.mxu0 0
  %7690 = vmatpush1.bf16.msra.mxu0 %v7615
  %7691 = vmatprep.subr.bf16.mxu0 0
  %7692 = vmatpush1.bf16.msra.mxu0 %v7614
  %7693 = vmatprep.subr.bf16.mxu0 0
  %7694 = vmatpush1.bf16.msra.mxu0 %v7613
  %7695 = vmatprep.subr.bf16.mxu0 0
  %7696 = vmatpush1.bf16.msra.mxu0 %v7612
  %7697 = vmatprep.subr.bf16.mxu0 0
  %7698 = vmatpush1.bf16.msra.mxu0 %v7611
  %7699 = vmatprep.subr.bf16.mxu0 0
  %7700 = vmatpush2.bf16.msra.mxu0 0
  %7701 = vmatprep.subr.bf16.mxu0 0
  %7702 = vmatpush2.bf16.msra.mxu0 0
  %7703 = vmatprep.subr.bf16.mxu0 0
  %7704 = vmatpush2.bf16.msra.mxu0 0
  %7705 = vmatprep.subr.bf16.mxu0 0
  %7706 = vmatpush2.bf16.msra.mxu0 0
  %7707 = vmatprep.subr.bf16.mxu0 0
  %7708 = vmatpush2.bf16.msra.mxu0 0
  %7709 = vmatprep.subr.bf16.mxu0 0
  %7710 = vmatpush2.bf16.msra.mxu0 0
  %7711 = vmatprep.subr.bf16.mxu0 0
  %7712 = vmatpush2.bf16.msra.mxu0 0
  %7713 = vmatprep.subr.bf16.mxu0 0
  %7714 = vmatpush2.bf16.msra.mxu0 0
  %7715 = vmatprep.mubr.bf16.mxu0 0
  %7716 = vmatmul.mubr.bf16.gmra.mxu0 %v7443
  %v7717 = vpop.f32.mrf.mxu0
  %v7718 = vadd.f32 %v7678, %v7717
  %v7719 = vpop.f32.mrf.mxu0
  %v7720 = vpop.f32.mrf.mxu0
  %v7721 = vpop.f32.mrf.mxu0
  %7722 = vdwg.mxu0
  %v7723 = vmul.f32 %v7718, %v7718
  %v7724 = vld [vmem:[%s11] sm:$0xff]
  %v7725 = vld [vmem:[%s11 + $0x8] sm:$0xff]
  %v7726 = vld [vmem:[%s11 + $0x10] sm:$0xff]
  %v7727 = vld [vmem:[%s11 + $0x18] sm:$0xff]
  %v7728 = vld [vmem:[%s11 + $0x20] sm:$0xff]
  %v7729 = vld [vmem:[%s11 + $0x28] sm:$0xff]
  %v7730 = vld [vmem:[%s11 + $0x30] sm:$0xff]
  %v7731 = vld [vmem:[%s11 + $0x38] sm:$0xff]
  %v7732 = vld [vmem:[%s11 + $0x40] sm:$0xff]
  %v7733 = vld [vmem:[%s11 + $0x48] sm:$0xff]
  %v7734 = vld [vmem:[%s11 + $0x50] sm:$0xff]
  %v7735 = vld [vmem:[%s11 + $0x58] sm:$0xff]
  %vm7736 = vcmask 785408
  %v7738 = vsel %vm7736, %v7723, 0
  %7740 = vmatprep.subr.mxu0 0.0
  %7741 = vmatpush1.msra.mxu0 0.0
  %7742 = vmatprep.subr.mxu0 0.0
  %7743 = vmatpush1.msra.mxu0 0.0
  %7744 = vmatprep.subr.mxu0 0.0
  %7745 = vmatpush1.msra.mxu0 0.0
  %7746 = vmatprep.subr.mxu0 0.0
  %7747 = vmatpush1.msra.mxu0 0.0
  %7748 = vmatprep.subr.mxu0 0.0
  %7749 = vmatpush1.msra.mxu0 %v7735
  %7750 = vmatprep.subr.mxu0 0.0
  %7751 = vmatpush1.msra.mxu0 %v7734
  %7752 = vmatprep.subr.mxu0 0.0
  %7753 = vmatpush1.msra.mxu0 %v7733
  %7754 = vmatprep.subr.mxu0 0.0
  %7755 = vmatpush1.msra.mxu0 %v7732
  %7756 = vmatprep.subr.mxu0 0.0
  %7757 = vmatpush1.msra.mxu0 %v7731
  %7758 = vmatprep.subr.mxu0 0.0
  %7759 = vmatpush1.msra.mxu0 %v7730
  %7760 = vmatprep.subr.mxu0 0.0
  %7761 = vmatpush1.msra.mxu0 %v7729
  %7762 = vmatprep.subr.mxu0 0.0
  %7763 = vmatpush1.msra.mxu0 %v7728
  %7764 = vmatprep.subr.mxu0 0.0
  %7765 = vmatpush1.msra.mxu0 %v7727
  %7766 = vmatprep.subr.mxu0 0.0
  %7767 = vmatpush1.msra.mxu0 %v7726
  %7768 = vmatprep.subr.mxu0 0.0
  %7769 = vmatpush1.msra.mxu0 %v7725
  %7770 = vmatprep.subr.mxu0 0.0
  %7771 = vmatpush1.msra.mxu0 %v7724
  %7772 = vmatprep.subr.mxu0 0.0
  %7773 = vmatpush2.msra.mxu0 0.0
  %7774 = vmatprep.subr.mxu0 0.0
  %7775 = vmatpush2.msra.mxu0 0.0
  %7776 = vmatprep.subr.mxu0 0.0
  %7777 = vmatpush2.msra.mxu0 0.0
  %7778 = vmatprep.subr.mxu0 0.0
  %7779 = vmatpush2.msra.mxu0 0.0
  %7780 = vmatprep.subr.mxu0 0.0
  %7781 = vmatpush2.msra.mxu0 0.0
  %7782 = vmatprep.subr.mxu0 0.0
  %7783 = vmatpush2.msra.mxu0 0.0
  %7784 = vmatprep.subr.mxu0 0.0
  %7785 = vmatpush2.msra.mxu0 0.0
  %7786 = vmatprep.subr.mxu0 0.0
  %7787 = vmatpush2.msra.mxu0 0.0
  %7788 = vmatprep.subr.mxu0 0.0
  %7789 = vmatpush2.msra.mxu0 0.0
  %7790 = vmatprep.subr.mxu0 0.0
  %7791 = vmatpush2.msra.mxu0 0.0
  %7792 = vmatprep.subr.mxu0 0.0
  %7793 = vmatpush2.msra.mxu0 0.0
  %7794 = vmatprep.subr.mxu0 0.0
  %7795 = vmatpush2.msra.mxu0 0.0
  %7796 = vmatprep.subr.mxu0 0.0
  %7797 = vmatpush2.msra.mxu0 0.0
  %7798 = vmatprep.subr.mxu0 0.0
  %7799 = vmatpush2.msra.mxu0 0.0
  %7800 = vmatprep.subr.mxu0 0.0
  %7801 = vmatpush2.msra.mxu0 0.0
  %7802 = vmatprep.subr.mxu0 0.0
  %7803 = vmatpush2.msra.mxu0 0.0
  %7804 = vmatprep.mubr.f32.mxu0 0.0
  %7805 = vmatmul.mubr.f32.gmra.mxu0 %v7738
  %v7806 = vpop.f32.mrf.mxu0
  %v7807 = vadd.f32 0.0, %v7806
  %v7808 = vpop.f32.mrf.mxu0
  %7809 = vdwg.mxu0
  %v7810 = vmax.f32 %v7807, 1e-24
  %v7811 = vrsqrt.pop %v7810
  %v7812 = vmul.f32 %v7718, %v7811
  %v7813 = vpack.c.bf16 %v7812, %v7812
  %v7814 = vld [vmem:[%s12] sm:$0xff]
  %v7815 = vld [vmem:[%s12 + $0x8] sm:$0xff]
  %v7816 = vld [vmem:[%s12 + $0x10] sm:$0xff]
  %v7817 = vld [vmem:[%s12 + $0x18] sm:$0xff]
  %v7818 = vld [vmem:[%s12 + $0x20] sm:$0xff]
  %v7819 = vld [vmem:[%s12 + $0x28] sm:$0xff]
  %v7820 = vld [vmem:[%s12 + $0x30] sm:$0xff]
  %v7821 = vld [vmem:[%s12 + $0x38] sm:$0xff]
  %v7822 = vld [vmem:[%s12 + $0x40] sm:$0xff]
  %v7823 = vld [vmem:[%s12 + $0x48] sm:$0xff]
  %v7824 = vld [vmem:[%s12 + $0x50] sm:$0xff]
  %v7825 = vld [vmem:[%s12 + $0x58] sm:$0xff]
  %v7838 = vunpack.c.l.b16 %v7814
  %v7839 = vunpack.c.h.b16 %v7814
  %v7840 = vunpack.c.l.b16 %v7815
  %v7841 = vunpack.c.h.b16 %v7815
  %v7842 = vunpack.c.l.b16 %v7816
  %v7843 = vunpack.c.h.b16 %v7816
  %v7844 = vunpack.c.l.b16 %v7817
  %v7845 = vunpack.c.h.b16 %v7817
  %v7846 = vunpack.c.l.b16 %v7818
  %v7847 = vunpack.c.h.b16 %v7818
  %v7848 = vunpack.c.l.b16 %v7819
  %v7849 = vunpack.c.h.b16 %v7819
  %v7850 = vunpack.c.l.b16 %v7820
  %v7851 = vunpack.c.h.b16 %v7820
  %v7852 = vunpack.c.l.b16 %v7821
  %v7853 = vunpack.c.h.b16 %v7821
  %v7854 = vunpack.c.l.b16 %v7822
  %v7855 = vunpack.c.h.b16 %v7822
  %v7856 = vunpack.c.l.b16 %v7823
  %v7857 = vunpack.c.h.b16 %v7823
  %v7858 = vunpack.c.l.b16 %v7824
  %v7859 = vunpack.c.h.b16 %v7824
  %v7860 = vunpack.c.l.b16 %v7825
  %v7861 = vunpack.c.h.b16 %v7825
  %v7862 = vpack.c.b16 %v7840, %v7838
  %v7863 = vpack.c.b16 %v7841, %v7839
  %v7864 = vpack.c.b16 %v7844, %v7842
  %v7865 = vpack.c.b16 %v7845, %v7843
  %v7866 = vpack.c.b16 %v7848, %v7846
  %v7867 = vpack.c.b16 %v7849, %v7847
  %v7868 = vpack.c.b16 %v7852, %v7850
  %v7869 = vpack.c.b16 %v7853, %v7851
  %v7870 = vpack.c.b16 %v7856, %v7854
  %v7871 = vpack.c.b16 %v7857, %v7855
  %v7872 = vpack.c.b16 %v7860, %v7858
  %v7873 = vpack.c.b16 %v7861, %v7859
  %v7887 = vsel %vm7736, %v7813, 0
  %7889 = vmatprep.subr.bf16.mxu0 0
  %7890 = vmatpush1.bf16.msra.mxu0 0
  %7891 = vmatprep.subr.bf16.mxu0 0
  %7892 = vmatpush1.bf16.msra.mxu0 0
  %7893 = vmatprep.subr.bf16.mxu0 %v7873
  %7894 = vmatpush1.bf16.msra.mxu0 %v7872
  %7895 = vmatprep.subr.bf16.mxu0 %v7871
  %7896 = vmatpush1.bf16.msra.mxu0 %v7870
  %7897 = vmatprep.subr.bf16.mxu0 %v7869
  %7898 = vmatpush1.bf16.msra.mxu0 %v7868
  %7899 = vmatprep.subr.bf16.mxu0 %v7867
  %7900 = vmatpush1.bf16.msra.mxu0 %v7866
  %7901 = vmatprep.subr.bf16.mxu0 %v7865
  %7902 = vmatpush1.bf16.msra.mxu0 %v7864
  %7903 = vmatprep.subr.bf16.mxu0 %v7863
  %7904 = vmatpush1.bf16.msra.mxu0 %v7862
  %7905 = vmatprep.subr.bf16.mxu0 0
  %7906 = vmatpush2.bf16.msra.mxu0 0
  %7907 = vmatprep.subr.bf16.mxu0 0
  %7908 = vmatpush2.bf16.msra.mxu0 0
  %7909 = vmatprep.subr.bf16.mxu0 0
  %7910 = vmatpush2.bf16.msra.mxu0 0
  %7911 = vmatprep.subr.bf16.mxu0 0
  %7912 = vmatpush2.bf16.msra.mxu0 0
  %7913 = vmatprep.subr.bf16.mxu0 0
  %7914 = vmatpush2.bf16.msra.mxu0 0
  %7915 = vmatprep.subr.bf16.mxu0 0
  %7916 = vmatpush2.bf16.msra.mxu0 0
  %7917 = vmatprep.subr.bf16.mxu0 0
  %7918 = vmatpush2.bf16.msra.mxu0 0
  %7919 = vmatprep.subr.bf16.mxu0 0
  %7920 = vmatpush2.bf16.msra.mxu0 0
  %7921 = vmatprep.mubr.bf16.mxu0 0
  %7922 = vmatmul.mubr.bf16.gmra.mxu0 %v7887
  %v7923 = vpop.f32.mrf.mxu0
  %v7924 = vadd.f32 0.0, %v7923
  %v7925 = vpop.f32.mrf.mxu0
  %v7926 = vadd.f32 0.0, %v7925
  %v7927 = vpop.f32.mrf.mxu0
  %v7928 = vpop.f32.mrf.mxu0
  %7929 = vdwg.mxu0
  %7931 = vrot.lane.b32.xlu0 %v7187, 32
  %v7932 = vpop.permute.xlu0 %7931
  %7936 = vrot.lane.b32.xlu0 %v7924, 42
  %v7937 = vpop.permute.xlu0 %7936
  %7938 = vrot.lane.b32.xlu0 %v7926, 42
  %v7939 = vpop.permute.xlu0 %7938
  %vm7940 = vcmask 343040
  %v7941 = vsel %vm7940, %v7937, %v7939
  %7945 = vrot.lane.b32.xlu0 %v7812, 58
  %v7946 = vpop.permute.xlu0 %7945
  %v7948 = vsel %vm6310, %v7122, %v7932
  %v7949 = vsel %vm7940, %v7948, %v7937
  %vm7950 = vcmask 474112
  %v7951 = vsel %vm7950, %v7941, %v7946
  %vm7952 = vcmask 211968
  %v7953 = vsel %vm7952, %v7946, 0.0
  %v7957 = vcombine.low %v7949, %v7951
  %v7959 = vunpack.c.l.s4 1983009808
  %v7960 = vunpack.c.0.s8 %v7959
  %v7961 = vlaneseq
  %v7962 = vshrl.u32 %v7961, 7
  %v7963 = vsub.s32 %v7960, %v7962
  %v7964 = vrot.slane %v7957, %v7963
  %v7966 = vunpack.c.l.s4 1983009808
  %v7967 = vunpack.c.0.s8 %v7966
  %v7968 = vlaneseq
  %v7969 = vshrl.u32 %v7968, 7
  %v7970 = vsub.s32 %v7967, %v7969
  %v7971 = vrot.slane %v7953, %v7970
  %v7972 = vcombine.low %v7964, %v7971
  %7974 = vst [vmem:[%s13] sm:$0x3f] %v7972
  // Predicated region
  $region54: #{multi_head_encoder_forward.1} parent=0 // pred_check
    _
  $region55: #{multi_head_encoder_forward.1} parent=0 // pred_check_branch
    %7976 = sbr.rel (0) target = $region57
  $region56: #{multi_head_encoder_forward.1} parent=0 // pred_region
    _
  $region57: #{multi_head_encoder_forward.1} parent=0 // pred_fallthru
    _
  // Predicated region
  $region58: #{multi_head_encoder_forward.1} parent=0 // pred_check
    _
  $region59: #{multi_head_encoder_forward.1} parent=0 // pred_check_branch
    %7978 = sbr.rel (0) target = $region61
  $region60: #{multi_head_encoder_forward.1} parent=0 // pred_region
    _
  $region61: #{multi_head_encoder_forward.1} parent=0 // pred_fallthru
    _

</llo_original>
